<compile_context>
chip_gen: v5e
topology: v5e:2x2
jax: 0.10.0
libtpu: 0.0.40
codegen_flags: <defaults>
</compile_context>

<pallas_src>
import jax
import jax.numpy as jnp
from jax import lax
from jax.experimental import pallas as pl
from jax.experimental.pallas import tpu as pltpu


# Aligned origin of the image inside the zero-halo scratch: sublane offset 8,
# lane offset 128 -> the interior *store* needs no relayout/shift, while the
# nine shifted patch *loads* (offsets -1/0/+1) are ordinary static slice loads.
_R0 = 8
_C0 = 128


def _silu(z):
    # SiLU: exp runs on the EUP; exact reciprocal replaces the VPU divide.
    return z * pl.reciprocal(1.0 + jnp.exp(-z), approx=False)


def _make_fused_neck_kernel(mid, H, W):
    HW = H * W

    def kernel(x_ref, w12_ref, b12_ref, w3_ref, b3_ref,
               w4_ref, b4_ref, wo_ref, bo_ref, o_ref, pad_ref):
        # Zero the halo scratch once per grid step; the zero border around the
        # image region provides the 'SAME' padding for both 3x3 convs.
        pad_ref[...] = jnp.zeros_like(pad_ref)

        def conv3x3_silu(y, w_t, b):
            # y: (mid, HW) channel-major. Aligned interior store, then gather
            # the 9 shifted views and do ONE im2col matmul with K = 9*mid.
            pad_ref[:, _R0:_R0 + H, _C0:_C0 + W] = y.reshape(mid, H, W)
            views = [pad_ref[:, _R0 - 1 + dy:_R0 - 1 + dy + H,
                             _C0 - 1 + dx:_C0 - 1 + dx + W]
                     for dy in range(3) for dx in range(3)]
            patches = jnp.concatenate(views, axis=0).reshape(9 * mid, HW)
            z = jnp.dot(w_t, patches, preferred_element_type=jnp.float32)
            return _silu(z + b)

        x = x_ref[0].astype(jnp.float32)                       # (Cin, HW)

        # conv1 + conv2 fused: weights stacked along Cout -> one matmul.
        z12 = jnp.dot(w12_ref[...], x, preferred_element_type=jnp.float32)
        z12 = _silu(z12 + b12_ref[...])
        x1 = z12[:mid, :]                                      # conv1 output
        y1 = z12[mid:, :]                                      # conv2 output

        y2 = conv3x3_silu(y1, w3_ref[...], b3_ref[...])
        y3 = conv3x3_silu(y2, w4_ref[...], b4_ref[...])

        # conv_out(cat([y3, y2, y1, x1])) -- the concat never leaves VMEM.
        cat = jnp.concatenate([y3, y2, y1, x1], axis=0)        # (4*mid, HW)
        zo = jnp.dot(wo_ref[...], cat, preferred_element_type=jnp.float32)
        zo = _silu(zo + bo_ref[...])
        o_ref[0] = zo.astype(o_ref.dtype)                      # lane-dense NCHW

    return kernel


def tiny_downsample_neck(x_nchw, params):
    """Matches TinyDownSampleNeck.forward; NCHW in / NCHW out, one kernel."""
    N, Cin, H, W = x_nchw.shape
    HW = H * W
    w1, b1 = params["conv1"]
    w2, b2 = params["conv2"]
    w3, b3 = params["conv3"]
    w4, b4 = params["conv4"]
    wo, bo = params["conv_out"]
    mid = w3.shape[-1]
    assert Cin == 4 * mid and wo.shape[-2] == 4 * mid and wo.shape[-1] == 2 * mid

    # Re-layout the (tiny) folded weights for channel-major matmuls:
    #   1x1: (1,1,Cin,Cout) -> (Cout, Cin); conv1/conv2 stacked along Cout.
    #   3x3: (3,3,Cin,Cout) -> (Cout, 9*Cin), column = (dy*3+dx)*Cin + ci,
    #        matching the tap-major / channel-minor patch stacking in-kernel.
    w12_t = jnp.concatenate([w1[0, 0].T, w2[0, 0].T], axis=0)       # (2*mid, Cin)
    b12 = jnp.concatenate([b1, b2]).reshape(2 * mid, 1)
    w3_t = jnp.transpose(w3, (3, 0, 1, 2)).reshape(mid, 9 * mid)
    w4_t = jnp.transpose(w4, (3, 0, 1, 2)).reshape(mid, 9 * mid)
    wo_t = wo[0, 0].T                                               # (2*mid, 4*mid)

    x2 = x_nchw.reshape(N, Cin, HW)          # NCHW row-major: free reshape

    out = pl.pallas_call(
        _make_fused_neck_kernel(mid, H, W),
        out_shape=jax.ShapeDtypeStruct((N, 2 * mid, HW), x_nchw.dtype),
        grid=(N,),
        in_specs=[
            pl.BlockSpec((1, Cin, HW), lambda n: (n, 0, 0)),        # x
            pl.BlockSpec((2 * mid, Cin), lambda n: (0, 0)),         # w1|w2
            pl.BlockSpec((2 * mid, 1), lambda n: (0, 0)),           # b1|b2
            pl.BlockSpec((mid, 9 * mid), lambda n: (0, 0)),         # w3
            pl.BlockSpec((mid, 1), lambda n: (0, 0)),               # b3
            pl.BlockSpec((mid, 9 * mid), lambda n: (0, 0)),         # w4
            pl.BlockSpec((mid, 1), lambda n: (0, 0)),               # b4
            pl.BlockSpec((2 * mid, 4 * mid), lambda n: (0, 0)),     # w_out
            pl.BlockSpec((2 * mid, 1), lambda n: (0, 0)),           # b_out
        ],
        out_specs=pl.BlockSpec((1, 2 * mid, HW), lambda n: (n, 0, 0)),
        scratch_shapes=[
            pltpu.VMEM((mid, _R0 + H + 1, _C0 + W + 1), jnp.float32)],
        compiler_params=pltpu.CompilerParams(
            dimension_semantics=("parallel",)),
    )(x2, w12_t, b12, w3_t, b3.reshape(mid, 1), w4_t, b4.reshape(mid, 1),
      wo_t, bo.reshape(2 * mid, 1))
    return out.reshape(N, 2 * mid, H, W)     # already NCHW; free reshape


# --------------------------- parameter construction -------------------------

def init_conv_bn(key, cin, cout, k):
    """Deterministic synthetic init of Conv2d(bias=False)+BN, folded to (w, b)."""
    kw, kg, kb, km, kv = jax.random.split(key, 5)
    w = 0.1 * jax.random.normal(kw, (k, k, cin, cout), jnp.float32)      # HWIO
    gamma = 1.0 + 0.1 * jax.random.normal(kg, (cout,), jnp.float32)
    beta = 0.1 * jax.random.normal(kb, (cout,), jnp.float32)
    mean = 0.1 * jax.random.normal(km, (cout,), jnp.float32)
    var = 1.0 + 0.1 * jnp.abs(jax.random.normal(kv, (cout,), jnp.float32))
    eps = 1e-3
    scale = gamma / jnp.sqrt(var + eps)
    return w * scale, beta - mean * scale


# ------------------------------ pure-JAX reference ---------------------------

def _ref_conv(x, w, b):
    y = lax.conv_general_dilated(x, w, (1, 1), "SAME",
                                 dimension_numbers=("NHWC", "HWIO", "NHWC"))
    y = y + b
    return y * jax.nn.sigmoid(y)


def reference(x_nchw, params):
    x = jnp.transpose(x_nchw, (0, 2, 3, 1))
    x1 = _ref_conv(x, *params["conv1"])
    y1 = _ref_conv(x, *params["conv2"])
    y2 = _ref_conv(y1, *params["conv3"])
    y3 = _ref_conv(y2, *params["conv4"])
    out = _ref_conv(jnp.concatenate([y3, y2, y1, x1], axis=-1),
                    *params["conv_out"])
    return jnp.transpose(out, (0, 3, 1, 2))


# ----------------------------------- main ------------------------------------

if __name__ == "__main__":
    key = jax.random.PRNGKey(0)
    in_ch = 32                    # mid_ch = in_ch // 4 = 8: keeps every channel
    mid_ch = in_ch // 4           # split / concat 8-sublane aligned on TPU
    N, H, W = 2, 16, 16

    kx, k1, k2, k3, k4, ko = jax.random.split(key, 6)
    x = jax.random.normal(kx, (N, in_ch, H, W), jnp.float32)

    params = {
        "conv1": init_conv_bn(k1, in_ch, mid_ch, 1),
        "conv2": init_conv_bn(k2, in_ch, mid_ch, 1),
        "conv3": init_conv_bn(k3, mid_ch, mid_ch, 3),
        "conv4": init_conv_bn(k4, mid_ch, mid_ch, 3),
        "conv_out": init_conv_bn(ko, mid_ch * 4, mid_ch * 2, 1),
    }

    out = tiny_downsample_neck(x, params)
    out = jax.block_until_ready(out)

    ref = reference(x, params)
    assert out.shape == (N, mid_ch * 2, H, W), out.shape
    assert jnp.allclose(out, ref, atol=1e-4, rtol=1e-4), float(
        jnp.max(jnp.abs(out - ref)))

    print("KERNEL_OK")
</pallas_src>

<mosaic_0001>
module attributes {stable_mosaic.version = 11 : i64} {
  func.func @kernel(%arg0: i32, %arg1: memref<1x32x256xf32, #tpu.memory_space<vmem>>, %arg2: memref<16x32xf32, #tpu.memory_space<vmem>>, %arg3: memref<16x1xf32, #tpu.memory_space<vmem>>, %arg4: memref<8x72xf32, #tpu.memory_space<vmem>>, %arg5: memref<8x1xf32, #tpu.memory_space<vmem>>, %arg6: memref<8x72xf32, #tpu.memory_space<vmem>>, %arg7: memref<8x1xf32, #tpu.memory_space<vmem>>, %arg8: memref<16x32xf32, #tpu.memory_space<vmem>>, %arg9: memref<16x1xf32, #tpu.memory_space<vmem>>, %arg10: memref<1x16x256xf32, #tpu.memory_space<vmem>>, %arg11: memref<8x25x145xf32, #tpu.memory_space<vmem>>) attributes {dimension_semantics = [#tpu.dimension_semantics<parallel>], iteration_bounds = array<i64: 2>, scalar_prefetch = 0 : i64, scratch_operands = 1 : i64, tpu.core_type = #tpu.core_type<tc>, window_params = [{transform_indices = @transform_0, window_bounds = array<i64: 1, 32, 256>}, {pipeline_mode = #tpu.pipeline_mode<synchronous>, transform_indices = @transform_1, window_bounds = array<i64: 16, 32>}, {pipeline_mode = #tpu.pipeline_mode<synchronous>, transform_indices = @transform_2, window_bounds = array<i64: 16, 1>}, {pipeline_mode = #tpu.pipeline_mode<synchronous>, transform_indices = @transform_3, window_bounds = array<i64: 8, 72>}, {pipeline_mode = #tpu.pipeline_mode<synchronous>, transform_indices = @transform_4, window_bounds = array<i64: 8, 1>}, {pipeline_mode = #tpu.pipeline_mode<synchronous>, transform_indices = @transform_5, window_bounds = array<i64: 8, 72>}, {pipeline_mode = #tpu.pipeline_mode<synchronous>, transform_indices = @transform_6, window_bounds = array<i64: 8, 1>}, {pipeline_mode = #tpu.pipeline_mode<synchronous>, transform_indices = @transform_7, window_bounds = array<i64: 16, 32>}, {pipeline_mode = #tpu.pipeline_mode<synchronous>, transform_indices = @transform_8, window_bounds = array<i64: 16, 1>}, {transform_indices = @transform_9, window_bounds = array<i64: 1, 16, 256>}]} {
    %cst = arith.constant 0.000000e+00 : f32
    %0 = vector.broadcast %cst : f32 to vector<8x25x145xf32>
    %c0 = arith.constant 0 : index
    %c0_0 = arith.constant 0 : index
    %c0_1 = arith.constant 0 : index
    %1 = vector.load %arg11[%c0, %c0_0, %c0_1] : memref<8x25x145xf32, #tpu.memory_space<vmem>>, vector<8x25x145xf32>
    tpu.vector_store %arg11[%c0, %c0_0, %c0_1], %0 {strides = array<i32>} : memref<8x25x145xf32, #tpu.memory_space<vmem>>, vector<8x25x145xf32>,
    %c0_2 = arith.constant 0 : index
    %c0_3 = arith.constant 0 : index
    %c0_4 = arith.constant 0 : index
    %2 = vector.load %arg1[%c0_2, %c0_3, %c0_4] : memref<1x32x256xf32, #tpu.memory_space<vmem>>, vector<1x32x256xf32>
    %3 = vector.shape_cast %2 : vector<1x32x256xf32> to vector<32x256xf32>
    %c0_5 = arith.constant 0 : index
    %c0_6 = arith.constant 0 : index
    %4 = vector.load %arg2[%c0_5, %c0_6] : memref<16x32xf32, #tpu.memory_space<vmem>>, vector<16x32xf32>
    %cst_7 = arith.constant dense<0.000000e+00> : vector<16x256xf32>
    %5 = tpu.matmul %4, %3, %cst_7 {dimension_numbers = #tpu.dot_dimension_numbers<[1], [0], [0], [1], [0, 0, 1, 1], [], []>} : vector<16x32xf32>, vector<32x256xf32>, vector<16x256xf32> -> vector<16x256xf32>
    %c0_8 = arith.constant 0 : index
    %c0_9 = arith.constant 0 : index
    %6 = vector.load %arg3[%c0_8, %c0_9] : memref<16x1xf32, #tpu.memory_space<vmem>>, vector<16x1xf32>
    %7 = vector.broadcast %6 : vector<16x1xf32> to vector<16x256xf32>
    %8 = arith.addf %5, %7 : vector<16x256xf32>
    %cst_10 = arith.constant 0.000000e+00 : f32
    %9 = vector.broadcast %cst_10 : f32 to vector<16x256xf32>
    %10 = arith.subf %9, %8 : vector<16x256xf32>
    %11 = math.exp %10 : vector<16x256xf32>
    %cst_11 = arith.constant 1.000000e+00 : f32
    %12 = vector.broadcast %cst_11 : f32 to vector<16x256xf32>
    %13 = arith.addf %12, %11 : vector<16x256xf32>
    %14 = tpu.reciprocal %13 : vector<16x256xf32> -> vector<16x256xf32>
    %15 = arith.mulf %8, %14 : vector<16x256xf32>
    %16 = vector.extract_strided_slice %15 {offsets = [0, 0], sizes = [8, 256], strides = [1, 1]} : vector<16x256xf32> to vector<8x256xf32>
    %17 = vector.extract_strided_slice %15 {offsets = [8, 0], sizes = [8, 256], strides = [1, 1]} : vector<16x256xf32> to vector<8x256xf32>
    %c0_12 = arith.constant 0 : index
    %c0_13 = arith.constant 0 : index
    %18 = vector.load %arg4[%c0_12, %c0_13] : memref<8x72xf32, #tpu.memory_space<vmem>>, vector<8x72xf32>
    %c0_14 = arith.constant 0 : index
    %c0_15 = arith.constant 0 : index
    %19 = vector.load %arg5[%c0_14, %c0_15] : memref<8x1xf32, #tpu.memory_space<vmem>>, vector<8x1xf32>
    %20 = vector.shape_cast %17 : vector<8x256xf32> to vector<8x16x16xf32>
    %c0_16 = arith.constant 0 : index
    %c8 = arith.constant 8 : index
    %c128 = arith.constant 128 : index
    %21 = vector.load %arg11[%c0_16, %c8, %c128] : memref<8x25x145xf32, #tpu.memory_space<vmem>>, vector<8x16x16xf32>
    tpu.vector_store %arg11[%c0_16, %c8, %c128], %20 {strides = array<i32>} : memref<8x25x145xf32, #tpu.memory_space<vmem>>, vector<8x16x16xf32>,
    %c0_17 = arith.constant 0 : index
    %c7 = arith.constant 7 : index
    %c127 = arith.constant 127 : index
    %22 = vector.load %arg11[%c0_17, %c7, %c127] : memref<8x25x145xf32, #tpu.memory_space<vmem>>, vector<8x16x16xf32>
    %c0_18 = arith.constant 0 : index
    %c7_19 = arith.constant 7 : index
    %c128_20 = arith.constant 128 : index
    %23 = vector.load %arg11[%c0_18, %c7_19, %c128_20] : memref<8x25x145xf32, #tpu.memory_space<vmem>>, vector<8x16x16xf32>
    %c0_21 = arith.constant 0 : index
    %c7_22 = arith.constant 7 : index
    %c129 = arith.constant 129 : index
    %24 = vector.load %arg11[%c0_21, %c7_22, %c129] : memref<8x25x145xf32, #tpu.memory_space<vmem>>, vector<8x16x16xf32>
    %c0_23 = arith.constant 0 : index
    %c8_24 = arith.constant 8 : index
    %c127_25 = arith.constant 127 : index
    %25 = vector.load %arg11[%c0_23, %c8_24, %c127_25] : memref<8x25x145xf32, #tpu.memory_space<vmem>>, vector<8x16x16xf32>
    %c0_26 = arith.constant 0 : index
    %c8_27 = arith.constant 8 : index
    %c128_28 = arith.constant 128 : index
    %26 = vector.load %arg11[%c0_26, %c8_27, %c128_28] : memref<8x25x145xf32, #tpu.memory_space<vmem>>, vector<8x16x16xf32>
    %c0_29 = arith.constant 0 : index
    %c8_30 = arith.constant 8 : index
    %c129_31 = arith.constant 129 : index
    %27 = vector.load %arg11[%c0_29, %c8_30, %c129_31] : memref<8x25x145xf32, #tpu.memory_space<vmem>>, vector<8x16x16xf32>
    %c0_32 = arith.constant 0 : index
    %c9 = arith.constant 9 : index
    %c127_33 = arith.constant 127 : index
    %28 = vector.load %arg11[%c0_32, %c9, %c127_33] : memref<8x25x145xf32, #tpu.memory_space<vmem>>, vector<8x16x16xf32>
    %c0_34 = arith.constant 0 : index
    %c9_35 = arith.constant 9 : index
    %c128_36 = arith.constant 128 : index
    %29 = vector.load %arg11[%c0_34, %c9_35, %c128_36] : memref<8x25x145xf32, #tpu.memory_space<vmem>>, vector<8x16x16xf32>
    %c0_37 = arith.constant 0 : index
    %c9_38 = arith.constant 9 : index
    %c129_39 = arith.constant 129 : index
    %30 = vector.load %arg11[%c0_37, %c9_38, %c129_39] : memref<8x25x145xf32, #tpu.memory_space<vmem>>, vector<8x16x16xf32>
    %31 = tpu.concatenate %22, %23, %24, %25, %26, %27, %28, %29, %30 in 0 : vector<8x16x16xf32>, vector<8x16x16xf32>, vector<8x16x16xf32>, vector<8x16x16xf32>, vector<8x16x16xf32>, vector<8x16x16xf32>, vector<8x16x16xf32>, vector<8x16x16xf32>, vector<8x16x16xf32> -> vector<72x16x16xf32>
    %32 = vector.shape_cast %31 : vector<72x16x16xf32> to vector<72x256xf32>
    %cst_40 = arith.constant dense<0.000000e+00> : vector<8x256xf32>
    %33 = tpu.matmul %18, %32, %cst_40 {dimension_numbers = #tpu.dot_dimension_numbers<[1], [0], [0], [1], [0, 0, 1, 1], [], []>} : vector<8x72xf32>, vector<72x256xf32>, vector<8x256xf32> -> vector<8x256xf32>
    %34 = vector.broadcast %19 : vector<8x1xf32> to vector<8x256xf32>
    %35 = arith.addf %33, %34 : vector<8x256xf32>
    %cst_41 = arith.constant 0.000000e+00 : f32
    %36 = vector.broadcast %cst_41 : f32 to vector<8x256xf32>
    %37 = arith.subf %36, %35 : vector<8x256xf32>
    %38 = math.exp %37 : vector<8x256xf32>
    %cst_42 = arith.constant 1.000000e+00 : f32
    %39 = vector.broadcast %cst_42 : f32 to vector<8x256xf32>
    %40 = arith.addf %39, %38 : vector<8x256xf32>
    %41 = tpu.reciprocal %40 : vector<8x256xf32> -> vector<8x256xf32>
    %42 = arith.mulf %35, %41 : vector<8x256xf32>
    %c0_43 = arith.constant 0 : index
    %c0_44 = arith.constant 0 : index
    %43 = vector.load %arg6[%c0_43, %c0_44] : memref<8x72xf32, #tpu.memory_space<vmem>>, vector<8x72xf32>
    %c0_45 = arith.constant 0 : index
    %c0_46 = arith.constant 0 : index
    %44 = vector.load %arg7[%c0_45, %c0_46] : memref<8x1xf32, #tpu.memory_space<vmem>>, vector<8x1xf32>
    %45 = vector.shape_cast %42 : vector<8x256xf32> to vector<8x16x16xf32>
    %c0_47 = arith.constant 0 : index
    %c8_48 = arith.constant 8 : index
    %c128_49 = arith.constant 128 : index
    %46 = vector.load %arg11[%c0_47, %c8_48, %c128_49] : memref<8x25x145xf32, #tpu.memory_space<vmem>>, vector<8x16x16xf32>
    tpu.vector_store %arg11[%c0_47, %c8_48, %c128_49], %45 {strides = array<i32>} : memref<8x25x145xf32, #tpu.memory_space<vmem>>, vector<8x16x16xf32>,
    %c0_50 = arith.constant 0 : index
    %c7_51 = arith.constant 7 : index
    %c127_52 = arith.constant 127 : index
    %47 = vector.load %arg11[%c0_50, %c7_51, %c127_52] : memref<8x25x145xf32, #tpu.memory_space<vmem>>, vector<8x16x16xf32>
    %c0_53 = arith.constant 0 : index
    %c7_54 = arith.constant 7 : index
    %c128_55 = arith.constant 128 : index
    %48 = vector.load %arg11[%c0_53, %c7_54, %c128_55] : memref<8x25x145xf32, #tpu.memory_space<vmem>>, vector<8x16x16xf32>
    %c0_56 = arith.constant 0 : index
    %c7_57 = arith.constant 7 : index
    %c129_58 = arith.constant 129 : index
    %49 = vector.load %arg11[%c0_56, %c7_57, %c129_58] : memref<8x25x145xf32, #tpu.memory_space<vmem>>, vector<8x16x16xf32>
    %c0_59 = arith.constant 0 : index
    %c8_60 = arith.constant 8 : index
    %c127_61 = arith.constant 127 : index
    %50 = vector.load %arg11[%c0_59, %c8_60, %c127_61] : memref<8x25x145xf32, #tpu.memory_space<vmem>>, vector<8x16x16xf32>
    %c0_62 = arith.constant 0 : index
    %c8_63 = arith.constant 8 : index
    %c128_64 = arith.constant 128 : index
    %51 = vector.load %arg11[%c0_62, %c8_63, %c128_64] : memref<8x25x145xf32, #tpu.memory_space<vmem>>, vector<8x16x16xf32>
    %c0_65 = arith.constant 0 : index
    %c8_66 = arith.constant 8 : index
    %c129_67 = arith.constant 129 : index
    %52 = vector.load %arg11[%c0_65, %c8_66, %c129_67] : memref<8x25x145xf32, #tpu.memory_space<vmem>>, vector<8x16x16xf32>
    %c0_68 = arith.constant 0 : index
    %c9_69 = arith.constant 9 : index
    %c127_70 = arith.constant 127 : index
    %53 = vector.load %arg11[%c0_68, %c9_69, %c127_70] : memref<8x25x145xf32, #tpu.memory_space<vmem>>, vector<8x16x16xf32>
    %c0_71 = arith.constant 0 : index
    %c9_72 = arith.constant 9 : index
    %c128_73 = arith.constant 128 : index
    %54 = vector.load %arg11[%c0_71, %c9_72, %c128_73] : memref<8x25x145xf32, #tpu.memory_space<vmem>>, vector<8x16x16xf32>
    %c0_74 = arith.constant 0 : index
    %c9_75 = arith.constant 9 : index
    %c129_76 = arith.constant 129 : index
    %55 = vector.load %arg11[%c0_74, %c9_75, %c129_76] : memref<8x25x145xf32, #tpu.memory_space<vmem>>, vector<8x16x16xf32>
    %56 = tpu.concatenate %47, %48, %49, %50, %51, %52, %53, %54, %55 in 0 : vector<8x16x16xf32>, vector<8x16x16xf32>, vector<8x16x16xf32>, vector<8x16x16xf32>, vector<8x16x16xf32>, vector<8x16x16xf32>, vector<8x16x16xf32>, vector<8x16x16xf32>, vector<8x16x16xf32> -> vector<72x16x16xf32>
    %57 = vector.shape_cast %56 : vector<72x16x16xf32> to vector<72x256xf32>
    %cst_77 = arith.constant dense<0.000000e+00> : vector<8x256xf32>
    %58 = tpu.matmul %43, %57, %cst_77 {dimension_numbers = #tpu.dot_dimension_numbers<[1], [0], [0], [1], [0, 0, 1, 1], [], []>} : vector<8x72xf32>, vector<72x256xf32>, vector<8x256xf32> -> vector<8x256xf32>
    %59 = vector.broadcast %44 : vector<8x1xf32> to vector<8x256xf32>
    %60 = arith.addf %58, %59 : vector<8x256xf32>
    %cst_78 = arith.constant 0.000000e+00 : f32
    %61 = vector.broadcast %cst_78 : f32 to vector<8x256xf32>
    %62 = arith.subf %61, %60 : vector<8x256xf32>
    %63 = math.exp %62 : vector<8x256xf32>
    %cst_79 = arith.constant 1.000000e+00 : f32
    %64 = vector.broadcast %cst_79 : f32 to vector<8x256xf32>
    %65 = arith.addf %64, %63 : vector<8x256xf32>
    %66 = tpu.reciprocal %65 : vector<8x256xf32> -> vector<8x256xf32>
    %67 = arith.mulf %60, %66 : vector<8x256xf32>
    %68 = tpu.concatenate %67, %42, %17, %16 in 0 : vector<8x256xf32>, vector<8x256xf32>, vector<8x256xf32>, vector<8x256xf32> -> vector<32x256xf32>
    %c0_80 = arith.constant 0 : index
    %c0_81 = arith.constant 0 : index
    %69 = vector.load %arg8[%c0_80, %c0_81] : memref<16x32xf32, #tpu.memory_space<vmem>>, vector<16x32xf32>
    %cst_82 = arith.constant dense<0.000000e+00> : vector<16x256xf32>
    %70 = tpu.matmul %69, %68, %cst_82 {dimension_numbers = #tpu.dot_dimension_numbers<[1], [0], [0], [1], [0, 0, 1, 1], [], []>} : vector<16x32xf32>, vector<32x256xf32>, vector<16x256xf32> -> vector<16x256xf32>
    %c0_83 = arith.constant 0 : index
    %c0_84 = arith.constant 0 : index
    %71 = vector.load %arg9[%c0_83, %c0_84] : memref<16x1xf32, #tpu.memory_space<vmem>>, vector<16x1xf32>
    %72 = vector.broadcast %71 : vector<16x1xf32> to vector<16x256xf32>
    %73 = arith.addf %70, %72 : vector<16x256xf32>
    %cst_85 = arith.constant 0.000000e+00 : f32
    %74 = vector.broadcast %cst_85 : f32 to vector<16x256xf32>
    %75 = arith.subf %74, %73 : vector<16x256xf32>
    %76 = math.exp %75 : vector<16x256xf32>
    %cst_86 = arith.constant 1.000000e+00 : f32
    %77 = vector.broadcast %cst_86 : f32 to vector<16x256xf32>
    %78 = arith.addf %77, %76 : vector<16x256xf32>
    %79 = tpu.reciprocal %78 : vector<16x256xf32> -> vector<16x256xf32>
    %80 = arith.mulf %73, %79 : vector<16x256xf32>
    %c0_87 = arith.constant 0 : index
    %c0_88 = arith.constant 0 : index
    %c0_89 = arith.constant 0 : index
    %81 = vector.load %arg10[%c0_87, %c0_88, %c0_89] : memref<1x16x256xf32, #tpu.memory_space<vmem>>, vector<1x16x256xf32>
    %82 = vector.shape_cast %81 : vector<1x16x256xf32> to vector<16x256xf32>
    %83 = vector.shape_cast %80 : vector<16x256xf32> to vector<1x16x256xf32>
    tpu.vector_store %arg10[%c0_87, %c0_88, %c0_89], %83 {strides = array<i32>} : memref<1x16x256xf32, #tpu.memory_space<vmem>>, vector<1x16x256xf32>,
    return
  }
  func.func @transform_0(%arg0: i32) -> (i32, i32, i32) {
    %c0_i32 = arith.constant 0 : i32
    %c0_i32_0 = arith.constant 0 : i32
    %c0_i32_1 = arith.constant 0 : i32
    return %arg0, %c0_i32, %c0_i32_0 : i32, i32, i32
  }
  func.func @transform_1(%arg0: i32) -> (i32, i32) {
    %c0_i32 = arith.constant 0 : i32
    %c0_i32_0 = arith.constant 0 : i32
    %c0_i32_1 = arith.constant 0 : i32
    return %c0_i32, %c0_i32_0 : i32, i32
  }
  func.func @transform_2(%arg0: i32) -> (i32, i32) {
    %c0_i32 = arith.constant 0 : i32
    %c0_i32_0 = arith.constant 0 : i32
    %c0_i32_1 = arith.constant 0 : i32
    return %c0_i32, %c0_i32_0 : i32, i32
  }
  func.func @transform_3(%arg0: i32) -> (i32, i32) {
    %c0_i32 = arith.constant 0 : i32
    %c0_i32_0 = arith.constant 0 : i32
    %c0_i32_1 = arith.constant 0 : i32
    return %c0_i32, %c0_i32_0 : i32, i32
  }
  func.func @transform_4(%arg0: i32) -> (i32, i32) {
    %c0_i32 = arith.constant 0 : i32
    %c0_i32_0 = arith.constant 0 : i32
    %c0_i32_1 = arith.constant 0 : i32
    return %c0_i32, %c0_i32_0 : i32, i32
  }
  func.func @transform_5(%arg0: i32) -> (i32, i32) {
    %c0_i32 = arith.constant 0 : i32
    %c0_i32_0 = arith.constant 0 : i32
    %c0_i32_1 = arith.constant 0 : i32
    return %c0_i32, %c0_i32_0 : i32, i32
  }
  func.func @transform_6(%arg0: i32) -> (i32, i32) {
    %c0_i32 = arith.constant 0 : i32
    %c0_i32_0 = arith.constant 0 : i32
    %c0_i32_1 = arith.constant 0 : i32
    return %c0_i32, %c0_i32_0 : i32, i32
  }
  func.func @transform_7(%arg0: i32) -> (i32, i32) {
    %c0_i32 = arith.constant 0 : i32
    %c0_i32_0 = arith.constant 0 : i32
    %c0_i32_1 = arith.constant 0 : i32
    return %c0_i32, %c0_i32_0 : i32, i32
  }
  func.func @transform_8(%arg0: i32) -> (i32, i32) {
    %c0_i32 = arith.constant 0 : i32
    %c0_i32_0 = arith.constant 0 : i32
    %c0_i32_1 = arith.constant 0 : i32
    return %c0_i32, %c0_i32_0 : i32, i32
  }
  func.func @transform_9(%arg0: i32) -> (i32, i32, i32) {
    %c0_i32 = arith.constant 0 : i32
    %c0_i32_0 = arith.constant 0 : i32
    %c0_i32_1 = arith.constant 0 : i32
    return %arg0, %c0_i32, %c0_i32_0 : i32, i32, i32
  }
}

</mosaic_0001>

<llo_original>
// kernel: tpu_custom_call.1
$region0: #{tpu_custom_call.1}
  #allocation0 [shape = 'u32[]', space=smem, size = 0x4, offset = 0x4, fixed_abs, tag = 'smem constant byte address 0x4 - core index']
  #allocation1 [shape = 'u32[72,128]{1,0:T(1,128)}', space=vmem, size = 0x9000, scoped, tag = 'internal scratch']
  #allocation2 [shape = 'f32[8,25,145]{2,1,0:T(8,128)}', space=vmem, size = 0x40000, scoped, tag = 'scratch operand']
  %s0 = inlined_call_operand.hbm [shape: f32[2,32,256], index: 0, kind: input, shape index: {}]
  %s1 = inlined_call_operand.vmem [shape: f32[16,32], index: 1, kind: input, shape index: {}]
  %s2 = inlined_call_operand.vmem [shape: f32[16,1], index: 2, kind: input, shape index: {}]
  %s3 = inlined_call_operand.vmem [shape: f32[8,72], index: 3, kind: input, shape index: {}]
  %s4 = inlined_call_operand.vmem [shape: f32[8,1], index: 4, kind: input, shape index: {}]
  %s5 = inlined_call_operand.vmem [shape: f32[8,72], index: 5, kind: input, shape index: {}]
  %s6 = inlined_call_operand.vmem [shape: f32[8,1], index: 6, kind: input, shape index: {}]
  %s7 = inlined_call_operand.vmem [shape: f32[16,32], index: 7, kind: input, shape index: {}]
  %s8 = inlined_call_operand.vmem [shape: f32[16,1], index: 8, kind: input, shape index: {}]
  %s9 = inlined_call_operand.hbm [shape: f32[2,16,256], index: 9, kind: output, shape index: {}]
  %s10 = sld [smem:[#allocation0]]
  $region73: #{tpu_custom_call.1} parent=0
    _
  %s12 = ssub.s32 1, %s10
  %s13 = scalar_select 0, %s12, %s10
  $region1: #{tpu_custom_call.1} parent=0
    #allocation3 [shape = 'u8[65536]{0}', space=vmem, size = 0x10000, scoped, tag = 'input window, operand 0']
    #allocation4 [shape = 's32[2]{0}', space=sflag, size = 0x8, scoped, tag = 'scoped memory for tpu_custom_call.1']
    #allocation5 [shape = 's32[2]{0}', space=sflag, size = 0x8, scoped, tag = 'scoped memory for tpu_custom_call.1']
    #allocation6 [shape = 'u8[32768]{0}', space=vmem, size = 0x8000, scoped, tag = 'output window, operand 0']
    %14 = vsyncpa [#allocation4], 0
    %s15 = scalar_lea.sflag [#allocation4], 1
    %16 = vsyncpa %s15, 0
    %17 = vsyncpa [#allocation5], 0
    %s18 = scalar_lea.sflag [#allocation5], 1
    %19 = vsyncpa %s18, 0
    loop: start=0, step=1, limit=4
    $region2: #{tpu_custom_call.1} parent=1 // loop_pre_header
      _
    $region3: #{tpu_custom_call.1} parent=1 // loop_header
      %s21 = sphi 0, %s25
      %p22 = scmp.ge.s32.totalorder %s21, 4
      %s31 = sphi 0, %s33
      %s34 = sphi 0, %s31
      %s35 = sphi 0, %s34
      %s51 = sphi 0, %s35
      %s55 = sphi 0, %s55
      %s57 = sphi 0, %s55
      %s58 = sphi 0, %s57
      %s72 = sphi 0, %s58
      %s76 = sphi 0, %s76
      %s78 = sphi 0, %s76
      %s79 = sphi 0, %s78
      %s93 = sphi 0, %s79
      %s97 = sphi 0, %s97
      %s99 = sphi 0, %s97
      %s100 = sphi 0, %s99
      %s114 = sphi 0, %s100
      %s118 = sphi 0, %s118
      %s120 = sphi 0, %s118
      %s121 = sphi 0, %s120
      %s135 = sphi 0, %s121
      %s139 = sphi 0, %s139
      %s141 = sphi 0, %s139
      %s142 = sphi 0, %s141
      %s156 = sphi 0, %s142
      %s160 = sphi 0, %s160
      %s162 = sphi 0, %s160
      %s163 = sphi 0, %s162
      %s177 = sphi 0, %s163
      %s181 = sphi 0, %s181
      %s183 = sphi 0, %s181
      %s184 = sphi 0, %s183
      %s198 = sphi 0, %s184
      %s202 = sphi 0, %s202
      %s204 = sphi 0, %s202
      %s205 = sphi 0, %s204
      %s219 = sphi 0, %s205
      %s225 = sphi 0, %s227
      %s228 = sphi 0, %s225
      %s229 = sphi 0, %s228
      %s245 = sphi 0, %s229
    $region4: #{tpu_custom_call.1} parent=1 // loop_header_branch
      %24 = sbr.rel (%p22) target = $region8
    $region5: #{tpu_custom_call.1} parent=1 // loop_body
      %s26 = ssub.s32 %s21, 1
      %s27 = ssub.s32 %s21, 2
      %s28 = sadd.s32 %s21, 1
      %s29 = ssub.s32 %s21, %s28
      %p30 = scmp.eq.s32.totalorder %s29, 0
      %s32 = sadd.s32 %s31, 1
      %s33 = scalar_select %p30, %s31, %s32
      %p36 = pneg %p30
      %p37 = scmp.eq.s32.totalorder %s21, 1
      %p38 = por %p36, %p37
      %p39 = scmp.ne.s32.totalorder %s31, %s34
      %p40 = scmp.eq.s32.totalorder %s21, 0
      %p41 = por %p39, %p40
      %p42 = scmp.ne.s32.totalorder %s31, %s34
      %p43 = scmp.eq.s32.totalorder %s26, 1
      %p44 = por %p42, %p43
      %p45 = scmp.ne.s32.totalorder %s34, %s35
      %p46 = scmp.eq.s32.totalorder %s26, 0
      %p47 = por %p45, %p46
      %p48 = scmp.ne.s32.totalorder %s34, %s35
      %p49 = scmp.eq.s32.totalorder %s27, 1
      %p50 = por %p48, %p49
      %p52 = scmp.ne.s32.totalorder %s35, %s51
      %p53 = scmp.eq.s32.totalorder %s27, 0
      %p54 = por %p52, %p53
      %s56 = sadd.s32 %s55, 1
      %p59 = scmp.eq.s32.totalorder %s21, 1
      %p60 = scmp.ne.s32.totalorder %s55, %s57
      %p61 = scmp.eq.s32.totalorder %s21, 0
      %p62 = por %p60, %p61
      %p63 = scmp.ne.s32.totalorder %s55, %s57
      %p64 = scmp.eq.s32.totalorder %s26, 1
      %p65 = por %p63, %p64
      %p66 = scmp.ne.s32.totalorder %s57, %s58
      %p67 = scmp.eq.s32.totalorder %s26, 0
      %p68 = por %p66, %p67
      %p69 = scmp.ne.s32.totalorder %s57, %s58
      %p70 = scmp.eq.s32.totalorder %s27, 1
      %p71 = por %p69, %p70
      %p73 = scmp.ne.s32.totalorder %s58, %s72
      %p74 = scmp.eq.s32.totalorder %s27, 0
      %p75 = por %p73, %p74
      %s77 = sadd.s32 %s76, 1
      %p80 = scmp.eq.s32.totalorder %s21, 1
      %p81 = scmp.ne.s32.totalorder %s76, %s78
      %p82 = scmp.eq.s32.totalorder %s21, 0
      %p83 = por %p81, %p82
      %p84 = scmp.ne.s32.totalorder %s76, %s78
      %p85 = scmp.eq.s32.totalorder %s26, 1
      %p86 = por %p84, %p85
      %p87 = scmp.ne.s32.totalorder %s78, %s79
      %p88 = scmp.eq.s32.totalorder %s26, 0
      %p89 = por %p87, %p88
      %p90 = scmp.ne.s32.totalorder %s78, %s79
      %p91 = scmp.eq.s32.totalorder %s27, 1
      %p92 = por %p90, %p91
      %p94 = scmp.ne.s32.totalorder %s79, %s93
      %p95 = scmp.eq.s32.totalorder %s27, 0
      %p96 = por %p94, %p95
      %s98 = sadd.s32 %s97, 1
      %p101 = scmp.eq.s32.totalorder %s21, 1
      %p102 = scmp.ne.s32.totalorder %s97, %s99
      %p103 = scmp.eq.s32.totalorder %s21, 0
      %p104 = por %p102, %p103
      %p105 = scmp.ne.s32.totalorder %s97, %s99
      %p106 = scmp.eq.s32.totalorder %s26, 1
      %p107 = por %p105, %p106
      %p108 = scmp.ne.s32.totalorder %s99, %s100
      %p109 = scmp.eq.s32.totalorder %s26, 0
      %p110 = por %p108, %p109
      %p111 = scmp.ne.s32.totalorder %s99, %s100
      %p112 = scmp.eq.s32.totalorder %s27, 1
      %p113 = por %p111, %p112
      %p115 = scmp.ne.s32.totalorder %s100, %s114
      %p116 = scmp.eq.s32.totalorder %s27, 0
      %p117 = por %p115, %p116
      %s119 = sadd.s32 %s118, 1
      %p122 = scmp.eq.s32.totalorder %s21, 1
      %p123 = scmp.ne.s32.totalorder %s118, %s120
      %p124 = scmp.eq.s32.totalorder %s21, 0
      %p125 = por %p123, %p124
      %p126 = scmp.ne.s32.totalorder %s118, %s120
      %p127 = scmp.eq.s32.totalorder %s26, 1
      %p128 = por %p126, %p127
      %p129 = scmp.ne.s32.totalorder %s120, %s121
      %p130 = scmp.eq.s32.totalorder %s26, 0
      %p131 = por %p129, %p130
      %p132 = scmp.ne.s32.totalorder %s120, %s121
      %p133 = scmp.eq.s32.totalorder %s27, 1
      %p134 = por %p132, %p133
      %p136 = scmp.ne.s32.totalorder %s121, %s135
      %p137 = scmp.eq.s32.totalorder %s27, 0
      %p138 = por %p136, %p137
      %s140 = sadd.s32 %s139, 1
      %p143 = scmp.eq.s32.totalorder %s21, 1
      %p144 = scmp.ne.s32.totalorder %s139, %s141
      %p145 = scmp.eq.s32.totalorder %s21, 0
      %p146 = por %p144, %p145
      %p147 = scmp.ne.s32.totalorder %s139, %s141
      %p148 = scmp.eq.s32.totalorder %s26, 1
      %p149 = por %p147, %p148
      %p150 = scmp.ne.s32.totalorder %s141, %s142
      %p151 = scmp.eq.s32.totalorder %s26, 0
      %p152 = por %p150, %p151
      %p153 = scmp.ne.s32.totalorder %s141, %s142
      %p154 = scmp.eq.s32.totalorder %s27, 1
      %p155 = por %p153, %p154
      %p157 = scmp.ne.s32.totalorder %s142, %s156
      %p158 = scmp.eq.s32.totalorder %s27, 0
      %p159 = por %p157, %p158
      %s161 = sadd.s32 %s160, 1
      %p164 = scmp.eq.s32.totalorder %s21, 1
      %p165 = scmp.ne.s32.totalorder %s160, %s162
      %p166 = scmp.eq.s32.totalorder %s21, 0
      %p167 = por %p165, %p166
      %p168 = scmp.ne.s32.totalorder %s160, %s162
      %p169 = scmp.eq.s32.totalorder %s26, 1
      %p170 = por %p168, %p169
      %p171 = scmp.ne.s32.totalorder %s162, %s163
      %p172 = scmp.eq.s32.totalorder %s26, 0
      %p173 = por %p171, %p172
      %p174 = scmp.ne.s32.totalorder %s162, %s163
      %p175 = scmp.eq.s32.totalorder %s27, 1
      %p176 = por %p174, %p175
      %p178 = scmp.ne.s32.totalorder %s163, %s177
      %p179 = scmp.eq.s32.totalorder %s27, 0
      %p180 = por %p178, %p179
      %s182 = sadd.s32 %s181, 1
      %p185 = scmp.eq.s32.totalorder %s21, 1
      %p186 = scmp.ne.s32.totalorder %s181, %s183
      %p187 = scmp.eq.s32.totalorder %s21, 0
      %p188 = por %p186, %p187
      %p189 = scmp.ne.s32.totalorder %s181, %s183
      %p190 = scmp.eq.s32.totalorder %s26, 1
      %p191 = por %p189, %p190
      %p192 = scmp.ne.s32.totalorder %s183, %s184
      %p193 = scmp.eq.s32.totalorder %s26, 0
      %p194 = por %p192, %p193
      %p195 = scmp.ne.s32.totalorder %s183, %s184
      %p196 = scmp.eq.s32.totalorder %s27, 1
      %p197 = por %p195, %p196
      %p199 = scmp.ne.s32.totalorder %s184, %s198
      %p200 = scmp.eq.s32.totalorder %s27, 0
      %p201 = por %p199, %p200
      %s203 = sadd.s32 %s202, 1
      %p206 = scmp.eq.s32.totalorder %s21, 1
      %p207 = scmp.ne.s32.totalorder %s202, %s204
      %p208 = scmp.eq.s32.totalorder %s21, 0
      %p209 = por %p207, %p208
      %p210 = scmp.ne.s32.totalorder %s202, %s204
      %p211 = scmp.eq.s32.totalorder %s26, 1
      %p212 = por %p210, %p211
      %p213 = scmp.ne.s32.totalorder %s204, %s205
      %p214 = scmp.eq.s32.totalorder %s26, 0
      %p215 = por %p213, %p214
      %p216 = scmp.ne.s32.totalorder %s204, %s205
      %p217 = scmp.eq.s32.totalorder %s27, 1
      %p218 = por %p216, %p217
      %p220 = scmp.ne.s32.totalorder %s205, %s219
      %p221 = scmp.eq.s32.totalorder %s27, 0
      %p222 = por %p220, %p221
      %s223 = ssub.s32 %s21, %s28
      %p224 = scmp.eq.s32.totalorder %s223, 0
      %s226 = sadd.s32 %s225, 1
      %s227 = scalar_select %p224, %s225, %s226
      %p230 = pneg %p224
      %p231 = scmp.eq.s32.totalorder %s21, 1
      %p232 = por %p230, %p231
      %p233 = scmp.ne.s32.totalorder %s225, %s228
      %p234 = scmp.eq.s32.totalorder %s21, 0
      %p235 = por %p233, %p234
      %p236 = scmp.ne.s32.totalorder %s225, %s228
      %p237 = scmp.eq.s32.totalorder %s26, 1
      %p238 = por %p236, %p237
      %p239 = scmp.ne.s32.totalorder %s228, %s229
      %p240 = scmp.eq.s32.totalorder %s26, 0
      %p241 = por %p239, %p240
      %p242 = scmp.ne.s32.totalorder %s228, %s229
      %p243 = scmp.eq.s32.totalorder %s27, 1
      %p244 = por %p242, %p243
      %p246 = scmp.ne.s32.totalorder %s229, %s245
      %p247 = scmp.eq.s32.totalorder %s27, 0
      %p248 = por %p246, %p247
      %p249 = scmp.le.s32.totalorder 1, %s21
      %p250 = scmp.lt.s32.totalorder %s21, 3
      %p251 = pnand %p249, %p250
      %p252 = pneg %p251
      // Predicated region
      $region9: #{tpu_custom_call.1} parent=5 // pred_check
        _
      $region10: #{tpu_custom_call.1} parent=5 // pred_check_branch
        %254 = sbr.rel (%p251) target = $region12
      $region11: #{tpu_custom_call.1} parent=5 // pred_region
        %s255 = ssub.s32 %s21, 1
        // Predicated region
        $region13: #{tpu_custom_call.1} parent=11 // pred_check
          %p256 = pneg %p68
        $region14: #{tpu_custom_call.1} parent=11 // pred_check_branch
          %258 = sbr.rel (%p256) target = $region16
        $region15: #{tpu_custom_call.1} parent=11 // pred_region
          _
        $region16: #{tpu_custom_call.1} parent=11 // pred_fallthru
          _
        // Predicated region
        $region17: #{tpu_custom_call.1} parent=11 // pred_check
          %p259 = pneg %p89
        $region18: #{tpu_custom_call.1} parent=11 // pred_check_branch
          %261 = sbr.rel (%p259) target = $region20
        $region19: #{tpu_custom_call.1} parent=11 // pred_region
          _
        $region20: #{tpu_custom_call.1} parent=11 // pred_fallthru
          _
        // Predicated region
        $region21: #{tpu_custom_call.1} parent=11 // pred_check
          %p262 = pneg %p110
        $region22: #{tpu_custom_call.1} parent=11 // pred_check_branch
          %264 = sbr.rel (%p262) target = $region24
        $region23: #{tpu_custom_call.1} parent=11 // pred_region
          _
        $region24: #{tpu_custom_call.1} parent=11 // pred_fallthru
          _
        // Predicated region
        $region25: #{tpu_custom_call.1} parent=11 // pred_check
          %p265 = pneg %p131
        $region26: #{tpu_custom_call.1} parent=11 // pred_check_branch
          %267 = sbr.rel (%p265) target = $region28
        $region27: #{tpu_custom_call.1} parent=11 // pred_region
          _
        $region28: #{tpu_custom_call.1} parent=11 // pred_fallthru
          _
        // Predicated region
        $region29: #{tpu_custom_call.1} parent=11 // pred_check
          %p268 = pneg %p152
        $region30: #{tpu_custom_call.1} parent=11 // pred_check_branch
          %270 = sbr.rel (%p268) target = $region32
        $region31: #{tpu_custom_call.1} parent=11 // pred_region
          _
        $region32: #{tpu_custom_call.1} parent=11 // pred_fallthru
          _
        // Predicated region
        $region33: #{tpu_custom_call.1} parent=11 // pred_check
          %p271 = pneg %p173
        $region34: #{tpu_custom_call.1} parent=11 // pred_check_branch
          %273 = sbr.rel (%p271) target = $region36
        $region35: #{tpu_custom_call.1} parent=11 // pred_region
          _
        $region36: #{tpu_custom_call.1} parent=11 // pred_fallthru
          _
        // Predicated region
        $region37: #{tpu_custom_call.1} parent=11 // pred_check
          %p274 = pneg %p194
        $region38: #{tpu_custom_call.1} parent=11 // pred_check_branch
          %276 = sbr.rel (%p274) target = $region40
        $region39: #{tpu_custom_call.1} parent=11 // pred_region
          _
        $region40: #{tpu_custom_call.1} parent=11 // pred_fallthru
          _
        // Predicated region
        $region41: #{tpu_custom_call.1} parent=11 // pred_check
          %p277 = pneg %p215
        $region42: #{tpu_custom_call.1} parent=11 // pred_check_branch
          %279 = sbr.rel (%p277) target = $region44
        $region43: #{tpu_custom_call.1} parent=11 // pred_region
          _
        $region44: #{tpu_custom_call.1} parent=11 // pred_fallthru
          _
      $region12: #{tpu_custom_call.1} parent=5 // pred_fallthru
        _
      %p280 = scmp.lt.s32.totalorder %s21, 2
      // Predicated region
      $region45: #{tpu_custom_call.1} parent=5 // pred_check
        %p281 = pneg %p280
      $region46: #{tpu_custom_call.1} parent=5 // pred_check_branch
        %283 = sbr.rel (%p281) target = $region48
      $region47: #{tpu_custom_call.1} parent=5 // pred_region
        // Predicated region
        $region49: #{tpu_custom_call.1} parent=47 // pred_check
          %p284 = pneg %p41
        $region50: #{tpu_custom_call.1} parent=47 // pred_check_branch
          %286 = sbr.rel (%p284) target = $region52
        $region51: #{tpu_custom_call.1} parent=47 // pred_region
          %s287 = sand.u32 %s31, 1
          %s288 = scalar_lea.sflag [#allocation4], %s287
          %s289 = sand.u32 %s31, 1
          %s290 = smul.addr %s289, 64
          %s291 = scalar_lea.vmem [#allocation3], %s290
          %293 = vsyncadd %s288, 0
          %s294 = smul.addr %s21, 8
          %s295 = smul.addr %s294, 8
          %s296 = scalar_lea.hbm %s0, %s295
          %s297 = sshll.u32 %s296, 4
          %s298 = int_to_ptr.hbm [resolvable:$true] %s297
          %s299 = sshll.u32 %s291, 4
          %s300 = int_to_ptr.vmem [resolvable:$true] %s299
          %305 = dma.hbm_to_vmem [thread:$0]  %s298, 1024, %s300, %s288, 256, 256, 16
        $region52: #{tpu_custom_call.1} parent=47 // pred_fallthru
          _
      $region48: #{tpu_custom_call.1} parent=5 // pred_fallthru
        _
      %p306 = scmp.le.s32.totalorder 1, %s21
      %p307 = scmp.lt.s32.totalorder %s21, 3
      %p308 = pnand %p306, %p307
      %p309 = pneg %p308
      // Predicated region
      $region53: #{tpu_custom_call.1} parent=5 // pred_check
        _
      $region54: #{tpu_custom_call.1} parent=5 // pred_check_branch
        %311 = sbr.rel (%p308) target = $region56
      $region55: #{tpu_custom_call.1} parent=5 // pred_region
        %s312 = ssub.s32 %s21, 1
        %s313 = sand.u32 %s34, 1
        %s314 = scalar_lea.sflag [#allocation4], %s313
        %s315 = sand.u32 %s34, 1
        %s316 = smul.addr %s315, 64
        %s317 = scalar_lea.vmem [#allocation3], %s316
        // Predicated region
        $region57: #{tpu_custom_call.1} parent=55 // pred_check
          %p318 = pneg %p47
        $region58: #{tpu_custom_call.1} parent=55 // pred_check_branch
          %320 = sbr.rel (%p318) target = $region60
        $region59: #{tpu_custom_call.1} parent=55 // pred_region
          %322 = dma.done %s314, 1024
        $region60: #{tpu_custom_call.1} parent=55 // pred_fallthru
          _
        %s323 = sand.u32 %s34, 1
        %s324 = scalar_lea.sflag [#allocation4], %s323
        %s325 = sand.u32 %s34, 1
        %s326 = smul.addr %s325, 64
        %s327 = scalar_lea.vmem [#allocation3], %s326
        %p328 = pneg %p47
        %p329 = pneg %p44
        %p330 = pneg %p68
        %p331 = pneg %p65
        %p332 = pneg %p89
        %p333 = pneg %p86
        %p334 = pneg %p110
        %p335 = pneg %p107
        %p336 = pneg %p131
        %p337 = pneg %p128
        %p338 = pneg %p152
        %p339 = pneg %p149
        %p340 = pneg %p173
        %p341 = pneg %p170
        %p342 = pneg %p194
        %p343 = pneg %p191
        %p344 = pneg %p215
        %p345 = pneg %p212
        %p346 = pneg %p241
        %p347 = pneg %p238
        %s348 = sand.u32 %s228, 1
        %s349 = scalar_lea.sflag [#allocation5], %s348
        %s350 = sand.u32 %s228, 1
        %s351 = smul.addr %s350, 32
        %s352 = scalar_lea.vmem [#allocation6], %s351
        %353 = vst [vmem:[#allocation2] sm:$0xff] 0.0
        %vm354 = vcmask 138240
        %355 = vst.msk [vmem:[#allocation2 + $0x8] sm:$0xff] %vm354, 0.0
        %356 = vst [vmem:[#allocation2 + $0x10] sm:$0xff] 0.0
        %357 = vst.msk [vmem:[#allocation2 + $0x18] sm:$0xff] %vm354, 0.0
        %358 = vst [vmem:[#allocation2 + $0x20] sm:$0xff] 0.0
        %359 = vst.msk [vmem:[#allocation2 + $0x28] sm:$0xff] %vm354, 0.0
        %360 = vst [vmem:[#allocation2 + $0x30] sm:$0x1] 0.0
        %vm361 = vcmask 131072
        %362 = vst.msk [vmem:[#allocation2 + $0x38] sm:$0x1] %vm361, 0.0
        %363 = vst [vmem:[#allocation2 + $0x40] sm:$0xff] 0.0
        %364 = vst.msk [vmem:[#allocation2 + $0x48] sm:$0xff] %vm354, 0.0
        %365 = vst [vmem:[#allocation2 + $0x50] sm:$0xff] 0.0
        %366 = vst.msk [vmem:[#allocation2 + $0x58] sm:$0xff] %vm354, 0.0
        %367 = vst [vmem:[#allocation2 + $0x60] sm:$0xff] 0.0
        %368 = vst.msk [vmem:[#allocation2 + $0x68] sm:$0xff] %vm354, 0.0
        %369 = vst [vmem:[#allocation2 + $0x70] sm:$0x1] 0.0
        %370 = vst.msk [vmem:[#allocation2 + $0x78] sm:$0x1] %vm361, 0.0
        %371 = vst [vmem:[#allocation2 + $0x80] sm:$0xff] 0.0
        %372 = vst.msk [vmem:[#allocation2 + $0x88] sm:$0xff] %vm354, 0.0
        %373 = vst [vmem:[#allocation2 + $0x90] sm:$0xff] 0.0
        %374 = vst.msk [vmem:[#allocation2 + $0x98] sm:$0xff] %vm354, 0.0
        %375 = vst [vmem:[#allocation2 + $0xa0] sm:$0xff] 0.0
        %376 = vst.msk [vmem:[#allocation2 + $0xa8] sm:$0xff] %vm354, 0.0
        %377 = vst [vmem:[#allocation2 + $0xb0] sm:$0x1] 0.0
        %378 = vst.msk [vmem:[#allocation2 + $0xb8] sm:$0x1] %vm361, 0.0
        %379 = vst [vmem:[#allocation2 + $0xc0] sm:$0xff] 0.0
        %380 = vst.msk [vmem:[#allocation2 + $0xc8] sm:$0xff] %vm354, 0.0
        %381 = vst [vmem:[#allocation2 + $0xd0] sm:$0xff] 0.0
        %382 = vst.msk [vmem:[#allocation2 + $0xd8] sm:$0xff] %vm354, 0.0
        %383 = vst [vmem:[#allocation2 + $0xe0] sm:$0xff] 0.0
        %384 = vst.msk [vmem:[#allocation2 + $0xe8] sm:$0xff] %vm354, 0.0
        %385 = vst [vmem:[#allocation2 + $0xf0] sm:$0x1] 0.0
        %386 = vst.msk [vmem:[#allocation2 + $0xf8] sm:$0x1] %vm361, 0.0
        %387 = vst [vmem:[#allocation2 + $0x100] sm:$0xff] 0.0
        %388 = vst.msk [vmem:[#allocation2 + $0x108] sm:$0xff] %vm354, 0.0
        %389 = vst [vmem:[#allocation2 + $0x110] sm:$0xff] 0.0
        %390 = vst.msk [vmem:[#allocation2 + $0x118] sm:$0xff] %vm354, 0.0
        %391 = vst [vmem:[#allocation2 + $0x120] sm:$0xff] 0.0
        %392 = vst.msk [vmem:[#allocation2 + $0x128] sm:$0xff] %vm354, 0.0
        %393 = vst [vmem:[#allocation2 + $0x130] sm:$0x1] 0.0
        %394 = vst.msk [vmem:[#allocation2 + $0x138] sm:$0x1] %vm361, 0.0
        %395 = vst [vmem:[#allocation2 + $0x140] sm:$0xff] 0.0
        %396 = vst.msk [vmem:[#allocation2 + $0x148] sm:$0xff] %vm354, 0.0
        %397 = vst [vmem:[#allocation2 + $0x150] sm:$0xff] 0.0
        %398 = vst.msk [vmem:[#allocation2 + $0x158] sm:$0xff] %vm354, 0.0
        %399 = vst [vmem:[#allocation2 + $0x160] sm:$0xff] 0.0
        %400 = vst.msk [vmem:[#allocation2 + $0x168] sm:$0xff] %vm354, 0.0
        %401 = vst [vmem:[#allocation2 + $0x170] sm:$0x1] 0.0
        %402 = vst.msk [vmem:[#allocation2 + $0x178] sm:$0x1] %vm361, 0.0
        %403 = vst [vmem:[#allocation2 + $0x180] sm:$0xff] 0.0
        %404 = vst.msk [vmem:[#allocation2 + $0x188] sm:$0xff] %vm354, 0.0
        %405 = vst [vmem:[#allocation2 + $0x190] sm:$0xff] 0.0
        %406 = vst.msk [vmem:[#allocation2 + $0x198] sm:$0xff] %vm354, 0.0
        %407 = vst [vmem:[#allocation2 + $0x1a0] sm:$0xff] 0.0
        %408 = vst.msk [vmem:[#allocation2 + $0x1a8] sm:$0xff] %vm354, 0.0
        %409 = vst [vmem:[#allocation2 + $0x1b0] sm:$0x1] 0.0
        %410 = vst.msk [vmem:[#allocation2 + $0x1b8] sm:$0x1] %vm361, 0.0
        %411 = vst [vmem:[#allocation2 + $0x1c0] sm:$0xff] 0.0
        %412 = vst.msk [vmem:[#allocation2 + $0x1c8] sm:$0xff] %vm354, 0.0
        %413 = vst [vmem:[#allocation2 + $0x1d0] sm:$0xff] 0.0
        %414 = vst.msk [vmem:[#allocation2 + $0x1d8] sm:$0xff] %vm354, 0.0
        %415 = vst [vmem:[#allocation2 + $0x1e0] sm:$0xff] 0.0
        %416 = vst.msk [vmem:[#allocation2 + $0x1e8] sm:$0xff] %vm354, 0.0
        %417 = vst [vmem:[#allocation2 + $0x1f0] sm:$0x1] 0.0
        %418 = vst.msk [vmem:[#allocation2 + $0x1f8] sm:$0x1] %vm361, 0.0
        %v419 = vld [vmem:[%s317] sm:$0xff]
        %v420 = vld [vmem:[%s317 + $0x8] sm:$0xff]
        %v421 = vld [vmem:[%s317 + $0x10] sm:$0xff]
        %v422 = vld [vmem:[%s317 + $0x18] sm:$0xff]
        %v423 = vld [vmem:[%s317 + $0x20] sm:$0xff]
        %v424 = vld [vmem:[%s317 + $0x28] sm:$0xff]
        %v425 = vld [vmem:[%s317 + $0x30] sm:$0xff]
        %v426 = vld [vmem:[%s317 + $0x38] sm:$0xff]
        %v427 = vld [vmem:[%s1] sm:$0xff]
        %v428 = vld [vmem:[%s1 + $0x8] sm:$0xff]
        %v429 = vld [vmem:[%s2] sm:$0xff]
        %v430 = vld [vmem:[%s2 + $0x8] sm:$0xff]
        %432 = vset.pattern.permute.xlu0 0
        %433 = vperm.xlu0 %432, %v429
        %v434 = vpop.permute.xlu0 %433
        %437 = vset.pattern.permute.xlu0 0
        %438 = vperm.xlu0 %437, %v430
        %v439 = vpop.permute.xlu0 %438
        %vm441 = vcmask 261120
        %v443 = vsel %vm441, %v427, 0
        %v446 = vsel %vm441, %v428, 0
        %448 = vmatpush.msra.mxu0 0.0
        %449 = vmatpush.msra.mxu0 0.0
        %450 = vmatpush.msra.mxu0 0.0
        %451 = vmatpush.msra.mxu0 0.0
        %452 = vmatpush.msra.mxu0 0.0
        %453 = vmatpush.msra.mxu0 0.0
        %454 = vmatpush.msra.mxu0 0.0
        %455 = vmatpush.msra.mxu0 0.0
        %456 = vmatpush.msra.mxu0 0.0
        %457 = vmatpush.msra.mxu0 0.0
        %458 = vmatpush.msra.mxu0 0.0
        %459 = vmatpush.msra.mxu0 0.0
        %460 = vmatpush.msra.mxu0 %v425
        %461 = vmatpush.msra.mxu0 %v423
        %462 = vmatpush.msra.mxu0 %v421
        %463 = vmatpush.msra.mxu0 %v419
        %464 = vmatmul.f32.gmra.mxu0 %v443
        %v465 = vpop.f32.mrf.mxu0
        %v466 = vadd.f32 %v434, %v465
        %467 = vmatmul.f32.gmra.mxu0 %v446
        %v468 = vpop.f32.mrf.mxu0
        %v469 = vadd.f32 %v439, %v468
        %470 = vdwg.mxu0
        %471 = vmatpush.msra.mxu0 0.0
        %472 = vmatpush.msra.mxu0 0.0
        %473 = vmatpush.msra.mxu0 0.0
        %474 = vmatpush.msra.mxu0 0.0
        %475 = vmatpush.msra.mxu0 0.0
        %476 = vmatpush.msra.mxu0 0.0
        %477 = vmatpush.msra.mxu0 0.0
        %478 = vmatpush.msra.mxu0 0.0
        %479 = vmatpush.msra.mxu0 0.0
        %480 = vmatpush.msra.mxu0 0.0
        %481 = vmatpush.msra.mxu0 0.0
        %482 = vmatpush.msra.mxu0 0.0
        %483 = vmatpush.msra.mxu0 %v426
        %484 = vmatpush.msra.mxu0 %v424
        %485 = vmatpush.msra.mxu0 %v422
        %486 = vmatpush.msra.mxu0 %v420
        %487 = vmatmul.f32.gmra.mxu0 %v443
        %v488 = vpop.f32.mrf.mxu0
        %v489 = vadd.f32 %v434, %v488
        %490 = vmatmul.f32.gmra.mxu0 %v446
        %v491 = vpop.f32.mrf.mxu0
        %v492 = vadd.f32 %v439, %v491
        %493 = vdwg.mxu0
        %v494 = vsub.f32 0.0, %v466
        %v495 = vsub.f32 0.0, %v489
        %v496 = vsub.f32 0.0, %v469
        %v497 = vsub.f32 0.0, %v492
        %v498 = vmul.f32 %v494, 1.442695
        %v499 = vpow.pop %v498
        %v500 = vmul.f32 %v495, 1.442695
        %v501 = vpow.pop %v500
        %v502 = vmul.f32 %v496, 1.442695
        %v503 = vpow.pop %v502
        %v504 = vmul.f32 %v497, 1.442695
        %v505 = vpow.pop %v504
        %v506 = vadd.f32 %v499, 1.0
        %v507 = vadd.f32 %v501, 1.0
        %v508 = vadd.f32 %v503, 1.0
        %v509 = vadd.f32 %v505, 1.0
        %v510 = vrcp.pop %v506
        %v511 = vmul.f32 %v506, %v510
        %v512 = vsub.f32 1.0, %v511
        %v513 = vmul.f32 %v510, %v512
        %v514 = vadd.f32 %v510, %v513
        %vm515 = vweird.f32 %v506
        %vm516 = vweird.f32 %v510
        %vm517 = vmor %vm515, %vm516
        %v518 = vsel %vm517, %v510, %v514
        %v519 = vand.u32 2147483647, %v506
        %vm520 = vcmp.eq.f32.partialorder %v519, 8.507059e+37
        %v521 = vand.u32 %v506, 2147483648
        %v522 = vor.u32 1.1754944e-38, %v521
        %v523 = vsel %vm520, %v522, %v518
        %v524 = vrcp.pop %v507
        %v525 = vmul.f32 %v507, %v524
        %v526 = vsub.f32 1.0, %v525
        %v527 = vmul.f32 %v524, %v526
        %v528 = vadd.f32 %v524, %v527
        %vm529 = vweird.f32 %v507
        %vm530 = vweird.f32 %v524
        %vm531 = vmor %vm529, %vm530
        %v532 = vsel %vm531, %v524, %v528
        %v533 = vand.u32 2147483647, %v507
        %vm534 = vcmp.eq.f32.partialorder %v533, 8.507059e+37
        %v535 = vand.u32 %v507, 2147483648
        %v536 = vor.u32 1.1754944e-38, %v535
        %v537 = vsel %vm534, %v536, %v532
        %v538 = vrcp.pop %v508
        %v539 = vmul.f32 %v508, %v538
        %v540 = vsub.f32 1.0, %v539
        %v541 = vmul.f32 %v538, %v540
        %v542 = vadd.f32 %v538, %v541
        %vm543 = vweird.f32 %v508
        %vm544 = vweird.f32 %v538
        %vm545 = vmor %vm543, %vm544
        %v546 = vsel %vm545, %v538, %v542
        %v547 = vand.u32 2147483647, %v508
        %vm548 = vcmp.eq.f32.partialorder %v547, 8.507059e+37
        %v549 = vand.u32 %v508, 2147483648
        %v550 = vor.u32 1.1754944e-38, %v549
        %v551 = vsel %vm548, %v550, %v546
        %v552 = vrcp.pop %v509
        %v553 = vmul.f32 %v509, %v552
        %v554 = vsub.f32 1.0, %v553
        %v555 = vmul.f32 %v552, %v554
        %v556 = vadd.f32 %v552, %v555
        %vm557 = vweird.f32 %v509
        %vm558 = vweird.f32 %v552
        %vm559 = vmor %vm557, %vm558
        %v560 = vsel %vm559, %v552, %v556
        %v561 = vand.u32 2147483647, %v509
        %vm562 = vcmp.eq.f32.partialorder %v561, 8.507059e+37
        %v563 = vand.u32 %v509, 2147483648
        %v564 = vor.u32 1.1754944e-38, %v563
        %v565 = vsel %vm562, %v564, %v560
        %v566 = vmul.f32 %v466, %v523
        %v567 = vmul.f32 %v489, %v537
        %v568 = vmul.f32 %v469, %v551
        %v569 = vmul.f32 %v492, %v565
        %v570 = vld [vmem:[%s3] sm:$0xff]
        %v571 = vld [vmem:[%s4] sm:$0xff]
        %573 = vrot.lane.b32.xlu0 %v568, 112
        %v574 = vpop.permute.xlu0 %573
        %576 = vrot.lane.b32.xlu0 %v568, 96
        %v577 = vpop.permute.xlu0 %576
        %579 = vrot.lane.b32.xlu0 %v568, 80
        %v580 = vpop.permute.xlu0 %579
        %582 = vrot.lane.b32.xlu0 %v568, 64
        %v583 = vpop.permute.xlu0 %582
        %585 = vrot.lane.b32.xlu0 %v568, 48
        %v586 = vpop.permute.xlu0 %585
        %588 = vrot.lane.b32.xlu0 %v568, 32
        %v589 = vpop.permute.xlu0 %588
        %591 = vrot.lane.b32.xlu0 %v568, 16
        %v592 = vpop.permute.xlu0 %591
        %595 = vrot.lane.b32.xlu0 %v569, 112
        %v596 = vpop.permute.xlu0 %595
        %598 = vrot.lane.b32.xlu0 %v569, 96
        %v599 = vpop.permute.xlu0 %598
        %601 = vrot.lane.b32.xlu0 %v569, 80
        %v602 = vpop.permute.xlu0 %601
        %604 = vrot.lane.b32.xlu0 %v569, 64
        %v605 = vpop.permute.xlu0 %604
        %607 = vrot.lane.b32.xlu0 %v569, 48
        %v608 = vpop.permute.xlu0 %607
        %610 = vrot.lane.b32.xlu0 %v569, 32
        %v611 = vpop.permute.xlu0 %610
        %613 = vrot.lane.b32.xlu0 %v569, 16
        %v614 = vpop.permute.xlu0 %613
        %v616 = vrot.slane %v577, 4
        %vm617 = vcmask 1047556
        %v618 = vsel %vm617, %v616, %v568
        %v619 = vrot.slane %v568, 4
        %v620 = vsel %vm617, %v577, %v619
        %v622 = vunpack.c.l.s4 1983009808
        %v623 = vunpack.c.0.s8 %v622
        %v624 = vperm.slane %v618, %v623
        %v626 = vunpack.c.l.s4 1983009808
        %v627 = vunpack.c.0.s8 %v626
        %v628 = vperm.slane %v620, %v627
        %v629 = vrot.slane %v580, 4
        %v630 = vsel %vm617, %v629, %v574
        %v631 = vrot.slane %v574, 4
        %v632 = vsel %vm617, %v580, %v631
        %v634 = vunpack.c.l.s4 1983009808
        %v635 = vunpack.c.0.s8 %v634
        %v636 = vperm.slane %v630, %v635
        %v638 = vunpack.c.l.s4 1983009808
        %v639 = vunpack.c.0.s8 %v638
        %v640 = vperm.slane %v632, %v639
        %v641 = vrot.slane %v589, 4
        %v642 = vsel %vm617, %v641, %v583
        %v643 = vrot.slane %v583, 4
        %v644 = vsel %vm617, %v589, %v643
        %v646 = vunpack.c.l.s4 1983009808
        %v647 = vunpack.c.0.s8 %v646
        %v648 = vperm.slane %v642, %v647
        %v650 = vunpack.c.l.s4 1983009808
        %v651 = vunpack.c.0.s8 %v650
        %v652 = vperm.slane %v644, %v651
        %v653 = vrot.slane %v592, 4
        %v654 = vsel %vm617, %v653, %v586
        %v655 = vrot.slane %v586, 4
        %v656 = vsel %vm617, %v592, %v655
        %v658 = vunpack.c.l.s4 1983009808
        %v659 = vunpack.c.0.s8 %v658
        %v660 = vperm.slane %v654, %v659
        %v662 = vunpack.c.l.s4 1983009808
        %v663 = vunpack.c.0.s8 %v662
        %v664 = vperm.slane %v656, %v663
        %v665 = vrot.slane %v636, 4
        %v666 = vsel %vm617, %v665, %v624
        %v667 = vrot.slane %v624, 4
        %v668 = vsel %vm617, %v636, %v667
        %v670 = vunpack.c.l.s4 1934713408
        %v671 = vunpack.c.0.s8 %v670
        %v672 = vperm.slane %v666, %v671
        %v674 = vunpack.c.l.s4 1934713408
        %v675 = vunpack.c.0.s8 %v674
        %v676 = vperm.slane %v668, %v675
        %v677 = vrot.slane %v640, 4
        %v678 = vsel %vm617, %v677, %v628
        %v679 = vrot.slane %v628, 4
        %v680 = vsel %vm617, %v640, %v679
        %v682 = vunpack.c.l.s4 1934713408
        %v683 = vunpack.c.0.s8 %v682
        %v684 = vperm.slane %v678, %v683
        %v686 = vunpack.c.l.s4 1934713408
        %v687 = vunpack.c.0.s8 %v686
        %v688 = vperm.slane %v680, %v687
        %v689 = vrot.slane %v660, 4
        %v690 = vsel %vm617, %v689, %v648
        %v691 = vrot.slane %v648, 4
        %v692 = vsel %vm617, %v660, %v691
        %v694 = vunpack.c.l.s4 1934713408
        %v695 = vunpack.c.0.s8 %v694
        %v696 = vperm.slane %v690, %v695
        %v698 = vunpack.c.l.s4 1934713408
        %v699 = vunpack.c.0.s8 %v698
        %v700 = vperm.slane %v692, %v699
        %v701 = vrot.slane %v664, 4
        %v702 = vsel %vm617, %v701, %v652
        %v703 = vrot.slane %v652, 4
        %v704 = vsel %vm617, %v664, %v703
        %v706 = vunpack.c.l.s4 1934713408
        %v707 = vunpack.c.0.s8 %v706
        %v708 = vperm.slane %v702, %v707
        %v710 = vunpack.c.l.s4 1934713408
        %v711 = vunpack.c.0.s8 %v710
        %v712 = vperm.slane %v704, %v711
        %v713 = vrot.slane %v696, 4
        %v714 = vsel %vm617, %v713, %v672
        %v715 = vrot.slane %v672, 4
        %v716 = vsel %vm617, %v696, %v715
        %v717 = vrot.slane %v700, 4
        %v718 = vsel %vm617, %v717, %v676
        %v719 = vrot.slane %v676, 4
        %v720 = vsel %vm617, %v700, %v719
        %v721 = vrot.slane %v708, 4
        %v722 = vsel %vm617, %v721, %v684
        %v723 = vrot.slane %v684, 4
        %v724 = vsel %vm617, %v708, %v723
        %v725 = vrot.slane %v712, 4
        %v726 = vsel %vm617, %v725, %v688
        %v727 = vrot.slane %v688, 4
        %v728 = vsel %vm617, %v712, %v727
        %v729 = vrot.slane %v599, 4
        %v730 = vsel %vm617, %v729, %v569
        %v731 = vrot.slane %v569, 4
        %v732 = vsel %vm617, %v599, %v731
        %v734 = vunpack.c.l.s4 1983009808
        %v735 = vunpack.c.0.s8 %v734
        %v736 = vperm.slane %v730, %v735
        %v738 = vunpack.c.l.s4 1983009808
        %v739 = vunpack.c.0.s8 %v738
        %v740 = vperm.slane %v732, %v739
        %v741 = vrot.slane %v602, 4
        %v742 = vsel %vm617, %v741, %v596
        %v743 = vrot.slane %v596, 4
        %v744 = vsel %vm617, %v602, %v743
        %v746 = vunpack.c.l.s4 1983009808
        %v747 = vunpack.c.0.s8 %v746
        %v748 = vperm.slane %v742, %v747
        %v750 = vunpack.c.l.s4 1983009808
        %v751 = vunpack.c.0.s8 %v750
        %v752 = vperm.slane %v744, %v751
        %v753 = vrot.slane %v611, 4
        %v754 = vsel %vm617, %v753, %v605
        %v755 = vrot.slane %v605, 4
        %v756 = vsel %vm617, %v611, %v755
        %v758 = vunpack.c.l.s4 1983009808
        %v759 = vunpack.c.0.s8 %v758
        %v760 = vperm.slane %v754, %v759
        %v762 = vunpack.c.l.s4 1983009808
        %v763 = vunpack.c.0.s8 %v762
        %v764 = vperm.slane %v756, %v763
        %v765 = vrot.slane %v614, 4
        %v766 = vsel %vm617, %v765, %v608
        %v767 = vrot.slane %v608, 4
        %v768 = vsel %vm617, %v614, %v767
        %v770 = vunpack.c.l.s4 1983009808
        %v771 = vunpack.c.0.s8 %v770
        %v772 = vperm.slane %v766, %v771
        %v774 = vunpack.c.l.s4 1983009808
        %v775 = vunpack.c.0.s8 %v774
        %v776 = vperm.slane %v768, %v775
        %v777 = vrot.slane %v748, 4
        %v778 = vsel %vm617, %v777, %v736
        %v779 = vrot.slane %v736, 4
        %v780 = vsel %vm617, %v748, %v779
        %v782 = vunpack.c.l.s4 1934713408
        %v783 = vunpack.c.0.s8 %v782
        %v784 = vperm.slane %v778, %v783
        %v786 = vunpack.c.l.s4 1934713408
        %v787 = vunpack.c.0.s8 %v786
        %v788 = vperm.slane %v780, %v787
        %v789 = vrot.slane %v752, 4
        %v790 = vsel %vm617, %v789, %v740
        %v791 = vrot.slane %v740, 4
        %v792 = vsel %vm617, %v752, %v791
        %v794 = vunpack.c.l.s4 1934713408
        %v795 = vunpack.c.0.s8 %v794
        %v796 = vperm.slane %v790, %v795
        %v798 = vunpack.c.l.s4 1934713408
        %v799 = vunpack.c.0.s8 %v798
        %v800 = vperm.slane %v792, %v799
        %v801 = vrot.slane %v772, 4
        %v802 = vsel %vm617, %v801, %v760
        %v803 = vrot.slane %v760, 4
        %v804 = vsel %vm617, %v772, %v803
        %v806 = vunpack.c.l.s4 1934713408
        %v807 = vunpack.c.0.s8 %v806
        %v808 = vperm.slane %v802, %v807
        %v810 = vunpack.c.l.s4 1934713408
        %v811 = vunpack.c.0.s8 %v810
        %v812 = vperm.slane %v804, %v811
        %v813 = vrot.slane %v776, 4
        %v814 = vsel %vm617, %v813, %v764
        %v815 = vrot.slane %v764, 4
        %v816 = vsel %vm617, %v776, %v815
        %v818 = vunpack.c.l.s4 1934713408
        %v819 = vunpack.c.0.s8 %v818
        %v820 = vperm.slane %v814, %v819
        %v822 = vunpack.c.l.s4 1934713408
        %v823 = vunpack.c.0.s8 %v822
        %v824 = vperm.slane %v816, %v823
        %v825 = vrot.slane %v808, 4
        %v826 = vsel %vm617, %v825, %v784
        %v827 = vrot.slane %v784, 4
        %v828 = vsel %vm617, %v808, %v827
        %v829 = vrot.slane %v812, 4
        %v830 = vsel %vm617, %v829, %v788
        %v831 = vrot.slane %v788, 4
        %v832 = vsel %vm617, %v812, %v831
        %v833 = vrot.slane %v820, 4
        %v834 = vsel %vm617, %v833, %v796
        %v835 = vrot.slane %v796, 4
        %v836 = vsel %vm617, %v820, %v835
        %v837 = vrot.slane %v824, 4
        %v838 = vsel %vm617, %v837, %v800
        %v839 = vrot.slane %v800, 4
        %v840 = vsel %vm617, %v824, %v839
        %vm841 = vcmask 130048
        %842 = vst.msk [vmem:[#allocation2 + $0x18] sm:$0xff] %vm841, %v714
        %843 = vst.msk [vmem:[#allocation2 + $0x28] sm:$0xff] %vm841, %v826
        %844 = vst.msk [vmem:[#allocation2 + $0x58] sm:$0xff] %vm841, %v716
        %845 = vst.msk [vmem:[#allocation2 + $0x68] sm:$0xff] %vm841, %v828
        %846 = vst.msk [vmem:[#allocation2 + $0x98] sm:$0xff] %vm841, %v718
        %847 = vst.msk [vmem:[#allocation2 + $0xa8] sm:$0xff] %vm841, %v830
        %848 = vst.msk [vmem:[#allocation2 + $0xd8] sm:$0xff] %vm841, %v720
        %849 = vst.msk [vmem:[#allocation2 + $0xe8] sm:$0xff] %vm841, %v832
        %850 = vst.msk [vmem:[#allocation2 + $0x118] sm:$0xff] %vm841, %v722
        %851 = vst.msk [vmem:[#allocation2 + $0x128] sm:$0xff] %vm841, %v834
        %852 = vst.msk [vmem:[#allocation2 + $0x158] sm:$0xff] %vm841, %v724
        %853 = vst.msk [vmem:[#allocation2 + $0x168] sm:$0xff] %vm841, %v836
        %854 = vst.msk [vmem:[#allocation2 + $0x198] sm:$0xff] %vm841, %v726
        %855 = vst.msk [vmem:[#allocation2 + $0x1a8] sm:$0xff] %vm841, %v838
        %856 = vst.msk [vmem:[#allocation2 + $0x1d8] sm:$0xff] %vm841, %v728
        %857 = vst.msk [vmem:[#allocation2 + $0x1e8] sm:$0xff] %vm841, %v840
        %v858 = vld [vmem:[#allocation2] sm:$0x80]
        %v859 = vld [vmem:[#allocation2 + $0x8] sm:$0x80]
        %v860 = vld [vmem:[#allocation2 + $0x10] sm:$0xff]
        %v861 = vld [vmem:[#allocation2 + $0x18] sm:$0xff]
        %v862 = vld [vmem:[#allocation2 + $0x20] sm:$0x7f]
        %v863 = vld [vmem:[#allocation2 + $0x28] sm:$0x7f]
        %v864 = vld [vmem:[#allocation2 + $0x40] sm:$0x80]
        %v865 = vld [vmem:[#allocation2 + $0x48] sm:$0x80]
        %v866 = vld [vmem:[#allocation2 + $0x50] sm:$0xff]
        %v867 = vld [vmem:[#allocation2 + $0x58] sm:$0xff]
        %v868 = vld [vmem:[#allocation2 + $0x60] sm:$0x7f]
        %v869 = vld [vmem:[#allocation2 + $0x68] sm:$0x7f]
        %v870 = vld [vmem:[#allocation2 + $0x80] sm:$0x80]
        %v871 = vld [vmem:[#allocation2 + $0x88] sm:$0x80]
        %v872 = vld [vmem:[#allocation2 + $0x90] sm:$0xff]
        %v873 = vld [vmem:[#allocation2 + $0x98] sm:$0xff]
        %v874 = vld [vmem:[#allocation2 + $0xa0] sm:$0x7f]
        %v875 = vld [vmem:[#allocation2 + $0xa8] sm:$0x7f]
        %v876 = vld [vmem:[#allocation2 + $0xc0] sm:$0x80]
        %v877 = vld [vmem:[#allocation2 + $0xc8] sm:$0x80]
        %v878 = vld [vmem:[#allocation2 + $0xd0] sm:$0xff]
        %v879 = vld [vmem:[#allocation2 + $0xd8] sm:$0xff]
        %v880 = vld [vmem:[#allocation2 + $0xe0] sm:$0x7f]
        %v881 = vld [vmem:[#allocation2 + $0xe8] sm:$0x7f]
        %v882 = vld [vmem:[#allocation2 + $0x100] sm:$0x80]
        %v883 = vld [vmem:[#allocation2 + $0x108] sm:$0x80]
        %v884 = vld [vmem:[#allocation2 + $0x110] sm:$0xff]
        %v885 = vld [vmem:[#allocation2 + $0x118] sm:$0xff]
        %v886 = vld [vmem:[#allocation2 + $0x120] sm:$0x7f]
        %v887 = vld [vmem:[#allocation2 + $0x128] sm:$0x7f]
        %v888 = vld [vmem:[#allocation2 + $0x140] sm:$0x80]
        %v889 = vld [vmem:[#allocation2 + $0x148] sm:$0x80]
        %v890 = vld [vmem:[#allocation2 + $0x150] sm:$0xff]
        %v891 = vld [vmem:[#allocation2 + $0x158] sm:$0xff]
        %v892 = vld [vmem:[#allocation2 + $0x160] sm:$0x7f]
        %v893 = vld [vmem:[#allocation2 + $0x168] sm:$0x7f]
        %v894 = vld [vmem:[#allocation2 + $0x180] sm:$0x80]
        %v895 = vld [vmem:[#allocation2 + $0x188] sm:$0x80]
        %v896 = vld [vmem:[#allocation2 + $0x190] sm:$0xff]
        %v897 = vld [vmem:[#allocation2 + $0x198] sm:$0xff]
        %v898 = vld [vmem:[#allocation2 + $0x1a0] sm:$0x7f]
        %v899 = vld [vmem:[#allocation2 + $0x1a8] sm:$0x7f]
        %v900 = vld [vmem:[#allocation2 + $0x1c0] sm:$0x80]
        %v901 = vld [vmem:[#allocation2 + $0x1c8] sm:$0x80]
        %v902 = vld [vmem:[#allocation2 + $0x1d0] sm:$0xff]
        %v903 = vld [vmem:[#allocation2 + $0x1d8] sm:$0xff]
        %v904 = vld [vmem:[#allocation2 + $0x1e0] sm:$0x7f]
        %v905 = vld [vmem:[#allocation2 + $0x1e8] sm:$0x7f]
        %v906 = vld [vmem:[#allocation2 + $0x20] sm:$0xff]
        %v907 = vld [vmem:[#allocation2 + $0x28] sm:$0xff]
        %v908 = vld [vmem:[#allocation2 + $0x60] sm:$0xff]
        %v909 = vld [vmem:[#allocation2 + $0x68] sm:$0xff]
        %v910 = vld [vmem:[#allocation2 + $0xa0] sm:$0xff]
        %v911 = vld [vmem:[#allocation2 + $0xa8] sm:$0xff]
        %v912 = vld [vmem:[#allocation2 + $0xe0] sm:$0xff]
        %v913 = vld [vmem:[#allocation2 + $0xe8] sm:$0xff]
        %v914 = vld [vmem:[#allocation2 + $0x120] sm:$0xff]
        %v915 = vld [vmem:[#allocation2 + $0x128] sm:$0xff]
        %v916 = vld [vmem:[#allocation2 + $0x160] sm:$0xff]
        %v917 = vld [vmem:[#allocation2 + $0x168] sm:$0xff]
        %v918 = vld [vmem:[#allocation2 + $0x1a0] sm:$0xff]
        %v919 = vld [vmem:[#allocation2 + $0x1a8] sm:$0xff]
        %v920 = vld [vmem:[#allocation2 + $0x1e0] sm:$0xff]
        %v921 = vld [vmem:[#allocation2 + $0x1e8] sm:$0xff]
        %v922 = vld [vmem:[#allocation2 + $0x10] sm:$0xfe]
        %v923 = vld [vmem:[#allocation2 + $0x18] sm:$0xfe]
        %v924 = vld [vmem:[#allocation2 + $0x30] sm:$0x1]
        %v925 = vld [vmem:[#allocation2 + $0x38] sm:$0x1]
        %v926 = vld [vmem:[#allocation2 + $0x50] sm:$0xfe]
        %v927 = vld [vmem:[#allocation2 + $0x58] sm:$0xfe]
        %v928 = vld [vmem:[#allocation2 + $0x70] sm:$0x1]
        %v929 = vld [vmem:[#allocation2 + $0x78] sm:$0x1]
        %v930 = vld [vmem:[#allocation2 + $0x90] sm:$0xfe]
        %v931 = vld [vmem:[#allocation2 + $0x98] sm:$0xfe]
        %v932 = vld [vmem:[#allocation2 + $0xb0] sm:$0x1]
        %v933 = vld [vmem:[#allocation2 + $0xb8] sm:$0x1]
        %v934 = vld [vmem:[#allocation2 + $0xd0] sm:$0xfe]
        %v935 = vld [vmem:[#allocation2 + $0xd8] sm:$0xfe]
        %v936 = vld [vmem:[#allocation2 + $0xf0] sm:$0x1]
        %v937 = vld [vmem:[#allocation2 + $0xf8] sm:$0x1]
        %v938 = vld [vmem:[#allocation2 + $0x110] sm:$0xfe]
        %v939 = vld [vmem:[#allocation2 + $0x118] sm:$0xfe]
        %v940 = vld [vmem:[#allocation2 + $0x130] sm:$0x1]
        %v941 = vld [vmem:[#allocation2 + $0x138] sm:$0x1]
        %v942 = vld [vmem:[#allocation2 + $0x150] sm:$0xfe]
        %v943 = vld [vmem:[#allocation2 + $0x158] sm:$0xfe]
        %v944 = vld [vmem:[#allocation2 + $0x170] sm:$0x1]
        %v945 = vld [vmem:[#allocation2 + $0x178] sm:$0x1]
        %v946 = vld [vmem:[#allocation2 + $0x190] sm:$0xfe]
        %v947 = vld [vmem:[#allocation2 + $0x198] sm:$0xfe]
        %v948 = vld [vmem:[#allocation2 + $0x1b0] sm:$0x1]
        %v949 = vld [vmem:[#allocation2 + $0x1b8] sm:$0x1]
        %v950 = vld [vmem:[#allocation2 + $0x1d0] sm:$0xfe]
        %v951 = vld [vmem:[#allocation2 + $0x1d8] sm:$0xfe]
        %v952 = vld [vmem:[#allocation2 + $0x1f0] sm:$0x1]
        %v953 = vld [vmem:[#allocation2 + $0x1f8] sm:$0x1]
        %978 = vrot.lane.b32.xlu0 %v859, 127
        %v979 = vpop.permute.xlu0 %978
        %980 = vrot.lane.b32.xlu0 %v861, 127
        %v981 = vpop.permute.xlu0 %980
        %982 = vrot.lane.b32.xlu0 %v863, 127
        %v983 = vpop.permute.xlu0 %982
        %984 = vrot.lane.b32.xlu0 %v865, 127
        %v985 = vpop.permute.xlu0 %984
        %986 = vrot.lane.b32.xlu0 %v867, 127
        %v987 = vpop.permute.xlu0 %986
        %988 = vrot.lane.b32.xlu0 %v869, 127
        %v989 = vpop.permute.xlu0 %988
        %990 = vrot.lane.b32.xlu0 %v871, 127
        %v991 = vpop.permute.xlu0 %990
        %992 = vrot.lane.b32.xlu0 %v873, 127
        %v993 = vpop.permute.xlu0 %992
        %994 = vrot.lane.b32.xlu0 %v875, 127
        %v995 = vpop.permute.xlu0 %994
        %996 = vrot.lane.b32.xlu0 %v877, 127
        %v997 = vpop.permute.xlu0 %996
        %998 = vrot.lane.b32.xlu0 %v879, 127
        %v999 = vpop.permute.xlu0 %998
        %1000 = vrot.lane.b32.xlu0 %v881, 127
        %v1001 = vpop.permute.xlu0 %1000
        %1002 = vrot.lane.b32.xlu0 %v883, 127
        %v1003 = vpop.permute.xlu0 %1002
        %1004 = vrot.lane.b32.xlu0 %v885, 127
        %v1005 = vpop.permute.xlu0 %1004
        %1006 = vrot.lane.b32.xlu0 %v887, 127
        %v1007 = vpop.permute.xlu0 %1006
        %1008 = vrot.lane.b32.xlu0 %v889, 127
        %v1009 = vpop.permute.xlu0 %1008
        %1010 = vrot.lane.b32.xlu0 %v891, 127
        %v1011 = vpop.permute.xlu0 %1010
        %1012 = vrot.lane.b32.xlu0 %v893, 127
        %v1013 = vpop.permute.xlu0 %1012
        %1014 = vrot.lane.b32.xlu0 %v895, 127
        %v1015 = vpop.permute.xlu0 %1014
        %1016 = vrot.lane.b32.xlu0 %v897, 127
        %v1017 = vpop.permute.xlu0 %1016
        %1018 = vrot.lane.b32.xlu0 %v899, 127
        %v1019 = vpop.permute.xlu0 %1018
        %1020 = vrot.lane.b32.xlu0 %v901, 127
        %v1021 = vpop.permute.xlu0 %1020
        %1022 = vrot.lane.b32.xlu0 %v903, 127
        %v1023 = vpop.permute.xlu0 %1022
        %1024 = vrot.lane.b32.xlu0 %v905, 127
        %v1025 = vpop.permute.xlu0 %1024
        %1026 = vrot.lane.b32.xlu0 %v859, 126
        %v1027 = vpop.permute.xlu0 %1026
        %1028 = vrot.lane.b32.xlu0 %v861, 126
        %v1029 = vpop.permute.xlu0 %1028
        %1030 = vrot.lane.b32.xlu0 %v863, 126
        %v1031 = vpop.permute.xlu0 %1030
        %1032 = vrot.lane.b32.xlu0 %v865, 126
        %v1033 = vpop.permute.xlu0 %1032
        %1034 = vrot.lane.b32.xlu0 %v867, 126
        %v1035 = vpop.permute.xlu0 %1034
        %1036 = vrot.lane.b32.xlu0 %v869, 126
        %v1037 = vpop.permute.xlu0 %1036
        %1038 = vrot.lane.b32.xlu0 %v871, 126
        %v1039 = vpop.permute.xlu0 %1038
        %1040 = vrot.lane.b32.xlu0 %v873, 126
        %v1041 = vpop.permute.xlu0 %1040
        %1042 = vrot.lane.b32.xlu0 %v875, 126
        %v1043 = vpop.permute.xlu0 %1042
        %1044 = vrot.lane.b32.xlu0 %v877, 126
        %v1045 = vpop.permute.xlu0 %1044
        %1046 = vrot.lane.b32.xlu0 %v879, 126
        %v1047 = vpop.permute.xlu0 %1046
        %1048 = vrot.lane.b32.xlu0 %v881, 126
        %v1049 = vpop.permute.xlu0 %1048
        %1050 = vrot.lane.b32.xlu0 %v883, 126
        %v1051 = vpop.permute.xlu0 %1050
        %1052 = vrot.lane.b32.xlu0 %v885, 126
        %v1053 = vpop.permute.xlu0 %1052
        %1054 = vrot.lane.b32.xlu0 %v887, 126
        %v1055 = vpop.permute.xlu0 %1054
        %1056 = vrot.lane.b32.xlu0 %v889, 126
        %v1057 = vpop.permute.xlu0 %1056
        %1058 = vrot.lane.b32.xlu0 %v891, 126
        %v1059 = vpop.permute.xlu0 %1058
        %1060 = vrot.lane.b32.xlu0 %v893, 126
        %v1061 = vpop.permute.xlu0 %1060
        %1062 = vrot.lane.b32.xlu0 %v895, 126
        %v1063 = vpop.permute.xlu0 %1062
        %1064 = vrot.lane.b32.xlu0 %v897, 126
        %v1065 = vpop.permute.xlu0 %1064
        %1066 = vrot.lane.b32.xlu0 %v899, 126
        %v1067 = vpop.permute.xlu0 %1066
        %1068 = vrot.lane.b32.xlu0 %v901, 126
        %v1069 = vpop.permute.xlu0 %1068
        %1070 = vrot.lane.b32.xlu0 %v903, 126
        %v1071 = vpop.permute.xlu0 %1070
        %1072 = vrot.lane.b32.xlu0 %v905, 126
        %v1073 = vpop.permute.xlu0 %1072
        %vm1098 = vcmask 1046528
        %v1099 = vrot.slane %v860, 1
        %v1100 = vrot.slane %v861, 1
        %v1101 = vrot.slane %v906, 1
        %v1102 = vsel %vm1098, %v1099, %v1101
        %v1103 = vrot.slane %v907, 1
        %v1104 = vsel %vm1098, %v1100, %v1103
        %v1105 = vrot.slane %v866, 1
        %v1106 = vrot.slane %v867, 1
        %v1107 = vrot.slane %v908, 1
        %v1108 = vsel %vm1098, %v1105, %v1107
        %v1109 = vrot.slane %v909, 1
        %v1110 = vsel %vm1098, %v1106, %v1109
        %v1111 = vrot.slane %v872, 1
        %v1112 = vrot.slane %v873, 1
        %v1113 = vrot.slane %v910, 1
        %v1114 = vsel %vm1098, %v1111, %v1113
        %v1115 = vrot.slane %v911, 1
        %v1116 = vsel %vm1098, %v1112, %v1115
        %v1117 = vrot.slane %v878, 1
        %v1118 = vrot.slane %v879, 1
        %v1119 = vrot.slane %v912, 1
        %v1120 = vsel %vm1098, %v1117, %v1119
        %v1121 = vrot.slane %v913, 1
        %v1122 = vsel %vm1098, %v1118, %v1121
        %v1123 = vrot.slane %v884, 1
        %v1124 = vrot.slane %v885, 1
        %v1125 = vrot.slane %v914, 1
        %v1126 = vsel %vm1098, %v1123, %v1125
        %v1127 = vrot.slane %v915, 1
        %v1128 = vsel %vm1098, %v1124, %v1127
        %v1129 = vrot.slane %v890, 1
        %v1130 = vrot.slane %v891, 1
        %v1131 = vrot.slane %v916, 1
        %v1132 = vsel %vm1098, %v1129, %v1131
        %v1133 = vrot.slane %v917, 1
        %v1134 = vsel %vm1098, %v1130, %v1133
        %v1135 = vrot.slane %v896, 1
        %v1136 = vrot.slane %v897, 1
        %v1137 = vrot.slane %v918, 1
        %v1138 = vsel %vm1098, %v1135, %v1137
        %v1139 = vrot.slane %v919, 1
        %v1140 = vsel %vm1098, %v1136, %v1139
        %v1141 = vrot.slane %v902, 1
        %v1142 = vrot.slane %v903, 1
        %v1143 = vrot.slane %v920, 1
        %v1144 = vsel %vm1098, %v1141, %v1143
        %v1145 = vrot.slane %v921, 1
        %v1146 = vsel %vm1098, %v1142, %v1145
        %1147 = vrot.lane.b32.xlu0 %v1100, 127
        %v1148 = vpop.permute.xlu0 %1147
        %1149 = vrot.lane.b32.xlu0 %v1104, 127
        %v1150 = vpop.permute.xlu0 %1149
        %1151 = vrot.lane.b32.xlu0 %v1103, 127
        %v1152 = vpop.permute.xlu0 %1151
        %1153 = vrot.lane.b32.xlu0 %v1106, 127
        %v1154 = vpop.permute.xlu0 %1153
        %1155 = vrot.lane.b32.xlu0 %v1110, 127
        %v1156 = vpop.permute.xlu0 %1155
        %1157 = vrot.lane.b32.xlu0 %v1109, 127
        %v1158 = vpop.permute.xlu0 %1157
        %1159 = vrot.lane.b32.xlu0 %v1112, 127
        %v1160 = vpop.permute.xlu0 %1159
        %1161 = vrot.lane.b32.xlu0 %v1116, 127
        %v1162 = vpop.permute.xlu0 %1161
        %1163 = vrot.lane.b32.xlu0 %v1115, 127
        %v1164 = vpop.permute.xlu0 %1163
        %1165 = vrot.lane.b32.xlu0 %v1118, 127
        %v1166 = vpop.permute.xlu0 %1165
        %1167 = vrot.lane.b32.xlu0 %v1122, 127
        %v1168 = vpop.permute.xlu0 %1167
        %1169 = vrot.lane.b32.xlu0 %v1121, 127
        %v1170 = vpop.permute.xlu0 %1169
        %1171 = vrot.lane.b32.xlu0 %v1124, 127
        %v1172 = vpop.permute.xlu0 %1171
        %1173 = vrot.lane.b32.xlu0 %v1128, 127
        %v1174 = vpop.permute.xlu0 %1173
        %1175 = vrot.lane.b32.xlu0 %v1127, 127
        %v1176 = vpop.permute.xlu0 %1175
        %1177 = vrot.lane.b32.xlu0 %v1130, 127
        %v1178 = vpop.permute.xlu0 %1177
        %1179 = vrot.lane.b32.xlu0 %v1134, 127
        %v1180 = vpop.permute.xlu0 %1179
        %1181 = vrot.lane.b32.xlu0 %v1133, 127
        %v1182 = vpop.permute.xlu0 %1181
        %1183 = vrot.lane.b32.xlu0 %v1136, 127
        %v1184 = vpop.permute.xlu0 %1183
        %1185 = vrot.lane.b32.xlu0 %v1140, 127
        %v1186 = vpop.permute.xlu0 %1185
        %1187 = vrot.lane.b32.xlu0 %v1139, 127
        %v1188 = vpop.permute.xlu0 %1187
        %1189 = vrot.lane.b32.xlu0 %v1142, 127
        %v1190 = vpop.permute.xlu0 %1189
        %1191 = vrot.lane.b32.xlu0 %v1146, 127
        %v1192 = vpop.permute.xlu0 %1191
        %1193 = vrot.lane.b32.xlu0 %v1145, 127
        %v1194 = vpop.permute.xlu0 %1193
        %1195 = vrot.lane.b32.xlu0 %v1100, 126
        %v1196 = vpop.permute.xlu0 %1195
        %1197 = vrot.lane.b32.xlu0 %v1104, 126
        %v1198 = vpop.permute.xlu0 %1197
        %1199 = vrot.lane.b32.xlu0 %v1103, 126
        %v1200 = vpop.permute.xlu0 %1199
        %1201 = vrot.lane.b32.xlu0 %v1106, 126
        %v1202 = vpop.permute.xlu0 %1201
        %1203 = vrot.lane.b32.xlu0 %v1110, 126
        %v1204 = vpop.permute.xlu0 %1203
        %1205 = vrot.lane.b32.xlu0 %v1109, 126
        %v1206 = vpop.permute.xlu0 %1205
        %1207 = vrot.lane.b32.xlu0 %v1112, 126
        %v1208 = vpop.permute.xlu0 %1207
        %1209 = vrot.lane.b32.xlu0 %v1116, 126
        %v1210 = vpop.permute.xlu0 %1209
        %1211 = vrot.lane.b32.xlu0 %v1115, 126
        %v1212 = vpop.permute.xlu0 %1211
        %1213 = vrot.lane.b32.xlu0 %v1118, 126
        %v1214 = vpop.permute.xlu0 %1213
        %1215 = vrot.lane.b32.xlu0 %v1122, 126
        %v1216 = vpop.permute.xlu0 %1215
        %1217 = vrot.lane.b32.xlu0 %v1121, 126
        %v1218 = vpop.permute.xlu0 %1217
        %1219 = vrot.lane.b32.xlu0 %v1124, 126
        %v1220 = vpop.permute.xlu0 %1219
        %1221 = vrot.lane.b32.xlu0 %v1128, 126
        %v1222 = vpop.permute.xlu0 %1221
        %1223 = vrot.lane.b32.xlu0 %v1127, 126
        %v1224 = vpop.permute.xlu0 %1223
        %1225 = vrot.lane.b32.xlu0 %v1130, 126
        %v1226 = vpop.permute.xlu0 %1225
        %1227 = vrot.lane.b32.xlu0 %v1134, 126
        %v1228 = vpop.permute.xlu0 %1227
        %1229 = vrot.lane.b32.xlu0 %v1133, 126
        %v1230 = vpop.permute.xlu0 %1229
        %1231 = vrot.lane.b32.xlu0 %v1136, 126
        %v1232 = vpop.permute.xlu0 %1231
        %1233 = vrot.lane.b32.xlu0 %v1140, 126
        %v1234 = vpop.permute.xlu0 %1233
        %1235 = vrot.lane.b32.xlu0 %v1139, 126
        %v1236 = vpop.permute.xlu0 %1235
        %1237 = vrot.lane.b32.xlu0 %v1142, 126
        %v1238 = vpop.permute.xlu0 %1237
        %1239 = vrot.lane.b32.xlu0 %v1146, 126
        %v1240 = vpop.permute.xlu0 %1239
        %1241 = vrot.lane.b32.xlu0 %v1145, 126
        %v1242 = vpop.permute.xlu0 %1241
        %vm1275 = vcmask 1045504
        %v1276 = vrot.slane %v922, 2
        %v1277 = vrot.slane %v923, 2
        %v1278 = vrot.slane %v906, 2
        %v1279 = vsel %vm1275, %v1276, %v1278
        %v1280 = vrot.slane %v907, 2
        %v1281 = vsel %vm1275, %v1277, %v1280
        %v1282 = vrot.slane %v924, 2
        %v1283 = vsel %vm1275, %v1278, %v1282
        %v1284 = vrot.slane %v925, 2
        %v1285 = vsel %vm1275, %v1280, %v1284
        %v1286 = vrot.slane %v926, 2
        %v1287 = vrot.slane %v927, 2
        %v1288 = vrot.slane %v908, 2
        %v1289 = vsel %vm1275, %v1286, %v1288
        %v1290 = vrot.slane %v909, 2
        %v1291 = vsel %vm1275, %v1287, %v1290
        %v1292 = vrot.slane %v928, 2
        %v1293 = vsel %vm1275, %v1288, %v1292
        %v1294 = vrot.slane %v929, 2
        %v1295 = vsel %vm1275, %v1290, %v1294
        %v1296 = vrot.slane %v930, 2
        %v1297 = vrot.slane %v931, 2
        %v1298 = vrot.slane %v910, 2
        %v1299 = vsel %vm1275, %v1296, %v1298
        %v1300 = vrot.slane %v911, 2
        %v1301 = vsel %vm1275, %v1297, %v1300
        %v1302 = vrot.slane %v932, 2
        %v1303 = vsel %vm1275, %v1298, %v1302
        %v1304 = vrot.slane %v933, 2
        %v1305 = vsel %vm1275, %v1300, %v1304
        %v1306 = vrot.slane %v934, 2
        %v1307 = vrot.slane %v935, 2
        %v1308 = vrot.slane %v912, 2
        %v1309 = vsel %vm1275, %v1306, %v1308
        %v1310 = vrot.slane %v913, 2
        %v1311 = vsel %vm1275, %v1307, %v1310
        %v1312 = vrot.slane %v936, 2
        %v1313 = vsel %vm1275, %v1308, %v1312
        %v1314 = vrot.slane %v937, 2
        %v1315 = vsel %vm1275, %v1310, %v1314
        %v1316 = vrot.slane %v938, 2
        %v1317 = vrot.slane %v939, 2
        %v1318 = vrot.slane %v914, 2
        %v1319 = vsel %vm1275, %v1316, %v1318
        %v1320 = vrot.slane %v915, 2
        %v1321 = vsel %vm1275, %v1317, %v1320
        %v1322 = vrot.slane %v940, 2
        %v1323 = vsel %vm1275, %v1318, %v1322
        %v1324 = vrot.slane %v941, 2
        %v1325 = vsel %vm1275, %v1320, %v1324
        %v1326 = vrot.slane %v942, 2
        %v1327 = vrot.slane %v943, 2
        %v1328 = vrot.slane %v916, 2
        %v1329 = vsel %vm1275, %v1326, %v1328
        %v1330 = vrot.slane %v917, 2
        %v1331 = vsel %vm1275, %v1327, %v1330
        %v1332 = vrot.slane %v944, 2
        %v1333 = vsel %vm1275, %v1328, %v1332
        %v1334 = vrot.slane %v945, 2
        %v1335 = vsel %vm1275, %v1330, %v1334
        %v1336 = vrot.slane %v946, 2
        %v1337 = vrot.slane %v947, 2
        %v1338 = vrot.slane %v918, 2
        %v1339 = vsel %vm1275, %v1336, %v1338
        %v1340 = vrot.slane %v919, 2
        %v1341 = vsel %vm1275, %v1337, %v1340
        %v1342 = vrot.slane %v948, 2
        %v1343 = vsel %vm1275, %v1338, %v1342
        %v1344 = vrot.slane %v949, 2
        %v1345 = vsel %vm1275, %v1340, %v1344
        %v1346 = vrot.slane %v950, 2
        %v1347 = vrot.slane %v951, 2
        %v1348 = vrot.slane %v920, 2
        %v1349 = vsel %vm1275, %v1346, %v1348
        %v1350 = vrot.slane %v921, 2
        %v1351 = vsel %vm1275, %v1347, %v1350
        %v1352 = vrot.slane %v952, 2
        %v1353 = vsel %vm1275, %v1348, %v1352
        %v1354 = vrot.slane %v953, 2
        %v1355 = vsel %vm1275, %v1350, %v1354
        %1356 = vrot.lane.b32.xlu0 %v1277, 127
        %v1357 = vpop.permute.xlu0 %1356
        %1358 = vrot.lane.b32.xlu0 %v1281, 127
        %v1359 = vpop.permute.xlu0 %1358
        %1360 = vrot.lane.b32.xlu0 %v1285, 127
        %v1361 = vpop.permute.xlu0 %1360
        %1362 = vrot.lane.b32.xlu0 %v1287, 127
        %v1363 = vpop.permute.xlu0 %1362
        %1364 = vrot.lane.b32.xlu0 %v1291, 127
        %v1365 = vpop.permute.xlu0 %1364
        %1366 = vrot.lane.b32.xlu0 %v1295, 127
        %v1367 = vpop.permute.xlu0 %1366
        %1368 = vrot.lane.b32.xlu0 %v1297, 127
        %v1369 = vpop.permute.xlu0 %1368
        %1370 = vrot.lane.b32.xlu0 %v1301, 127
        %v1371 = vpop.permute.xlu0 %1370
        %1372 = vrot.lane.b32.xlu0 %v1305, 127
        %v1373 = vpop.permute.xlu0 %1372
        %1374 = vrot.lane.b32.xlu0 %v1307, 127
        %v1375 = vpop.permute.xlu0 %1374
        %1376 = vrot.lane.b32.xlu0 %v1311, 127
        %v1377 = vpop.permute.xlu0 %1376
        %1378 = vrot.lane.b32.xlu0 %v1315, 127
        %v1379 = vpop.permute.xlu0 %1378
        %1380 = vrot.lane.b32.xlu0 %v1317, 127
        %v1381 = vpop.permute.xlu0 %1380
        %1382 = vrot.lane.b32.xlu0 %v1321, 127
        %v1383 = vpop.permute.xlu0 %1382
        %1384 = vrot.lane.b32.xlu0 %v1325, 127
        %v1385 = vpop.permute.xlu0 %1384
        %1386 = vrot.lane.b32.xlu0 %v1327, 127
        %v1387 = vpop.permute.xlu0 %1386
        %1388 = vrot.lane.b32.xlu0 %v1331, 127
        %v1389 = vpop.permute.xlu0 %1388
        %1390 = vrot.lane.b32.xlu0 %v1335, 127
        %v1391 = vpop.permute.xlu0 %1390
        %1392 = vrot.lane.b32.xlu0 %v1337, 127
        %v1393 = vpop.permute.xlu0 %1392
        %1394 = vrot.lane.b32.xlu0 %v1341, 127
        %v1395 = vpop.permute.xlu0 %1394
        %1396 = vrot.lane.b32.xlu0 %v1345, 127
        %v1397 = vpop.permute.xlu0 %1396
        %1398 = vrot.lane.b32.xlu0 %v1347, 127
        %v1399 = vpop.permute.xlu0 %1398
        %1400 = vrot.lane.b32.xlu0 %v1351, 127
        %v1401 = vpop.permute.xlu0 %1400
        %1402 = vrot.lane.b32.xlu0 %v1355, 127
        %v1403 = vpop.permute.xlu0 %1402
        %1404 = vrot.lane.b32.xlu0 %v1277, 126
        %v1405 = vpop.permute.xlu0 %1404
        %1406 = vrot.lane.b32.xlu0 %v1281, 126
        %v1407 = vpop.permute.xlu0 %1406
        %1408 = vrot.lane.b32.xlu0 %v1285, 126
        %v1409 = vpop.permute.xlu0 %1408
        %1410 = vrot.lane.b32.xlu0 %v1287, 126
        %v1411 = vpop.permute.xlu0 %1410
        %1412 = vrot.lane.b32.xlu0 %v1291, 126
        %v1413 = vpop.permute.xlu0 %1412
        %1414 = vrot.lane.b32.xlu0 %v1295, 126
        %v1415 = vpop.permute.xlu0 %1414
        %1416 = vrot.lane.b32.xlu0 %v1297, 126
        %v1417 = vpop.permute.xlu0 %1416
        %1418 = vrot.lane.b32.xlu0 %v1301, 126
        %v1419 = vpop.permute.xlu0 %1418
        %1420 = vrot.lane.b32.xlu0 %v1305, 126
        %v1421 = vpop.permute.xlu0 %1420
        %1422 = vrot.lane.b32.xlu0 %v1307, 126
        %v1423 = vpop.permute.xlu0 %1422
        %1424 = vrot.lane.b32.xlu0 %v1311, 126
        %v1425 = vpop.permute.xlu0 %1424
        %1426 = vrot.lane.b32.xlu0 %v1315, 126
        %v1427 = vpop.permute.xlu0 %1426
        %1428 = vrot.lane.b32.xlu0 %v1317, 126
        %v1429 = vpop.permute.xlu0 %1428
        %1430 = vrot.lane.b32.xlu0 %v1321, 126
        %v1431 = vpop.permute.xlu0 %1430
        %1432 = vrot.lane.b32.xlu0 %v1325, 126
        %v1433 = vpop.permute.xlu0 %1432
        %1434 = vrot.lane.b32.xlu0 %v1327, 126
        %v1435 = vpop.permute.xlu0 %1434
        %1436 = vrot.lane.b32.xlu0 %v1331, 126
        %v1437 = vpop.permute.xlu0 %1436
        %1438 = vrot.lane.b32.xlu0 %v1335, 126
        %v1439 = vpop.permute.xlu0 %1438
        %1440 = vrot.lane.b32.xlu0 %v1337, 126
        %v1441 = vpop.permute.xlu0 %1440
        %1442 = vrot.lane.b32.xlu0 %v1341, 126
        %v1443 = vpop.permute.xlu0 %1442
        %1444 = vrot.lane.b32.xlu0 %v1345, 126
        %v1445 = vpop.permute.xlu0 %1444
        %1446 = vrot.lane.b32.xlu0 %v1347, 126
        %v1447 = vpop.permute.xlu0 %1446
        %1448 = vrot.lane.b32.xlu0 %v1351, 126
        %v1449 = vpop.permute.xlu0 %1448
        %1450 = vrot.lane.b32.xlu0 %v1355, 126
        %v1451 = vpop.permute.xlu0 %1450
        %vm1468 = vcmask 1040384
        %v1469 = vrot.slane %v858, 7
        %v1470 = vrot.slane %v860, 7
        %v1471 = vsel %vm1468, %v1469, %v1470
        %v1472 = vrot.slane %v859, 7
        %v1473 = vrot.slane %v861, 7
        %v1474 = vsel %vm1468, %v1472, %v1473
        %v1475 = vrot.slane %v862, 7
        %v1476 = vsel %vm1468, %v1470, %v1475
        %v1477 = vrot.slane %v863, 7
        %v1478 = vsel %vm1468, %v1473, %v1477
        %v1479 = vrot.slane %v864, 7
        %v1480 = vrot.slane %v866, 7
        %v1481 = vsel %vm1468, %v1479, %v1480
        %v1482 = vrot.slane %v865, 7
        %v1483 = vrot.slane %v867, 7
        %v1484 = vsel %vm1468, %v1482, %v1483
        %v1485 = vrot.slane %v868, 7
        %v1486 = vsel %vm1468, %v1480, %v1485
        %v1487 = vrot.slane %v869, 7
        %v1488 = vsel %vm1468, %v1483, %v1487
        %v1489 = vrot.slane %v870, 7
        %v1490 = vrot.slane %v872, 7
        %v1491 = vsel %vm1468, %v1489, %v1490
        %v1492 = vrot.slane %v871, 7
        %v1493 = vrot.slane %v873, 7
        %v1494 = vsel %vm1468, %v1492, %v1493
        %v1495 = vrot.slane %v874, 7
        %v1496 = vsel %vm1468, %v1490, %v1495
        %v1497 = vrot.slane %v875, 7
        %v1498 = vsel %vm1468, %v1493, %v1497
        %v1499 = vrot.slane %v876, 7
        %v1500 = vrot.slane %v878, 7
        %v1501 = vsel %vm1468, %v1499, %v1500
        %v1502 = vrot.slane %v877, 7
        %v1503 = vrot.slane %v879, 7
        %v1504 = vsel %vm1468, %v1502, %v1503
        %v1505 = vrot.slane %v880, 7
        %v1506 = vsel %vm1468, %v1500, %v1505
        %v1507 = vrot.slane %v881, 7
        %v1508 = vsel %vm1468, %v1503, %v1507
        %v1509 = vrot.slane %v882, 7
        %v1510 = vrot.slane %v884, 7
        %v1511 = vsel %vm1468, %v1509, %v1510
        %v1512 = vrot.slane %v883, 7
        %v1513 = vrot.slane %v885, 7
        %v1514 = vsel %vm1468, %v1512, %v1513
        %v1515 = vrot.slane %v886, 7
        %v1516 = vsel %vm1468, %v1510, %v1515
        %v1517 = vrot.slane %v887, 7
        %v1518 = vsel %vm1468, %v1513, %v1517
        %v1519 = vrot.slane %v888, 7
        %v1520 = vrot.slane %v890, 7
        %v1521 = vsel %vm1468, %v1519, %v1520
        %v1522 = vrot.slane %v889, 7
        %v1523 = vrot.slane %v891, 7
        %v1524 = vsel %vm1468, %v1522, %v1523
        %v1525 = vrot.slane %v892, 7
        %v1526 = vsel %vm1468, %v1520, %v1525
        %v1527 = vrot.slane %v893, 7
        %v1528 = vsel %vm1468, %v1523, %v1527
        %v1529 = vrot.slane %v894, 7
        %v1530 = vrot.slane %v896, 7
        %v1531 = vsel %vm1468, %v1529, %v1530
        %v1532 = vrot.slane %v895, 7
        %v1533 = vrot.slane %v897, 7
        %v1534 = vsel %vm1468, %v1532, %v1533
        %v1535 = vrot.slane %v898, 7
        %v1536 = vsel %vm1468, %v1530, %v1535
        %v1537 = vrot.slane %v899, 7
        %v1538 = vsel %vm1468, %v1533, %v1537
        %v1539 = vrot.slane %v900, 7
        %v1540 = vrot.slane %v902, 7
        %v1541 = vsel %vm1468, %v1539, %v1540
        %v1542 = vrot.slane %v901, 7
        %v1543 = vrot.slane %v903, 7
        %v1544 = vsel %vm1468, %v1542, %v1543
        %v1545 = vrot.slane %v904, 7
        %v1546 = vsel %vm1468, %v1540, %v1545
        %v1547 = vrot.slane %v905, 7
        %v1548 = vsel %vm1468, %v1543, %v1547
        %v1549 = vrot.slane %v979, 7
        %v1550 = vrot.slane %v981, 7
        %v1551 = vsel %vm1468, %v1549, %v1550
        %v1552 = vrot.slane %v983, 7
        %v1553 = vsel %vm1468, %v1550, %v1552
        %v1554 = vrot.slane %v985, 7
        %v1555 = vrot.slane %v987, 7
        %v1556 = vsel %vm1468, %v1554, %v1555
        %v1557 = vrot.slane %v989, 7
        %v1558 = vsel %vm1468, %v1555, %v1557
        %v1559 = vrot.slane %v991, 7
        %v1560 = vrot.slane %v993, 7
        %v1561 = vsel %vm1468, %v1559, %v1560
        %v1562 = vrot.slane %v995, 7
        %v1563 = vsel %vm1468, %v1560, %v1562
        %v1564 = vrot.slane %v997, 7
        %v1565 = vrot.slane %v999, 7
        %v1566 = vsel %vm1468, %v1564, %v1565
        %v1567 = vrot.slane %v1001, 7
        %v1568 = vsel %vm1468, %v1565, %v1567
        %v1569 = vrot.slane %v1003, 7
        %v1570 = vrot.slane %v1005, 7
        %v1571 = vsel %vm1468, %v1569, %v1570
        %v1572 = vrot.slane %v1007, 7
        %v1573 = vsel %vm1468, %v1570, %v1572
        %v1574 = vrot.slane %v1009, 7
        %v1575 = vrot.slane %v1011, 7
        %v1576 = vsel %vm1468, %v1574, %v1575
        %v1577 = vrot.slane %v1013, 7
        %v1578 = vsel %vm1468, %v1575, %v1577
        %v1579 = vrot.slane %v1015, 7
        %v1580 = vrot.slane %v1017, 7
        %v1581 = vsel %vm1468, %v1579, %v1580
        %v1582 = vrot.slane %v1019, 7
        %v1583 = vsel %vm1468, %v1580, %v1582
        %v1584 = vrot.slane %v1021, 7
        %v1585 = vrot.slane %v1023, 7
        %v1586 = vsel %vm1468, %v1584, %v1585
        %v1587 = vrot.slane %v1025, 7
        %v1588 = vsel %vm1468, %v1585, %v1587
        %v1589 = vrot.slane %v1027, 7
        %v1590 = vrot.slane %v1029, 7
        %v1591 = vsel %vm1468, %v1589, %v1590
        %v1592 = vrot.slane %v1031, 7
        %v1593 = vsel %vm1468, %v1590, %v1592
        %v1594 = vrot.slane %v1033, 7
        %v1595 = vrot.slane %v1035, 7
        %v1596 = vsel %vm1468, %v1594, %v1595
        %v1597 = vrot.slane %v1037, 7
        %v1598 = vsel %vm1468, %v1595, %v1597
        %v1599 = vrot.slane %v1039, 7
        %v1600 = vrot.slane %v1041, 7
        %v1601 = vsel %vm1468, %v1599, %v1600
        %v1602 = vrot.slane %v1043, 7
        %v1603 = vsel %vm1468, %v1600, %v1602
        %v1604 = vrot.slane %v1045, 7
        %v1605 = vrot.slane %v1047, 7
        %v1606 = vsel %vm1468, %v1604, %v1605
        %v1607 = vrot.slane %v1049, 7
        %v1608 = vsel %vm1468, %v1605, %v1607
        %v1609 = vrot.slane %v1051, 7
        %v1610 = vrot.slane %v1053, 7
        %v1611 = vsel %vm1468, %v1609, %v1610
        %v1612 = vrot.slane %v1055, 7
        %v1613 = vsel %vm1468, %v1610, %v1612
        %v1614 = vrot.slane %v1057, 7
        %v1615 = vrot.slane %v1059, 7
        %v1616 = vsel %vm1468, %v1614, %v1615
        %v1617 = vrot.slane %v1061, 7
        %v1618 = vsel %vm1468, %v1615, %v1617
        %v1619 = vrot.slane %v1063, 7
        %v1620 = vrot.slane %v1065, 7
        %v1621 = vsel %vm1468, %v1619, %v1620
        %v1622 = vrot.slane %v1067, 7
        %v1623 = vsel %vm1468, %v1620, %v1622
        %v1624 = vrot.slane %v1069, 7
        %v1625 = vrot.slane %v1071, 7
        %v1626 = vsel %vm1468, %v1624, %v1625
        %v1627 = vrot.slane %v1073, 7
        %v1628 = vsel %vm1468, %v1625, %v1627
        %v1629 = vrot.slane %v1099, 7
        %v1630 = vrot.slane %v1102, 7
        %v1631 = vsel %vm1468, %v1629, %v1630
        %v1632 = vrot.slane %v1100, 7
        %v1633 = vrot.slane %v1104, 7
        %v1634 = vsel %vm1468, %v1632, %v1633
        %v1635 = vrot.slane %v1101, 7
        %v1636 = vsel %vm1468, %v1630, %v1635
        %v1637 = vrot.slane %v1103, 7
        %v1638 = vsel %vm1468, %v1633, %v1637
        %v1639 = vrot.slane %v1105, 7
        %v1640 = vrot.slane %v1108, 7
        %v1641 = vsel %vm1468, %v1639, %v1640
        %v1642 = vrot.slane %v1106, 7
        %v1643 = vrot.slane %v1110, 7
        %v1644 = vsel %vm1468, %v1642, %v1643
        %v1645 = vrot.slane %v1107, 7
        %v1646 = vsel %vm1468, %v1640, %v1645
        %v1647 = vrot.slane %v1109, 7
        %v1648 = vsel %vm1468, %v1643, %v1647
        %v1649 = vrot.slane %v1111, 7
        %v1650 = vrot.slane %v1114, 7
        %v1651 = vsel %vm1468, %v1649, %v1650
        %v1652 = vrot.slane %v1112, 7
        %v1653 = vrot.slane %v1116, 7
        %v1654 = vsel %vm1468, %v1652, %v1653
        %v1655 = vrot.slane %v1113, 7
        %v1656 = vsel %vm1468, %v1650, %v1655
        %v1657 = vrot.slane %v1115, 7
        %v1658 = vsel %vm1468, %v1653, %v1657
        %v1659 = vrot.slane %v1117, 7
        %v1660 = vrot.slane %v1120, 7
        %v1661 = vsel %vm1468, %v1659, %v1660
        %v1662 = vrot.slane %v1118, 7
        %v1663 = vrot.slane %v1122, 7
        %v1664 = vsel %vm1468, %v1662, %v1663
        %v1665 = vrot.slane %v1119, 7
        %v1666 = vsel %vm1468, %v1660, %v1665
        %v1667 = vrot.slane %v1121, 7
        %v1668 = vsel %vm1468, %v1663, %v1667
        %v1669 = vrot.slane %v1123, 7
        %v1670 = vrot.slane %v1126, 7
        %v1671 = vsel %vm1468, %v1669, %v1670
        %v1672 = vrot.slane %v1124, 7
        %v1673 = vrot.slane %v1128, 7
        %v1674 = vsel %vm1468, %v1672, %v1673
        %v1675 = vrot.slane %v1125, 7
        %v1676 = vsel %vm1468, %v1670, %v1675
        %v1677 = vrot.slane %v1127, 7
        %v1678 = vsel %vm1468, %v1673, %v1677
        %v1679 = vrot.slane %v1129, 7
        %v1680 = vrot.slane %v1132, 7
        %v1681 = vsel %vm1468, %v1679, %v1680
        %v1682 = vrot.slane %v1130, 7
        %v1683 = vrot.slane %v1134, 7
        %v1684 = vsel %vm1468, %v1682, %v1683
        %v1685 = vrot.slane %v1131, 7
        %v1686 = vsel %vm1468, %v1680, %v1685
        %v1687 = vrot.slane %v1133, 7
        %v1688 = vsel %vm1468, %v1683, %v1687
        %v1689 = vrot.slane %v1135, 7
        %v1690 = vrot.slane %v1138, 7
        %v1691 = vsel %vm1468, %v1689, %v1690
        %v1692 = vrot.slane %v1136, 7
        %v1693 = vrot.slane %v1140, 7
        %v1694 = vsel %vm1468, %v1692, %v1693
        %v1695 = vrot.slane %v1137, 7
        %v1696 = vsel %vm1468, %v1690, %v1695
        %v1697 = vrot.slane %v1139, 7
        %v1698 = vsel %vm1468, %v1693, %v1697
        %v1699 = vrot.slane %v1141, 7
        %v1700 = vrot.slane %v1144, 7
        %v1701 = vsel %vm1468, %v1699, %v1700
        %v1702 = vrot.slane %v1142, 7
        %v1703 = vrot.slane %v1146, 7
        %v1704 = vsel %vm1468, %v1702, %v1703
        %v1705 = vrot.slane %v1143, 7
        %v1706 = vsel %vm1468, %v1700, %v1705
        %v1707 = vrot.slane %v1145, 7
        %v1708 = vsel %vm1468, %v1703, %v1707
        %v1709 = vrot.slane %v1148, 7
        %v1710 = vrot.slane %v1150, 7
        %v1711 = vsel %vm1468, %v1709, %v1710
        %v1712 = vrot.slane %v1152, 7
        %v1713 = vsel %vm1468, %v1710, %v1712
        %v1714 = vrot.slane %v1154, 7
        %v1715 = vrot.slane %v1156, 7
        %v1716 = vsel %vm1468, %v1714, %v1715
        %v1717 = vrot.slane %v1158, 7
        %v1718 = vsel %vm1468, %v1715, %v1717
        %v1719 = vrot.slane %v1160, 7
        %v1720 = vrot.slane %v1162, 7
        %v1721 = vsel %vm1468, %v1719, %v1720
        %v1722 = vrot.slane %v1164, 7
        %v1723 = vsel %vm1468, %v1720, %v1722
        %v1724 = vrot.slane %v1166, 7
        %v1725 = vrot.slane %v1168, 7
        %v1726 = vsel %vm1468, %v1724, %v1725
        %v1727 = vrot.slane %v1170, 7
        %v1728 = vsel %vm1468, %v1725, %v1727
        %v1729 = vrot.slane %v1172, 7
        %v1730 = vrot.slane %v1174, 7
        %v1731 = vsel %vm1468, %v1729, %v1730
        %v1732 = vrot.slane %v1176, 7
        %v1733 = vsel %vm1468, %v1730, %v1732
        %v1734 = vrot.slane %v1178, 7
        %v1735 = vrot.slane %v1180, 7
        %v1736 = vsel %vm1468, %v1734, %v1735
        %v1737 = vrot.slane %v1182, 7
        %v1738 = vsel %vm1468, %v1735, %v1737
        %v1739 = vrot.slane %v1184, 7
        %v1740 = vrot.slane %v1186, 7
        %v1741 = vsel %vm1468, %v1739, %v1740
        %v1742 = vrot.slane %v1188, 7
        %v1743 = vsel %vm1468, %v1740, %v1742
        %v1744 = vrot.slane %v1190, 7
        %v1745 = vrot.slane %v1192, 7
        %v1746 = vsel %vm1468, %v1744, %v1745
        %v1747 = vrot.slane %v1194, 7
        %v1748 = vsel %vm1468, %v1745, %v1747
        %v1749 = vrot.slane %v1196, 7
        %v1750 = vrot.slane %v1198, 7
        %v1751 = vsel %vm1468, %v1749, %v1750
        %v1752 = vrot.slane %v1200, 7
        %v1753 = vsel %vm1468, %v1750, %v1752
        %v1754 = vrot.slane %v1202, 7
        %v1755 = vrot.slane %v1204, 7
        %v1756 = vsel %vm1468, %v1754, %v1755
        %v1757 = vrot.slane %v1206, 7
        %v1758 = vsel %vm1468, %v1755, %v1757
        %v1759 = vrot.slane %v1208, 7
        %v1760 = vrot.slane %v1210, 7
        %v1761 = vsel %vm1468, %v1759, %v1760
        %v1762 = vrot.slane %v1212, 7
        %v1763 = vsel %vm1468, %v1760, %v1762
        %v1764 = vrot.slane %v1214, 7
        %v1765 = vrot.slane %v1216, 7
        %v1766 = vsel %vm1468, %v1764, %v1765
        %v1767 = vrot.slane %v1218, 7
        %v1768 = vsel %vm1468, %v1765, %v1767
        %v1769 = vrot.slane %v1220, 7
        %v1770 = vrot.slane %v1222, 7
        %v1771 = vsel %vm1468, %v1769, %v1770
        %v1772 = vrot.slane %v1224, 7
        %v1773 = vsel %vm1468, %v1770, %v1772
        %v1774 = vrot.slane %v1226, 7
        %v1775 = vrot.slane %v1228, 7
        %v1776 = vsel %vm1468, %v1774, %v1775
        %v1777 = vrot.slane %v1230, 7
        %v1778 = vsel %vm1468, %v1775, %v1777
        %v1779 = vrot.slane %v1232, 7
        %v1780 = vrot.slane %v1234, 7
        %v1781 = vsel %vm1468, %v1779, %v1780
        %v1782 = vrot.slane %v1236, 7
        %v1783 = vsel %vm1468, %v1780, %v1782
        %v1784 = vrot.slane %v1238, 7
        %v1785 = vrot.slane %v1240, 7
        %v1786 = vsel %vm1468, %v1784, %v1785
        %v1787 = vrot.slane %v1242, 7
        %v1788 = vsel %vm1468, %v1785, %v1787
        %v1789 = vrot.slane %v1276, 7
        %v1790 = vrot.slane %v1279, 7
        %v1791 = vsel %vm1468, %v1789, %v1790
        %v1792 = vrot.slane %v1277, 7
        %v1793 = vrot.slane %v1281, 7
        %v1794 = vsel %vm1468, %v1792, %v1793
        %v1795 = vrot.slane %v1283, 7
        %v1796 = vsel %vm1468, %v1790, %v1795
        %v1797 = vrot.slane %v1285, 7
        %v1798 = vsel %vm1468, %v1793, %v1797
        %v1799 = vrot.slane %v1286, 7
        %v1800 = vrot.slane %v1289, 7
        %v1801 = vsel %vm1468, %v1799, %v1800
        %v1802 = vrot.slane %v1287, 7
        %v1803 = vrot.slane %v1291, 7
        %v1804 = vsel %vm1468, %v1802, %v1803
        %v1805 = vrot.slane %v1293, 7
        %v1806 = vsel %vm1468, %v1800, %v1805
        %v1807 = vrot.slane %v1295, 7
        %v1808 = vsel %vm1468, %v1803, %v1807
        %v1809 = vrot.slane %v1296, 7
        %v1810 = vrot.slane %v1299, 7
        %v1811 = vsel %vm1468, %v1809, %v1810
        %v1812 = vrot.slane %v1297, 7
        %v1813 = vrot.slane %v1301, 7
        %v1814 = vsel %vm1468, %v1812, %v1813
        %v1815 = vrot.slane %v1303, 7
        %v1816 = vsel %vm1468, %v1810, %v1815
        %v1817 = vrot.slane %v1305, 7
        %v1818 = vsel %vm1468, %v1813, %v1817
        %v1819 = vrot.slane %v1306, 7
        %v1820 = vrot.slane %v1309, 7
        %v1821 = vsel %vm1468, %v1819, %v1820
        %v1822 = vrot.slane %v1307, 7
        %v1823 = vrot.slane %v1311, 7
        %v1824 = vsel %vm1468, %v1822, %v1823
        %v1825 = vrot.slane %v1313, 7
        %v1826 = vsel %vm1468, %v1820, %v1825
        %v1827 = vrot.slane %v1315, 7
        %v1828 = vsel %vm1468, %v1823, %v1827
        %v1829 = vrot.slane %v1316, 7
        %v1830 = vrot.slane %v1319, 7
        %v1831 = vsel %vm1468, %v1829, %v1830
        %v1832 = vrot.slane %v1317, 7
        %v1833 = vrot.slane %v1321, 7
        %v1834 = vsel %vm1468, %v1832, %v1833
        %v1835 = vrot.slane %v1323, 7
        %v1836 = vsel %vm1468, %v1830, %v1835
        %v1837 = vrot.slane %v1325, 7
        %v1838 = vsel %vm1468, %v1833, %v1837
        %v1839 = vrot.slane %v1326, 7
        %v1840 = vrot.slane %v1329, 7
        %v1841 = vsel %vm1468, %v1839, %v1840
        %v1842 = vrot.slane %v1327, 7
        %v1843 = vrot.slane %v1331, 7
        %v1844 = vsel %vm1468, %v1842, %v1843
        %v1845 = vrot.slane %v1333, 7
        %v1846 = vsel %vm1468, %v1840, %v1845
        %v1847 = vrot.slane %v1335, 7
        %v1848 = vsel %vm1468, %v1843, %v1847
        %v1849 = vrot.slane %v1336, 7
        %v1850 = vrot.slane %v1339, 7
        %v1851 = vsel %vm1468, %v1849, %v1850
        %v1852 = vrot.slane %v1337, 7
        %v1853 = vrot.slane %v1341, 7
        %v1854 = vsel %vm1468, %v1852, %v1853
        %v1855 = vrot.slane %v1343, 7
        %v1856 = vsel %vm1468, %v1850, %v1855
        %v1857 = vrot.slane %v1345, 7
        %v1858 = vsel %vm1468, %v1853, %v1857
        %v1859 = vrot.slane %v1346, 7
        %v1860 = vrot.slane %v1349, 7
        %v1861 = vsel %vm1468, %v1859, %v1860
        %v1862 = vrot.slane %v1347, 7
        %v1863 = vrot.slane %v1351, 7
        %v1864 = vsel %vm1468, %v1862, %v1863
        %v1865 = vrot.slane %v1353, 7
        %v1866 = vsel %vm1468, %v1860, %v1865
        %v1867 = vrot.slane %v1355, 7
        %v1868 = vsel %vm1468, %v1863, %v1867
        %v1869 = vrot.slane %v1357, 7
        %v1870 = vrot.slane %v1359, 7
        %v1871 = vsel %vm1468, %v1869, %v1870
        %v1872 = vrot.slane %v1361, 7
        %v1873 = vsel %vm1468, %v1870, %v1872
        %v1874 = vrot.slane %v1363, 7
        %v1875 = vrot.slane %v1365, 7
        %v1876 = vsel %vm1468, %v1874, %v1875
        %v1877 = vrot.slane %v1367, 7
        %v1878 = vsel %vm1468, %v1875, %v1877
        %v1879 = vrot.slane %v1369, 7
        %v1880 = vrot.slane %v1371, 7
        %v1881 = vsel %vm1468, %v1879, %v1880
        %v1882 = vrot.slane %v1373, 7
        %v1883 = vsel %vm1468, %v1880, %v1882
        %v1884 = vrot.slane %v1375, 7
        %v1885 = vrot.slane %v1377, 7
        %v1886 = vsel %vm1468, %v1884, %v1885
        %v1887 = vrot.slane %v1379, 7
        %v1888 = vsel %vm1468, %v1885, %v1887
        %v1889 = vrot.slane %v1381, 7
        %v1890 = vrot.slane %v1383, 7
        %v1891 = vsel %vm1468, %v1889, %v1890
        %v1892 = vrot.slane %v1385, 7
        %v1893 = vsel %vm1468, %v1890, %v1892
        %v1894 = vrot.slane %v1387, 7
        %v1895 = vrot.slane %v1389, 7
        %v1896 = vsel %vm1468, %v1894, %v1895
        %v1897 = vrot.slane %v1391, 7
        %v1898 = vsel %vm1468, %v1895, %v1897
        %v1899 = vrot.slane %v1393, 7
        %v1900 = vrot.slane %v1395, 7
        %v1901 = vsel %vm1468, %v1899, %v1900
        %v1902 = vrot.slane %v1397, 7
        %v1903 = vsel %vm1468, %v1900, %v1902
        %v1904 = vrot.slane %v1399, 7
        %v1905 = vrot.slane %v1401, 7
        %v1906 = vsel %vm1468, %v1904, %v1905
        %v1907 = vrot.slane %v1403, 7
        %v1908 = vsel %vm1468, %v1905, %v1907
        %v1909 = vrot.slane %v1405, 7
        %v1910 = vrot.slane %v1407, 7
        %v1911 = vsel %vm1468, %v1909, %v1910
        %v1912 = vrot.slane %v1409, 7
        %v1913 = vsel %vm1468, %v1910, %v1912
        %v1914 = vrot.slane %v1411, 7
        %v1915 = vrot.slane %v1413, 7
        %v1916 = vsel %vm1468, %v1914, %v1915
        %v1917 = vrot.slane %v1415, 7
        %v1918 = vsel %vm1468, %v1915, %v1917
        %v1919 = vrot.slane %v1417, 7
        %v1920 = vrot.slane %v1419, 7
        %v1921 = vsel %vm1468, %v1919, %v1920
        %v1922 = vrot.slane %v1421, 7
        %v1923 = vsel %vm1468, %v1920, %v1922
        %v1924 = vrot.slane %v1423, 7
        %v1925 = vrot.slane %v1425, 7
        %v1926 = vsel %vm1468, %v1924, %v1925
        %v1927 = vrot.slane %v1427, 7
        %v1928 = vsel %vm1468, %v1925, %v1927
        %v1929 = vrot.slane %v1429, 7
        %v1930 = vrot.slane %v1431, 7
        %v1931 = vsel %vm1468, %v1929, %v1930
        %v1932 = vrot.slane %v1433, 7
        %v1933 = vsel %vm1468, %v1930, %v1932
        %v1934 = vrot.slane %v1435, 7
        %v1935 = vrot.slane %v1437, 7
        %v1936 = vsel %vm1468, %v1934, %v1935
        %v1937 = vrot.slane %v1439, 7
        %v1938 = vsel %vm1468, %v1935, %v1937
        %v1939 = vrot.slane %v1441, 7
        %v1940 = vrot.slane %v1443, 7
        %v1941 = vsel %vm1468, %v1939, %v1940
        %v1942 = vrot.slane %v1445, 7
        %v1943 = vsel %vm1468, %v1940, %v1942
        %v1944 = vrot.slane %v1447, 7
        %v1945 = vrot.slane %v1449, 7
        %v1946 = vsel %vm1468, %v1944, %v1945
        %v1947 = vrot.slane %v1451, 7
        %v1948 = vsel %vm1468, %v1945, %v1947
        %1949 = vrot.lane.b32.xlu0 %v1471, 1
        %v1950 = vpop.permute.xlu0 %1949
        %1951 = vrot.lane.b32.xlu0 %v1474, 1
        %v1952 = vpop.permute.xlu0 %1951
        %1953 = vrot.lane.b32.xlu0 %v1476, 1
        %v1954 = vpop.permute.xlu0 %1953
        %1955 = vrot.lane.b32.xlu0 %v1478, 1
        %v1956 = vpop.permute.xlu0 %1955
        %1957 = vrot.lane.b32.xlu0 %v1481, 1
        %v1958 = vpop.permute.xlu0 %1957
        %1959 = vrot.lane.b32.xlu0 %v1484, 1
        %v1960 = vpop.permute.xlu0 %1959
        %1961 = vrot.lane.b32.xlu0 %v1486, 1
        %v1962 = vpop.permute.xlu0 %1961
        %1963 = vrot.lane.b32.xlu0 %v1488, 1
        %v1964 = vpop.permute.xlu0 %1963
        %1965 = vrot.lane.b32.xlu0 %v1491, 1
        %v1966 = vpop.permute.xlu0 %1965
        %1967 = vrot.lane.b32.xlu0 %v1494, 1
        %v1968 = vpop.permute.xlu0 %1967
        %1969 = vrot.lane.b32.xlu0 %v1496, 1
        %v1970 = vpop.permute.xlu0 %1969
        %1971 = vrot.lane.b32.xlu0 %v1498, 1
        %v1972 = vpop.permute.xlu0 %1971
        %1973 = vrot.lane.b32.xlu0 %v1501, 1
        %v1974 = vpop.permute.xlu0 %1973
        %1975 = vrot.lane.b32.xlu0 %v1504, 1
        %v1976 = vpop.permute.xlu0 %1975
        %1977 = vrot.lane.b32.xlu0 %v1506, 1
        %v1978 = vpop.permute.xlu0 %1977
        %1979 = vrot.lane.b32.xlu0 %v1508, 1
        %v1980 = vpop.permute.xlu0 %1979
        %1981 = vrot.lane.b32.xlu0 %v1511, 1
        %v1982 = vpop.permute.xlu0 %1981
        %1983 = vrot.lane.b32.xlu0 %v1514, 1
        %v1984 = vpop.permute.xlu0 %1983
        %1985 = vrot.lane.b32.xlu0 %v1516, 1
        %v1986 = vpop.permute.xlu0 %1985
        %1987 = vrot.lane.b32.xlu0 %v1518, 1
        %v1988 = vpop.permute.xlu0 %1987
        %1989 = vrot.lane.b32.xlu0 %v1521, 1
        %v1990 = vpop.permute.xlu0 %1989
        %1991 = vrot.lane.b32.xlu0 %v1524, 1
        %v1992 = vpop.permute.xlu0 %1991
        %1993 = vrot.lane.b32.xlu0 %v1526, 1
        %v1994 = vpop.permute.xlu0 %1993
        %1995 = vrot.lane.b32.xlu0 %v1528, 1
        %v1996 = vpop.permute.xlu0 %1995
        %1997 = vrot.lane.b32.xlu0 %v1531, 1
        %v1998 = vpop.permute.xlu0 %1997
        %1999 = vrot.lane.b32.xlu0 %v1534, 1
        %v2000 = vpop.permute.xlu0 %1999
        %2001 = vrot.lane.b32.xlu0 %v1536, 1
        %v2002 = vpop.permute.xlu0 %2001
        %2003 = vrot.lane.b32.xlu0 %v1538, 1
        %v2004 = vpop.permute.xlu0 %2003
        %2005 = vrot.lane.b32.xlu0 %v1541, 1
        %v2006 = vpop.permute.xlu0 %2005
        %2007 = vrot.lane.b32.xlu0 %v1544, 1
        %v2008 = vpop.permute.xlu0 %2007
        %2009 = vrot.lane.b32.xlu0 %v1546, 1
        %v2010 = vpop.permute.xlu0 %2009
        %2011 = vrot.lane.b32.xlu0 %v1548, 1
        %v2012 = vpop.permute.xlu0 %2011
        %2013 = vrot.lane.b32.xlu0 %v1551, 1
        %v2014 = vpop.permute.xlu0 %2013
        %2015 = vrot.lane.b32.xlu0 %v1553, 1
        %v2016 = vpop.permute.xlu0 %2015
        %2017 = vrot.lane.b32.xlu0 %v1556, 1
        %v2018 = vpop.permute.xlu0 %2017
        %2019 = vrot.lane.b32.xlu0 %v1558, 1
        %v2020 = vpop.permute.xlu0 %2019
        %2021 = vrot.lane.b32.xlu0 %v1561, 1
        %v2022 = vpop.permute.xlu0 %2021
        %2023 = vrot.lane.b32.xlu0 %v1563, 1
        %v2024 = vpop.permute.xlu0 %2023
        %2025 = vrot.lane.b32.xlu0 %v1566, 1
        %v2026 = vpop.permute.xlu0 %2025
        %2027 = vrot.lane.b32.xlu0 %v1568, 1
        %v2028 = vpop.permute.xlu0 %2027
        %2029 = vrot.lane.b32.xlu0 %v1571, 1
        %v2030 = vpop.permute.xlu0 %2029
        %2031 = vrot.lane.b32.xlu0 %v1573, 1
        %v2032 = vpop.permute.xlu0 %2031
        %2033 = vrot.lane.b32.xlu0 %v1576, 1
        %v2034 = vpop.permute.xlu0 %2033
        %2035 = vrot.lane.b32.xlu0 %v1578, 1
        %v2036 = vpop.permute.xlu0 %2035
        %2037 = vrot.lane.b32.xlu0 %v1581, 1
        %v2038 = vpop.permute.xlu0 %2037
        %2039 = vrot.lane.b32.xlu0 %v1583, 1
        %v2040 = vpop.permute.xlu0 %2039
        %2041 = vrot.lane.b32.xlu0 %v1586, 1
        %v2042 = vpop.permute.xlu0 %2041
        %2043 = vrot.lane.b32.xlu0 %v1588, 1
        %v2044 = vpop.permute.xlu0 %2043
        %2045 = vrot.lane.b32.xlu0 %v1591, 1
        %v2046 = vpop.permute.xlu0 %2045
        %2047 = vrot.lane.b32.xlu0 %v1593, 1
        %v2048 = vpop.permute.xlu0 %2047
        %2049 = vrot.lane.b32.xlu0 %v1596, 1
        %v2050 = vpop.permute.xlu0 %2049
        %2051 = vrot.lane.b32.xlu0 %v1598, 1
        %v2052 = vpop.permute.xlu0 %2051
        %2053 = vrot.lane.b32.xlu0 %v1601, 1
        %v2054 = vpop.permute.xlu0 %2053
        %2055 = vrot.lane.b32.xlu0 %v1603, 1
        %v2056 = vpop.permute.xlu0 %2055
        %2057 = vrot.lane.b32.xlu0 %v1606, 1
        %v2058 = vpop.permute.xlu0 %2057
        %2059 = vrot.lane.b32.xlu0 %v1608, 1
        %v2060 = vpop.permute.xlu0 %2059
        %2061 = vrot.lane.b32.xlu0 %v1611, 1
        %v2062 = vpop.permute.xlu0 %2061
        %2063 = vrot.lane.b32.xlu0 %v1613, 1
        %v2064 = vpop.permute.xlu0 %2063
        %2065 = vrot.lane.b32.xlu0 %v1616, 1
        %v2066 = vpop.permute.xlu0 %2065
        %2067 = vrot.lane.b32.xlu0 %v1618, 1
        %v2068 = vpop.permute.xlu0 %2067
        %2069 = vrot.lane.b32.xlu0 %v1621, 1
        %v2070 = vpop.permute.xlu0 %2069
        %2071 = vrot.lane.b32.xlu0 %v1623, 1
        %v2072 = vpop.permute.xlu0 %2071
        %2073 = vrot.lane.b32.xlu0 %v1626, 1
        %v2074 = vpop.permute.xlu0 %2073
        %2075 = vrot.lane.b32.xlu0 %v1628, 1
        %v2076 = vpop.permute.xlu0 %2075
        %2077 = vrot.lane.b32.xlu0 %v1631, 1
        %v2078 = vpop.permute.xlu0 %2077
        %2079 = vrot.lane.b32.xlu0 %v1634, 1
        %v2080 = vpop.permute.xlu0 %2079
        %2081 = vrot.lane.b32.xlu0 %v1636, 1
        %v2082 = vpop.permute.xlu0 %2081
        %2083 = vrot.lane.b32.xlu0 %v1638, 1
        %v2084 = vpop.permute.xlu0 %2083
        %2085 = vrot.lane.b32.xlu0 %v1641, 1
        %v2086 = vpop.permute.xlu0 %2085
        %2087 = vrot.lane.b32.xlu0 %v1644, 1
        %v2088 = vpop.permute.xlu0 %2087
        %2089 = vrot.lane.b32.xlu0 %v1646, 1
        %v2090 = vpop.permute.xlu0 %2089
        %2091 = vrot.lane.b32.xlu0 %v1648, 1
        %v2092 = vpop.permute.xlu0 %2091
        %2093 = vrot.lane.b32.xlu0 %v1651, 1
        %v2094 = vpop.permute.xlu0 %2093
        %2095 = vrot.lane.b32.xlu0 %v1654, 1
        %v2096 = vpop.permute.xlu0 %2095
        %2097 = vrot.lane.b32.xlu0 %v1656, 1
        %v2098 = vpop.permute.xlu0 %2097
        %2099 = vrot.lane.b32.xlu0 %v1658, 1
        %v2100 = vpop.permute.xlu0 %2099
        %2101 = vrot.lane.b32.xlu0 %v1661, 1
        %v2102 = vpop.permute.xlu0 %2101
        %2103 = vrot.lane.b32.xlu0 %v1664, 1
        %v2104 = vpop.permute.xlu0 %2103
        %2105 = vrot.lane.b32.xlu0 %v1666, 1
        %v2106 = vpop.permute.xlu0 %2105
        %2107 = vrot.lane.b32.xlu0 %v1668, 1
        %v2108 = vpop.permute.xlu0 %2107
        %2109 = vrot.lane.b32.xlu0 %v1671, 1
        %v2110 = vpop.permute.xlu0 %2109
        %2111 = vrot.lane.b32.xlu0 %v1674, 1
        %v2112 = vpop.permute.xlu0 %2111
        %2113 = vrot.lane.b32.xlu0 %v1676, 1
        %v2114 = vpop.permute.xlu0 %2113
        %2115 = vrot.lane.b32.xlu0 %v1678, 1
        %v2116 = vpop.permute.xlu0 %2115
        %2117 = vrot.lane.b32.xlu0 %v1681, 1
        %v2118 = vpop.permute.xlu0 %2117
        %2119 = vrot.lane.b32.xlu0 %v1684, 1
        %v2120 = vpop.permute.xlu0 %2119
        %2121 = vrot.lane.b32.xlu0 %v1686, 1
        %v2122 = vpop.permute.xlu0 %2121
        %2123 = vrot.lane.b32.xlu0 %v1688, 1
        %v2124 = vpop.permute.xlu0 %2123
        %2125 = vrot.lane.b32.xlu0 %v1691, 1
        %v2126 = vpop.permute.xlu0 %2125
        %2127 = vrot.lane.b32.xlu0 %v1694, 1
        %v2128 = vpop.permute.xlu0 %2127
        %2129 = vrot.lane.b32.xlu0 %v1696, 1
        %v2130 = vpop.permute.xlu0 %2129
        %2131 = vrot.lane.b32.xlu0 %v1698, 1
        %v2132 = vpop.permute.xlu0 %2131
        %2133 = vrot.lane.b32.xlu0 %v1701, 1
        %v2134 = vpop.permute.xlu0 %2133
        %2135 = vrot.lane.b32.xlu0 %v1704, 1
        %v2136 = vpop.permute.xlu0 %2135
        %2137 = vrot.lane.b32.xlu0 %v1706, 1
        %v2138 = vpop.permute.xlu0 %2137
        %2139 = vrot.lane.b32.xlu0 %v1708, 1
        %v2140 = vpop.permute.xlu0 %2139
        %2141 = vrot.lane.b32.xlu0 %v1711, 1
        %v2142 = vpop.permute.xlu0 %2141
        %2143 = vrot.lane.b32.xlu0 %v1713, 1
        %v2144 = vpop.permute.xlu0 %2143
        %2145 = vrot.lane.b32.xlu0 %v1716, 1
        %v2146 = vpop.permute.xlu0 %2145
        %2147 = vrot.lane.b32.xlu0 %v1718, 1
        %v2148 = vpop.permute.xlu0 %2147
        %2149 = vrot.lane.b32.xlu0 %v1721, 1
        %v2150 = vpop.permute.xlu0 %2149
        %2151 = vrot.lane.b32.xlu0 %v1723, 1
        %v2152 = vpop.permute.xlu0 %2151
        %2153 = vrot.lane.b32.xlu0 %v1726, 1
        %v2154 = vpop.permute.xlu0 %2153
        %2155 = vrot.lane.b32.xlu0 %v1728, 1
        %v2156 = vpop.permute.xlu0 %2155
        %2157 = vrot.lane.b32.xlu0 %v1731, 1
        %v2158 = vpop.permute.xlu0 %2157
        %2159 = vrot.lane.b32.xlu0 %v1733, 1
        %v2160 = vpop.permute.xlu0 %2159
        %2161 = vrot.lane.b32.xlu0 %v1736, 1
        %v2162 = vpop.permute.xlu0 %2161
        %2163 = vrot.lane.b32.xlu0 %v1738, 1
        %v2164 = vpop.permute.xlu0 %2163
        %2165 = vrot.lane.b32.xlu0 %v1741, 1
        %v2166 = vpop.permute.xlu0 %2165
        %2167 = vrot.lane.b32.xlu0 %v1743, 1
        %v2168 = vpop.permute.xlu0 %2167
        %2169 = vrot.lane.b32.xlu0 %v1746, 1
        %v2170 = vpop.permute.xlu0 %2169
        %2171 = vrot.lane.b32.xlu0 %v1748, 1
        %v2172 = vpop.permute.xlu0 %2171
        %2173 = vrot.lane.b32.xlu0 %v1751, 1
        %v2174 = vpop.permute.xlu0 %2173
        %2175 = vrot.lane.b32.xlu0 %v1753, 1
        %v2176 = vpop.permute.xlu0 %2175
        %2177 = vrot.lane.b32.xlu0 %v1756, 1
        %v2178 = vpop.permute.xlu0 %2177
        %2179 = vrot.lane.b32.xlu0 %v1758, 1
        %v2180 = vpop.permute.xlu0 %2179
        %2181 = vrot.lane.b32.xlu0 %v1761, 1
        %v2182 = vpop.permute.xlu0 %2181
        %2183 = vrot.lane.b32.xlu0 %v1763, 1
        %v2184 = vpop.permute.xlu0 %2183
        %2185 = vrot.lane.b32.xlu0 %v1766, 1
        %v2186 = vpop.permute.xlu0 %2185
        %2187 = vrot.lane.b32.xlu0 %v1768, 1
        %v2188 = vpop.permute.xlu0 %2187
        %2189 = vrot.lane.b32.xlu0 %v1771, 1
        %v2190 = vpop.permute.xlu0 %2189
        %2191 = vrot.lane.b32.xlu0 %v1773, 1
        %v2192 = vpop.permute.xlu0 %2191
        %2193 = vrot.lane.b32.xlu0 %v1776, 1
        %v2194 = vpop.permute.xlu0 %2193
        %2195 = vrot.lane.b32.xlu0 %v1778, 1
        %v2196 = vpop.permute.xlu0 %2195
        %2197 = vrot.lane.b32.xlu0 %v1781, 1
        %v2198 = vpop.permute.xlu0 %2197
        %2199 = vrot.lane.b32.xlu0 %v1783, 1
        %v2200 = vpop.permute.xlu0 %2199
        %2201 = vrot.lane.b32.xlu0 %v1786, 1
        %v2202 = vpop.permute.xlu0 %2201
        %2203 = vrot.lane.b32.xlu0 %v1788, 1
        %v2204 = vpop.permute.xlu0 %2203
        %2205 = vrot.lane.b32.xlu0 %v1791, 1
        %v2206 = vpop.permute.xlu0 %2205
        %2207 = vrot.lane.b32.xlu0 %v1794, 1
        %v2208 = vpop.permute.xlu0 %2207
        %2209 = vrot.lane.b32.xlu0 %v1796, 1
        %v2210 = vpop.permute.xlu0 %2209
        %2211 = vrot.lane.b32.xlu0 %v1798, 1
        %v2212 = vpop.permute.xlu0 %2211
        %2213 = vrot.lane.b32.xlu0 %v1801, 1
        %v2214 = vpop.permute.xlu0 %2213
        %2215 = vrot.lane.b32.xlu0 %v1804, 1
        %v2216 = vpop.permute.xlu0 %2215
        %2217 = vrot.lane.b32.xlu0 %v1806, 1
        %v2218 = vpop.permute.xlu0 %2217
        %2219 = vrot.lane.b32.xlu0 %v1808, 1
        %v2220 = vpop.permute.xlu0 %2219
        %2221 = vrot.lane.b32.xlu0 %v1811, 1
        %v2222 = vpop.permute.xlu0 %2221
        %2223 = vrot.lane.b32.xlu0 %v1814, 1
        %v2224 = vpop.permute.xlu0 %2223
        %2225 = vrot.lane.b32.xlu0 %v1816, 1
        %v2226 = vpop.permute.xlu0 %2225
        %2227 = vrot.lane.b32.xlu0 %v1818, 1
        %v2228 = vpop.permute.xlu0 %2227
        %2229 = vrot.lane.b32.xlu0 %v1821, 1
        %v2230 = vpop.permute.xlu0 %2229
        %2231 = vrot.lane.b32.xlu0 %v1824, 1
        %v2232 = vpop.permute.xlu0 %2231
        %2233 = vrot.lane.b32.xlu0 %v1826, 1
        %v2234 = vpop.permute.xlu0 %2233
        %2235 = vrot.lane.b32.xlu0 %v1828, 1
        %v2236 = vpop.permute.xlu0 %2235
        %2237 = vrot.lane.b32.xlu0 %v1831, 1
        %v2238 = vpop.permute.xlu0 %2237
        %2239 = vrot.lane.b32.xlu0 %v1834, 1
        %v2240 = vpop.permute.xlu0 %2239
        %2241 = vrot.lane.b32.xlu0 %v1836, 1
        %v2242 = vpop.permute.xlu0 %2241
        %2243 = vrot.lane.b32.xlu0 %v1838, 1
        %v2244 = vpop.permute.xlu0 %2243
        %2245 = vrot.lane.b32.xlu0 %v1841, 1
        %v2246 = vpop.permute.xlu0 %2245
        %2247 = vrot.lane.b32.xlu0 %v1844, 1
        %v2248 = vpop.permute.xlu0 %2247
        %2249 = vrot.lane.b32.xlu0 %v1846, 1
        %v2250 = vpop.permute.xlu0 %2249
        %2251 = vrot.lane.b32.xlu0 %v1848, 1
        %v2252 = vpop.permute.xlu0 %2251
        %2253 = vrot.lane.b32.xlu0 %v1851, 1
        %v2254 = vpop.permute.xlu0 %2253
        %2255 = vrot.lane.b32.xlu0 %v1854, 1
        %v2256 = vpop.permute.xlu0 %2255
        %2257 = vrot.lane.b32.xlu0 %v1856, 1
        %v2258 = vpop.permute.xlu0 %2257
        %2259 = vrot.lane.b32.xlu0 %v1858, 1
        %v2260 = vpop.permute.xlu0 %2259
        %2261 = vrot.lane.b32.xlu0 %v1861, 1
        %v2262 = vpop.permute.xlu0 %2261
        %2263 = vrot.lane.b32.xlu0 %v1864, 1
        %v2264 = vpop.permute.xlu0 %2263
        %2265 = vrot.lane.b32.xlu0 %v1866, 1
        %v2266 = vpop.permute.xlu0 %2265
        %2267 = vrot.lane.b32.xlu0 %v1868, 1
        %v2268 = vpop.permute.xlu0 %2267
        %2269 = vrot.lane.b32.xlu0 %v1871, 1
        %v2270 = vpop.permute.xlu0 %2269
        %2271 = vrot.lane.b32.xlu0 %v1873, 1
        %v2272 = vpop.permute.xlu0 %2271
        %2273 = vrot.lane.b32.xlu0 %v1876, 1
        %v2274 = vpop.permute.xlu0 %2273
        %2275 = vrot.lane.b32.xlu0 %v1878, 1
        %v2276 = vpop.permute.xlu0 %2275
        %2277 = vrot.lane.b32.xlu0 %v1881, 1
        %v2278 = vpop.permute.xlu0 %2277
        %2279 = vrot.lane.b32.xlu0 %v1883, 1
        %v2280 = vpop.permute.xlu0 %2279
        %2281 = vrot.lane.b32.xlu0 %v1886, 1
        %v2282 = vpop.permute.xlu0 %2281
        %2283 = vrot.lane.b32.xlu0 %v1888, 1
        %v2284 = vpop.permute.xlu0 %2283
        %2285 = vrot.lane.b32.xlu0 %v1891, 1
        %v2286 = vpop.permute.xlu0 %2285
        %2287 = vrot.lane.b32.xlu0 %v1893, 1
        %v2288 = vpop.permute.xlu0 %2287
        %2289 = vrot.lane.b32.xlu0 %v1896, 1
        %v2290 = vpop.permute.xlu0 %2289
        %2291 = vrot.lane.b32.xlu0 %v1898, 1
        %v2292 = vpop.permute.xlu0 %2291
        %2293 = vrot.lane.b32.xlu0 %v1901, 1
        %v2294 = vpop.permute.xlu0 %2293
        %2295 = vrot.lane.b32.xlu0 %v1903, 1
        %v2296 = vpop.permute.xlu0 %2295
        %2297 = vrot.lane.b32.xlu0 %v1906, 1
        %v2298 = vpop.permute.xlu0 %2297
        %2299 = vrot.lane.b32.xlu0 %v1908, 1
        %v2300 = vpop.permute.xlu0 %2299
        %2301 = vrot.lane.b32.xlu0 %v1911, 1
        %v2302 = vpop.permute.xlu0 %2301
        %2303 = vrot.lane.b32.xlu0 %v1913, 1
        %v2304 = vpop.permute.xlu0 %2303
        %2305 = vrot.lane.b32.xlu0 %v1916, 1
        %v2306 = vpop.permute.xlu0 %2305
        %2307 = vrot.lane.b32.xlu0 %v1918, 1
        %v2308 = vpop.permute.xlu0 %2307
        %2309 = vrot.lane.b32.xlu0 %v1921, 1
        %v2310 = vpop.permute.xlu0 %2309
        %2311 = vrot.lane.b32.xlu0 %v1923, 1
        %v2312 = vpop.permute.xlu0 %2311
        %2313 = vrot.lane.b32.xlu0 %v1926, 1
        %v2314 = vpop.permute.xlu0 %2313
        %2315 = vrot.lane.b32.xlu0 %v1928, 1
        %v2316 = vpop.permute.xlu0 %2315
        %2317 = vrot.lane.b32.xlu0 %v1931, 1
        %v2318 = vpop.permute.xlu0 %2317
        %2319 = vrot.lane.b32.xlu0 %v1933, 1
        %v2320 = vpop.permute.xlu0 %2319
        %2321 = vrot.lane.b32.xlu0 %v1936, 1
        %v2322 = vpop.permute.xlu0 %2321
        %2323 = vrot.lane.b32.xlu0 %v1938, 1
        %v2324 = vpop.permute.xlu0 %2323
        %2325 = vrot.lane.b32.xlu0 %v1941, 1
        %v2326 = vpop.permute.xlu0 %2325
        %2327 = vrot.lane.b32.xlu0 %v1943, 1
        %v2328 = vpop.permute.xlu0 %2327
        %2329 = vrot.lane.b32.xlu0 %v1946, 1
        %v2330 = vpop.permute.xlu0 %2329
        %2331 = vrot.lane.b32.xlu0 %v1948, 1
        %v2332 = vpop.permute.xlu0 %2331
        %vm2333 = vcmask 7168
        %v2334 = vsel %vm2333, %v1950, %v1952
        %v2335 = vsel %vm2333, %v1954, %v1956
        %v2336 = vsel %vm2333, %v1958, %v1960
        %v2337 = vsel %vm2333, %v1962, %v1964
        %v2338 = vsel %vm2333, %v1966, %v1968
        %v2339 = vsel %vm2333, %v1970, %v1972
        %v2340 = vsel %vm2333, %v1974, %v1976
        %v2341 = vsel %vm2333, %v1978, %v1980
        %v2342 = vsel %vm2333, %v1982, %v1984
        %v2343 = vsel %vm2333, %v1986, %v1988
        %v2344 = vsel %vm2333, %v1990, %v1992
        %v2345 = vsel %vm2333, %v1994, %v1996
        %v2346 = vsel %vm2333, %v1998, %v2000
        %v2347 = vsel %vm2333, %v2002, %v2004
        %v2348 = vsel %vm2333, %v2006, %v2008
        %v2349 = vsel %vm2333, %v2010, %v2012
        %v2350 = vsel %vm2333, %v2078, %v2080
        %v2351 = vsel %vm2333, %v2082, %v2084
        %v2352 = vsel %vm2333, %v2086, %v2088
        %v2353 = vsel %vm2333, %v2090, %v2092
        %v2354 = vsel %vm2333, %v2094, %v2096
        %v2355 = vsel %vm2333, %v2098, %v2100
        %v2356 = vsel %vm2333, %v2102, %v2104
        %v2357 = vsel %vm2333, %v2106, %v2108
        %v2358 = vsel %vm2333, %v2110, %v2112
        %v2359 = vsel %vm2333, %v2114, %v2116
        %v2360 = vsel %vm2333, %v2118, %v2120
        %v2361 = vsel %vm2333, %v2122, %v2124
        %v2362 = vsel %vm2333, %v2126, %v2128
        %v2363 = vsel %vm2333, %v2130, %v2132
        %v2364 = vsel %vm2333, %v2134, %v2136
        %v2365 = vsel %vm2333, %v2138, %v2140
        %v2366 = vsel %vm2333, %v2206, %v2208
        %v2367 = vsel %vm2333, %v2210, %v2212
        %v2368 = vsel %vm2333, %v2214, %v2216
        %v2369 = vsel %vm2333, %v2218, %v2220
        %v2370 = vsel %vm2333, %v2222, %v2224
        %v2371 = vsel %vm2333, %v2226, %v2228
        %v2372 = vsel %vm2333, %v2230, %v2232
        %v2373 = vsel %vm2333, %v2234, %v2236
        %v2374 = vsel %vm2333, %v2238, %v2240
        %v2375 = vsel %vm2333, %v2242, %v2244
        %v2376 = vsel %vm2333, %v2246, %v2248
        %v2377 = vsel %vm2333, %v2250, %v2252
        %v2378 = vsel %vm2333, %v2254, %v2256
        %v2379 = vsel %vm2333, %v2258, %v2260
        %v2380 = vsel %vm2333, %v2262, %v2264
        %v2381 = vsel %vm2333, %v2266, %v2268
        %v2526 = vrot.slane %v2338, 4
        %v2527 = vsel %vm617, %v2526, %v2334
        %v2528 = vrot.slane %v2334, 4
        %v2529 = vsel %vm617, %v2338, %v2528
        %v2531 = vunpack.c.l.s4 1983009808
        %v2532 = vunpack.c.0.s8 %v2531
        %v2533 = vperm.slane %v2527, %v2532
        %v2535 = vunpack.c.l.s4 1983009808
        %v2536 = vunpack.c.0.s8 %v2535
        %v2537 = vperm.slane %v2529, %v2536
        %v2538 = vrot.slane %v2340, 4
        %v2539 = vsel %vm617, %v2538, %v2336
        %v2540 = vrot.slane %v2336, 4
        %v2541 = vsel %vm617, %v2340, %v2540
        %v2543 = vunpack.c.l.s4 1983009808
        %v2544 = vunpack.c.0.s8 %v2543
        %v2545 = vperm.slane %v2539, %v2544
        %v2547 = vunpack.c.l.s4 1983009808
        %v2548 = vunpack.c.0.s8 %v2547
        %v2549 = vperm.slane %v2541, %v2548
        %v2550 = vrot.slane %v2346, 4
        %v2551 = vsel %vm617, %v2550, %v2342
        %v2552 = vrot.slane %v2342, 4
        %v2553 = vsel %vm617, %v2346, %v2552
        %v2555 = vunpack.c.l.s4 1983009808
        %v2556 = vunpack.c.0.s8 %v2555
        %v2557 = vperm.slane %v2551, %v2556
        %v2559 = vunpack.c.l.s4 1983009808
        %v2560 = vunpack.c.0.s8 %v2559
        %v2561 = vperm.slane %v2553, %v2560
        %v2562 = vrot.slane %v2348, 4
        %v2563 = vsel %vm617, %v2562, %v2344
        %v2564 = vrot.slane %v2344, 4
        %v2565 = vsel %vm617, %v2348, %v2564
        %v2567 = vunpack.c.l.s4 1983009808
        %v2568 = vunpack.c.0.s8 %v2567
        %v2569 = vperm.slane %v2563, %v2568
        %v2571 = vunpack.c.l.s4 1983009808
        %v2572 = vunpack.c.0.s8 %v2571
        %v2573 = vperm.slane %v2565, %v2572
        %v2574 = vrot.slane %v2545, 4
        %v2575 = vsel %vm617, %v2574, %v2533
        %v2576 = vrot.slane %v2533, 4
        %v2577 = vsel %vm617, %v2545, %v2576
        %v2579 = vunpack.c.l.s4 1934713408
        %v2580 = vunpack.c.0.s8 %v2579
        %v2581 = vperm.slane %v2575, %v2580
        %v2583 = vunpack.c.l.s4 1934713408
        %v2584 = vunpack.c.0.s8 %v2583
        %v2585 = vperm.slane %v2577, %v2584
        %v2586 = vrot.slane %v2549, 4
        %v2587 = vsel %vm617, %v2586, %v2537
        %v2588 = vrot.slane %v2537, 4
        %v2589 = vsel %vm617, %v2549, %v2588
        %v2591 = vunpack.c.l.s4 1934713408
        %v2592 = vunpack.c.0.s8 %v2591
        %v2593 = vperm.slane %v2587, %v2592
        %v2595 = vunpack.c.l.s4 1934713408
        %v2596 = vunpack.c.0.s8 %v2595
        %v2597 = vperm.slane %v2589, %v2596
        %v2598 = vrot.slane %v2569, 4
        %v2599 = vsel %vm617, %v2598, %v2557
        %v2600 = vrot.slane %v2557, 4
        %v2601 = vsel %vm617, %v2569, %v2600
        %v2603 = vunpack.c.l.s4 1934713408
        %v2604 = vunpack.c.0.s8 %v2603
        %v2605 = vperm.slane %v2599, %v2604
        %v2607 = vunpack.c.l.s4 1934713408
        %v2608 = vunpack.c.0.s8 %v2607
        %v2609 = vperm.slane %v2601, %v2608
        %v2610 = vrot.slane %v2573, 4
        %v2611 = vsel %vm617, %v2610, %v2561
        %v2612 = vrot.slane %v2561, 4
        %v2613 = vsel %vm617, %v2573, %v2612
        %v2615 = vunpack.c.l.s4 1934713408
        %v2616 = vunpack.c.0.s8 %v2615
        %v2617 = vperm.slane %v2611, %v2616
        %v2619 = vunpack.c.l.s4 1934713408
        %v2620 = vunpack.c.0.s8 %v2619
        %v2621 = vperm.slane %v2613, %v2620
        %v2622 = vrot.slane %v2605, 4
        %v2623 = vsel %vm617, %v2622, %v2581
        %v2624 = vrot.slane %v2581, 4
        %v2625 = vsel %vm617, %v2605, %v2624
        %v2626 = vrot.slane %v2609, 4
        %v2627 = vsel %vm617, %v2626, %v2585
        %v2628 = vrot.slane %v2585, 4
        %v2629 = vsel %vm617, %v2609, %v2628
        %v2630 = vrot.slane %v2617, 4
        %v2631 = vsel %vm617, %v2630, %v2593
        %v2632 = vrot.slane %v2593, 4
        %v2633 = vsel %vm617, %v2617, %v2632
        %v2634 = vrot.slane %v2621, 4
        %v2635 = vsel %vm617, %v2634, %v2597
        %v2636 = vrot.slane %v2597, 4
        %v2637 = vsel %vm617, %v2621, %v2636
        %v2638 = vrot.slane %v2022, 4
        %v2639 = vsel %vm617, %v2638, %v2014
        %v2640 = vrot.slane %v2014, 4
        %v2641 = vsel %vm617, %v2022, %v2640
        %v2643 = vunpack.c.l.s4 1983009808
        %v2644 = vunpack.c.0.s8 %v2643
        %v2645 = vperm.slane %v2639, %v2644
        %v2647 = vunpack.c.l.s4 1983009808
        %v2648 = vunpack.c.0.s8 %v2647
        %v2649 = vperm.slane %v2641, %v2648
        %v2650 = vrot.slane %v2026, 4
        %v2651 = vsel %vm617, %v2650, %v2018
        %v2652 = vrot.slane %v2018, 4
        %v2653 = vsel %vm617, %v2026, %v2652
        %v2655 = vunpack.c.l.s4 1983009808
        %v2656 = vunpack.c.0.s8 %v2655
        %v2657 = vperm.slane %v2651, %v2656
        %v2659 = vunpack.c.l.s4 1983009808
        %v2660 = vunpack.c.0.s8 %v2659
        %v2661 = vperm.slane %v2653, %v2660
        %v2662 = vrot.slane %v2038, 4
        %v2663 = vsel %vm617, %v2662, %v2030
        %v2664 = vrot.slane %v2030, 4
        %v2665 = vsel %vm617, %v2038, %v2664
        %v2667 = vunpack.c.l.s4 1983009808
        %v2668 = vunpack.c.0.s8 %v2667
        %v2669 = vperm.slane %v2663, %v2668
        %v2671 = vunpack.c.l.s4 1983009808
        %v2672 = vunpack.c.0.s8 %v2671
        %v2673 = vperm.slane %v2665, %v2672
        %v2674 = vrot.slane %v2042, 4
        %v2675 = vsel %vm617, %v2674, %v2034
        %v2676 = vrot.slane %v2034, 4
        %v2677 = vsel %vm617, %v2042, %v2676
        %v2679 = vunpack.c.l.s4 1983009808
        %v2680 = vunpack.c.0.s8 %v2679
        %v2681 = vperm.slane %v2675, %v2680
        %v2683 = vunpack.c.l.s4 1983009808
        %v2684 = vunpack.c.0.s8 %v2683
        %v2685 = vperm.slane %v2677, %v2684
        %v2686 = vrot.slane %v2657, 4
        %v2687 = vsel %vm617, %v2686, %v2645
        %v2688 = vrot.slane %v2645, 4
        %v2689 = vsel %vm617, %v2657, %v2688
        %v2691 = vunpack.c.l.s4 1934713408
        %v2692 = vunpack.c.0.s8 %v2691
        %v2693 = vperm.slane %v2687, %v2692
        %v2695 = vunpack.c.l.s4 1934713408
        %v2696 = vunpack.c.0.s8 %v2695
        %v2697 = vperm.slane %v2689, %v2696
        %v2698 = vrot.slane %v2661, 4
        %v2699 = vsel %vm617, %v2698, %v2649
        %v2700 = vrot.slane %v2649, 4
        %v2701 = vsel %vm617, %v2661, %v2700
        %v2703 = vunpack.c.l.s4 1934713408
        %v2704 = vunpack.c.0.s8 %v2703
        %v2705 = vperm.slane %v2699, %v2704
        %v2707 = vunpack.c.l.s4 1934713408
        %v2708 = vunpack.c.0.s8 %v2707
        %v2709 = vperm.slane %v2701, %v2708
        %v2710 = vrot.slane %v2681, 4
        %v2711 = vsel %vm617, %v2710, %v2669
        %v2712 = vrot.slane %v2669, 4
        %v2713 = vsel %vm617, %v2681, %v2712
        %v2715 = vunpack.c.l.s4 1934713408
        %v2716 = vunpack.c.0.s8 %v2715
        %v2717 = vperm.slane %v2711, %v2716
        %v2719 = vunpack.c.l.s4 1934713408
        %v2720 = vunpack.c.0.s8 %v2719
        %v2721 = vperm.slane %v2713, %v2720
        %v2722 = vrot.slane %v2685, 4
        %v2723 = vsel %vm617, %v2722, %v2673
        %v2724 = vrot.slane %v2673, 4
        %v2725 = vsel %vm617, %v2685, %v2724
        %v2727 = vunpack.c.l.s4 1934713408
        %v2728 = vunpack.c.0.s8 %v2727
        %v2729 = vperm.slane %v2723, %v2728
        %v2731 = vunpack.c.l.s4 1934713408
        %v2732 = vunpack.c.0.s8 %v2731
        %v2733 = vperm.slane %v2725, %v2732
        %v2734 = vrot.slane %v2717, 4
        %v2735 = vsel %vm617, %v2734, %v2693
        %v2736 = vrot.slane %v2693, 4
        %v2737 = vsel %vm617, %v2717, %v2736
        %v2738 = vrot.slane %v2721, 4
        %v2739 = vsel %vm617, %v2738, %v2697
        %v2740 = vrot.slane %v2697, 4
        %v2741 = vsel %vm617, %v2721, %v2740
        %v2742 = vrot.slane %v2729, 4
        %v2743 = vsel %vm617, %v2742, %v2705
        %v2744 = vrot.slane %v2705, 4
        %v2745 = vsel %vm617, %v2729, %v2744
        %v2746 = vrot.slane %v2733, 4
        %v2747 = vsel %vm617, %v2746, %v2709
        %v2748 = vrot.slane %v2709, 4
        %v2749 = vsel %vm617, %v2733, %v2748
        %v2750 = vrot.slane %v2054, 4
        %v2751 = vsel %vm617, %v2750, %v2046
        %v2752 = vrot.slane %v2046, 4
        %v2753 = vsel %vm617, %v2054, %v2752
        %v2755 = vunpack.c.l.s4 1983009808
        %v2756 = vunpack.c.0.s8 %v2755
        %v2757 = vperm.slane %v2751, %v2756
        %v2759 = vunpack.c.l.s4 1983009808
        %v2760 = vunpack.c.0.s8 %v2759
        %v2761 = vperm.slane %v2753, %v2760
        %v2762 = vrot.slane %v2058, 4
        %v2763 = vsel %vm617, %v2762, %v2050
        %v2764 = vrot.slane %v2050, 4
        %v2765 = vsel %vm617, %v2058, %v2764
        %v2767 = vunpack.c.l.s4 1983009808
        %v2768 = vunpack.c.0.s8 %v2767
        %v2769 = vperm.slane %v2763, %v2768
        %v2771 = vunpack.c.l.s4 1983009808
        %v2772 = vunpack.c.0.s8 %v2771
        %v2773 = vperm.slane %v2765, %v2772
        %v2774 = vrot.slane %v2070, 4
        %v2775 = vsel %vm617, %v2774, %v2062
        %v2776 = vrot.slane %v2062, 4
        %v2777 = vsel %vm617, %v2070, %v2776
        %v2779 = vunpack.c.l.s4 1983009808
        %v2780 = vunpack.c.0.s8 %v2779
        %v2781 = vperm.slane %v2775, %v2780
        %v2783 = vunpack.c.l.s4 1983009808
        %v2784 = vunpack.c.0.s8 %v2783
        %v2785 = vperm.slane %v2777, %v2784
        %v2786 = vrot.slane %v2074, 4
        %v2787 = vsel %vm617, %v2786, %v2066
        %v2788 = vrot.slane %v2066, 4
        %v2789 = vsel %vm617, %v2074, %v2788
        %v2791 = vunpack.c.l.s4 1983009808
        %v2792 = vunpack.c.0.s8 %v2791
        %v2793 = vperm.slane %v2787, %v2792
        %v2795 = vunpack.c.l.s4 1983009808
        %v2796 = vunpack.c.0.s8 %v2795
        %v2797 = vperm.slane %v2789, %v2796
        %v2798 = vrot.slane %v2769, 4
        %v2799 = vsel %vm617, %v2798, %v2757
        %v2800 = vrot.slane %v2757, 4
        %v2801 = vsel %vm617, %v2769, %v2800
        %v2803 = vunpack.c.l.s4 1934713408
        %v2804 = vunpack.c.0.s8 %v2803
        %v2805 = vperm.slane %v2799, %v2804
        %v2807 = vunpack.c.l.s4 1934713408
        %v2808 = vunpack.c.0.s8 %v2807
        %v2809 = vperm.slane %v2801, %v2808
        %v2810 = vrot.slane %v2773, 4
        %v2811 = vsel %vm617, %v2810, %v2761
        %v2812 = vrot.slane %v2761, 4
        %v2813 = vsel %vm617, %v2773, %v2812
        %v2815 = vunpack.c.l.s4 1934713408
        %v2816 = vunpack.c.0.s8 %v2815
        %v2817 = vperm.slane %v2811, %v2816
        %v2819 = vunpack.c.l.s4 1934713408
        %v2820 = vunpack.c.0.s8 %v2819
        %v2821 = vperm.slane %v2813, %v2820
        %v2822 = vrot.slane %v2793, 4
        %v2823 = vsel %vm617, %v2822, %v2781
        %v2824 = vrot.slane %v2781, 4
        %v2825 = vsel %vm617, %v2793, %v2824
        %v2827 = vunpack.c.l.s4 1934713408
        %v2828 = vunpack.c.0.s8 %v2827
        %v2829 = vperm.slane %v2823, %v2828
        %v2831 = vunpack.c.l.s4 1934713408
        %v2832 = vunpack.c.0.s8 %v2831
        %v2833 = vperm.slane %v2825, %v2832
        %v2834 = vrot.slane %v2797, 4
        %v2835 = vsel %vm617, %v2834, %v2785
        %v2836 = vrot.slane %v2785, 4
        %v2837 = vsel %vm617, %v2797, %v2836
        %v2839 = vunpack.c.l.s4 1934713408
        %v2840 = vunpack.c.0.s8 %v2839
        %v2841 = vperm.slane %v2835, %v2840
        %v2843 = vunpack.c.l.s4 1934713408
        %v2844 = vunpack.c.0.s8 %v2843
        %v2845 = vperm.slane %v2837, %v2844
        %v2846 = vrot.slane %v2829, 4
        %v2847 = vsel %vm617, %v2846, %v2805
        %v2848 = vrot.slane %v2805, 4
        %v2849 = vsel %vm617, %v2829, %v2848
        %v2850 = vrot.slane %v2833, 4
        %v2851 = vsel %vm617, %v2850, %v2809
        %v2852 = vrot.slane %v2809, 4
        %v2853 = vsel %vm617, %v2833, %v2852
        %v2854 = vrot.slane %v2841, 4
        %v2855 = vsel %vm617, %v2854, %v2817
        %v2856 = vrot.slane %v2817, 4
        %v2857 = vsel %vm617, %v2841, %v2856
        %v2858 = vrot.slane %v2845, 4
        %v2859 = vsel %vm617, %v2858, %v2821
        %v2860 = vrot.slane %v2821, 4
        %v2861 = vsel %vm617, %v2845, %v2860
        %v2862 = vrot.slane %v2354, 4
        %v2863 = vsel %vm617, %v2862, %v2350
        %v2864 = vrot.slane %v2350, 4
        %v2865 = vsel %vm617, %v2354, %v2864
        %v2867 = vunpack.c.l.s4 1983009808
        %v2868 = vunpack.c.0.s8 %v2867
        %v2869 = vperm.slane %v2863, %v2868
        %v2871 = vunpack.c.l.s4 1983009808
        %v2872 = vunpack.c.0.s8 %v2871
        %v2873 = vperm.slane %v2865, %v2872
        %v2874 = vrot.slane %v2356, 4
        %v2875 = vsel %vm617, %v2874, %v2352
        %v2876 = vrot.slane %v2352, 4
        %v2877 = vsel %vm617, %v2356, %v2876
        %v2879 = vunpack.c.l.s4 1983009808
        %v2880 = vunpack.c.0.s8 %v2879
        %v2881 = vperm.slane %v2875, %v2880
        %v2883 = vunpack.c.l.s4 1983009808
        %v2884 = vunpack.c.0.s8 %v2883
        %v2885 = vperm.slane %v2877, %v2884
        %v2886 = vrot.slane %v2362, 4
        %v2887 = vsel %vm617, %v2886, %v2358
        %v2888 = vrot.slane %v2358, 4
        %v2889 = vsel %vm617, %v2362, %v2888
        %v2891 = vunpack.c.l.s4 1983009808
        %v2892 = vunpack.c.0.s8 %v2891
        %v2893 = vperm.slane %v2887, %v2892
        %v2895 = vunpack.c.l.s4 1983009808
        %v2896 = vunpack.c.0.s8 %v2895
        %v2897 = vperm.slane %v2889, %v2896
        %v2898 = vrot.slane %v2364, 4
        %v2899 = vsel %vm617, %v2898, %v2360
        %v2900 = vrot.slane %v2360, 4
        %v2901 = vsel %vm617, %v2364, %v2900
        %v2903 = vunpack.c.l.s4 1983009808
        %v2904 = vunpack.c.0.s8 %v2903
        %v2905 = vperm.slane %v2899, %v2904
        %v2907 = vunpack.c.l.s4 1983009808
        %v2908 = vunpack.c.0.s8 %v2907
        %v2909 = vperm.slane %v2901, %v2908
        %v2910 = vrot.slane %v2881, 4
        %v2911 = vsel %vm617, %v2910, %v2869
        %v2912 = vrot.slane %v2869, 4
        %v2913 = vsel %vm617, %v2881, %v2912
        %v2915 = vunpack.c.l.s4 1934713408
        %v2916 = vunpack.c.0.s8 %v2915
        %v2917 = vperm.slane %v2911, %v2916
        %v2919 = vunpack.c.l.s4 1934713408
        %v2920 = vunpack.c.0.s8 %v2919
        %v2921 = vperm.slane %v2913, %v2920
        %v2922 = vrot.slane %v2885, 4
        %v2923 = vsel %vm617, %v2922, %v2873
        %v2924 = vrot.slane %v2873, 4
        %v2925 = vsel %vm617, %v2885, %v2924
        %v2927 = vunpack.c.l.s4 1934713408
        %v2928 = vunpack.c.0.s8 %v2927
        %v2929 = vperm.slane %v2923, %v2928
        %v2931 = vunpack.c.l.s4 1934713408
        %v2932 = vunpack.c.0.s8 %v2931
        %v2933 = vperm.slane %v2925, %v2932
        %v2934 = vrot.slane %v2905, 4
        %v2935 = vsel %vm617, %v2934, %v2893
        %v2936 = vrot.slane %v2893, 4
        %v2937 = vsel %vm617, %v2905, %v2936
        %v2939 = vunpack.c.l.s4 1934713408
        %v2940 = vunpack.c.0.s8 %v2939
        %v2941 = vperm.slane %v2935, %v2940
        %v2943 = vunpack.c.l.s4 1934713408
        %v2944 = vunpack.c.0.s8 %v2943
        %v2945 = vperm.slane %v2937, %v2944
        %v2946 = vrot.slane %v2909, 4
        %v2947 = vsel %vm617, %v2946, %v2897
        %v2948 = vrot.slane %v2897, 4
        %v2949 = vsel %vm617, %v2909, %v2948
        %v2951 = vunpack.c.l.s4 1934713408
        %v2952 = vunpack.c.0.s8 %v2951
        %v2953 = vperm.slane %v2947, %v2952
        %v2955 = vunpack.c.l.s4 1934713408
        %v2956 = vunpack.c.0.s8 %v2955
        %v2957 = vperm.slane %v2949, %v2956
        %v2958 = vrot.slane %v2941, 4
        %v2959 = vsel %vm617, %v2958, %v2917
        %v2960 = vrot.slane %v2917, 4
        %v2961 = vsel %vm617, %v2941, %v2960
        %v2962 = vrot.slane %v2945, 4
        %v2963 = vsel %vm617, %v2962, %v2921
        %v2964 = vrot.slane %v2921, 4
        %v2965 = vsel %vm617, %v2945, %v2964
        %v2966 = vrot.slane %v2953, 4
        %v2967 = vsel %vm617, %v2966, %v2929
        %v2968 = vrot.slane %v2929, 4
        %v2969 = vsel %vm617, %v2953, %v2968
        %v2970 = vrot.slane %v2957, 4
        %v2971 = vsel %vm617, %v2970, %v2933
        %v2972 = vrot.slane %v2933, 4
        %v2973 = vsel %vm617, %v2957, %v2972
        %v2974 = vrot.slane %v2150, 4
        %v2975 = vsel %vm617, %v2974, %v2142
        %v2976 = vrot.slane %v2142, 4
        %v2977 = vsel %vm617, %v2150, %v2976
        %v2979 = vunpack.c.l.s4 1983009808
        %v2980 = vunpack.c.0.s8 %v2979
        %v2981 = vperm.slane %v2975, %v2980
        %v2983 = vunpack.c.l.s4 1983009808
        %v2984 = vunpack.c.0.s8 %v2983
        %v2985 = vperm.slane %v2977, %v2984
        %v2986 = vrot.slane %v2154, 4
        %v2987 = vsel %vm617, %v2986, %v2146
        %v2988 = vrot.slane %v2146, 4
        %v2989 = vsel %vm617, %v2154, %v2988
        %v2991 = vunpack.c.l.s4 1983009808
        %v2992 = vunpack.c.0.s8 %v2991
        %v2993 = vperm.slane %v2987, %v2992
        %v2995 = vunpack.c.l.s4 1983009808
        %v2996 = vunpack.c.0.s8 %v2995
        %v2997 = vperm.slane %v2989, %v2996
        %v2998 = vrot.slane %v2166, 4
        %v2999 = vsel %vm617, %v2998, %v2158
        %v3000 = vrot.slane %v2158, 4
        %v3001 = vsel %vm617, %v2166, %v3000
        %v3003 = vunpack.c.l.s4 1983009808
        %v3004 = vunpack.c.0.s8 %v3003
        %v3005 = vperm.slane %v2999, %v3004
        %v3007 = vunpack.c.l.s4 1983009808
        %v3008 = vunpack.c.0.s8 %v3007
        %v3009 = vperm.slane %v3001, %v3008
        %v3010 = vrot.slane %v2170, 4
        %v3011 = vsel %vm617, %v3010, %v2162
        %v3012 = vrot.slane %v2162, 4
        %v3013 = vsel %vm617, %v2170, %v3012
        %v3015 = vunpack.c.l.s4 1983009808
        %v3016 = vunpack.c.0.s8 %v3015
        %v3017 = vperm.slane %v3011, %v3016
        %v3019 = vunpack.c.l.s4 1983009808
        %v3020 = vunpack.c.0.s8 %v3019
        %v3021 = vperm.slane %v3013, %v3020
        %v3022 = vrot.slane %v2993, 4
        %v3023 = vsel %vm617, %v3022, %v2981
        %v3024 = vrot.slane %v2981, 4
        %v3025 = vsel %vm617, %v2993, %v3024
        %v3027 = vunpack.c.l.s4 1934713408
        %v3028 = vunpack.c.0.s8 %v3027
        %v3029 = vperm.slane %v3023, %v3028
        %v3031 = vunpack.c.l.s4 1934713408
        %v3032 = vunpack.c.0.s8 %v3031
        %v3033 = vperm.slane %v3025, %v3032
        %v3034 = vrot.slane %v2997, 4
        %v3035 = vsel %vm617, %v3034, %v2985
        %v3036 = vrot.slane %v2985, 4
        %v3037 = vsel %vm617, %v2997, %v3036
        %v3039 = vunpack.c.l.s4 1934713408
        %v3040 = vunpack.c.0.s8 %v3039
        %v3041 = vperm.slane %v3035, %v3040
        %v3043 = vunpack.c.l.s4 1934713408
        %v3044 = vunpack.c.0.s8 %v3043
        %v3045 = vperm.slane %v3037, %v3044
        %v3046 = vrot.slane %v3017, 4
        %v3047 = vsel %vm617, %v3046, %v3005
        %v3048 = vrot.slane %v3005, 4
        %v3049 = vsel %vm617, %v3017, %v3048
        %v3051 = vunpack.c.l.s4 1934713408
        %v3052 = vunpack.c.0.s8 %v3051
        %v3053 = vperm.slane %v3047, %v3052
        %v3055 = vunpack.c.l.s4 1934713408
        %v3056 = vunpack.c.0.s8 %v3055
        %v3057 = vperm.slane %v3049, %v3056
        %v3058 = vrot.slane %v3021, 4
        %v3059 = vsel %vm617, %v3058, %v3009
        %v3060 = vrot.slane %v3009, 4
        %v3061 = vsel %vm617, %v3021, %v3060
        %v3063 = vunpack.c.l.s4 1934713408
        %v3064 = vunpack.c.0.s8 %v3063
        %v3065 = vperm.slane %v3059, %v3064
        %v3067 = vunpack.c.l.s4 1934713408
        %v3068 = vunpack.c.0.s8 %v3067
        %v3069 = vperm.slane %v3061, %v3068
        %v3070 = vrot.slane %v3053, 4
        %v3071 = vsel %vm617, %v3070, %v3029
        %v3072 = vrot.slane %v3029, 4
        %v3073 = vsel %vm617, %v3053, %v3072
        %v3074 = vrot.slane %v3057, 4
        %v3075 = vsel %vm617, %v3074, %v3033
        %v3076 = vrot.slane %v3033, 4
        %v3077 = vsel %vm617, %v3057, %v3076
        %v3078 = vrot.slane %v3065, 4
        %v3079 = vsel %vm617, %v3078, %v3041
        %v3080 = vrot.slane %v3041, 4
        %v3081 = vsel %vm617, %v3065, %v3080
        %v3082 = vrot.slane %v3069, 4
        %v3083 = vsel %vm617, %v3082, %v3045
        %v3084 = vrot.slane %v3045, 4
        %v3085 = vsel %vm617, %v3069, %v3084
        %v3086 = vrot.slane %v2182, 4
        %v3087 = vsel %vm617, %v3086, %v2174
        %v3088 = vrot.slane %v2174, 4
        %v3089 = vsel %vm617, %v2182, %v3088
        %v3091 = vunpack.c.l.s4 1983009808
        %v3092 = vunpack.c.0.s8 %v3091
        %v3093 = vperm.slane %v3087, %v3092
        %v3095 = vunpack.c.l.s4 1983009808
        %v3096 = vunpack.c.0.s8 %v3095
        %v3097 = vperm.slane %v3089, %v3096
        %v3098 = vrot.slane %v2186, 4
        %v3099 = vsel %vm617, %v3098, %v2178
        %v3100 = vrot.slane %v2178, 4
        %v3101 = vsel %vm617, %v2186, %v3100
        %v3103 = vunpack.c.l.s4 1983009808
        %v3104 = vunpack.c.0.s8 %v3103
        %v3105 = vperm.slane %v3099, %v3104
        %v3107 = vunpack.c.l.s4 1983009808
        %v3108 = vunpack.c.0.s8 %v3107
        %v3109 = vperm.slane %v3101, %v3108
        %v3110 = vrot.slane %v2198, 4
        %v3111 = vsel %vm617, %v3110, %v2190
        %v3112 = vrot.slane %v2190, 4
        %v3113 = vsel %vm617, %v2198, %v3112
        %v3115 = vunpack.c.l.s4 1983009808
        %v3116 = vunpack.c.0.s8 %v3115
        %v3117 = vperm.slane %v3111, %v3116
        %v3119 = vunpack.c.l.s4 1983009808
        %v3120 = vunpack.c.0.s8 %v3119
        %v3121 = vperm.slane %v3113, %v3120
        %v3122 = vrot.slane %v2202, 4
        %v3123 = vsel %vm617, %v3122, %v2194
        %v3124 = vrot.slane %v2194, 4
        %v3125 = vsel %vm617, %v2202, %v3124
        %v3127 = vunpack.c.l.s4 1983009808
        %v3128 = vunpack.c.0.s8 %v3127
        %v3129 = vperm.slane %v3123, %v3128
        %v3131 = vunpack.c.l.s4 1983009808
        %v3132 = vunpack.c.0.s8 %v3131
        %v3133 = vperm.slane %v3125, %v3132
        %v3134 = vrot.slane %v3105, 4
        %v3135 = vsel %vm617, %v3134, %v3093
        %v3136 = vrot.slane %v3093, 4
        %v3137 = vsel %vm617, %v3105, %v3136
        %v3139 = vunpack.c.l.s4 1934713408
        %v3140 = vunpack.c.0.s8 %v3139
        %v3141 = vperm.slane %v3135, %v3140
        %v3143 = vunpack.c.l.s4 1934713408
        %v3144 = vunpack.c.0.s8 %v3143
        %v3145 = vperm.slane %v3137, %v3144
        %v3146 = vrot.slane %v3109, 4
        %v3147 = vsel %vm617, %v3146, %v3097
        %v3148 = vrot.slane %v3097, 4
        %v3149 = vsel %vm617, %v3109, %v3148
        %v3151 = vunpack.c.l.s4 1934713408
        %v3152 = vunpack.c.0.s8 %v3151
        %v3153 = vperm.slane %v3147, %v3152
        %v3155 = vunpack.c.l.s4 1934713408
        %v3156 = vunpack.c.0.s8 %v3155
        %v3157 = vperm.slane %v3149, %v3156
        %v3158 = vrot.slane %v3129, 4
        %v3159 = vsel %vm617, %v3158, %v3117
        %v3160 = vrot.slane %v3117, 4
        %v3161 = vsel %vm617, %v3129, %v3160
        %v3163 = vunpack.c.l.s4 1934713408
        %v3164 = vunpack.c.0.s8 %v3163
        %v3165 = vperm.slane %v3159, %v3164
        %v3167 = vunpack.c.l.s4 1934713408
        %v3168 = vunpack.c.0.s8 %v3167
        %v3169 = vperm.slane %v3161, %v3168
        %v3170 = vrot.slane %v3133, 4
        %v3171 = vsel %vm617, %v3170, %v3121
        %v3172 = vrot.slane %v3121, 4
        %v3173 = vsel %vm617, %v3133, %v3172
        %v3175 = vunpack.c.l.s4 1934713408
        %v3176 = vunpack.c.0.s8 %v3175
        %v3177 = vperm.slane %v3171, %v3176
        %v3179 = vunpack.c.l.s4 1934713408
        %v3180 = vunpack.c.0.s8 %v3179
        %v3181 = vperm.slane %v3173, %v3180
        %v3182 = vrot.slane %v3165, 4
        %v3183 = vsel %vm617, %v3182, %v3141
        %v3184 = vrot.slane %v3141, 4
        %v3185 = vsel %vm617, %v3165, %v3184
        %v3186 = vrot.slane %v3169, 4
        %v3187 = vsel %vm617, %v3186, %v3145
        %v3188 = vrot.slane %v3145, 4
        %v3189 = vsel %vm617, %v3169, %v3188
        %v3190 = vrot.slane %v3177, 4
        %v3191 = vsel %vm617, %v3190, %v3153
        %v3192 = vrot.slane %v3153, 4
        %v3193 = vsel %vm617, %v3177, %v3192
        %v3194 = vrot.slane %v3181, 4
        %v3195 = vsel %vm617, %v3194, %v3157
        %v3196 = vrot.slane %v3157, 4
        %v3197 = vsel %vm617, %v3181, %v3196
        %v3198 = vrot.slane %v2370, 4
        %v3199 = vsel %vm617, %v3198, %v2366
        %v3200 = vrot.slane %v2366, 4
        %v3201 = vsel %vm617, %v2370, %v3200
        %v3203 = vunpack.c.l.s4 1983009808
        %v3204 = vunpack.c.0.s8 %v3203
        %v3205 = vperm.slane %v3199, %v3204
        %v3207 = vunpack.c.l.s4 1983009808
        %v3208 = vunpack.c.0.s8 %v3207
        %v3209 = vperm.slane %v3201, %v3208
        %v3210 = vrot.slane %v2372, 4
        %v3211 = vsel %vm617, %v3210, %v2368
        %v3212 = vrot.slane %v2368, 4
        %v3213 = vsel %vm617, %v2372, %v3212
        %v3215 = vunpack.c.l.s4 1983009808
        %v3216 = vunpack.c.0.s8 %v3215
        %v3217 = vperm.slane %v3211, %v3216
        %v3219 = vunpack.c.l.s4 1983009808
        %v3220 = vunpack.c.0.s8 %v3219
        %v3221 = vperm.slane %v3213, %v3220
        %v3222 = vrot.slane %v2378, 4
        %v3223 = vsel %vm617, %v3222, %v2374
        %v3224 = vrot.slane %v2374, 4
        %v3225 = vsel %vm617, %v2378, %v3224
        %v3227 = vunpack.c.l.s4 1983009808
        %v3228 = vunpack.c.0.s8 %v3227
        %v3229 = vperm.slane %v3223, %v3228
        %v3231 = vunpack.c.l.s4 1983009808
        %v3232 = vunpack.c.0.s8 %v3231
        %v3233 = vperm.slane %v3225, %v3232
        %v3234 = vrot.slane %v2380, 4
        %v3235 = vsel %vm617, %v3234, %v2376
        %v3236 = vrot.slane %v2376, 4
        %v3237 = vsel %vm617, %v2380, %v3236
        %v3239 = vunpack.c.l.s4 1983009808
        %v3240 = vunpack.c.0.s8 %v3239
        %v3241 = vperm.slane %v3235, %v3240
        %v3243 = vunpack.c.l.s4 1983009808
        %v3244 = vunpack.c.0.s8 %v3243
        %v3245 = vperm.slane %v3237, %v3244
        %v3246 = vrot.slane %v3217, 4
        %v3247 = vsel %vm617, %v3246, %v3205
        %v3248 = vrot.slane %v3205, 4
        %v3249 = vsel %vm617, %v3217, %v3248
        %v3251 = vunpack.c.l.s4 1934713408
        %v3252 = vunpack.c.0.s8 %v3251
        %v3253 = vperm.slane %v3247, %v3252
        %v3255 = vunpack.c.l.s4 1934713408
        %v3256 = vunpack.c.0.s8 %v3255
        %v3257 = vperm.slane %v3249, %v3256
        %v3258 = vrot.slane %v3221, 4
        %v3259 = vsel %vm617, %v3258, %v3209
        %v3260 = vrot.slane %v3209, 4
        %v3261 = vsel %vm617, %v3221, %v3260
        %v3263 = vunpack.c.l.s4 1934713408
        %v3264 = vunpack.c.0.s8 %v3263
        %v3265 = vperm.slane %v3259, %v3264
        %v3267 = vunpack.c.l.s4 1934713408
        %v3268 = vunpack.c.0.s8 %v3267
        %v3269 = vperm.slane %v3261, %v3268
        %v3270 = vrot.slane %v3241, 4
        %v3271 = vsel %vm617, %v3270, %v3229
        %v3272 = vrot.slane %v3229, 4
        %v3273 = vsel %vm617, %v3241, %v3272
        %v3275 = vunpack.c.l.s4 1934713408
        %v3276 = vunpack.c.0.s8 %v3275
        %v3277 = vperm.slane %v3271, %v3276
        %v3279 = vunpack.c.l.s4 1934713408
        %v3280 = vunpack.c.0.s8 %v3279
        %v3281 = vperm.slane %v3273, %v3280
        %v3282 = vrot.slane %v3245, 4
        %v3283 = vsel %vm617, %v3282, %v3233
        %v3284 = vrot.slane %v3233, 4
        %v3285 = vsel %vm617, %v3245, %v3284
        %v3287 = vunpack.c.l.s4 1934713408
        %v3288 = vunpack.c.0.s8 %v3287
        %v3289 = vperm.slane %v3283, %v3288
        %v3291 = vunpack.c.l.s4 1934713408
        %v3292 = vunpack.c.0.s8 %v3291
        %v3293 = vperm.slane %v3285, %v3292
        %v3294 = vrot.slane %v3277, 4
        %v3295 = vsel %vm617, %v3294, %v3253
        %v3296 = vrot.slane %v3253, 4
        %v3297 = vsel %vm617, %v3277, %v3296
        %v3298 = vrot.slane %v3281, 4
        %v3299 = vsel %vm617, %v3298, %v3257
        %v3300 = vrot.slane %v3257, 4
        %v3301 = vsel %vm617, %v3281, %v3300
        %v3302 = vrot.slane %v3289, 4
        %v3303 = vsel %vm617, %v3302, %v3265
        %v3304 = vrot.slane %v3265, 4
        %v3305 = vsel %vm617, %v3289, %v3304
        %v3306 = vrot.slane %v3293, 4
        %v3307 = vsel %vm617, %v3306, %v3269
        %v3308 = vrot.slane %v3269, 4
        %v3309 = vsel %vm617, %v3293, %v3308
        %v3310 = vrot.slane %v2278, 4
        %v3311 = vsel %vm617, %v3310, %v2270
        %v3312 = vrot.slane %v2270, 4
        %v3313 = vsel %vm617, %v2278, %v3312
        %v3315 = vunpack.c.l.s4 1983009808
        %v3316 = vunpack.c.0.s8 %v3315
        %v3317 = vperm.slane %v3311, %v3316
        %v3319 = vunpack.c.l.s4 1983009808
        %v3320 = vunpack.c.0.s8 %v3319
        %v3321 = vperm.slane %v3313, %v3320
        %v3322 = vrot.slane %v2282, 4
        %v3323 = vsel %vm617, %v3322, %v2274
        %v3324 = vrot.slane %v2274, 4
        %v3325 = vsel %vm617, %v2282, %v3324
        %v3327 = vunpack.c.l.s4 1983009808
        %v3328 = vunpack.c.0.s8 %v3327
        %v3329 = vperm.slane %v3323, %v3328
        %v3331 = vunpack.c.l.s4 1983009808
        %v3332 = vunpack.c.0.s8 %v3331
        %v3333 = vperm.slane %v3325, %v3332
        %v3334 = vrot.slane %v2294, 4
        %v3335 = vsel %vm617, %v3334, %v2286
        %v3336 = vrot.slane %v2286, 4
        %v3337 = vsel %vm617, %v2294, %v3336
        %v3339 = vunpack.c.l.s4 1983009808
        %v3340 = vunpack.c.0.s8 %v3339
        %v3341 = vperm.slane %v3335, %v3340
        %v3343 = vunpack.c.l.s4 1983009808
        %v3344 = vunpack.c.0.s8 %v3343
        %v3345 = vperm.slane %v3337, %v3344
        %v3346 = vrot.slane %v2298, 4
        %v3347 = vsel %vm617, %v3346, %v2290
        %v3348 = vrot.slane %v2290, 4
        %v3349 = vsel %vm617, %v2298, %v3348
        %v3351 = vunpack.c.l.s4 1983009808
        %v3352 = vunpack.c.0.s8 %v3351
        %v3353 = vperm.slane %v3347, %v3352
        %v3355 = vunpack.c.l.s4 1983009808
        %v3356 = vunpack.c.0.s8 %v3355
        %v3357 = vperm.slane %v3349, %v3356
        %v3358 = vrot.slane %v3329, 4
        %v3359 = vsel %vm617, %v3358, %v3317
        %v3360 = vrot.slane %v3317, 4
        %v3361 = vsel %vm617, %v3329, %v3360
        %v3363 = vunpack.c.l.s4 1934713408
        %v3364 = vunpack.c.0.s8 %v3363
        %v3365 = vperm.slane %v3359, %v3364
        %v3367 = vunpack.c.l.s4 1934713408
        %v3368 = vunpack.c.0.s8 %v3367
        %v3369 = vperm.slane %v3361, %v3368
        %v3370 = vrot.slane %v3333, 4
        %v3371 = vsel %vm617, %v3370, %v3321
        %v3372 = vrot.slane %v3321, 4
        %v3373 = vsel %vm617, %v3333, %v3372
        %v3375 = vunpack.c.l.s4 1934713408
        %v3376 = vunpack.c.0.s8 %v3375
        %v3377 = vperm.slane %v3371, %v3376
        %v3379 = vunpack.c.l.s4 1934713408
        %v3380 = vunpack.c.0.s8 %v3379
        %v3381 = vperm.slane %v3373, %v3380
        %v3382 = vrot.slane %v3353, 4
        %v3383 = vsel %vm617, %v3382, %v3341
        %v3384 = vrot.slane %v3341, 4
        %v3385 = vsel %vm617, %v3353, %v3384
        %v3387 = vunpack.c.l.s4 1934713408
        %v3388 = vunpack.c.0.s8 %v3387
        %v3389 = vperm.slane %v3383, %v3388
        %v3391 = vunpack.c.l.s4 1934713408
        %v3392 = vunpack.c.0.s8 %v3391
        %v3393 = vperm.slane %v3385, %v3392
        %v3394 = vrot.slane %v3357, 4
        %v3395 = vsel %vm617, %v3394, %v3345
        %v3396 = vrot.slane %v3345, 4
        %v3397 = vsel %vm617, %v3357, %v3396
        %v3399 = vunpack.c.l.s4 1934713408
        %v3400 = vunpack.c.0.s8 %v3399
        %v3401 = vperm.slane %v3395, %v3400
        %v3403 = vunpack.c.l.s4 1934713408
        %v3404 = vunpack.c.0.s8 %v3403
        %v3405 = vperm.slane %v3397, %v3404
        %v3406 = vrot.slane %v3389, 4
        %v3407 = vsel %vm617, %v3406, %v3365
        %v3408 = vrot.slane %v3365, 4
        %v3409 = vsel %vm617, %v3389, %v3408
        %v3410 = vrot.slane %v3393, 4
        %v3411 = vsel %vm617, %v3410, %v3369
        %v3412 = vrot.slane %v3369, 4
        %v3413 = vsel %vm617, %v3393, %v3412
        %v3414 = vrot.slane %v3401, 4
        %v3415 = vsel %vm617, %v3414, %v3377
        %v3416 = vrot.slane %v3377, 4
        %v3417 = vsel %vm617, %v3401, %v3416
        %v3418 = vrot.slane %v3405, 4
        %v3419 = vsel %vm617, %v3418, %v3381
        %v3420 = vrot.slane %v3381, 4
        %v3421 = vsel %vm617, %v3405, %v3420
        %v3422 = vrot.slane %v2310, 4
        %v3423 = vsel %vm617, %v3422, %v2302
        %v3424 = vrot.slane %v2302, 4
        %v3425 = vsel %vm617, %v2310, %v3424
        %v3427 = vunpack.c.l.s4 1983009808
        %v3428 = vunpack.c.0.s8 %v3427
        %v3429 = vperm.slane %v3423, %v3428
        %v3431 = vunpack.c.l.s4 1983009808
        %v3432 = vunpack.c.0.s8 %v3431
        %v3433 = vperm.slane %v3425, %v3432
        %v3434 = vrot.slane %v2314, 4
        %v3435 = vsel %vm617, %v3434, %v2306
        %v3436 = vrot.slane %v2306, 4
        %v3437 = vsel %vm617, %v2314, %v3436
        %v3439 = vunpack.c.l.s4 1983009808
        %v3440 = vunpack.c.0.s8 %v3439
        %v3441 = vperm.slane %v3435, %v3440
        %v3443 = vunpack.c.l.s4 1983009808
        %v3444 = vunpack.c.0.s8 %v3443
        %v3445 = vperm.slane %v3437, %v3444
        %v3446 = vrot.slane %v2326, 4
        %v3447 = vsel %vm617, %v3446, %v2318
        %v3448 = vrot.slane %v2318, 4
        %v3449 = vsel %vm617, %v2326, %v3448
        %v3451 = vunpack.c.l.s4 1983009808
        %v3452 = vunpack.c.0.s8 %v3451
        %v3453 = vperm.slane %v3447, %v3452
        %v3455 = vunpack.c.l.s4 1983009808
        %v3456 = vunpack.c.0.s8 %v3455
        %v3457 = vperm.slane %v3449, %v3456
        %v3458 = vrot.slane %v2330, 4
        %v3459 = vsel %vm617, %v3458, %v2322
        %v3460 = vrot.slane %v2322, 4
        %v3461 = vsel %vm617, %v2330, %v3460
        %v3463 = vunpack.c.l.s4 1983009808
        %v3464 = vunpack.c.0.s8 %v3463
        %v3465 = vperm.slane %v3459, %v3464
        %v3467 = vunpack.c.l.s4 1983009808
        %v3468 = vunpack.c.0.s8 %v3467
        %v3469 = vperm.slane %v3461, %v3468
        %v3470 = vrot.slane %v3441, 4
        %v3471 = vsel %vm617, %v3470, %v3429
        %v3472 = vrot.slane %v3429, 4
        %v3473 = vsel %vm617, %v3441, %v3472
        %v3475 = vunpack.c.l.s4 1934713408
        %v3476 = vunpack.c.0.s8 %v3475
        %v3477 = vperm.slane %v3471, %v3476
        %v3479 = vunpack.c.l.s4 1934713408
        %v3480 = vunpack.c.0.s8 %v3479
        %v3481 = vperm.slane %v3473, %v3480
        %v3482 = vrot.slane %v3445, 4
        %v3483 = vsel %vm617, %v3482, %v3433
        %v3484 = vrot.slane %v3433, 4
        %v3485 = vsel %vm617, %v3445, %v3484
        %v3487 = vunpack.c.l.s4 1934713408
        %v3488 = vunpack.c.0.s8 %v3487
        %v3489 = vperm.slane %v3483, %v3488
        %v3491 = vunpack.c.l.s4 1934713408
        %v3492 = vunpack.c.0.s8 %v3491
        %v3493 = vperm.slane %v3485, %v3492
        %v3494 = vrot.slane %v3465, 4
        %v3495 = vsel %vm617, %v3494, %v3453
        %v3496 = vrot.slane %v3453, 4
        %v3497 = vsel %vm617, %v3465, %v3496
        %v3499 = vunpack.c.l.s4 1934713408
        %v3500 = vunpack.c.0.s8 %v3499
        %v3501 = vperm.slane %v3495, %v3500
        %v3503 = vunpack.c.l.s4 1934713408
        %v3504 = vunpack.c.0.s8 %v3503
        %v3505 = vperm.slane %v3497, %v3504
        %v3506 = vrot.slane %v3469, 4
        %v3507 = vsel %vm617, %v3506, %v3457
        %v3508 = vrot.slane %v3457, 4
        %v3509 = vsel %vm617, %v3469, %v3508
        %v3511 = vunpack.c.l.s4 1934713408
        %v3512 = vunpack.c.0.s8 %v3511
        %v3513 = vperm.slane %v3507, %v3512
        %v3515 = vunpack.c.l.s4 1934713408
        %v3516 = vunpack.c.0.s8 %v3515
        %v3517 = vperm.slane %v3509, %v3516
        %v3518 = vrot.slane %v3501, 4
        %v3519 = vsel %vm617, %v3518, %v3477
        %v3520 = vrot.slane %v3477, 4
        %v3521 = vsel %vm617, %v3501, %v3520
        %v3522 = vrot.slane %v3505, 4
        %v3523 = vsel %vm617, %v3522, %v3481
        %v3524 = vrot.slane %v3481, 4
        %v3525 = vsel %vm617, %v3505, %v3524
        %v3526 = vrot.slane %v3513, 4
        %v3527 = vsel %vm617, %v3526, %v3489
        %v3528 = vrot.slane %v3489, 4
        %v3529 = vsel %vm617, %v3513, %v3528
        %v3530 = vrot.slane %v3517, 4
        %v3531 = vsel %vm617, %v3530, %v3493
        %v3532 = vrot.slane %v3493, 4
        %v3533 = vsel %vm617, %v3517, %v3532
        %v3534 = vrot.slane %v2339, 4
        %v3535 = vsel %vm617, %v3534, %v2335
        %v3536 = vrot.slane %v2335, 4
        %v3537 = vsel %vm617, %v2339, %v3536
        %v3539 = vunpack.c.l.s4 1983009808
        %v3540 = vunpack.c.0.s8 %v3539
        %v3541 = vperm.slane %v3535, %v3540
        %v3543 = vunpack.c.l.s4 1983009808
        %v3544 = vunpack.c.0.s8 %v3543
        %v3545 = vperm.slane %v3537, %v3544
        %v3546 = vrot.slane %v2341, 4
        %v3547 = vsel %vm617, %v3546, %v2337
        %v3548 = vrot.slane %v2337, 4
        %v3549 = vsel %vm617, %v2341, %v3548
        %v3551 = vunpack.c.l.s4 1983009808
        %v3552 = vunpack.c.0.s8 %v3551
        %v3553 = vperm.slane %v3547, %v3552
        %v3555 = vunpack.c.l.s4 1983009808
        %v3556 = vunpack.c.0.s8 %v3555
        %v3557 = vperm.slane %v3549, %v3556
        %v3558 = vrot.slane %v2347, 4
        %v3559 = vsel %vm617, %v3558, %v2343
        %v3560 = vrot.slane %v2343, 4
        %v3561 = vsel %vm617, %v2347, %v3560
        %v3563 = vunpack.c.l.s4 1983009808
        %v3564 = vunpack.c.0.s8 %v3563
        %v3565 = vperm.slane %v3559, %v3564
        %v3567 = vunpack.c.l.s4 1983009808
        %v3568 = vunpack.c.0.s8 %v3567
        %v3569 = vperm.slane %v3561, %v3568
        %v3570 = vrot.slane %v2349, 4
        %v3571 = vsel %vm617, %v3570, %v2345
        %v3572 = vrot.slane %v2345, 4
        %v3573 = vsel %vm617, %v2349, %v3572
        %v3575 = vunpack.c.l.s4 1983009808
        %v3576 = vunpack.c.0.s8 %v3575
        %v3577 = vperm.slane %v3571, %v3576
        %v3579 = vunpack.c.l.s4 1983009808
        %v3580 = vunpack.c.0.s8 %v3579
        %v3581 = vperm.slane %v3573, %v3580
        %v3582 = vrot.slane %v3553, 4
        %v3583 = vsel %vm617, %v3582, %v3541
        %v3584 = vrot.slane %v3541, 4
        %v3585 = vsel %vm617, %v3553, %v3584
        %v3587 = vunpack.c.l.s4 1934713408
        %v3588 = vunpack.c.0.s8 %v3587
        %v3589 = vperm.slane %v3583, %v3588
        %v3591 = vunpack.c.l.s4 1934713408
        %v3592 = vunpack.c.0.s8 %v3591
        %v3593 = vperm.slane %v3585, %v3592
        %v3594 = vrot.slane %v3557, 4
        %v3595 = vsel %vm617, %v3594, %v3545
        %v3596 = vrot.slane %v3545, 4
        %v3597 = vsel %vm617, %v3557, %v3596
        %v3599 = vunpack.c.l.s4 1934713408
        %v3600 = vunpack.c.0.s8 %v3599
        %v3601 = vperm.slane %v3595, %v3600
        %v3603 = vunpack.c.l.s4 1934713408
        %v3604 = vunpack.c.0.s8 %v3603
        %v3605 = vperm.slane %v3597, %v3604
        %v3606 = vrot.slane %v3577, 4
        %v3607 = vsel %vm617, %v3606, %v3565
        %v3608 = vrot.slane %v3565, 4
        %v3609 = vsel %vm617, %v3577, %v3608
        %v3611 = vunpack.c.l.s4 1934713408
        %v3612 = vunpack.c.0.s8 %v3611
        %v3613 = vperm.slane %v3607, %v3612
        %v3615 = vunpack.c.l.s4 1934713408
        %v3616 = vunpack.c.0.s8 %v3615
        %v3617 = vperm.slane %v3609, %v3616
        %v3618 = vrot.slane %v3581, 4
        %v3619 = vsel %vm617, %v3618, %v3569
        %v3620 = vrot.slane %v3569, 4
        %v3621 = vsel %vm617, %v3581, %v3620
        %v3623 = vunpack.c.l.s4 1934713408
        %v3624 = vunpack.c.0.s8 %v3623
        %v3625 = vperm.slane %v3619, %v3624
        %v3627 = vunpack.c.l.s4 1934713408
        %v3628 = vunpack.c.0.s8 %v3627
        %v3629 = vperm.slane %v3621, %v3628
        %v3630 = vrot.slane %v3613, 4
        %v3631 = vsel %vm617, %v3630, %v3589
        %v3632 = vrot.slane %v3589, 4
        %v3633 = vsel %vm617, %v3613, %v3632
        %v3634 = vrot.slane %v3617, 4
        %v3635 = vsel %vm617, %v3634, %v3593
        %v3636 = vrot.slane %v3593, 4
        %v3637 = vsel %vm617, %v3617, %v3636
        %v3638 = vrot.slane %v3625, 4
        %v3639 = vsel %vm617, %v3638, %v3601
        %v3640 = vrot.slane %v3601, 4
        %v3641 = vsel %vm617, %v3625, %v3640
        %v3642 = vrot.slane %v3629, 4
        %v3643 = vsel %vm617, %v3642, %v3605
        %v3644 = vrot.slane %v3605, 4
        %v3645 = vsel %vm617, %v3629, %v3644
        %v3646 = vrot.slane %v2024, 4
        %v3647 = vsel %vm617, %v3646, %v2016
        %v3648 = vrot.slane %v2016, 4
        %v3649 = vsel %vm617, %v2024, %v3648
        %v3651 = vunpack.c.l.s4 1983009808
        %v3652 = vunpack.c.0.s8 %v3651
        %v3653 = vperm.slane %v3647, %v3652
        %v3655 = vunpack.c.l.s4 1983009808
        %v3656 = vunpack.c.0.s8 %v3655
        %v3657 = vperm.slane %v3649, %v3656
        %v3658 = vrot.slane %v2028, 4
        %v3659 = vsel %vm617, %v3658, %v2020
        %v3660 = vrot.slane %v2020, 4
        %v3661 = vsel %vm617, %v2028, %v3660
        %v3663 = vunpack.c.l.s4 1983009808
        %v3664 = vunpack.c.0.s8 %v3663
        %v3665 = vperm.slane %v3659, %v3664
        %v3667 = vunpack.c.l.s4 1983009808
        %v3668 = vunpack.c.0.s8 %v3667
        %v3669 = vperm.slane %v3661, %v3668
        %v3670 = vrot.slane %v2040, 4
        %v3671 = vsel %vm617, %v3670, %v2032
        %v3672 = vrot.slane %v2032, 4
        %v3673 = vsel %vm617, %v2040, %v3672
        %v3675 = vunpack.c.l.s4 1983009808
        %v3676 = vunpack.c.0.s8 %v3675
        %v3677 = vperm.slane %v3671, %v3676
        %v3679 = vunpack.c.l.s4 1983009808
        %v3680 = vunpack.c.0.s8 %v3679
        %v3681 = vperm.slane %v3673, %v3680
        %v3682 = vrot.slane %v2044, 4
        %v3683 = vsel %vm617, %v3682, %v2036
        %v3684 = vrot.slane %v2036, 4
        %v3685 = vsel %vm617, %v2044, %v3684
        %v3687 = vunpack.c.l.s4 1983009808
        %v3688 = vunpack.c.0.s8 %v3687
        %v3689 = vperm.slane %v3683, %v3688
        %v3691 = vunpack.c.l.s4 1983009808
        %v3692 = vunpack.c.0.s8 %v3691
        %v3693 = vperm.slane %v3685, %v3692
        %v3694 = vrot.slane %v3665, 4
        %v3695 = vsel %vm617, %v3694, %v3653
        %v3696 = vrot.slane %v3653, 4
        %v3697 = vsel %vm617, %v3665, %v3696
        %v3699 = vunpack.c.l.s4 1934713408
        %v3700 = vunpack.c.0.s8 %v3699
        %v3701 = vperm.slane %v3695, %v3700
        %v3703 = vunpack.c.l.s4 1934713408
        %v3704 = vunpack.c.0.s8 %v3703
        %v3705 = vperm.slane %v3697, %v3704
        %v3706 = vrot.slane %v3669, 4
        %v3707 = vsel %vm617, %v3706, %v3657
        %v3708 = vrot.slane %v3657, 4
        %v3709 = vsel %vm617, %v3669, %v3708
        %v3711 = vunpack.c.l.s4 1934713408
        %v3712 = vunpack.c.0.s8 %v3711
        %v3713 = vperm.slane %v3707, %v3712
        %v3715 = vunpack.c.l.s4 1934713408
        %v3716 = vunpack.c.0.s8 %v3715
        %v3717 = vperm.slane %v3709, %v3716
        %v3718 = vrot.slane %v3689, 4
        %v3719 = vsel %vm617, %v3718, %v3677
        %v3720 = vrot.slane %v3677, 4
        %v3721 = vsel %vm617, %v3689, %v3720
        %v3723 = vunpack.c.l.s4 1934713408
        %v3724 = vunpack.c.0.s8 %v3723
        %v3725 = vperm.slane %v3719, %v3724
        %v3727 = vunpack.c.l.s4 1934713408
        %v3728 = vunpack.c.0.s8 %v3727
        %v3729 = vperm.slane %v3721, %v3728
        %v3730 = vrot.slane %v3693, 4
        %v3731 = vsel %vm617, %v3730, %v3681
        %v3732 = vrot.slane %v3681, 4
        %v3733 = vsel %vm617, %v3693, %v3732
        %v3735 = vunpack.c.l.s4 1934713408
        %v3736 = vunpack.c.0.s8 %v3735
        %v3737 = vperm.slane %v3731, %v3736
        %v3739 = vunpack.c.l.s4 1934713408
        %v3740 = vunpack.c.0.s8 %v3739
        %v3741 = vperm.slane %v3733, %v3740
        %v3742 = vrot.slane %v3725, 4
        %v3743 = vsel %vm617, %v3742, %v3701
        %v3744 = vrot.slane %v3701, 4
        %v3745 = vsel %vm617, %v3725, %v3744
        %v3746 = vrot.slane %v3729, 4
        %v3747 = vsel %vm617, %v3746, %v3705
        %v3748 = vrot.slane %v3705, 4
        %v3749 = vsel %vm617, %v3729, %v3748
        %v3750 = vrot.slane %v3737, 4
        %v3751 = vsel %vm617, %v3750, %v3713
        %v3752 = vrot.slane %v3713, 4
        %v3753 = vsel %vm617, %v3737, %v3752
        %v3754 = vrot.slane %v3741, 4
        %v3755 = vsel %vm617, %v3754, %v3717
        %v3756 = vrot.slane %v3717, 4
        %v3757 = vsel %vm617, %v3741, %v3756
        %v3758 = vrot.slane %v2056, 4
        %v3759 = vsel %vm617, %v3758, %v2048
        %v3760 = vrot.slane %v2048, 4
        %v3761 = vsel %vm617, %v2056, %v3760
        %v3763 = vunpack.c.l.s4 1983009808
        %v3764 = vunpack.c.0.s8 %v3763
        %v3765 = vperm.slane %v3759, %v3764
        %v3767 = vunpack.c.l.s4 1983009808
        %v3768 = vunpack.c.0.s8 %v3767
        %v3769 = vperm.slane %v3761, %v3768
        %v3770 = vrot.slane %v2060, 4
        %v3771 = vsel %vm617, %v3770, %v2052
        %v3772 = vrot.slane %v2052, 4
        %v3773 = vsel %vm617, %v2060, %v3772
        %v3775 = vunpack.c.l.s4 1983009808
        %v3776 = vunpack.c.0.s8 %v3775
        %v3777 = vperm.slane %v3771, %v3776
        %v3779 = vunpack.c.l.s4 1983009808
        %v3780 = vunpack.c.0.s8 %v3779
        %v3781 = vperm.slane %v3773, %v3780
        %v3782 = vrot.slane %v2072, 4
        %v3783 = vsel %vm617, %v3782, %v2064
        %v3784 = vrot.slane %v2064, 4
        %v3785 = vsel %vm617, %v2072, %v3784
        %v3787 = vunpack.c.l.s4 1983009808
        %v3788 = vunpack.c.0.s8 %v3787
        %v3789 = vperm.slane %v3783, %v3788
        %v3791 = vunpack.c.l.s4 1983009808
        %v3792 = vunpack.c.0.s8 %v3791
        %v3793 = vperm.slane %v3785, %v3792
        %v3794 = vrot.slane %v2076, 4
        %v3795 = vsel %vm617, %v3794, %v2068
        %v3796 = vrot.slane %v2068, 4
        %v3797 = vsel %vm617, %v2076, %v3796
        %v3799 = vunpack.c.l.s4 1983009808
        %v3800 = vunpack.c.0.s8 %v3799
        %v3801 = vperm.slane %v3795, %v3800
        %v3803 = vunpack.c.l.s4 1983009808
        %v3804 = vunpack.c.0.s8 %v3803
        %v3805 = vperm.slane %v3797, %v3804
        %v3806 = vrot.slane %v3777, 4
        %v3807 = vsel %vm617, %v3806, %v3765
        %v3808 = vrot.slane %v3765, 4
        %v3809 = vsel %vm617, %v3777, %v3808
        %v3811 = vunpack.c.l.s4 1934713408
        %v3812 = vunpack.c.0.s8 %v3811
        %v3813 = vperm.slane %v3807, %v3812
        %v3815 = vunpack.c.l.s4 1934713408
        %v3816 = vunpack.c.0.s8 %v3815
        %v3817 = vperm.slane %v3809, %v3816
        %v3818 = vrot.slane %v3781, 4
        %v3819 = vsel %vm617, %v3818, %v3769
        %v3820 = vrot.slane %v3769, 4
        %v3821 = vsel %vm617, %v3781, %v3820
        %v3823 = vunpack.c.l.s4 1934713408
        %v3824 = vunpack.c.0.s8 %v3823
        %v3825 = vperm.slane %v3819, %v3824
        %v3827 = vunpack.c.l.s4 1934713408
        %v3828 = vunpack.c.0.s8 %v3827
        %v3829 = vperm.slane %v3821, %v3828
        %v3830 = vrot.slane %v3801, 4
        %v3831 = vsel %vm617, %v3830, %v3789
        %v3832 = vrot.slane %v3789, 4
        %v3833 = vsel %vm617, %v3801, %v3832
        %v3835 = vunpack.c.l.s4 1934713408
        %v3836 = vunpack.c.0.s8 %v3835
        %v3837 = vperm.slane %v3831, %v3836
        %v3839 = vunpack.c.l.s4 1934713408
        %v3840 = vunpack.c.0.s8 %v3839
        %v3841 = vperm.slane %v3833, %v3840
        %v3842 = vrot.slane %v3805, 4
        %v3843 = vsel %vm617, %v3842, %v3793
        %v3844 = vrot.slane %v3793, 4
        %v3845 = vsel %vm617, %v3805, %v3844
        %v3847 = vunpack.c.l.s4 1934713408
        %v3848 = vunpack.c.0.s8 %v3847
        %v3849 = vperm.slane %v3843, %v3848
        %v3851 = vunpack.c.l.s4 1934713408
        %v3852 = vunpack.c.0.s8 %v3851
        %v3853 = vperm.slane %v3845, %v3852
        %v3854 = vrot.slane %v3837, 4
        %v3855 = vsel %vm617, %v3854, %v3813
        %v3856 = vrot.slane %v3813, 4
        %v3857 = vsel %vm617, %v3837, %v3856
        %v3858 = vrot.slane %v3841, 4
        %v3859 = vsel %vm617, %v3858, %v3817
        %v3860 = vrot.slane %v3817, 4
        %v3861 = vsel %vm617, %v3841, %v3860
        %v3862 = vrot.slane %v3849, 4
        %v3863 = vsel %vm617, %v3862, %v3825
        %v3864 = vrot.slane %v3825, 4
        %v3865 = vsel %vm617, %v3849, %v3864
        %v3866 = vrot.slane %v3853, 4
        %v3867 = vsel %vm617, %v3866, %v3829
        %v3868 = vrot.slane %v3829, 4
        %v3869 = vsel %vm617, %v3853, %v3868
        %v3870 = vrot.slane %v2355, 4
        %v3871 = vsel %vm617, %v3870, %v2351
        %v3872 = vrot.slane %v2351, 4
        %v3873 = vsel %vm617, %v2355, %v3872
        %v3875 = vunpack.c.l.s4 1983009808
        %v3876 = vunpack.c.0.s8 %v3875
        %v3877 = vperm.slane %v3871, %v3876
        %v3879 = vunpack.c.l.s4 1983009808
        %v3880 = vunpack.c.0.s8 %v3879
        %v3881 = vperm.slane %v3873, %v3880
        %v3882 = vrot.slane %v2357, 4
        %v3883 = vsel %vm617, %v3882, %v2353
        %v3884 = vrot.slane %v2353, 4
        %v3885 = vsel %vm617, %v2357, %v3884
        %v3887 = vunpack.c.l.s4 1983009808
        %v3888 = vunpack.c.0.s8 %v3887
        %v3889 = vperm.slane %v3883, %v3888
        %v3891 = vunpack.c.l.s4 1983009808
        %v3892 = vunpack.c.0.s8 %v3891
        %v3893 = vperm.slane %v3885, %v3892
        %v3894 = vrot.slane %v2363, 4
        %v3895 = vsel %vm617, %v3894, %v2359
        %v3896 = vrot.slane %v2359, 4
        %v3897 = vsel %vm617, %v2363, %v3896
        %v3899 = vunpack.c.l.s4 1983009808
        %v3900 = vunpack.c.0.s8 %v3899
        %v3901 = vperm.slane %v3895, %v3900
        %v3903 = vunpack.c.l.s4 1983009808
        %v3904 = vunpack.c.0.s8 %v3903
        %v3905 = vperm.slane %v3897, %v3904
        %v3906 = vrot.slane %v2365, 4
        %v3907 = vsel %vm617, %v3906, %v2361
        %v3908 = vrot.slane %v2361, 4
        %v3909 = vsel %vm617, %v2365, %v3908
        %v3911 = vunpack.c.l.s4 1983009808
        %v3912 = vunpack.c.0.s8 %v3911
        %v3913 = vperm.slane %v3907, %v3912
        %v3915 = vunpack.c.l.s4 1983009808
        %v3916 = vunpack.c.0.s8 %v3915
        %v3917 = vperm.slane %v3909, %v3916
        %v3918 = vrot.slane %v3889, 4
        %v3919 = vsel %vm617, %v3918, %v3877
        %v3920 = vrot.slane %v3877, 4
        %v3921 = vsel %vm617, %v3889, %v3920
        %v3923 = vunpack.c.l.s4 1934713408
        %v3924 = vunpack.c.0.s8 %v3923
        %v3925 = vperm.slane %v3919, %v3924
        %v3927 = vunpack.c.l.s4 1934713408
        %v3928 = vunpack.c.0.s8 %v3927
        %v3929 = vperm.slane %v3921, %v3928
        %v3930 = vrot.slane %v3893, 4
        %v3931 = vsel %vm617, %v3930, %v3881
        %v3932 = vrot.slane %v3881, 4
        %v3933 = vsel %vm617, %v3893, %v3932
        %v3935 = vunpack.c.l.s4 1934713408
        %v3936 = vunpack.c.0.s8 %v3935
        %v3937 = vperm.slane %v3931, %v3936
        %v3939 = vunpack.c.l.s4 1934713408
        %v3940 = vunpack.c.0.s8 %v3939
        %v3941 = vperm.slane %v3933, %v3940
        %v3942 = vrot.slane %v3913, 4
        %v3943 = vsel %vm617, %v3942, %v3901
        %v3944 = vrot.slane %v3901, 4
        %v3945 = vsel %vm617, %v3913, %v3944
        %v3947 = vunpack.c.l.s4 1934713408
        %v3948 = vunpack.c.0.s8 %v3947
        %v3949 = vperm.slane %v3943, %v3948
        %v3951 = vunpack.c.l.s4 1934713408
        %v3952 = vunpack.c.0.s8 %v3951
        %v3953 = vperm.slane %v3945, %v3952
        %v3954 = vrot.slane %v3917, 4
        %v3955 = vsel %vm617, %v3954, %v3905
        %v3956 = vrot.slane %v3905, 4
        %v3957 = vsel %vm617, %v3917, %v3956
        %v3959 = vunpack.c.l.s4 1934713408
        %v3960 = vunpack.c.0.s8 %v3959
        %v3961 = vperm.slane %v3955, %v3960
        %v3963 = vunpack.c.l.s4 1934713408
        %v3964 = vunpack.c.0.s8 %v3963
        %v3965 = vperm.slane %v3957, %v3964
        %v3966 = vrot.slane %v3949, 4
        %v3967 = vsel %vm617, %v3966, %v3925
        %v3968 = vrot.slane %v3925, 4
        %v3969 = vsel %vm617, %v3949, %v3968
        %v3970 = vrot.slane %v3953, 4
        %v3971 = vsel %vm617, %v3970, %v3929
        %v3972 = vrot.slane %v3929, 4
        %v3973 = vsel %vm617, %v3953, %v3972
        %v3974 = vrot.slane %v3961, 4
        %v3975 = vsel %vm617, %v3974, %v3937
        %v3976 = vrot.slane %v3937, 4
        %v3977 = vsel %vm617, %v3961, %v3976
        %v3978 = vrot.slane %v3965, 4
        %v3979 = vsel %vm617, %v3978, %v3941
        %v3980 = vrot.slane %v3941, 4
        %v3981 = vsel %vm617, %v3965, %v3980
        %v3982 = vrot.slane %v2152, 4
        %v3983 = vsel %vm617, %v3982, %v2144
        %v3984 = vrot.slane %v2144, 4
        %v3985 = vsel %vm617, %v2152, %v3984
        %v3987 = vunpack.c.l.s4 1983009808
        %v3988 = vunpack.c.0.s8 %v3987
        %v3989 = vperm.slane %v3983, %v3988
        %v3991 = vunpack.c.l.s4 1983009808
        %v3992 = vunpack.c.0.s8 %v3991
        %v3993 = vperm.slane %v3985, %v3992
        %v3994 = vrot.slane %v2156, 4
        %v3995 = vsel %vm617, %v3994, %v2148
        %v3996 = vrot.slane %v2148, 4
        %v3997 = vsel %vm617, %v2156, %v3996
        %v3999 = vunpack.c.l.s4 1983009808
        %v4000 = vunpack.c.0.s8 %v3999
        %v4001 = vperm.slane %v3995, %v4000
        %v4003 = vunpack.c.l.s4 1983009808
        %v4004 = vunpack.c.0.s8 %v4003
        %v4005 = vperm.slane %v3997, %v4004
        %v4006 = vrot.slane %v2168, 4
        %v4007 = vsel %vm617, %v4006, %v2160
        %v4008 = vrot.slane %v2160, 4
        %v4009 = vsel %vm617, %v2168, %v4008
        %v4011 = vunpack.c.l.s4 1983009808
        %v4012 = vunpack.c.0.s8 %v4011
        %v4013 = vperm.slane %v4007, %v4012
        %v4015 = vunpack.c.l.s4 1983009808
        %v4016 = vunpack.c.0.s8 %v4015
        %v4017 = vperm.slane %v4009, %v4016
        %v4018 = vrot.slane %v2172, 4
        %v4019 = vsel %vm617, %v4018, %v2164
        %v4020 = vrot.slane %v2164, 4
        %v4021 = vsel %vm617, %v2172, %v4020
        %v4023 = vunpack.c.l.s4 1983009808
        %v4024 = vunpack.c.0.s8 %v4023
        %v4025 = vperm.slane %v4019, %v4024
        %v4027 = vunpack.c.l.s4 1983009808
        %v4028 = vunpack.c.0.s8 %v4027
        %v4029 = vperm.slane %v4021, %v4028
        %v4030 = vrot.slane %v4001, 4
        %v4031 = vsel %vm617, %v4030, %v3989
        %v4032 = vrot.slane %v3989, 4
        %v4033 = vsel %vm617, %v4001, %v4032
        %v4035 = vunpack.c.l.s4 1934713408
        %v4036 = vunpack.c.0.s8 %v4035
        %v4037 = vperm.slane %v4031, %v4036
        %v4039 = vunpack.c.l.s4 1934713408
        %v4040 = vunpack.c.0.s8 %v4039
        %v4041 = vperm.slane %v4033, %v4040
        %v4042 = vrot.slane %v4005, 4
        %v4043 = vsel %vm617, %v4042, %v3993
        %v4044 = vrot.slane %v3993, 4
        %v4045 = vsel %vm617, %v4005, %v4044
        %v4047 = vunpack.c.l.s4 1934713408
        %v4048 = vunpack.c.0.s8 %v4047
        %v4049 = vperm.slane %v4043, %v4048
        %v4051 = vunpack.c.l.s4 1934713408
        %v4052 = vunpack.c.0.s8 %v4051
        %v4053 = vperm.slane %v4045, %v4052
        %v4054 = vrot.slane %v4025, 4
        %v4055 = vsel %vm617, %v4054, %v4013
        %v4056 = vrot.slane %v4013, 4
        %v4057 = vsel %vm617, %v4025, %v4056
        %v4059 = vunpack.c.l.s4 1934713408
        %v4060 = vunpack.c.0.s8 %v4059
        %v4061 = vperm.slane %v4055, %v4060
        %v4063 = vunpack.c.l.s4 1934713408
        %v4064 = vunpack.c.0.s8 %v4063
        %v4065 = vperm.slane %v4057, %v4064
        %v4066 = vrot.slane %v4029, 4
        %v4067 = vsel %vm617, %v4066, %v4017
        %v4068 = vrot.slane %v4017, 4
        %v4069 = vsel %vm617, %v4029, %v4068
        %v4071 = vunpack.c.l.s4 1934713408
        %v4072 = vunpack.c.0.s8 %v4071
        %v4073 = vperm.slane %v4067, %v4072
        %v4075 = vunpack.c.l.s4 1934713408
        %v4076 = vunpack.c.0.s8 %v4075
        %v4077 = vperm.slane %v4069, %v4076
        %v4078 = vrot.slane %v4061, 4
        %v4079 = vsel %vm617, %v4078, %v4037
        %v4080 = vrot.slane %v4037, 4
        %v4081 = vsel %vm617, %v4061, %v4080
        %v4082 = vrot.slane %v4065, 4
        %v4083 = vsel %vm617, %v4082, %v4041
        %v4084 = vrot.slane %v4041, 4
        %v4085 = vsel %vm617, %v4065, %v4084
        %v4086 = vrot.slane %v4073, 4
        %v4087 = vsel %vm617, %v4086, %v4049
        %v4088 = vrot.slane %v4049, 4
        %v4089 = vsel %vm617, %v4073, %v4088
        %v4090 = vrot.slane %v4077, 4
        %v4091 = vsel %vm617, %v4090, %v4053
        %v4092 = vrot.slane %v4053, 4
        %v4093 = vsel %vm617, %v4077, %v4092
        %v4094 = vrot.slane %v2184, 4
        %v4095 = vsel %vm617, %v4094, %v2176
        %v4096 = vrot.slane %v2176, 4
        %v4097 = vsel %vm617, %v2184, %v4096
        %v4099 = vunpack.c.l.s4 1983009808
        %v4100 = vunpack.c.0.s8 %v4099
        %v4101 = vperm.slane %v4095, %v4100
        %v4103 = vunpack.c.l.s4 1983009808
        %v4104 = vunpack.c.0.s8 %v4103
        %v4105 = vperm.slane %v4097, %v4104
        %v4106 = vrot.slane %v2188, 4
        %v4107 = vsel %vm617, %v4106, %v2180
        %v4108 = vrot.slane %v2180, 4
        %v4109 = vsel %vm617, %v2188, %v4108
        %v4111 = vunpack.c.l.s4 1983009808
        %v4112 = vunpack.c.0.s8 %v4111
        %v4113 = vperm.slane %v4107, %v4112
        %v4115 = vunpack.c.l.s4 1983009808
        %v4116 = vunpack.c.0.s8 %v4115
        %v4117 = vperm.slane %v4109, %v4116
        %v4118 = vrot.slane %v2200, 4
        %v4119 = vsel %vm617, %v4118, %v2192
        %v4120 = vrot.slane %v2192, 4
        %v4121 = vsel %vm617, %v2200, %v4120
        %v4123 = vunpack.c.l.s4 1983009808
        %v4124 = vunpack.c.0.s8 %v4123
        %v4125 = vperm.slane %v4119, %v4124
        %v4127 = vunpack.c.l.s4 1983009808
        %v4128 = vunpack.c.0.s8 %v4127
        %v4129 = vperm.slane %v4121, %v4128
        %v4130 = vrot.slane %v2204, 4
        %v4131 = vsel %vm617, %v4130, %v2196
        %v4132 = vrot.slane %v2196, 4
        %v4133 = vsel %vm617, %v2204, %v4132
        %v4135 = vunpack.c.l.s4 1983009808
        %v4136 = vunpack.c.0.s8 %v4135
        %v4137 = vperm.slane %v4131, %v4136
        %v4139 = vunpack.c.l.s4 1983009808
        %v4140 = vunpack.c.0.s8 %v4139
        %v4141 = vperm.slane %v4133, %v4140
        %v4142 = vrot.slane %v4113, 4
        %v4143 = vsel %vm617, %v4142, %v4101
        %v4144 = vrot.slane %v4101, 4
        %v4145 = vsel %vm617, %v4113, %v4144
        %v4147 = vunpack.c.l.s4 1934713408
        %v4148 = vunpack.c.0.s8 %v4147
        %v4149 = vperm.slane %v4143, %v4148
        %v4151 = vunpack.c.l.s4 1934713408
        %v4152 = vunpack.c.0.s8 %v4151
        %v4153 = vperm.slane %v4145, %v4152
        %v4154 = vrot.slane %v4117, 4
        %v4155 = vsel %vm617, %v4154, %v4105
        %v4156 = vrot.slane %v4105, 4
        %v4157 = vsel %vm617, %v4117, %v4156
        %v4159 = vunpack.c.l.s4 1934713408
        %v4160 = vunpack.c.0.s8 %v4159
        %v4161 = vperm.slane %v4155, %v4160
        %v4163 = vunpack.c.l.s4 1934713408
        %v4164 = vunpack.c.0.s8 %v4163
        %v4165 = vperm.slane %v4157, %v4164
        %v4166 = vrot.slane %v4137, 4
        %v4167 = vsel %vm617, %v4166, %v4125
        %v4168 = vrot.slane %v4125, 4
        %v4169 = vsel %vm617, %v4137, %v4168
        %v4171 = vunpack.c.l.s4 1934713408
        %v4172 = vunpack.c.0.s8 %v4171
        %v4173 = vperm.slane %v4167, %v4172
        %v4175 = vunpack.c.l.s4 1934713408
        %v4176 = vunpack.c.0.s8 %v4175
        %v4177 = vperm.slane %v4169, %v4176
        %v4178 = vrot.slane %v4141, 4
        %v4179 = vsel %vm617, %v4178, %v4129
        %v4180 = vrot.slane %v4129, 4
        %v4181 = vsel %vm617, %v4141, %v4180
        %v4183 = vunpack.c.l.s4 1934713408
        %v4184 = vunpack.c.0.s8 %v4183
        %v4185 = vperm.slane %v4179, %v4184
        %v4187 = vunpack.c.l.s4 1934713408
        %v4188 = vunpack.c.0.s8 %v4187
        %v4189 = vperm.slane %v4181, %v4188
        %v4190 = vrot.slane %v4173, 4
        %v4191 = vsel %vm617, %v4190, %v4149
        %v4192 = vrot.slane %v4149, 4
        %v4193 = vsel %vm617, %v4173, %v4192
        %v4194 = vrot.slane %v4177, 4
        %v4195 = vsel %vm617, %v4194, %v4153
        %v4196 = vrot.slane %v4153, 4
        %v4197 = vsel %vm617, %v4177, %v4196
        %v4198 = vrot.slane %v4185, 4
        %v4199 = vsel %vm617, %v4198, %v4161
        %v4200 = vrot.slane %v4161, 4
        %v4201 = vsel %vm617, %v4185, %v4200
        %v4202 = vrot.slane %v4189, 4
        %v4203 = vsel %vm617, %v4202, %v4165
        %v4204 = vrot.slane %v4165, 4
        %v4205 = vsel %vm617, %v4189, %v4204
        %v4206 = vrot.slane %v2371, 4
        %v4207 = vsel %vm617, %v4206, %v2367
        %v4208 = vrot.slane %v2367, 4
        %v4209 = vsel %vm617, %v2371, %v4208
        %v4211 = vunpack.c.l.s4 1983009808
        %v4212 = vunpack.c.0.s8 %v4211
        %v4213 = vperm.slane %v4207, %v4212
        %v4215 = vunpack.c.l.s4 1983009808
        %v4216 = vunpack.c.0.s8 %v4215
        %v4217 = vperm.slane %v4209, %v4216
        %v4218 = vrot.slane %v2373, 4
        %v4219 = vsel %vm617, %v4218, %v2369
        %v4220 = vrot.slane %v2369, 4
        %v4221 = vsel %vm617, %v2373, %v4220
        %v4223 = vunpack.c.l.s4 1983009808
        %v4224 = vunpack.c.0.s8 %v4223
        %v4225 = vperm.slane %v4219, %v4224
        %v4227 = vunpack.c.l.s4 1983009808
        %v4228 = vunpack.c.0.s8 %v4227
        %v4229 = vperm.slane %v4221, %v4228
        %v4230 = vrot.slane %v2379, 4
        %v4231 = vsel %vm617, %v4230, %v2375
        %v4232 = vrot.slane %v2375, 4
        %v4233 = vsel %vm617, %v2379, %v4232
        %v4235 = vunpack.c.l.s4 1983009808
        %v4236 = vunpack.c.0.s8 %v4235
        %v4237 = vperm.slane %v4231, %v4236
        %v4239 = vunpack.c.l.s4 1983009808
        %v4240 = vunpack.c.0.s8 %v4239
        %v4241 = vperm.slane %v4233, %v4240
        %v4242 = vrot.slane %v2381, 4
        %v4243 = vsel %vm617, %v4242, %v2377
        %v4244 = vrot.slane %v2377, 4
        %v4245 = vsel %vm617, %v2381, %v4244
        %v4247 = vunpack.c.l.s4 1983009808
        %v4248 = vunpack.c.0.s8 %v4247
        %v4249 = vperm.slane %v4243, %v4248
        %v4251 = vunpack.c.l.s4 1983009808
        %v4252 = vunpack.c.0.s8 %v4251
        %v4253 = vperm.slane %v4245, %v4252
        %v4254 = vrot.slane %v4225, 4
        %v4255 = vsel %vm617, %v4254, %v4213
        %v4256 = vrot.slane %v4213, 4
        %v4257 = vsel %vm617, %v4225, %v4256
        %v4259 = vunpack.c.l.s4 1934713408
        %v4260 = vunpack.c.0.s8 %v4259
        %v4261 = vperm.slane %v4255, %v4260
        %v4263 = vunpack.c.l.s4 1934713408
        %v4264 = vunpack.c.0.s8 %v4263
        %v4265 = vperm.slane %v4257, %v4264
        %v4266 = vrot.slane %v4229, 4
        %v4267 = vsel %vm617, %v4266, %v4217
        %v4268 = vrot.slane %v4217, 4
        %v4269 = vsel %vm617, %v4229, %v4268
        %v4271 = vunpack.c.l.s4 1934713408
        %v4272 = vunpack.c.0.s8 %v4271
        %v4273 = vperm.slane %v4267, %v4272
        %v4275 = vunpack.c.l.s4 1934713408
        %v4276 = vunpack.c.0.s8 %v4275
        %v4277 = vperm.slane %v4269, %v4276
        %v4278 = vrot.slane %v4249, 4
        %v4279 = vsel %vm617, %v4278, %v4237
        %v4280 = vrot.slane %v4237, 4
        %v4281 = vsel %vm617, %v4249, %v4280
        %v4283 = vunpack.c.l.s4 1934713408
        %v4284 = vunpack.c.0.s8 %v4283
        %v4285 = vperm.slane %v4279, %v4284
        %v4287 = vunpack.c.l.s4 1934713408
        %v4288 = vunpack.c.0.s8 %v4287
        %v4289 = vperm.slane %v4281, %v4288
        %v4290 = vrot.slane %v4253, 4
        %v4291 = vsel %vm617, %v4290, %v4241
        %v4292 = vrot.slane %v4241, 4
        %v4293 = vsel %vm617, %v4253, %v4292
        %v4295 = vunpack.c.l.s4 1934713408
        %v4296 = vunpack.c.0.s8 %v4295
        %v4297 = vperm.slane %v4291, %v4296
        %v4299 = vunpack.c.l.s4 1934713408
        %v4300 = vunpack.c.0.s8 %v4299
        %v4301 = vperm.slane %v4293, %v4300
        %v4302 = vrot.slane %v4285, 4
        %v4303 = vsel %vm617, %v4302, %v4261
        %v4304 = vrot.slane %v4261, 4
        %v4305 = vsel %vm617, %v4285, %v4304
        %v4306 = vrot.slane %v4289, 4
        %v4307 = vsel %vm617, %v4306, %v4265
        %v4308 = vrot.slane %v4265, 4
        %v4309 = vsel %vm617, %v4289, %v4308
        %v4310 = vrot.slane %v4297, 4
        %v4311 = vsel %vm617, %v4310, %v4273
        %v4312 = vrot.slane %v4273, 4
        %v4313 = vsel %vm617, %v4297, %v4312
        %v4314 = vrot.slane %v4301, 4
        %v4315 = vsel %vm617, %v4314, %v4277
        %v4316 = vrot.slane %v4277, 4
        %v4317 = vsel %vm617, %v4301, %v4316
        %v4318 = vrot.slane %v2280, 4
        %v4319 = vsel %vm617, %v4318, %v2272
        %v4320 = vrot.slane %v2272, 4
        %v4321 = vsel %vm617, %v2280, %v4320
        %v4323 = vunpack.c.l.s4 1983009808
        %v4324 = vunpack.c.0.s8 %v4323
        %v4325 = vperm.slane %v4319, %v4324
        %v4327 = vunpack.c.l.s4 1983009808
        %v4328 = vunpack.c.0.s8 %v4327
        %v4329 = vperm.slane %v4321, %v4328
        %v4330 = vrot.slane %v2284, 4
        %v4331 = vsel %vm617, %v4330, %v2276
        %v4332 = vrot.slane %v2276, 4
        %v4333 = vsel %vm617, %v2284, %v4332
        %v4335 = vunpack.c.l.s4 1983009808
        %v4336 = vunpack.c.0.s8 %v4335
        %v4337 = vperm.slane %v4331, %v4336
        %v4339 = vunpack.c.l.s4 1983009808
        %v4340 = vunpack.c.0.s8 %v4339
        %v4341 = vperm.slane %v4333, %v4340
        %v4342 = vrot.slane %v2296, 4
        %v4343 = vsel %vm617, %v4342, %v2288
        %v4344 = vrot.slane %v2288, 4
        %v4345 = vsel %vm617, %v2296, %v4344
        %v4347 = vunpack.c.l.s4 1983009808
        %v4348 = vunpack.c.0.s8 %v4347
        %v4349 = vperm.slane %v4343, %v4348
        %v4351 = vunpack.c.l.s4 1983009808
        %v4352 = vunpack.c.0.s8 %v4351
        %v4353 = vperm.slane %v4345, %v4352
        %v4354 = vrot.slane %v2300, 4
        %v4355 = vsel %vm617, %v4354, %v2292
        %v4356 = vrot.slane %v2292, 4
        %v4357 = vsel %vm617, %v2300, %v4356
        %v4359 = vunpack.c.l.s4 1983009808
        %v4360 = vunpack.c.0.s8 %v4359
        %v4361 = vperm.slane %v4355, %v4360
        %v4363 = vunpack.c.l.s4 1983009808
        %v4364 = vunpack.c.0.s8 %v4363
        %v4365 = vperm.slane %v4357, %v4364
        %v4366 = vrot.slane %v4337, 4
        %v4367 = vsel %vm617, %v4366, %v4325
        %v4368 = vrot.slane %v4325, 4
        %v4369 = vsel %vm617, %v4337, %v4368
        %v4371 = vunpack.c.l.s4 1934713408
        %v4372 = vunpack.c.0.s8 %v4371
        %v4373 = vperm.slane %v4367, %v4372
        %v4375 = vunpack.c.l.s4 1934713408
        %v4376 = vunpack.c.0.s8 %v4375
        %v4377 = vperm.slane %v4369, %v4376
        %v4378 = vrot.slane %v4341, 4
        %v4379 = vsel %vm617, %v4378, %v4329
        %v4380 = vrot.slane %v4329, 4
        %v4381 = vsel %vm617, %v4341, %v4380
        %v4383 = vunpack.c.l.s4 1934713408
        %v4384 = vunpack.c.0.s8 %v4383
        %v4385 = vperm.slane %v4379, %v4384
        %v4387 = vunpack.c.l.s4 1934713408
        %v4388 = vunpack.c.0.s8 %v4387
        %v4389 = vperm.slane %v4381, %v4388
        %v4390 = vrot.slane %v4361, 4
        %v4391 = vsel %vm617, %v4390, %v4349
        %v4392 = vrot.slane %v4349, 4
        %v4393 = vsel %vm617, %v4361, %v4392
        %v4395 = vunpack.c.l.s4 1934713408
        %v4396 = vunpack.c.0.s8 %v4395
        %v4397 = vperm.slane %v4391, %v4396
        %v4399 = vunpack.c.l.s4 1934713408
        %v4400 = vunpack.c.0.s8 %v4399
        %v4401 = vperm.slane %v4393, %v4400
        %v4402 = vrot.slane %v4365, 4
        %v4403 = vsel %vm617, %v4402, %v4353
        %v4404 = vrot.slane %v4353, 4
        %v4405 = vsel %vm617, %v4365, %v4404
        %v4407 = vunpack.c.l.s4 1934713408
        %v4408 = vunpack.c.0.s8 %v4407
        %v4409 = vperm.slane %v4403, %v4408
        %v4411 = vunpack.c.l.s4 1934713408
        %v4412 = vunpack.c.0.s8 %v4411
        %v4413 = vperm.slane %v4405, %v4412
        %v4414 = vrot.slane %v4397, 4
        %v4415 = vsel %vm617, %v4414, %v4373
        %v4416 = vrot.slane %v4373, 4
        %v4417 = vsel %vm617, %v4397, %v4416
        %v4418 = vrot.slane %v4401, 4
        %v4419 = vsel %vm617, %v4418, %v4377
        %v4420 = vrot.slane %v4377, 4
        %v4421 = vsel %vm617, %v4401, %v4420
        %v4422 = vrot.slane %v4409, 4
        %v4423 = vsel %vm617, %v4422, %v4385
        %v4424 = vrot.slane %v4385, 4
        %v4425 = vsel %vm617, %v4409, %v4424
        %v4426 = vrot.slane %v4413, 4
        %v4427 = vsel %vm617, %v4426, %v4389
        %v4428 = vrot.slane %v4389, 4
        %v4429 = vsel %vm617, %v4413, %v4428
        %v4430 = vrot.slane %v2312, 4
        %v4431 = vsel %vm617, %v4430, %v2304
        %v4432 = vrot.slane %v2304, 4
        %v4433 = vsel %vm617, %v2312, %v4432
        %v4435 = vunpack.c.l.s4 1983009808
        %v4436 = vunpack.c.0.s8 %v4435
        %v4437 = vperm.slane %v4431, %v4436
        %v4439 = vunpack.c.l.s4 1983009808
        %v4440 = vunpack.c.0.s8 %v4439
        %v4441 = vperm.slane %v4433, %v4440
        %v4442 = vrot.slane %v2316, 4
        %v4443 = vsel %vm617, %v4442, %v2308
        %v4444 = vrot.slane %v2308, 4
        %v4445 = vsel %vm617, %v2316, %v4444
        %v4447 = vunpack.c.l.s4 1983009808
        %v4448 = vunpack.c.0.s8 %v4447
        %v4449 = vperm.slane %v4443, %v4448
        %v4451 = vunpack.c.l.s4 1983009808
        %v4452 = vunpack.c.0.s8 %v4451
        %v4453 = vperm.slane %v4445, %v4452
        %v4454 = vrot.slane %v2328, 4
        %v4455 = vsel %vm617, %v4454, %v2320
        %v4456 = vrot.slane %v2320, 4
        %v4457 = vsel %vm617, %v2328, %v4456
        %v4459 = vunpack.c.l.s4 1983009808
        %v4460 = vunpack.c.0.s8 %v4459
        %v4461 = vperm.slane %v4455, %v4460
        %v4463 = vunpack.c.l.s4 1983009808
        %v4464 = vunpack.c.0.s8 %v4463
        %v4465 = vperm.slane %v4457, %v4464
        %v4466 = vrot.slane %v2332, 4
        %v4467 = vsel %vm617, %v4466, %v2324
        %v4468 = vrot.slane %v2324, 4
        %v4469 = vsel %vm617, %v2332, %v4468
        %v4471 = vunpack.c.l.s4 1983009808
        %v4472 = vunpack.c.0.s8 %v4471
        %v4473 = vperm.slane %v4467, %v4472
        %v4475 = vunpack.c.l.s4 1983009808
        %v4476 = vunpack.c.0.s8 %v4475
        %v4477 = vperm.slane %v4469, %v4476
        %v4478 = vrot.slane %v4449, 4
        %v4479 = vsel %vm617, %v4478, %v4437
        %v4480 = vrot.slane %v4437, 4
        %v4481 = vsel %vm617, %v4449, %v4480
        %v4483 = vunpack.c.l.s4 1934713408
        %v4484 = vunpack.c.0.s8 %v4483
        %v4485 = vperm.slane %v4479, %v4484
        %v4487 = vunpack.c.l.s4 1934713408
        %v4488 = vunpack.c.0.s8 %v4487
        %v4489 = vperm.slane %v4481, %v4488
        %v4490 = vrot.slane %v4453, 4
        %v4491 = vsel %vm617, %v4490, %v4441
        %v4492 = vrot.slane %v4441, 4
        %v4493 = vsel %vm617, %v4453, %v4492
        %v4495 = vunpack.c.l.s4 1934713408
        %v4496 = vunpack.c.0.s8 %v4495
        %v4497 = vperm.slane %v4491, %v4496
        %v4499 = vunpack.c.l.s4 1934713408
        %v4500 = vunpack.c.0.s8 %v4499
        %v4501 = vperm.slane %v4493, %v4500
        %v4502 = vrot.slane %v4473, 4
        %v4503 = vsel %vm617, %v4502, %v4461
        %v4504 = vrot.slane %v4461, 4
        %v4505 = vsel %vm617, %v4473, %v4504
        %v4507 = vunpack.c.l.s4 1934713408
        %v4508 = vunpack.c.0.s8 %v4507
        %v4509 = vperm.slane %v4503, %v4508
        %v4511 = vunpack.c.l.s4 1934713408
        %v4512 = vunpack.c.0.s8 %v4511
        %v4513 = vperm.slane %v4505, %v4512
        %v4514 = vrot.slane %v4477, 4
        %v4515 = vsel %vm617, %v4514, %v4465
        %v4516 = vrot.slane %v4465, 4
        %v4517 = vsel %vm617, %v4477, %v4516
        %v4519 = vunpack.c.l.s4 1934713408
        %v4520 = vunpack.c.0.s8 %v4519
        %v4521 = vperm.slane %v4515, %v4520
        %v4523 = vunpack.c.l.s4 1934713408
        %v4524 = vunpack.c.0.s8 %v4523
        %v4525 = vperm.slane %v4517, %v4524
        %v4526 = vrot.slane %v4509, 4
        %v4527 = vsel %vm617, %v4526, %v4485
        %v4528 = vrot.slane %v4485, 4
        %v4529 = vsel %vm617, %v4509, %v4528
        %v4530 = vrot.slane %v4513, 4
        %v4531 = vsel %vm617, %v4530, %v4489
        %v4532 = vrot.slane %v4489, 4
        %v4533 = vsel %vm617, %v4513, %v4532
        %v4534 = vrot.slane %v4521, 4
        %v4535 = vsel %vm617, %v4534, %v4497
        %v4536 = vrot.slane %v4497, 4
        %v4537 = vsel %vm617, %v4521, %v4536
        %v4538 = vrot.slane %v4525, 4
        %v4539 = vsel %vm617, %v4538, %v4501
        %v4540 = vrot.slane %v4501, 4
        %v4541 = vsel %vm617, %v4525, %v4540
        %4551 = vrot.lane.b32.xlu0 %v2625, 16
        %v4552 = vpop.permute.xlu0 %4551
        %4553 = vrot.lane.b32.xlu0 %v2737, 16
        %v4554 = vpop.permute.xlu0 %4553
        %4555 = vrot.lane.b32.xlu0 %v2849, 16
        %v4556 = vpop.permute.xlu0 %4555
        %4557 = vrot.lane.b32.xlu0 %v2961, 16
        %v4558 = vpop.permute.xlu0 %4557
        %4559 = vrot.lane.b32.xlu0 %v3073, 16
        %v4560 = vpop.permute.xlu0 %4559
        %4561 = vrot.lane.b32.xlu0 %v3185, 16
        %v4562 = vpop.permute.xlu0 %4561
        %4563 = vrot.lane.b32.xlu0 %v3297, 16
        %v4564 = vpop.permute.xlu0 %4563
        %4565 = vrot.lane.b32.xlu0 %v3409, 16
        %v4566 = vpop.permute.xlu0 %4565
        %4567 = vrot.lane.b32.xlu0 %v3521, 16
        %v4568 = vpop.permute.xlu0 %4567
        %4587 = vrot.lane.b32.xlu0 %v2627, 32
        %v4588 = vpop.permute.xlu0 %4587
        %4589 = vrot.lane.b32.xlu0 %v2739, 32
        %v4590 = vpop.permute.xlu0 %4589
        %4591 = vrot.lane.b32.xlu0 %v2851, 32
        %v4592 = vpop.permute.xlu0 %4591
        %4593 = vrot.lane.b32.xlu0 %v2963, 32
        %v4594 = vpop.permute.xlu0 %4593
        %4595 = vrot.lane.b32.xlu0 %v3075, 32
        %v4596 = vpop.permute.xlu0 %4595
        %4597 = vrot.lane.b32.xlu0 %v3187, 32
        %v4598 = vpop.permute.xlu0 %4597
        %4599 = vrot.lane.b32.xlu0 %v3299, 32
        %v4600 = vpop.permute.xlu0 %4599
        %4601 = vrot.lane.b32.xlu0 %v3411, 32
        %v4602 = vpop.permute.xlu0 %4601
        %4603 = vrot.lane.b32.xlu0 %v3523, 32
        %v4604 = vpop.permute.xlu0 %4603
        %4623 = vrot.lane.b32.xlu0 %v2629, 48
        %v4624 = vpop.permute.xlu0 %4623
        %4625 = vrot.lane.b32.xlu0 %v2741, 48
        %v4626 = vpop.permute.xlu0 %4625
        %4627 = vrot.lane.b32.xlu0 %v2853, 48
        %v4628 = vpop.permute.xlu0 %4627
        %4629 = vrot.lane.b32.xlu0 %v2965, 48
        %v4630 = vpop.permute.xlu0 %4629
        %4631 = vrot.lane.b32.xlu0 %v3077, 48
        %v4632 = vpop.permute.xlu0 %4631
        %4633 = vrot.lane.b32.xlu0 %v3189, 48
        %v4634 = vpop.permute.xlu0 %4633
        %4635 = vrot.lane.b32.xlu0 %v3301, 48
        %v4636 = vpop.permute.xlu0 %4635
        %4637 = vrot.lane.b32.xlu0 %v3413, 48
        %v4638 = vpop.permute.xlu0 %4637
        %4639 = vrot.lane.b32.xlu0 %v3525, 48
        %v4640 = vpop.permute.xlu0 %4639
        %4659 = vrot.lane.b32.xlu0 %v2631, 64
        %v4660 = vpop.permute.xlu0 %4659
        %4661 = vrot.lane.b32.xlu0 %v2743, 64
        %v4662 = vpop.permute.xlu0 %4661
        %4663 = vrot.lane.b32.xlu0 %v2855, 64
        %v4664 = vpop.permute.xlu0 %4663
        %4665 = vrot.lane.b32.xlu0 %v2967, 64
        %v4666 = vpop.permute.xlu0 %4665
        %4667 = vrot.lane.b32.xlu0 %v3079, 64
        %v4668 = vpop.permute.xlu0 %4667
        %4669 = vrot.lane.b32.xlu0 %v3191, 64
        %v4670 = vpop.permute.xlu0 %4669
        %4671 = vrot.lane.b32.xlu0 %v3303, 64
        %v4672 = vpop.permute.xlu0 %4671
        %4673 = vrot.lane.b32.xlu0 %v3415, 64
        %v4674 = vpop.permute.xlu0 %4673
        %4675 = vrot.lane.b32.xlu0 %v3527, 64
        %v4676 = vpop.permute.xlu0 %4675
        %4695 = vrot.lane.b32.xlu0 %v2633, 80
        %v4696 = vpop.permute.xlu0 %4695
        %4697 = vrot.lane.b32.xlu0 %v2745, 80
        %v4698 = vpop.permute.xlu0 %4697
        %4699 = vrot.lane.b32.xlu0 %v2857, 80
        %v4700 = vpop.permute.xlu0 %4699
        %4701 = vrot.lane.b32.xlu0 %v2969, 80
        %v4702 = vpop.permute.xlu0 %4701
        %4703 = vrot.lane.b32.xlu0 %v3081, 80
        %v4704 = vpop.permute.xlu0 %4703
        %4705 = vrot.lane.b32.xlu0 %v3193, 80
        %v4706 = vpop.permute.xlu0 %4705
        %4707 = vrot.lane.b32.xlu0 %v3305, 80
        %v4708 = vpop.permute.xlu0 %4707
        %4709 = vrot.lane.b32.xlu0 %v3417, 80
        %v4710 = vpop.permute.xlu0 %4709
        %4711 = vrot.lane.b32.xlu0 %v3529, 80
        %v4712 = vpop.permute.xlu0 %4711
        %4731 = vrot.lane.b32.xlu0 %v2635, 96
        %v4732 = vpop.permute.xlu0 %4731
        %4733 = vrot.lane.b32.xlu0 %v2747, 96
        %v4734 = vpop.permute.xlu0 %4733
        %4735 = vrot.lane.b32.xlu0 %v2859, 96
        %v4736 = vpop.permute.xlu0 %4735
        %4737 = vrot.lane.b32.xlu0 %v2971, 96
        %v4738 = vpop.permute.xlu0 %4737
        %4739 = vrot.lane.b32.xlu0 %v3083, 96
        %v4740 = vpop.permute.xlu0 %4739
        %4741 = vrot.lane.b32.xlu0 %v3195, 96
        %v4742 = vpop.permute.xlu0 %4741
        %4743 = vrot.lane.b32.xlu0 %v3307, 96
        %v4744 = vpop.permute.xlu0 %4743
        %4745 = vrot.lane.b32.xlu0 %v3419, 96
        %v4746 = vpop.permute.xlu0 %4745
        %4747 = vrot.lane.b32.xlu0 %v3531, 96
        %v4748 = vpop.permute.xlu0 %4747
        %4767 = vrot.lane.b32.xlu0 %v2637, 112
        %v4768 = vpop.permute.xlu0 %4767
        %4769 = vrot.lane.b32.xlu0 %v2749, 112
        %v4770 = vpop.permute.xlu0 %4769
        %4771 = vrot.lane.b32.xlu0 %v2861, 112
        %v4772 = vpop.permute.xlu0 %4771
        %4773 = vrot.lane.b32.xlu0 %v2973, 112
        %v4774 = vpop.permute.xlu0 %4773
        %4775 = vrot.lane.b32.xlu0 %v3085, 112
        %v4776 = vpop.permute.xlu0 %4775
        %4777 = vrot.lane.b32.xlu0 %v3197, 112
        %v4778 = vpop.permute.xlu0 %4777
        %4779 = vrot.lane.b32.xlu0 %v3309, 112
        %v4780 = vpop.permute.xlu0 %4779
        %4781 = vrot.lane.b32.xlu0 %v3421, 112
        %v4782 = vpop.permute.xlu0 %4781
        %4783 = vrot.lane.b32.xlu0 %v3533, 112
        %v4784 = vpop.permute.xlu0 %4783
        %4803 = vrot.lane.b32.xlu0 %v3633, 16
        %v4804 = vpop.permute.xlu0 %4803
        %4805 = vrot.lane.b32.xlu0 %v3745, 16
        %v4806 = vpop.permute.xlu0 %4805
        %4807 = vrot.lane.b32.xlu0 %v3857, 16
        %v4808 = vpop.permute.xlu0 %4807
        %4809 = vrot.lane.b32.xlu0 %v3969, 16
        %v4810 = vpop.permute.xlu0 %4809
        %4811 = vrot.lane.b32.xlu0 %v4081, 16
        %v4812 = vpop.permute.xlu0 %4811
        %4813 = vrot.lane.b32.xlu0 %v4193, 16
        %v4814 = vpop.permute.xlu0 %4813
        %4815 = vrot.lane.b32.xlu0 %v4305, 16
        %v4816 = vpop.permute.xlu0 %4815
        %4817 = vrot.lane.b32.xlu0 %v4417, 16
        %v4818 = vpop.permute.xlu0 %4817
        %4819 = vrot.lane.b32.xlu0 %v4529, 16
        %v4820 = vpop.permute.xlu0 %4819
        %4839 = vrot.lane.b32.xlu0 %v3635, 32
        %v4840 = vpop.permute.xlu0 %4839
        %4841 = vrot.lane.b32.xlu0 %v3747, 32
        %v4842 = vpop.permute.xlu0 %4841
        %4843 = vrot.lane.b32.xlu0 %v3859, 32
        %v4844 = vpop.permute.xlu0 %4843
        %4845 = vrot.lane.b32.xlu0 %v3971, 32
        %v4846 = vpop.permute.xlu0 %4845
        %4847 = vrot.lane.b32.xlu0 %v4083, 32
        %v4848 = vpop.permute.xlu0 %4847
        %4849 = vrot.lane.b32.xlu0 %v4195, 32
        %v4850 = vpop.permute.xlu0 %4849
        %4851 = vrot.lane.b32.xlu0 %v4307, 32
        %v4852 = vpop.permute.xlu0 %4851
        %4853 = vrot.lane.b32.xlu0 %v4419, 32
        %v4854 = vpop.permute.xlu0 %4853
        %4855 = vrot.lane.b32.xlu0 %v4531, 32
        %v4856 = vpop.permute.xlu0 %4855
        %4875 = vrot.lane.b32.xlu0 %v3637, 48
        %v4876 = vpop.permute.xlu0 %4875
        %4877 = vrot.lane.b32.xlu0 %v3749, 48
        %v4878 = vpop.permute.xlu0 %4877
        %4879 = vrot.lane.b32.xlu0 %v3861, 48
        %v4880 = vpop.permute.xlu0 %4879
        %4881 = vrot.lane.b32.xlu0 %v3973, 48
        %v4882 = vpop.permute.xlu0 %4881
        %4883 = vrot.lane.b32.xlu0 %v4085, 48
        %v4884 = vpop.permute.xlu0 %4883
        %4885 = vrot.lane.b32.xlu0 %v4197, 48
        %v4886 = vpop.permute.xlu0 %4885
        %4887 = vrot.lane.b32.xlu0 %v4309, 48
        %v4888 = vpop.permute.xlu0 %4887
        %4889 = vrot.lane.b32.xlu0 %v4421, 48
        %v4890 = vpop.permute.xlu0 %4889
        %4891 = vrot.lane.b32.xlu0 %v4533, 48
        %v4892 = vpop.permute.xlu0 %4891
        %4911 = vrot.lane.b32.xlu0 %v3639, 64
        %v4912 = vpop.permute.xlu0 %4911
        %4913 = vrot.lane.b32.xlu0 %v3751, 64
        %v4914 = vpop.permute.xlu0 %4913
        %4915 = vrot.lane.b32.xlu0 %v3863, 64
        %v4916 = vpop.permute.xlu0 %4915
        %4917 = vrot.lane.b32.xlu0 %v3975, 64
        %v4918 = vpop.permute.xlu0 %4917
        %4919 = vrot.lane.b32.xlu0 %v4087, 64
        %v4920 = vpop.permute.xlu0 %4919
        %4921 = vrot.lane.b32.xlu0 %v4199, 64
        %v4922 = vpop.permute.xlu0 %4921
        %4923 = vrot.lane.b32.xlu0 %v4311, 64
        %v4924 = vpop.permute.xlu0 %4923
        %4925 = vrot.lane.b32.xlu0 %v4423, 64
        %v4926 = vpop.permute.xlu0 %4925
        %4927 = vrot.lane.b32.xlu0 %v4535, 64
        %v4928 = vpop.permute.xlu0 %4927
        %4947 = vrot.lane.b32.xlu0 %v3641, 80
        %v4948 = vpop.permute.xlu0 %4947
        %4949 = vrot.lane.b32.xlu0 %v3753, 80
        %v4950 = vpop.permute.xlu0 %4949
        %4951 = vrot.lane.b32.xlu0 %v3865, 80
        %v4952 = vpop.permute.xlu0 %4951
        %4953 = vrot.lane.b32.xlu0 %v3977, 80
        %v4954 = vpop.permute.xlu0 %4953
        %4955 = vrot.lane.b32.xlu0 %v4089, 80
        %v4956 = vpop.permute.xlu0 %4955
        %4957 = vrot.lane.b32.xlu0 %v4201, 80
        %v4958 = vpop.permute.xlu0 %4957
        %4959 = vrot.lane.b32.xlu0 %v4313, 80
        %v4960 = vpop.permute.xlu0 %4959
        %4961 = vrot.lane.b32.xlu0 %v4425, 80
        %v4962 = vpop.permute.xlu0 %4961
        %4963 = vrot.lane.b32.xlu0 %v4537, 80
        %v4964 = vpop.permute.xlu0 %4963
        %4983 = vrot.lane.b32.xlu0 %v3643, 96
        %v4984 = vpop.permute.xlu0 %4983
        %4985 = vrot.lane.b32.xlu0 %v3755, 96
        %v4986 = vpop.permute.xlu0 %4985
        %4987 = vrot.lane.b32.xlu0 %v3867, 96
        %v4988 = vpop.permute.xlu0 %4987
        %4989 = vrot.lane.b32.xlu0 %v3979, 96
        %v4990 = vpop.permute.xlu0 %4989
        %4991 = vrot.lane.b32.xlu0 %v4091, 96
        %v4992 = vpop.permute.xlu0 %4991
        %4993 = vrot.lane.b32.xlu0 %v4203, 96
        %v4994 = vpop.permute.xlu0 %4993
        %4995 = vrot.lane.b32.xlu0 %v4315, 96
        %v4996 = vpop.permute.xlu0 %4995
        %4997 = vrot.lane.b32.xlu0 %v4427, 96
        %v4998 = vpop.permute.xlu0 %4997
        %4999 = vrot.lane.b32.xlu0 %v4539, 96
        %v5000 = vpop.permute.xlu0 %4999
        %5019 = vrot.lane.b32.xlu0 %v3645, 112
        %v5020 = vpop.permute.xlu0 %5019
        %5021 = vrot.lane.b32.xlu0 %v3757, 112
        %v5022 = vpop.permute.xlu0 %5021
        %5023 = vrot.lane.b32.xlu0 %v3869, 112
        %v5024 = vpop.permute.xlu0 %5023
        %5025 = vrot.lane.b32.xlu0 %v3981, 112
        %v5026 = vpop.permute.xlu0 %5025
        %5027 = vrot.lane.b32.xlu0 %v4093, 112
        %v5028 = vpop.permute.xlu0 %5027
        %5029 = vrot.lane.b32.xlu0 %v4205, 112
        %v5030 = vpop.permute.xlu0 %5029
        %5031 = vrot.lane.b32.xlu0 %v4317, 112
        %v5032 = vpop.permute.xlu0 %5031
        %5033 = vrot.lane.b32.xlu0 %v4429, 112
        %v5034 = vpop.permute.xlu0 %5033
        %5035 = vrot.lane.b32.xlu0 %v4541, 112
        %v5036 = vpop.permute.xlu0 %5035
        %v5046 = vsel %vm841, %v2623, %v4552
        %v5047 = vsel %vm841, %v2735, %v4554
        %v5048 = vsel %vm841, %v2847, %v4556
        %v5049 = vsel %vm841, %v2959, %v4558
        %v5050 = vsel %vm841, %v3071, %v4560
        %v5051 = vsel %vm841, %v3183, %v4562
        %v5052 = vsel %vm841, %v3295, %v4564
        %v5053 = vsel %vm841, %v3407, %v4566
        %v5054 = vsel %vm841, %v3519, %v4568
        %v5055 = vsel %vm441, %v5046, %v4588
        %v5056 = vsel %vm441, %v5047, %v4590
        %v5057 = vsel %vm441, %v5048, %v4592
        %v5058 = vsel %vm441, %v5049, %v4594
        %v5059 = vsel %vm441, %v5050, %v4596
        %v5060 = vsel %vm441, %v5051, %v4598
        %v5061 = vsel %vm441, %v5052, %v4600
        %v5062 = vsel %vm441, %v5053, %v4602
        %v5063 = vsel %vm441, %v5054, %v4604
        %vm5064 = vcmask 392192
        %v5065 = vsel %vm5064, %v5055, %v4624
        %v5066 = vsel %vm5064, %v5056, %v4626
        %v5067 = vsel %vm5064, %v5057, %v4628
        %v5068 = vsel %vm5064, %v5058, %v4630
        %v5069 = vsel %vm5064, %v5059, %v4632
        %v5070 = vsel %vm5064, %v5060, %v4634
        %v5071 = vsel %vm5064, %v5061, %v4636
        %v5072 = vsel %vm5064, %v5062, %v4638
        %v5073 = vsel %vm5064, %v5063, %v4640
        %vm5074 = vcmask 523264
        %v5075 = vsel %vm5074, %v5065, %v4660
        %v5076 = vsel %vm5074, %v5066, %v4662
        %v5077 = vsel %vm5074, %v5067, %v4664
        %v5078 = vsel %vm5074, %v5068, %v4666
        %v5079 = vsel %vm5074, %v5069, %v4668
        %v5080 = vsel %vm5074, %v5070, %v4670
        %v5081 = vsel %vm5074, %v5071, %v4672
        %v5082 = vsel %vm5074, %v5072, %v4674
        %v5083 = vsel %vm5074, %v5073, %v4676
        %vm5084 = vcmask 654336
        %v5085 = vsel %vm5084, %v5075, %v4696
        %v5086 = vsel %vm5084, %v5076, %v4698
        %v5087 = vsel %vm5084, %v5077, %v4700
        %v5088 = vsel %vm5084, %v5078, %v4702
        %v5089 = vsel %vm5084, %v5079, %v4704
        %v5090 = vsel %vm5084, %v5080, %v4706
        %v5091 = vsel %vm5084, %v5081, %v4708
        %v5092 = vsel %vm5084, %v5082, %v4710
        %v5093 = vsel %vm5084, %v5083, %v4712
        %vm5094 = vcmask 785408
        %v5095 = vsel %vm5094, %v5085, %v4732
        %v5096 = vsel %vm5094, %v5086, %v4734
        %v5097 = vsel %vm5094, %v5087, %v4736
        %v5098 = vsel %vm5094, %v5088, %v4738
        %v5099 = vsel %vm5094, %v5089, %v4740
        %v5100 = vsel %vm5094, %v5090, %v4742
        %v5101 = vsel %vm5094, %v5091, %v4744
        %v5102 = vsel %vm5094, %v5092, %v4746
        %v5103 = vsel %vm5094, %v5093, %v4748
        %vm5104 = vcmask 916480
        %v5105 = vsel %vm5104, %v5095, %v4768
        %v5106 = vsel %vm5104, %v5096, %v4770
        %v5107 = vsel %vm5104, %v5097, %v4772
        %v5108 = vsel %vm5104, %v5098, %v4774
        %v5109 = vsel %vm5104, %v5099, %v4776
        %v5110 = vsel %vm5104, %v5100, %v4778
        %v5111 = vsel %vm5104, %v5101, %v4780
        %v5112 = vsel %vm5104, %v5102, %v4782
        %v5113 = vsel %vm5104, %v5103, %v4784
        %v5114 = vsel %vm841, %v3631, %v4804
        %v5115 = vsel %vm841, %v3743, %v4806
        %v5116 = vsel %vm841, %v3855, %v4808
        %v5117 = vsel %vm841, %v3967, %v4810
        %v5118 = vsel %vm841, %v4079, %v4812
        %v5119 = vsel %vm841, %v4191, %v4814
        %v5120 = vsel %vm841, %v4303, %v4816
        %v5121 = vsel %vm841, %v4415, %v4818
        %v5122 = vsel %vm841, %v4527, %v4820
        %v5123 = vsel %vm441, %v5114, %v4840
        %v5124 = vsel %vm441, %v5115, %v4842
        %v5125 = vsel %vm441, %v5116, %v4844
        %v5126 = vsel %vm441, %v5117, %v4846
        %v5127 = vsel %vm441, %v5118, %v4848
        %v5128 = vsel %vm441, %v5119, %v4850
        %v5129 = vsel %vm441, %v5120, %v4852
        %v5130 = vsel %vm441, %v5121, %v4854
        %v5131 = vsel %vm441, %v5122, %v4856
        %v5132 = vsel %vm5064, %v5123, %v4876
        %v5133 = vsel %vm5064, %v5124, %v4878
        %v5134 = vsel %vm5064, %v5125, %v4880
        %v5135 = vsel %vm5064, %v5126, %v4882
        %v5136 = vsel %vm5064, %v5127, %v4884
        %v5137 = vsel %vm5064, %v5128, %v4886
        %v5138 = vsel %vm5064, %v5129, %v4888
        %v5139 = vsel %vm5064, %v5130, %v4890
        %v5140 = vsel %vm5064, %v5131, %v4892
        %v5141 = vsel %vm5074, %v5132, %v4912
        %v5142 = vsel %vm5074, %v5133, %v4914
        %v5143 = vsel %vm5074, %v5134, %v4916
        %v5144 = vsel %vm5074, %v5135, %v4918
        %v5145 = vsel %vm5074, %v5136, %v4920
        %v5146 = vsel %vm5074, %v5137, %v4922
        %v5147 = vsel %vm5074, %v5138, %v4924
        %v5148 = vsel %vm5074, %v5139, %v4926
        %v5149 = vsel %vm5074, %v5140, %v4928
        %v5150 = vsel %vm5084, %v5141, %v4948
        %v5151 = vsel %vm5084, %v5142, %v4950
        %v5152 = vsel %vm5084, %v5143, %v4952
        %v5153 = vsel %vm5084, %v5144, %v4954
        %v5154 = vsel %vm5084, %v5145, %v4956
        %v5155 = vsel %vm5084, %v5146, %v4958
        %v5156 = vsel %vm5084, %v5147, %v4960
        %v5157 = vsel %vm5084, %v5148, %v4962
        %v5158 = vsel %vm5084, %v5149, %v4964
        %v5159 = vsel %vm5094, %v5150, %v4984
        %v5160 = vsel %vm5094, %v5151, %v4986
        %v5161 = vsel %vm5094, %v5152, %v4988
        %v5162 = vsel %vm5094, %v5153, %v4990
        %v5163 = vsel %vm5094, %v5154, %v4992
        %v5164 = vsel %vm5094, %v5155, %v4994
        %v5165 = vsel %vm5094, %v5156, %v4996
        %v5166 = vsel %vm5094, %v5157, %v4998
        %v5167 = vsel %vm5094, %v5158, %v5000
        %v5168 = vsel %vm5104, %v5159, %v5020
        %v5169 = vsel %vm5104, %v5160, %v5022
        %v5170 = vsel %vm5104, %v5161, %v5024
        %v5171 = vsel %vm5104, %v5162, %v5026
        %v5172 = vsel %vm5104, %v5163, %v5028
        %v5173 = vsel %vm5104, %v5164, %v5030
        %v5174 = vsel %vm5104, %v5165, %v5032
        %v5175 = vsel %vm5104, %v5166, %v5034
        %v5176 = vsel %vm5104, %v5167, %v5036
        %5178 = vset.pattern.permute.xlu0 0
        %5179 = vperm.xlu0 %5178, %v571
        %v5180 = vpop.permute.xlu0 %5179
        %vm5182 = vcmask 588800
        %v5184 = vsel %vm5182, %v570, 0
        %5186 = vmatpush.msra.mxu0 0.0
        %5187 = vmatpush.msra.mxu0 0.0
        %5188 = vmatpush.msra.mxu0 0.0
        %5189 = vmatpush.msra.mxu0 0.0
        %5190 = vmatpush.msra.mxu0 0.0
        %5191 = vmatpush.msra.mxu0 0.0
        %5192 = vmatpush.msra.mxu0 0.0
        %5193 = vmatpush.msra.mxu0 %v5113
        %5194 = vmatpush.msra.mxu0 %v5112
        %5195 = vmatpush.msra.mxu0 %v5111
        %5196 = vmatpush.msra.mxu0 %v5110
        %5197 = vmatpush.msra.mxu0 %v5109
        %5198 = vmatpush.msra.mxu0 %v5108
        %5199 = vmatpush.msra.mxu0 %v5107
        %5200 = vmatpush.msra.mxu0 %v5106
        %5201 = vmatpush.msra.mxu0 %v5105
        %5202 = vmatmul.f32.gmra.mxu0 %v5184
        %v5203 = vpop.f32.mrf.mxu0
        %v5204 = vadd.f32 %v5180, %v5203
        %5205 = vdwg.mxu0
        %5206 = vmatpush.msra.mxu0 0.0
        %5207 = vmatpush.msra.mxu0 0.0
        %5208 = vmatpush.msra.mxu0 0.0
        %5209 = vmatpush.msra.mxu0 0.0
        %5210 = vmatpush.msra.mxu0 0.0
        %5211 = vmatpush.msra.mxu0 0.0
        %5212 = vmatpush.msra.mxu0 0.0
        %5213 = vmatpush.msra.mxu0 %v5176
        %5214 = vmatpush.msra.mxu0 %v5175
        %5215 = vmatpush.msra.mxu0 %v5174
        %5216 = vmatpush.msra.mxu0 %v5173
        %5217 = vmatpush.msra.mxu0 %v5172
        %5218 = vmatpush.msra.mxu0 %v5171
        %5219 = vmatpush.msra.mxu0 %v5170
        %5220 = vmatpush.msra.mxu0 %v5169
        %5221 = vmatpush.msra.mxu0 %v5168
        %5222 = vmatmul.f32.gmra.mxu0 %v5184
        %v5223 = vpop.f32.mrf.mxu0
        %v5224 = vadd.f32 %v5180, %v5223
        %5225 = vdwg.mxu0
        %v5226 = vsub.f32 0.0, %v5204
        %v5227 = vsub.f32 0.0, %v5224
        %v5228 = vmul.f32 %v5226, 1.442695
        %v5229 = vpow.pop %v5228
        %v5230 = vmul.f32 %v5227, 1.442695
        %v5231 = vpow.pop %v5230
        %v5232 = vadd.f32 %v5229, 1.0
        %v5233 = vadd.f32 %v5231, 1.0
        %v5234 = vrcp.pop %v5232
        %v5235 = vmul.f32 %v5232, %v5234
        %v5236 = vsub.f32 1.0, %v5235
        %v5237 = vmul.f32 %v5234, %v5236
        %v5238 = vadd.f32 %v5234, %v5237
        %vm5239 = vweird.f32 %v5232
        %vm5240 = vweird.f32 %v5234
        %vm5241 = vmor %vm5239, %vm5240
        %v5242 = vsel %vm5241, %v5234, %v5238
        %v5243 = vand.u32 2147483647, %v5232
        %vm5244 = vcmp.eq.f32.partialorder %v5243, 8.507059e+37
        %v5245 = vand.u32 %v5232, 2147483648
        %v5246 = vor.u32 1.1754944e-38, %v5245
        %v5247 = vsel %vm5244, %v5246, %v5242
        %v5248 = vrcp.pop %v5233
        %v5249 = vmul.f32 %v5233, %v5248
        %v5250 = vsub.f32 1.0, %v5249
        %v5251 = vmul.f32 %v5248, %v5250
        %v5252 = vadd.f32 %v5248, %v5251
        %vm5253 = vweird.f32 %v5233
        %vm5254 = vweird.f32 %v5248
        %vm5255 = vmor %vm5253, %vm5254
        %v5256 = vsel %vm5255, %v5248, %v5252
        %v5257 = vand.u32 2147483647, %v5233
        %vm5258 = vcmp.eq.f32.partialorder %v5257, 8.507059e+37
        %v5259 = vand.u32 %v5233, 2147483648
        %v5260 = vor.u32 1.1754944e-38, %v5259
        %v5261 = vsel %vm5258, %v5260, %v5256
        %v5262 = vmul.f32 %v5204, %v5247
        %v5263 = vmul.f32 %v5224, %v5261
        %v5264 = vld [vmem:[%s5] sm:$0xff]
        %v5265 = vld [vmem:[%s6] sm:$0xff]
        %5267 = vrot.lane.b32.xlu0 %v5262, 112
        %v5268 = vpop.permute.xlu0 %5267
        %5270 = vrot.lane.b32.xlu0 %v5262, 96
        %v5271 = vpop.permute.xlu0 %5270
        %5273 = vrot.lane.b32.xlu0 %v5262, 80
        %v5274 = vpop.permute.xlu0 %5273
        %5276 = vrot.lane.b32.xlu0 %v5262, 64
        %v5277 = vpop.permute.xlu0 %5276
        %5279 = vrot.lane.b32.xlu0 %v5262, 48
        %v5280 = vpop.permute.xlu0 %5279
        %5282 = vrot.lane.b32.xlu0 %v5262, 32
        %v5283 = vpop.permute.xlu0 %5282
        %5285 = vrot.lane.b32.xlu0 %v5262, 16
        %v5286 = vpop.permute.xlu0 %5285
        %5289 = vrot.lane.b32.xlu0 %v5263, 112
        %v5290 = vpop.permute.xlu0 %5289
        %5292 = vrot.lane.b32.xlu0 %v5263, 96
        %v5293 = vpop.permute.xlu0 %5292
        %5295 = vrot.lane.b32.xlu0 %v5263, 80
        %v5296 = vpop.permute.xlu0 %5295
        %5298 = vrot.lane.b32.xlu0 %v5263, 64
        %v5299 = vpop.permute.xlu0 %5298
        %5301 = vrot.lane.b32.xlu0 %v5263, 48
        %v5302 = vpop.permute.xlu0 %5301
        %5304 = vrot.lane.b32.xlu0 %v5263, 32
        %v5305 = vpop.permute.xlu0 %5304
        %5307 = vrot.lane.b32.xlu0 %v5263, 16
        %v5308 = vpop.permute.xlu0 %5307
        %v5310 = vrot.slane %v5271, 4
        %v5311 = vsel %vm617, %v5310, %v5262
        %v5312 = vrot.slane %v5262, 4
        %v5313 = vsel %vm617, %v5271, %v5312
        %v5315 = vunpack.c.l.s4 1983009808
        %v5316 = vunpack.c.0.s8 %v5315
        %v5317 = vperm.slane %v5311, %v5316
        %v5319 = vunpack.c.l.s4 1983009808
        %v5320 = vunpack.c.0.s8 %v5319
        %v5321 = vperm.slane %v5313, %v5320
        %v5322 = vrot.slane %v5274, 4
        %v5323 = vsel %vm617, %v5322, %v5268
        %v5324 = vrot.slane %v5268, 4
        %v5325 = vsel %vm617, %v5274, %v5324
        %v5327 = vunpack.c.l.s4 1983009808
        %v5328 = vunpack.c.0.s8 %v5327
        %v5329 = vperm.slane %v5323, %v5328
        %v5331 = vunpack.c.l.s4 1983009808
        %v5332 = vunpack.c.0.s8 %v5331
        %v5333 = vperm.slane %v5325, %v5332
        %v5334 = vrot.slane %v5283, 4
        %v5335 = vsel %vm617, %v5334, %v5277
        %v5336 = vrot.slane %v5277, 4
        %v5337 = vsel %vm617, %v5283, %v5336
        %v5339 = vunpack.c.l.s4 1983009808
        %v5340 = vunpack.c.0.s8 %v5339
        %v5341 = vperm.slane %v5335, %v5340
        %v5343 = vunpack.c.l.s4 1983009808
        %v5344 = vunpack.c.0.s8 %v5343
        %v5345 = vperm.slane %v5337, %v5344
        %v5346 = vrot.slane %v5286, 4
        %v5347 = vsel %vm617, %v5346, %v5280
        %v5348 = vrot.slane %v5280, 4
        %v5349 = vsel %vm617, %v5286, %v5348
        %v5351 = vunpack.c.l.s4 1983009808
        %v5352 = vunpack.c.0.s8 %v5351
        %v5353 = vperm.slane %v5347, %v5352
        %v5355 = vunpack.c.l.s4 1983009808
        %v5356 = vunpack.c.0.s8 %v5355
        %v5357 = vperm.slane %v5349, %v5356
        %v5358 = vrot.slane %v5329, 4
        %v5359 = vsel %vm617, %v5358, %v5317
        %v5360 = vrot.slane %v5317, 4
        %v5361 = vsel %vm617, %v5329, %v5360
        %v5363 = vunpack.c.l.s4 1934713408
        %v5364 = vunpack.c.0.s8 %v5363
        %v5365 = vperm.slane %v5359, %v5364
        %v5367 = vunpack.c.l.s4 1934713408
        %v5368 = vunpack.c.0.s8 %v5367
        %v5369 = vperm.slane %v5361, %v5368
        %v5370 = vrot.slane %v5333, 4
        %v5371 = vsel %vm617, %v5370, %v5321
        %v5372 = vrot.slane %v5321, 4
        %v5373 = vsel %vm617, %v5333, %v5372
        %v5375 = vunpack.c.l.s4 1934713408
        %v5376 = vunpack.c.0.s8 %v5375
        %v5377 = vperm.slane %v5371, %v5376
        %v5379 = vunpack.c.l.s4 1934713408
        %v5380 = vunpack.c.0.s8 %v5379
        %v5381 = vperm.slane %v5373, %v5380
        %v5382 = vrot.slane %v5353, 4
        %v5383 = vsel %vm617, %v5382, %v5341
        %v5384 = vrot.slane %v5341, 4
        %v5385 = vsel %vm617, %v5353, %v5384
        %v5387 = vunpack.c.l.s4 1934713408
        %v5388 = vunpack.c.0.s8 %v5387
        %v5389 = vperm.slane %v5383, %v5388
        %v5391 = vunpack.c.l.s4 1934713408
        %v5392 = vunpack.c.0.s8 %v5391
        %v5393 = vperm.slane %v5385, %v5392
        %v5394 = vrot.slane %v5357, 4
        %v5395 = vsel %vm617, %v5394, %v5345
        %v5396 = vrot.slane %v5345, 4
        %v5397 = vsel %vm617, %v5357, %v5396
        %v5399 = vunpack.c.l.s4 1934713408
        %v5400 = vunpack.c.0.s8 %v5399
        %v5401 = vperm.slane %v5395, %v5400
        %v5403 = vunpack.c.l.s4 1934713408
        %v5404 = vunpack.c.0.s8 %v5403
        %v5405 = vperm.slane %v5397, %v5404
        %v5406 = vrot.slane %v5389, 4
        %v5407 = vsel %vm617, %v5406, %v5365
        %v5408 = vrot.slane %v5365, 4
        %v5409 = vsel %vm617, %v5389, %v5408
        %v5410 = vrot.slane %v5393, 4
        %v5411 = vsel %vm617, %v5410, %v5369
        %v5412 = vrot.slane %v5369, 4
        %v5413 = vsel %vm617, %v5393, %v5412
        %v5414 = vrot.slane %v5401, 4
        %v5415 = vsel %vm617, %v5414, %v5377
        %v5416 = vrot.slane %v5377, 4
        %v5417 = vsel %vm617, %v5401, %v5416
        %v5418 = vrot.slane %v5405, 4
        %v5419 = vsel %vm617, %v5418, %v5381
        %v5420 = vrot.slane %v5381, 4
        %v5421 = vsel %vm617, %v5405, %v5420
        %v5422 = vrot.slane %v5293, 4
        %v5423 = vsel %vm617, %v5422, %v5263
        %v5424 = vrot.slane %v5263, 4
        %v5425 = vsel %vm617, %v5293, %v5424
        %v5427 = vunpack.c.l.s4 1983009808
        %v5428 = vunpack.c.0.s8 %v5427
        %v5429 = vperm.slane %v5423, %v5428
        %v5431 = vunpack.c.l.s4 1983009808
        %v5432 = vunpack.c.0.s8 %v5431
        %v5433 = vperm.slane %v5425, %v5432
        %v5434 = vrot.slane %v5296, 4
        %v5435 = vsel %vm617, %v5434, %v5290
        %v5436 = vrot.slane %v5290, 4
        %v5437 = vsel %vm617, %v5296, %v5436
        %v5439 = vunpack.c.l.s4 1983009808
        %v5440 = vunpack.c.0.s8 %v5439
        %v5441 = vperm.slane %v5435, %v5440
        %v5443 = vunpack.c.l.s4 1983009808
        %v5444 = vunpack.c.0.s8 %v5443
        %v5445 = vperm.slane %v5437, %v5444
        %v5446 = vrot.slane %v5305, 4
        %v5447 = vsel %vm617, %v5446, %v5299
        %v5448 = vrot.slane %v5299, 4
        %v5449 = vsel %vm617, %v5305, %v5448
        %v5451 = vunpack.c.l.s4 1983009808
        %v5452 = vunpack.c.0.s8 %v5451
        %v5453 = vperm.slane %v5447, %v5452
        %v5455 = vunpack.c.l.s4 1983009808
        %v5456 = vunpack.c.0.s8 %v5455
        %v5457 = vperm.slane %v5449, %v5456
        %v5458 = vrot.slane %v5308, 4
        %v5459 = vsel %vm617, %v5458, %v5302
        %v5460 = vrot.slane %v5302, 4
        %v5461 = vsel %vm617, %v5308, %v5460
        %v5463 = vunpack.c.l.s4 1983009808
        %v5464 = vunpack.c.0.s8 %v5463
        %v5465 = vperm.slane %v5459, %v5464
        %v5467 = vunpack.c.l.s4 1983009808
        %v5468 = vunpack.c.0.s8 %v5467
        %v5469 = vperm.slane %v5461, %v5468
        %v5470 = vrot.slane %v5441, 4
        %v5471 = vsel %vm617, %v5470, %v5429
        %v5472 = vrot.slane %v5429, 4
        %v5473 = vsel %vm617, %v5441, %v5472
        %v5475 = vunpack.c.l.s4 1934713408
        %v5476 = vunpack.c.0.s8 %v5475
        %v5477 = vperm.slane %v5471, %v5476
        %v5479 = vunpack.c.l.s4 1934713408
        %v5480 = vunpack.c.0.s8 %v5479
        %v5481 = vperm.slane %v5473, %v5480
        %v5482 = vrot.slane %v5445, 4
        %v5483 = vsel %vm617, %v5482, %v5433
        %v5484 = vrot.slane %v5433, 4
        %v5485 = vsel %vm617, %v5445, %v5484
        %v5487 = vunpack.c.l.s4 1934713408
        %v5488 = vunpack.c.0.s8 %v5487
        %v5489 = vperm.slane %v5483, %v5488
        %v5491 = vunpack.c.l.s4 1934713408
        %v5492 = vunpack.c.0.s8 %v5491
        %v5493 = vperm.slane %v5485, %v5492
        %v5494 = vrot.slane %v5465, 4
        %v5495 = vsel %vm617, %v5494, %v5453
        %v5496 = vrot.slane %v5453, 4
        %v5497 = vsel %vm617, %v5465, %v5496
        %v5499 = vunpack.c.l.s4 1934713408
        %v5500 = vunpack.c.0.s8 %v5499
        %v5501 = vperm.slane %v5495, %v5500
        %v5503 = vunpack.c.l.s4 1934713408
        %v5504 = vunpack.c.0.s8 %v5503
        %v5505 = vperm.slane %v5497, %v5504
        %v5506 = vrot.slane %v5469, 4
        %v5507 = vsel %vm617, %v5506, %v5457
        %v5508 = vrot.slane %v5457, 4
        %v5509 = vsel %vm617, %v5469, %v5508
        %v5511 = vunpack.c.l.s4 1934713408
        %v5512 = vunpack.c.0.s8 %v5511
        %v5513 = vperm.slane %v5507, %v5512
        %v5515 = vunpack.c.l.s4 1934713408
        %v5516 = vunpack.c.0.s8 %v5515
        %v5517 = vperm.slane %v5509, %v5516
        %v5518 = vrot.slane %v5501, 4
        %v5519 = vsel %vm617, %v5518, %v5477
        %v5520 = vrot.slane %v5477, 4
        %v5521 = vsel %vm617, %v5501, %v5520
        %v5522 = vrot.slane %v5505, 4
        %v5523 = vsel %vm617, %v5522, %v5481
        %v5524 = vrot.slane %v5481, 4
        %v5525 = vsel %vm617, %v5505, %v5524
        %v5526 = vrot.slane %v5513, 4
        %v5527 = vsel %vm617, %v5526, %v5489
        %v5528 = vrot.slane %v5489, 4
        %v5529 = vsel %vm617, %v5513, %v5528
        %v5530 = vrot.slane %v5517, 4
        %v5531 = vsel %vm617, %v5530, %v5493
        %v5532 = vrot.slane %v5493, 4
        %v5533 = vsel %vm617, %v5517, %v5532
        %5534 = vst.msk [vmem:[#allocation2 + $0x18] sm:$0xff] %vm841, %v5407
        %5535 = vst.msk [vmem:[#allocation2 + $0x28] sm:$0xff] %vm841, %v5519
        %5536 = vst.msk [vmem:[#allocation2 + $0x58] sm:$0xff] %vm841, %v5409
        %5537 = vst.msk [vmem:[#allocation2 + $0x68] sm:$0xff] %vm841, %v5521
        %5538 = vst.msk [vmem:[#allocation2 + $0x98] sm:$0xff] %vm841, %v5411
        %5539 = vst.msk [vmem:[#allocation2 + $0xa8] sm:$0xff] %vm841, %v5523
        %5540 = vst.msk [vmem:[#allocation2 + $0xd8] sm:$0xff] %vm841, %v5413
        %5541 = vst.msk [vmem:[#allocation2 + $0xe8] sm:$0xff] %vm841, %v5525
        %5542 = vst.msk [vmem:[#allocation2 + $0x118] sm:$0xff] %vm841, %v5415
        %5543 = vst.msk [vmem:[#allocation2 + $0x128] sm:$0xff] %vm841, %v5527
        %5544 = vst.msk [vmem:[#allocation2 + $0x158] sm:$0xff] %vm841, %v5417
        %5545 = vst.msk [vmem:[#allocation2 + $0x168] sm:$0xff] %vm841, %v5529
        %5546 = vst.msk [vmem:[#allocation2 + $0x198] sm:$0xff] %vm841, %v5419
        %5547 = vst.msk [vmem:[#allocation2 + $0x1a8] sm:$0xff] %vm841, %v5531
        %5548 = vst.msk [vmem:[#allocation2 + $0x1d8] sm:$0xff] %vm841, %v5421
        %5549 = vst.msk [vmem:[#allocation2 + $0x1e8] sm:$0xff] %vm841, %v5533
        %v5550 = vld [vmem:[#allocation2] sm:$0x80]
        %v5551 = vld [vmem:[#allocation2 + $0x8] sm:$0x80]
        %v5552 = vld [vmem:[#allocation2 + $0x10] sm:$0xff]
        %v5553 = vld [vmem:[#allocation2 + $0x18] sm:$0xff]
        %v5554 = vld [vmem:[#allocation2 + $0x20] sm:$0x7f]
        %v5555 = vld [vmem:[#allocation2 + $0x28] sm:$0x7f]
        %v5556 = vld [vmem:[#allocation2 + $0x40] sm:$0x80]
        %v5557 = vld [vmem:[#allocation2 + $0x48] sm:$0x80]
        %v5558 = vld [vmem:[#allocation2 + $0x50] sm:$0xff]
        %v5559 = vld [vmem:[#allocation2 + $0x58] sm:$0xff]
        %v5560 = vld [vmem:[#allocation2 + $0x60] sm:$0x7f]
        %v5561 = vld [vmem:[#allocation2 + $0x68] sm:$0x7f]
        %v5562 = vld [vmem:[#allocation2 + $0x80] sm:$0x80]
        %v5563 = vld [vmem:[#allocation2 + $0x88] sm:$0x80]
        %v5564 = vld [vmem:[#allocation2 + $0x90] sm:$0xff]
        %v5565 = vld [vmem:[#allocation2 + $0x98] sm:$0xff]
        %v5566 = vld [vmem:[#allocation2 + $0xa0] sm:$0x7f]
        %v5567 = vld [vmem:[#allocation2 + $0xa8] sm:$0x7f]
        %v5568 = vld [vmem:[#allocation2 + $0xc0] sm:$0x80]
        %v5569 = vld [vmem:[#allocation2 + $0xc8] sm:$0x80]
        %v5570 = vld [vmem:[#allocation2 + $0xd0] sm:$0xff]
        %v5571 = vld [vmem:[#allocation2 + $0xd8] sm:$0xff]
        %v5572 = vld [vmem:[#allocation2 + $0xe0] sm:$0x7f]
        %v5573 = vld [vmem:[#allocation2 + $0xe8] sm:$0x7f]
        %v5574 = vld [vmem:[#allocation2 + $0x100] sm:$0x80]
        %v5575 = vld [vmem:[#allocation2 + $0x108] sm:$0x80]
        %v5576 = vld [vmem:[#allocation2 + $0x110] sm:$0xff]
        %v5577 = vld [vmem:[#allocation2 + $0x118] sm:$0xff]
        %v5578 = vld [vmem:[#allocation2 + $0x120] sm:$0x7f]
        %v5579 = vld [vmem:[#allocation2 + $0x128] sm:$0x7f]
        %v5580 = vld [vmem:[#allocation2 + $0x140] sm:$0x80]
        %v5581 = vld [vmem:[#allocation2 + $0x148] sm:$0x80]
        %v5582 = vld [vmem:[#allocation2 + $0x150] sm:$0xff]
        %v5583 = vld [vmem:[#allocation2 + $0x158] sm:$0xff]
        %v5584 = vld [vmem:[#allocation2 + $0x160] sm:$0x7f]
        %v5585 = vld [vmem:[#allocation2 + $0x168] sm:$0x7f]
        %v5586 = vld [vmem:[#allocation2 + $0x180] sm:$0x80]
        %v5587 = vld [vmem:[#allocation2 + $0x188] sm:$0x80]
        %v5588 = vld [vmem:[#allocation2 + $0x190] sm:$0xff]
        %v5589 = vld [vmem:[#allocation2 + $0x198] sm:$0xff]
        %v5590 = vld [vmem:[#allocation2 + $0x1a0] sm:$0x7f]
        %v5591 = vld [vmem:[#allocation2 + $0x1a8] sm:$0x7f]
        %v5592 = vld [vmem:[#allocation2 + $0x1c0] sm:$0x80]
        %v5593 = vld [vmem:[#allocation2 + $0x1c8] sm:$0x80]
        %v5594 = vld [vmem:[#allocation2 + $0x1d0] sm:$0xff]
        %v5595 = vld [vmem:[#allocation2 + $0x1d8] sm:$0xff]
        %v5596 = vld [vmem:[#allocation2 + $0x1e0] sm:$0x7f]
        %v5597 = vld [vmem:[#allocation2 + $0x1e8] sm:$0x7f]
        %v5598 = vld [vmem:[#allocation2 + $0x20] sm:$0xff]
        %v5599 = vld [vmem:[#allocation2 + $0x28] sm:$0xff]
        %v5600 = vld [vmem:[#allocation2 + $0x60] sm:$0xff]
        %v5601 = vld [vmem:[#allocation2 + $0x68] sm:$0xff]
        %v5602 = vld [vmem:[#allocation2 + $0xa0] sm:$0xff]
        %v5603 = vld [vmem:[#allocation2 + $0xa8] sm:$0xff]
        %v5604 = vld [vmem:[#allocation2 + $0xe0] sm:$0xff]
        %v5605 = vld [vmem:[#allocation2 + $0xe8] sm:$0xff]
        %v5606 = vld [vmem:[#allocation2 + $0x120] sm:$0xff]
        %v5607 = vld [vmem:[#allocation2 + $0x128] sm:$0xff]
        %v5608 = vld [vmem:[#allocation2 + $0x160] sm:$0xff]
        %v5609 = vld [vmem:[#allocation2 + $0x168] sm:$0xff]
        %v5610 = vld [vmem:[#allocation2 + $0x1a0] sm:$0xff]
        %v5611 = vld [vmem:[#allocation2 + $0x1a8] sm:$0xff]
        %v5612 = vld [vmem:[#allocation2 + $0x1e0] sm:$0xff]
        %v5613 = vld [vmem:[#allocation2 + $0x1e8] sm:$0xff]
        %v5614 = vld [vmem:[#allocation2 + $0x10] sm:$0xfe]
        %v5615 = vld [vmem:[#allocation2 + $0x18] sm:$0xfe]
        %v5616 = vld [vmem:[#allocation2 + $0x30] sm:$0x1]
        %v5617 = vld [vmem:[#allocation2 + $0x38] sm:$0x1]
        %v5618 = vld [vmem:[#allocation2 + $0x50] sm:$0xfe]
        %v5619 = vld [vmem:[#allocation2 + $0x58] sm:$0xfe]
        %v5620 = vld [vmem:[#allocation2 + $0x70] sm:$0x1]
        %v5621 = vld [vmem:[#allocation2 + $0x78] sm:$0x1]
        %v5622 = vld [vmem:[#allocation2 + $0x90] sm:$0xfe]
        %v5623 = vld [vmem:[#allocation2 + $0x98] sm:$0xfe]
        %v5624 = vld [vmem:[#allocation2 + $0xb0] sm:$0x1]
        %v5625 = vld [vmem:[#allocation2 + $0xb8] sm:$0x1]
        %v5626 = vld [vmem:[#allocation2 + $0xd0] sm:$0xfe]
        %v5627 = vld [vmem:[#allocation2 + $0xd8] sm:$0xfe]
        %v5628 = vld [vmem:[#allocation2 + $0xf0] sm:$0x1]
        %v5629 = vld [vmem:[#allocation2 + $0xf8] sm:$0x1]
        %v5630 = vld [vmem:[#allocation2 + $0x110] sm:$0xfe]
        %v5631 = vld [vmem:[#allocation2 + $0x118] sm:$0xfe]
        %v5632 = vld [vmem:[#allocation2 + $0x130] sm:$0x1]
        %v5633 = vld [vmem:[#allocation2 + $0x138] sm:$0x1]
        %v5634 = vld [vmem:[#allocation2 + $0x150] sm:$0xfe]
        %v5635 = vld [vmem:[#allocation2 + $0x158] sm:$0xfe]
        %v5636 = vld [vmem:[#allocation2 + $0x170] sm:$0x1]
        %v5637 = vld [vmem:[#allocation2 + $0x178] sm:$0x1]
        %v5638 = vld [vmem:[#allocation2 + $0x190] sm:$0xfe]
        %v5639 = vld [vmem:[#allocation2 + $0x198] sm:$0xfe]
        %v5640 = vld [vmem:[#allocation2 + $0x1b0] sm:$0x1]
        %v5641 = vld [vmem:[#allocation2 + $0x1b8] sm:$0x1]
        %v5642 = vld [vmem:[#allocation2 + $0x1d0] sm:$0xfe]
        %v5643 = vld [vmem:[#allocation2 + $0x1d8] sm:$0xfe]
        %v5644 = vld [vmem:[#allocation2 + $0x1f0] sm:$0x1]
        %v5645 = vld [vmem:[#allocation2 + $0x1f8] sm:$0x1]
        %5670 = vrot.lane.b32.xlu0 %v5551, 127
        %v5671 = vpop.permute.xlu0 %5670
        %5672 = vrot.lane.b32.xlu0 %v5553, 127
        %v5673 = vpop.permute.xlu0 %5672
        %5674 = vrot.lane.b32.xlu0 %v5555, 127
        %v5675 = vpop.permute.xlu0 %5674
        %5676 = vrot.lane.b32.xlu0 %v5557, 127
        %v5677 = vpop.permute.xlu0 %5676
        %5678 = vrot.lane.b32.xlu0 %v5559, 127
        %v5679 = vpop.permute.xlu0 %5678
        %5680 = vrot.lane.b32.xlu0 %v5561, 127
        %v5681 = vpop.permute.xlu0 %5680
        %5682 = vrot.lane.b32.xlu0 %v5563, 127
        %v5683 = vpop.permute.xlu0 %5682
        %5684 = vrot.lane.b32.xlu0 %v5565, 127
        %v5685 = vpop.permute.xlu0 %5684
        %5686 = vrot.lane.b32.xlu0 %v5567, 127
        %v5687 = vpop.permute.xlu0 %5686
        %5688 = vrot.lane.b32.xlu0 %v5569, 127
        %v5689 = vpop.permute.xlu0 %5688
        %5690 = vrot.lane.b32.xlu0 %v5571, 127
        %v5691 = vpop.permute.xlu0 %5690
        %5692 = vrot.lane.b32.xlu0 %v5573, 127
        %v5693 = vpop.permute.xlu0 %5692
        %5694 = vrot.lane.b32.xlu0 %v5575, 127
        %v5695 = vpop.permute.xlu0 %5694
        %5696 = vrot.lane.b32.xlu0 %v5577, 127
        %v5697 = vpop.permute.xlu0 %5696
        %5698 = vrot.lane.b32.xlu0 %v5579, 127
        %v5699 = vpop.permute.xlu0 %5698
        %5700 = vrot.lane.b32.xlu0 %v5581, 127
        %v5701 = vpop.permute.xlu0 %5700
        %5702 = vrot.lane.b32.xlu0 %v5583, 127
        %v5703 = vpop.permute.xlu0 %5702
        %5704 = vrot.lane.b32.xlu0 %v5585, 127
        %v5705 = vpop.permute.xlu0 %5704
        %5706 = vrot.lane.b32.xlu0 %v5587, 127
        %v5707 = vpop.permute.xlu0 %5706
        %5708 = vrot.lane.b32.xlu0 %v5589, 127
        %v5709 = vpop.permute.xlu0 %5708
        %5710 = vrot.lane.b32.xlu0 %v5591, 127
        %v5711 = vpop.permute.xlu0 %5710
        %5712 = vrot.lane.b32.xlu0 %v5593, 127
        %v5713 = vpop.permute.xlu0 %5712
        %5714 = vrot.lane.b32.xlu0 %v5595, 127
        %v5715 = vpop.permute.xlu0 %5714
        %5716 = vrot.lane.b32.xlu0 %v5597, 127
        %v5717 = vpop.permute.xlu0 %5716
        %5718 = vrot.lane.b32.xlu0 %v5551, 126
        %v5719 = vpop.permute.xlu0 %5718
        %5720 = vrot.lane.b32.xlu0 %v5553, 126
        %v5721 = vpop.permute.xlu0 %5720
        %5722 = vrot.lane.b32.xlu0 %v5555, 126
        %v5723 = vpop.permute.xlu0 %5722
        %5724 = vrot.lane.b32.xlu0 %v5557, 126
        %v5725 = vpop.permute.xlu0 %5724
        %5726 = vrot.lane.b32.xlu0 %v5559, 126
        %v5727 = vpop.permute.xlu0 %5726
        %5728 = vrot.lane.b32.xlu0 %v5561, 126
        %v5729 = vpop.permute.xlu0 %5728
        %5730 = vrot.lane.b32.xlu0 %v5563, 126
        %v5731 = vpop.permute.xlu0 %5730
        %5732 = vrot.lane.b32.xlu0 %v5565, 126
        %v5733 = vpop.permute.xlu0 %5732
        %5734 = vrot.lane.b32.xlu0 %v5567, 126
        %v5735 = vpop.permute.xlu0 %5734
        %5736 = vrot.lane.b32.xlu0 %v5569, 126
        %v5737 = vpop.permute.xlu0 %5736
        %5738 = vrot.lane.b32.xlu0 %v5571, 126
        %v5739 = vpop.permute.xlu0 %5738
        %5740 = vrot.lane.b32.xlu0 %v5573, 126
        %v5741 = vpop.permute.xlu0 %5740
        %5742 = vrot.lane.b32.xlu0 %v5575, 126
        %v5743 = vpop.permute.xlu0 %5742
        %5744 = vrot.lane.b32.xlu0 %v5577, 126
        %v5745 = vpop.permute.xlu0 %5744
        %5746 = vrot.lane.b32.xlu0 %v5579, 126
        %v5747 = vpop.permute.xlu0 %5746
        %5748 = vrot.lane.b32.xlu0 %v5581, 126
        %v5749 = vpop.permute.xlu0 %5748
        %5750 = vrot.lane.b32.xlu0 %v5583, 126
        %v5751 = vpop.permute.xlu0 %5750
        %5752 = vrot.lane.b32.xlu0 %v5585, 126
        %v5753 = vpop.permute.xlu0 %5752
        %5754 = vrot.lane.b32.xlu0 %v5587, 126
        %v5755 = vpop.permute.xlu0 %5754
        %5756 = vrot.lane.b32.xlu0 %v5589, 126
        %v5757 = vpop.permute.xlu0 %5756
        %5758 = vrot.lane.b32.xlu0 %v5591, 126
        %v5759 = vpop.permute.xlu0 %5758
        %5760 = vrot.lane.b32.xlu0 %v5593, 126
        %v5761 = vpop.permute.xlu0 %5760
        %5762 = vrot.lane.b32.xlu0 %v5595, 126
        %v5763 = vpop.permute.xlu0 %5762
        %5764 = vrot.lane.b32.xlu0 %v5597, 126
        %v5765 = vpop.permute.xlu0 %5764
        %v5790 = vrot.slane %v5552, 1
        %v5791 = vrot.slane %v5553, 1
        %v5792 = vrot.slane %v5598, 1
        %v5793 = vsel %vm1098, %v5790, %v5792
        %v5794 = vrot.slane %v5599, 1
        %v5795 = vsel %vm1098, %v5791, %v5794
        %v5796 = vrot.slane %v5558, 1
        %v5797 = vrot.slane %v5559, 1
        %v5798 = vrot.slane %v5600, 1
        %v5799 = vsel %vm1098, %v5796, %v5798
        %v5800 = vrot.slane %v5601, 1
        %v5801 = vsel %vm1098, %v5797, %v5800
        %v5802 = vrot.slane %v5564, 1
        %v5803 = vrot.slane %v5565, 1
        %v5804 = vrot.slane %v5602, 1
        %v5805 = vsel %vm1098, %v5802, %v5804
        %v5806 = vrot.slane %v5603, 1
        %v5807 = vsel %vm1098, %v5803, %v5806
        %v5808 = vrot.slane %v5570, 1
        %v5809 = vrot.slane %v5571, 1
        %v5810 = vrot.slane %v5604, 1
        %v5811 = vsel %vm1098, %v5808, %v5810
        %v5812 = vrot.slane %v5605, 1
        %v5813 = vsel %vm1098, %v5809, %v5812
        %v5814 = vrot.slane %v5576, 1
        %v5815 = vrot.slane %v5577, 1
        %v5816 = vrot.slane %v5606, 1
        %v5817 = vsel %vm1098, %v5814, %v5816
        %v5818 = vrot.slane %v5607, 1
        %v5819 = vsel %vm1098, %v5815, %v5818
        %v5820 = vrot.slane %v5582, 1
        %v5821 = vrot.slane %v5583, 1
        %v5822 = vrot.slane %v5608, 1
        %v5823 = vsel %vm1098, %v5820, %v5822
        %v5824 = vrot.slane %v5609, 1
        %v5825 = vsel %vm1098, %v5821, %v5824
        %v5826 = vrot.slane %v5588, 1
        %v5827 = vrot.slane %v5589, 1
        %v5828 = vrot.slane %v5610, 1
        %v5829 = vsel %vm1098, %v5826, %v5828
        %v5830 = vrot.slane %v5611, 1
        %v5831 = vsel %vm1098, %v5827, %v5830
        %v5832 = vrot.slane %v5594, 1
        %v5833 = vrot.slane %v5595, 1
        %v5834 = vrot.slane %v5612, 1
        %v5835 = vsel %vm1098, %v5832, %v5834
        %v5836 = vrot.slane %v5613, 1
        %v5837 = vsel %vm1098, %v5833, %v5836
        %5838 = vrot.lane.b32.xlu0 %v5791, 127
        %v5839 = vpop.permute.xlu0 %5838
        %5840 = vrot.lane.b32.xlu0 %v5795, 127
        %v5841 = vpop.permute.xlu0 %5840
        %5842 = vrot.lane.b32.xlu0 %v5794, 127
        %v5843 = vpop.permute.xlu0 %5842
        %5844 = vrot.lane.b32.xlu0 %v5797, 127
        %v5845 = vpop.permute.xlu0 %5844
        %5846 = vrot.lane.b32.xlu0 %v5801, 127
        %v5847 = vpop.permute.xlu0 %5846
        %5848 = vrot.lane.b32.xlu0 %v5800, 127
        %v5849 = vpop.permute.xlu0 %5848
        %5850 = vrot.lane.b32.xlu0 %v5803, 127
        %v5851 = vpop.permute.xlu0 %5850
        %5852 = vrot.lane.b32.xlu0 %v5807, 127
        %v5853 = vpop.permute.xlu0 %5852
        %5854 = vrot.lane.b32.xlu0 %v5806, 127
        %v5855 = vpop.permute.xlu0 %5854
        %5856 = vrot.lane.b32.xlu0 %v5809, 127
        %v5857 = vpop.permute.xlu0 %5856
        %5858 = vrot.lane.b32.xlu0 %v5813, 127
        %v5859 = vpop.permute.xlu0 %5858
        %5860 = vrot.lane.b32.xlu0 %v5812, 127
        %v5861 = vpop.permute.xlu0 %5860
        %5862 = vrot.lane.b32.xlu0 %v5815, 127
        %v5863 = vpop.permute.xlu0 %5862
        %5864 = vrot.lane.b32.xlu0 %v5819, 127
        %v5865 = vpop.permute.xlu0 %5864
        %5866 = vrot.lane.b32.xlu0 %v5818, 127
        %v5867 = vpop.permute.xlu0 %5866
        %5868 = vrot.lane.b32.xlu0 %v5821, 127
        %v5869 = vpop.permute.xlu0 %5868
        %5870 = vrot.lane.b32.xlu0 %v5825, 127
        %v5871 = vpop.permute.xlu0 %5870
        %5872 = vrot.lane.b32.xlu0 %v5824, 127
        %v5873 = vpop.permute.xlu0 %5872
        %5874 = vrot.lane.b32.xlu0 %v5827, 127
        %v5875 = vpop.permute.xlu0 %5874
        %5876 = vrot.lane.b32.xlu0 %v5831, 127
        %v5877 = vpop.permute.xlu0 %5876
        %5878 = vrot.lane.b32.xlu0 %v5830, 127
        %v5879 = vpop.permute.xlu0 %5878
        %5880 = vrot.lane.b32.xlu0 %v5833, 127
        %v5881 = vpop.permute.xlu0 %5880
        %5882 = vrot.lane.b32.xlu0 %v5837, 127
        %v5883 = vpop.permute.xlu0 %5882
        %5884 = vrot.lane.b32.xlu0 %v5836, 127
        %v5885 = vpop.permute.xlu0 %5884
        %5886 = vrot.lane.b32.xlu0 %v5791, 126
        %v5887 = vpop.permute.xlu0 %5886
        %5888 = vrot.lane.b32.xlu0 %v5795, 126
        %v5889 = vpop.permute.xlu0 %5888
        %5890 = vrot.lane.b32.xlu0 %v5794, 126
        %v5891 = vpop.permute.xlu0 %5890
        %5892 = vrot.lane.b32.xlu0 %v5797, 126
        %v5893 = vpop.permute.xlu0 %5892
        %5894 = vrot.lane.b32.xlu0 %v5801, 126
        %v5895 = vpop.permute.xlu0 %5894
        %5896 = vrot.lane.b32.xlu0 %v5800, 126
        %v5897 = vpop.permute.xlu0 %5896
        %5898 = vrot.lane.b32.xlu0 %v5803, 126
        %v5899 = vpop.permute.xlu0 %5898
        %5900 = vrot.lane.b32.xlu0 %v5807, 126
        %v5901 = vpop.permute.xlu0 %5900
        %5902 = vrot.lane.b32.xlu0 %v5806, 126
        %v5903 = vpop.permute.xlu0 %5902
        %5904 = vrot.lane.b32.xlu0 %v5809, 126
        %v5905 = vpop.permute.xlu0 %5904
        %5906 = vrot.lane.b32.xlu0 %v5813, 126
        %v5907 = vpop.permute.xlu0 %5906
        %5908 = vrot.lane.b32.xlu0 %v5812, 126
        %v5909 = vpop.permute.xlu0 %5908
        %5910 = vrot.lane.b32.xlu0 %v5815, 126
        %v5911 = vpop.permute.xlu0 %5910
        %5912 = vrot.lane.b32.xlu0 %v5819, 126
        %v5913 = vpop.permute.xlu0 %5912
        %5914 = vrot.lane.b32.xlu0 %v5818, 126
        %v5915 = vpop.permute.xlu0 %5914
        %5916 = vrot.lane.b32.xlu0 %v5821, 126
        %v5917 = vpop.permute.xlu0 %5916
        %5918 = vrot.lane.b32.xlu0 %v5825, 126
        %v5919 = vpop.permute.xlu0 %5918
        %5920 = vrot.lane.b32.xlu0 %v5824, 126
        %v5921 = vpop.permute.xlu0 %5920
        %5922 = vrot.lane.b32.xlu0 %v5827, 126
        %v5923 = vpop.permute.xlu0 %5922
        %5924 = vrot.lane.b32.xlu0 %v5831, 126
        %v5925 = vpop.permute.xlu0 %5924
        %5926 = vrot.lane.b32.xlu0 %v5830, 126
        %v5927 = vpop.permute.xlu0 %5926
        %5928 = vrot.lane.b32.xlu0 %v5833, 126
        %v5929 = vpop.permute.xlu0 %5928
        %5930 = vrot.lane.b32.xlu0 %v5837, 126
        %v5931 = vpop.permute.xlu0 %5930
        %5932 = vrot.lane.b32.xlu0 %v5836, 126
        %v5933 = vpop.permute.xlu0 %5932
        %v5966 = vrot.slane %v5614, 2
        %v5967 = vrot.slane %v5615, 2
        %v5968 = vrot.slane %v5598, 2
        %v5969 = vsel %vm1275, %v5966, %v5968
        %v5970 = vrot.slane %v5599, 2
        %v5971 = vsel %vm1275, %v5967, %v5970
        %v5972 = vrot.slane %v5616, 2
        %v5973 = vsel %vm1275, %v5968, %v5972
        %v5974 = vrot.slane %v5617, 2
        %v5975 = vsel %vm1275, %v5970, %v5974
        %v5976 = vrot.slane %v5618, 2
        %v5977 = vrot.slane %v5619, 2
        %v5978 = vrot.slane %v5600, 2
        %v5979 = vsel %vm1275, %v5976, %v5978
        %v5980 = vrot.slane %v5601, 2
        %v5981 = vsel %vm1275, %v5977, %v5980
        %v5982 = vrot.slane %v5620, 2
        %v5983 = vsel %vm1275, %v5978, %v5982
        %v5984 = vrot.slane %v5621, 2
        %v5985 = vsel %vm1275, %v5980, %v5984
        %v5986 = vrot.slane %v5622, 2
        %v5987 = vrot.slane %v5623, 2
        %v5988 = vrot.slane %v5602, 2
        %v5989 = vsel %vm1275, %v5986, %v5988
        %v5990 = vrot.slane %v5603, 2
        %v5991 = vsel %vm1275, %v5987, %v5990
        %v5992 = vrot.slane %v5624, 2
        %v5993 = vsel %vm1275, %v5988, %v5992
        %v5994 = vrot.slane %v5625, 2
        %v5995 = vsel %vm1275, %v5990, %v5994
        %v5996 = vrot.slane %v5626, 2
        %v5997 = vrot.slane %v5627, 2
        %v5998 = vrot.slane %v5604, 2
        %v5999 = vsel %vm1275, %v5996, %v5998
        %v6000 = vrot.slane %v5605, 2
        %v6001 = vsel %vm1275, %v5997, %v6000
        %v6002 = vrot.slane %v5628, 2
        %v6003 = vsel %vm1275, %v5998, %v6002
        %v6004 = vrot.slane %v5629, 2
        %v6005 = vsel %vm1275, %v6000, %v6004
        %v6006 = vrot.slane %v5630, 2
        %v6007 = vrot.slane %v5631, 2
        %v6008 = vrot.slane %v5606, 2
        %v6009 = vsel %vm1275, %v6006, %v6008
        %v6010 = vrot.slane %v5607, 2
        %v6011 = vsel %vm1275, %v6007, %v6010
        %v6012 = vrot.slane %v5632, 2
        %v6013 = vsel %vm1275, %v6008, %v6012
        %v6014 = vrot.slane %v5633, 2
        %v6015 = vsel %vm1275, %v6010, %v6014
        %v6016 = vrot.slane %v5634, 2
        %v6017 = vrot.slane %v5635, 2
        %v6018 = vrot.slane %v5608, 2
        %v6019 = vsel %vm1275, %v6016, %v6018
        %v6020 = vrot.slane %v5609, 2
        %v6021 = vsel %vm1275, %v6017, %v6020
        %v6022 = vrot.slane %v5636, 2
        %v6023 = vsel %vm1275, %v6018, %v6022
        %v6024 = vrot.slane %v5637, 2
        %v6025 = vsel %vm1275, %v6020, %v6024
        %v6026 = vrot.slane %v5638, 2
        %v6027 = vrot.slane %v5639, 2
        %v6028 = vrot.slane %v5610, 2
        %v6029 = vsel %vm1275, %v6026, %v6028
        %v6030 = vrot.slane %v5611, 2
        %v6031 = vsel %vm1275, %v6027, %v6030
        %v6032 = vrot.slane %v5640, 2
        %v6033 = vsel %vm1275, %v6028, %v6032
        %v6034 = vrot.slane %v5641, 2
        %v6035 = vsel %vm1275, %v6030, %v6034
        %v6036 = vrot.slane %v5642, 2
        %v6037 = vrot.slane %v5643, 2
        %v6038 = vrot.slane %v5612, 2
        %v6039 = vsel %vm1275, %v6036, %v6038
        %v6040 = vrot.slane %v5613, 2
        %v6041 = vsel %vm1275, %v6037, %v6040
        %v6042 = vrot.slane %v5644, 2
        %v6043 = vsel %vm1275, %v6038, %v6042
        %v6044 = vrot.slane %v5645, 2
        %v6045 = vsel %vm1275, %v6040, %v6044
        %6046 = vrot.lane.b32.xlu0 %v5967, 127
        %v6047 = vpop.permute.xlu0 %6046
        %6048 = vrot.lane.b32.xlu0 %v5971, 127
        %v6049 = vpop.permute.xlu0 %6048
        %6050 = vrot.lane.b32.xlu0 %v5975, 127
        %v6051 = vpop.permute.xlu0 %6050
        %6052 = vrot.lane.b32.xlu0 %v5977, 127
        %v6053 = vpop.permute.xlu0 %6052
        %6054 = vrot.lane.b32.xlu0 %v5981, 127
        %v6055 = vpop.permute.xlu0 %6054
        %6056 = vrot.lane.b32.xlu0 %v5985, 127
        %v6057 = vpop.permute.xlu0 %6056
        %6058 = vrot.lane.b32.xlu0 %v5987, 127
        %v6059 = vpop.permute.xlu0 %6058
        %6060 = vrot.lane.b32.xlu0 %v5991, 127
        %v6061 = vpop.permute.xlu0 %6060
        %6062 = vrot.lane.b32.xlu0 %v5995, 127
        %v6063 = vpop.permute.xlu0 %6062
        %6064 = vrot.lane.b32.xlu0 %v5997, 127
        %v6065 = vpop.permute.xlu0 %6064
        %6066 = vrot.lane.b32.xlu0 %v6001, 127
        %v6067 = vpop.permute.xlu0 %6066
        %6068 = vrot.lane.b32.xlu0 %v6005, 127
        %v6069 = vpop.permute.xlu0 %6068
        %6070 = vrot.lane.b32.xlu0 %v6007, 127
        %v6071 = vpop.permute.xlu0 %6070
        %6072 = vrot.lane.b32.xlu0 %v6011, 127
        %v6073 = vpop.permute.xlu0 %6072
        %6074 = vrot.lane.b32.xlu0 %v6015, 127
        %v6075 = vpop.permute.xlu0 %6074
        %6076 = vrot.lane.b32.xlu0 %v6017, 127
        %v6077 = vpop.permute.xlu0 %6076
        %6078 = vrot.lane.b32.xlu0 %v6021, 127
        %v6079 = vpop.permute.xlu0 %6078
        %6080 = vrot.lane.b32.xlu0 %v6025, 127
        %v6081 = vpop.permute.xlu0 %6080
        %6082 = vrot.lane.b32.xlu0 %v6027, 127
        %v6083 = vpop.permute.xlu0 %6082
        %6084 = vrot.lane.b32.xlu0 %v6031, 127
        %v6085 = vpop.permute.xlu0 %6084
        %6086 = vrot.lane.b32.xlu0 %v6035, 127
        %v6087 = vpop.permute.xlu0 %6086
        %6088 = vrot.lane.b32.xlu0 %v6037, 127
        %v6089 = vpop.permute.xlu0 %6088
        %6090 = vrot.lane.b32.xlu0 %v6041, 127
        %v6091 = vpop.permute.xlu0 %6090
        %6092 = vrot.lane.b32.xlu0 %v6045, 127
        %v6093 = vpop.permute.xlu0 %6092
        %6094 = vrot.lane.b32.xlu0 %v5967, 126
        %v6095 = vpop.permute.xlu0 %6094
        %6096 = vrot.lane.b32.xlu0 %v5971, 126
        %v6097 = vpop.permute.xlu0 %6096
        %6098 = vrot.lane.b32.xlu0 %v5975, 126
        %v6099 = vpop.permute.xlu0 %6098
        %6100 = vrot.lane.b32.xlu0 %v5977, 126
        %v6101 = vpop.permute.xlu0 %6100
        %6102 = vrot.lane.b32.xlu0 %v5981, 126
        %v6103 = vpop.permute.xlu0 %6102
        %6104 = vrot.lane.b32.xlu0 %v5985, 126
        %v6105 = vpop.permute.xlu0 %6104
        %6106 = vrot.lane.b32.xlu0 %v5987, 126
        %v6107 = vpop.permute.xlu0 %6106
        %6108 = vrot.lane.b32.xlu0 %v5991, 126
        %v6109 = vpop.permute.xlu0 %6108
        %6110 = vrot.lane.b32.xlu0 %v5995, 126
        %v6111 = vpop.permute.xlu0 %6110
        %6112 = vrot.lane.b32.xlu0 %v5997, 126
        %v6113 = vpop.permute.xlu0 %6112
        %6114 = vrot.lane.b32.xlu0 %v6001, 126
        %v6115 = vpop.permute.xlu0 %6114
        %6116 = vrot.lane.b32.xlu0 %v6005, 126
        %v6117 = vpop.permute.xlu0 %6116
        %6118 = vrot.lane.b32.xlu0 %v6007, 126
        %v6119 = vpop.permute.xlu0 %6118
        %6120 = vrot.lane.b32.xlu0 %v6011, 126
        %v6121 = vpop.permute.xlu0 %6120
        %6122 = vrot.lane.b32.xlu0 %v6015, 126
        %v6123 = vpop.permute.xlu0 %6122
        %6124 = vrot.lane.b32.xlu0 %v6017, 126
        %v6125 = vpop.permute.xlu0 %6124
        %6126 = vrot.lane.b32.xlu0 %v6021, 126
        %v6127 = vpop.permute.xlu0 %6126
        %6128 = vrot.lane.b32.xlu0 %v6025, 126
        %v6129 = vpop.permute.xlu0 %6128
        %6130 = vrot.lane.b32.xlu0 %v6027, 126
        %v6131 = vpop.permute.xlu0 %6130
        %6132 = vrot.lane.b32.xlu0 %v6031, 126
        %v6133 = vpop.permute.xlu0 %6132
        %6134 = vrot.lane.b32.xlu0 %v6035, 126
        %v6135 = vpop.permute.xlu0 %6134
        %6136 = vrot.lane.b32.xlu0 %v6037, 126
        %v6137 = vpop.permute.xlu0 %6136
        %6138 = vrot.lane.b32.xlu0 %v6041, 126
        %v6139 = vpop.permute.xlu0 %6138
        %6140 = vrot.lane.b32.xlu0 %v6045, 126
        %v6141 = vpop.permute.xlu0 %6140
        %v6158 = vrot.slane %v5550, 7
        %v6159 = vrot.slane %v5552, 7
        %v6160 = vsel %vm1468, %v6158, %v6159
        %v6161 = vrot.slane %v5551, 7
        %v6162 = vrot.slane %v5553, 7
        %v6163 = vsel %vm1468, %v6161, %v6162
        %v6164 = vrot.slane %v5554, 7
        %v6165 = vsel %vm1468, %v6159, %v6164
        %v6166 = vrot.slane %v5555, 7
        %v6167 = vsel %vm1468, %v6162, %v6166
        %v6168 = vrot.slane %v5556, 7
        %v6169 = vrot.slane %v5558, 7
        %v6170 = vsel %vm1468, %v6168, %v6169
        %v6171 = vrot.slane %v5557, 7
        %v6172 = vrot.slane %v5559, 7
        %v6173 = vsel %vm1468, %v6171, %v6172
        %v6174 = vrot.slane %v5560, 7
        %v6175 = vsel %vm1468, %v6169, %v6174
        %v6176 = vrot.slane %v5561, 7
        %v6177 = vsel %vm1468, %v6172, %v6176
        %v6178 = vrot.slane %v5562, 7
        %v6179 = vrot.slane %v5564, 7
        %v6180 = vsel %vm1468, %v6178, %v6179
        %v6181 = vrot.slane %v5563, 7
        %v6182 = vrot.slane %v5565, 7
        %v6183 = vsel %vm1468, %v6181, %v6182
        %v6184 = vrot.slane %v5566, 7
        %v6185 = vsel %vm1468, %v6179, %v6184
        %v6186 = vrot.slane %v5567, 7
        %v6187 = vsel %vm1468, %v6182, %v6186
        %v6188 = vrot.slane %v5568, 7
        %v6189 = vrot.slane %v5570, 7
        %v6190 = vsel %vm1468, %v6188, %v6189
        %v6191 = vrot.slane %v5569, 7
        %v6192 = vrot.slane %v5571, 7
        %v6193 = vsel %vm1468, %v6191, %v6192
        %v6194 = vrot.slane %v5572, 7
        %v6195 = vsel %vm1468, %v6189, %v6194
        %v6196 = vrot.slane %v5573, 7
        %v6197 = vsel %vm1468, %v6192, %v6196
        %v6198 = vrot.slane %v5574, 7
        %v6199 = vrot.slane %v5576, 7
        %v6200 = vsel %vm1468, %v6198, %v6199
        %v6201 = vrot.slane %v5575, 7
        %v6202 = vrot.slane %v5577, 7
        %v6203 = vsel %vm1468, %v6201, %v6202
        %v6204 = vrot.slane %v5578, 7
        %v6205 = vsel %vm1468, %v6199, %v6204
        %v6206 = vrot.slane %v5579, 7
        %v6207 = vsel %vm1468, %v6202, %v6206
        %v6208 = vrot.slane %v5580, 7
        %v6209 = vrot.slane %v5582, 7
        %v6210 = vsel %vm1468, %v6208, %v6209
        %v6211 = vrot.slane %v5581, 7
        %v6212 = vrot.slane %v5583, 7
        %v6213 = vsel %vm1468, %v6211, %v6212
        %v6214 = vrot.slane %v5584, 7
        %v6215 = vsel %vm1468, %v6209, %v6214
        %v6216 = vrot.slane %v5585, 7
        %v6217 = vsel %vm1468, %v6212, %v6216
        %v6218 = vrot.slane %v5586, 7
        %v6219 = vrot.slane %v5588, 7
        %v6220 = vsel %vm1468, %v6218, %v6219
        %v6221 = vrot.slane %v5587, 7
        %v6222 = vrot.slane %v5589, 7
        %v6223 = vsel %vm1468, %v6221, %v6222
        %v6224 = vrot.slane %v5590, 7
        %v6225 = vsel %vm1468, %v6219, %v6224
        %v6226 = vrot.slane %v5591, 7
        %v6227 = vsel %vm1468, %v6222, %v6226
        %v6228 = vrot.slane %v5592, 7
        %v6229 = vrot.slane %v5594, 7
        %v6230 = vsel %vm1468, %v6228, %v6229
        %v6231 = vrot.slane %v5593, 7
        %v6232 = vrot.slane %v5595, 7
        %v6233 = vsel %vm1468, %v6231, %v6232
        %v6234 = vrot.slane %v5596, 7
        %v6235 = vsel %vm1468, %v6229, %v6234
        %v6236 = vrot.slane %v5597, 7
        %v6237 = vsel %vm1468, %v6232, %v6236
        %v6238 = vrot.slane %v5671, 7
        %v6239 = vrot.slane %v5673, 7
        %v6240 = vsel %vm1468, %v6238, %v6239
        %v6241 = vrot.slane %v5675, 7
        %v6242 = vsel %vm1468, %v6239, %v6241
        %v6243 = vrot.slane %v5677, 7
        %v6244 = vrot.slane %v5679, 7
        %v6245 = vsel %vm1468, %v6243, %v6244
        %v6246 = vrot.slane %v5681, 7
        %v6247 = vsel %vm1468, %v6244, %v6246
        %v6248 = vrot.slane %v5683, 7
        %v6249 = vrot.slane %v5685, 7
        %v6250 = vsel %vm1468, %v6248, %v6249
        %v6251 = vrot.slane %v5687, 7
        %v6252 = vsel %vm1468, %v6249, %v6251
        %v6253 = vrot.slane %v5689, 7
        %v6254 = vrot.slane %v5691, 7
        %v6255 = vsel %vm1468, %v6253, %v6254
        %v6256 = vrot.slane %v5693, 7
        %v6257 = vsel %vm1468, %v6254, %v6256
        %v6258 = vrot.slane %v5695, 7
        %v6259 = vrot.slane %v5697, 7
        %v6260 = vsel %vm1468, %v6258, %v6259
        %v6261 = vrot.slane %v5699, 7
        %v6262 = vsel %vm1468, %v6259, %v6261
        %v6263 = vrot.slane %v5701, 7
        %v6264 = vrot.slane %v5703, 7
        %v6265 = vsel %vm1468, %v6263, %v6264
        %v6266 = vrot.slane %v5705, 7
        %v6267 = vsel %vm1468, %v6264, %v6266
        %v6268 = vrot.slane %v5707, 7
        %v6269 = vrot.slane %v5709, 7
        %v6270 = vsel %vm1468, %v6268, %v6269
        %v6271 = vrot.slane %v5711, 7
        %v6272 = vsel %vm1468, %v6269, %v6271
        %v6273 = vrot.slane %v5713, 7
        %v6274 = vrot.slane %v5715, 7
        %v6275 = vsel %vm1468, %v6273, %v6274
        %v6276 = vrot.slane %v5717, 7
        %v6277 = vsel %vm1468, %v6274, %v6276
        %v6278 = vrot.slane %v5719, 7
        %v6279 = vrot.slane %v5721, 7
        %v6280 = vsel %vm1468, %v6278, %v6279
        %v6281 = vrot.slane %v5723, 7
        %v6282 = vsel %vm1468, %v6279, %v6281
        %v6283 = vrot.slane %v5725, 7
        %v6284 = vrot.slane %v5727, 7
        %v6285 = vsel %vm1468, %v6283, %v6284
        %v6286 = vrot.slane %v5729, 7
        %v6287 = vsel %vm1468, %v6284, %v6286
        %v6288 = vrot.slane %v5731, 7
        %v6289 = vrot.slane %v5733, 7
        %v6290 = vsel %vm1468, %v6288, %v6289
        %v6291 = vrot.slane %v5735, 7
        %v6292 = vsel %vm1468, %v6289, %v6291
        %v6293 = vrot.slane %v5737, 7
        %v6294 = vrot.slane %v5739, 7
        %v6295 = vsel %vm1468, %v6293, %v6294
        %v6296 = vrot.slane %v5741, 7
        %v6297 = vsel %vm1468, %v6294, %v6296
        %v6298 = vrot.slane %v5743, 7
        %v6299 = vrot.slane %v5745, 7
        %v6300 = vsel %vm1468, %v6298, %v6299
        %v6301 = vrot.slane %v5747, 7
        %v6302 = vsel %vm1468, %v6299, %v6301
        %v6303 = vrot.slane %v5749, 7
        %v6304 = vrot.slane %v5751, 7
        %v6305 = vsel %vm1468, %v6303, %v6304
        %v6306 = vrot.slane %v5753, 7
        %v6307 = vsel %vm1468, %v6304, %v6306
        %v6308 = vrot.slane %v5755, 7
        %v6309 = vrot.slane %v5757, 7
        %v6310 = vsel %vm1468, %v6308, %v6309
        %v6311 = vrot.slane %v5759, 7
        %v6312 = vsel %vm1468, %v6309, %v6311
        %v6313 = vrot.slane %v5761, 7
        %v6314 = vrot.slane %v5763, 7
        %v6315 = vsel %vm1468, %v6313, %v6314
        %v6316 = vrot.slane %v5765, 7
        %v6317 = vsel %vm1468, %v6314, %v6316
        %v6318 = vrot.slane %v5790, 7
        %v6319 = vrot.slane %v5793, 7
        %v6320 = vsel %vm1468, %v6318, %v6319
        %v6321 = vrot.slane %v5791, 7
        %v6322 = vrot.slane %v5795, 7
        %v6323 = vsel %vm1468, %v6321, %v6322
        %v6324 = vrot.slane %v5792, 7
        %v6325 = vsel %vm1468, %v6319, %v6324
        %v6326 = vrot.slane %v5794, 7
        %v6327 = vsel %vm1468, %v6322, %v6326
        %v6328 = vrot.slane %v5796, 7
        %v6329 = vrot.slane %v5799, 7
        %v6330 = vsel %vm1468, %v6328, %v6329
        %v6331 = vrot.slane %v5797, 7
        %v6332 = vrot.slane %v5801, 7
        %v6333 = vsel %vm1468, %v6331, %v6332
        %v6334 = vrot.slane %v5798, 7
        %v6335 = vsel %vm1468, %v6329, %v6334
        %v6336 = vrot.slane %v5800, 7
        %v6337 = vsel %vm1468, %v6332, %v6336
        %v6338 = vrot.slane %v5802, 7
        %v6339 = vrot.slane %v5805, 7
        %v6340 = vsel %vm1468, %v6338, %v6339
        %v6341 = vrot.slane %v5803, 7
        %v6342 = vrot.slane %v5807, 7
        %v6343 = vsel %vm1468, %v6341, %v6342
        %v6344 = vrot.slane %v5804, 7
        %v6345 = vsel %vm1468, %v6339, %v6344
        %v6346 = vrot.slane %v5806, 7
        %v6347 = vsel %vm1468, %v6342, %v6346
        %v6348 = vrot.slane %v5808, 7
        %v6349 = vrot.slane %v5811, 7
        %v6350 = vsel %vm1468, %v6348, %v6349
        %v6351 = vrot.slane %v5809, 7
        %v6352 = vrot.slane %v5813, 7
        %v6353 = vsel %vm1468, %v6351, %v6352
        %v6354 = vrot.slane %v5810, 7
        %v6355 = vsel %vm1468, %v6349, %v6354
        %v6356 = vrot.slane %v5812, 7
        %v6357 = vsel %vm1468, %v6352, %v6356
        %v6358 = vrot.slane %v5814, 7
        %v6359 = vrot.slane %v5817, 7
        %v6360 = vsel %vm1468, %v6358, %v6359
        %v6361 = vrot.slane %v5815, 7
        %v6362 = vrot.slane %v5819, 7
        %v6363 = vsel %vm1468, %v6361, %v6362
        %v6364 = vrot.slane %v5816, 7
        %v6365 = vsel %vm1468, %v6359, %v6364
        %v6366 = vrot.slane %v5818, 7
        %v6367 = vsel %vm1468, %v6362, %v6366
        %v6368 = vrot.slane %v5820, 7
        %v6369 = vrot.slane %v5823, 7
        %v6370 = vsel %vm1468, %v6368, %v6369
        %v6371 = vrot.slane %v5821, 7
        %v6372 = vrot.slane %v5825, 7
        %v6373 = vsel %vm1468, %v6371, %v6372
        %v6374 = vrot.slane %v5822, 7
        %v6375 = vsel %vm1468, %v6369, %v6374
        %v6376 = vrot.slane %v5824, 7
        %v6377 = vsel %vm1468, %v6372, %v6376
        %v6378 = vrot.slane %v5826, 7
        %v6379 = vrot.slane %v5829, 7
        %v6380 = vsel %vm1468, %v6378, %v6379
        %v6381 = vrot.slane %v5827, 7
        %v6382 = vrot.slane %v5831, 7
        %v6383 = vsel %vm1468, %v6381, %v6382
        %v6384 = vrot.slane %v5828, 7
        %v6385 = vsel %vm1468, %v6379, %v6384
        %v6386 = vrot.slane %v5830, 7
        %v6387 = vsel %vm1468, %v6382, %v6386
        %v6388 = vrot.slane %v5832, 7
        %v6389 = vrot.slane %v5835, 7
        %v6390 = vsel %vm1468, %v6388, %v6389
        %v6391 = vrot.slane %v5833, 7
        %v6392 = vrot.slane %v5837, 7
        %v6393 = vsel %vm1468, %v6391, %v6392
        %v6394 = vrot.slane %v5834, 7
        %v6395 = vsel %vm1468, %v6389, %v6394
        %v6396 = vrot.slane %v5836, 7
        %v6397 = vsel %vm1468, %v6392, %v6396
        %v6398 = vrot.slane %v5839, 7
        %v6399 = vrot.slane %v5841, 7
        %v6400 = vsel %vm1468, %v6398, %v6399
        %v6401 = vrot.slane %v5843, 7
        %v6402 = vsel %vm1468, %v6399, %v6401
        %v6403 = vrot.slane %v5845, 7
        %v6404 = vrot.slane %v5847, 7
        %v6405 = vsel %vm1468, %v6403, %v6404
        %v6406 = vrot.slane %v5849, 7
        %v6407 = vsel %vm1468, %v6404, %v6406
        %v6408 = vrot.slane %v5851, 7
        %v6409 = vrot.slane %v5853, 7
        %v6410 = vsel %vm1468, %v6408, %v6409
        %v6411 = vrot.slane %v5855, 7
        %v6412 = vsel %vm1468, %v6409, %v6411
        %v6413 = vrot.slane %v5857, 7
        %v6414 = vrot.slane %v5859, 7
        %v6415 = vsel %vm1468, %v6413, %v6414
        %v6416 = vrot.slane %v5861, 7
        %v6417 = vsel %vm1468, %v6414, %v6416
        %v6418 = vrot.slane %v5863, 7
        %v6419 = vrot.slane %v5865, 7
        %v6420 = vsel %vm1468, %v6418, %v6419
        %v6421 = vrot.slane %v5867, 7
        %v6422 = vsel %vm1468, %v6419, %v6421
        %v6423 = vrot.slane %v5869, 7
        %v6424 = vrot.slane %v5871, 7
        %v6425 = vsel %vm1468, %v6423, %v6424
        %v6426 = vrot.slane %v5873, 7
        %v6427 = vsel %vm1468, %v6424, %v6426
        %v6428 = vrot.slane %v5875, 7
        %v6429 = vrot.slane %v5877, 7
        %v6430 = vsel %vm1468, %v6428, %v6429
        %v6431 = vrot.slane %v5879, 7
        %v6432 = vsel %vm1468, %v6429, %v6431
        %v6433 = vrot.slane %v5881, 7
        %v6434 = vrot.slane %v5883, 7
        %v6435 = vsel %vm1468, %v6433, %v6434
        %v6436 = vrot.slane %v5885, 7
        %v6437 = vsel %vm1468, %v6434, %v6436
        %v6438 = vrot.slane %v5887, 7
        %v6439 = vrot.slane %v5889, 7
        %v6440 = vsel %vm1468, %v6438, %v6439
        %v6441 = vrot.slane %v5891, 7
        %v6442 = vsel %vm1468, %v6439, %v6441
        %v6443 = vrot.slane %v5893, 7
        %v6444 = vrot.slane %v5895, 7
        %v6445 = vsel %vm1468, %v6443, %v6444
        %v6446 = vrot.slane %v5897, 7
        %v6447 = vsel %vm1468, %v6444, %v6446
        %v6448 = vrot.slane %v5899, 7
        %v6449 = vrot.slane %v5901, 7
        %v6450 = vsel %vm1468, %v6448, %v6449
        %v6451 = vrot.slane %v5903, 7
        %v6452 = vsel %vm1468, %v6449, %v6451
        %v6453 = vrot.slane %v5905, 7
        %v6454 = vrot.slane %v5907, 7
        %v6455 = vsel %vm1468, %v6453, %v6454
        %v6456 = vrot.slane %v5909, 7
        %v6457 = vsel %vm1468, %v6454, %v6456
        %v6458 = vrot.slane %v5911, 7
        %v6459 = vrot.slane %v5913, 7
        %v6460 = vsel %vm1468, %v6458, %v6459
        %v6461 = vrot.slane %v5915, 7
        %v6462 = vsel %vm1468, %v6459, %v6461
        %v6463 = vrot.slane %v5917, 7
        %v6464 = vrot.slane %v5919, 7
        %v6465 = vsel %vm1468, %v6463, %v6464
        %v6466 = vrot.slane %v5921, 7
        %v6467 = vsel %vm1468, %v6464, %v6466
        %v6468 = vrot.slane %v5923, 7
        %v6469 = vrot.slane %v5925, 7
        %v6470 = vsel %vm1468, %v6468, %v6469
        %v6471 = vrot.slane %v5927, 7
        %v6472 = vsel %vm1468, %v6469, %v6471
        %v6473 = vrot.slane %v5929, 7
        %v6474 = vrot.slane %v5931, 7
        %v6475 = vsel %vm1468, %v6473, %v6474
        %v6476 = vrot.slane %v5933, 7
        %v6477 = vsel %vm1468, %v6474, %v6476
        %v6478 = vrot.slane %v5966, 7
        %v6479 = vrot.slane %v5969, 7
        %v6480 = vsel %vm1468, %v6478, %v6479
        %v6481 = vrot.slane %v5967, 7
        %v6482 = vrot.slane %v5971, 7
        %v6483 = vsel %vm1468, %v6481, %v6482
        %v6484 = vrot.slane %v5973, 7
        %v6485 = vsel %vm1468, %v6479, %v6484
        %v6486 = vrot.slane %v5975, 7
        %v6487 = vsel %vm1468, %v6482, %v6486
        %v6488 = vrot.slane %v5976, 7
        %v6489 = vrot.slane %v5979, 7
        %v6490 = vsel %vm1468, %v6488, %v6489
        %v6491 = vrot.slane %v5977, 7
        %v6492 = vrot.slane %v5981, 7
        %v6493 = vsel %vm1468, %v6491, %v6492
        %v6494 = vrot.slane %v5983, 7
        %v6495 = vsel %vm1468, %v6489, %v6494
        %v6496 = vrot.slane %v5985, 7
        %v6497 = vsel %vm1468, %v6492, %v6496
        %v6498 = vrot.slane %v5986, 7
        %v6499 = vrot.slane %v5989, 7
        %v6500 = vsel %vm1468, %v6498, %v6499
        %v6501 = vrot.slane %v5987, 7
        %v6502 = vrot.slane %v5991, 7
        %v6503 = vsel %vm1468, %v6501, %v6502
        %v6504 = vrot.slane %v5993, 7
        %v6505 = vsel %vm1468, %v6499, %v6504
        %v6506 = vrot.slane %v5995, 7
        %v6507 = vsel %vm1468, %v6502, %v6506
        %v6508 = vrot.slane %v5996, 7
        %v6509 = vrot.slane %v5999, 7
        %v6510 = vsel %vm1468, %v6508, %v6509
        %v6511 = vrot.slane %v5997, 7
        %v6512 = vrot.slane %v6001, 7
        %v6513 = vsel %vm1468, %v6511, %v6512
        %v6514 = vrot.slane %v6003, 7
        %v6515 = vsel %vm1468, %v6509, %v6514
        %v6516 = vrot.slane %v6005, 7
        %v6517 = vsel %vm1468, %v6512, %v6516
        %v6518 = vrot.slane %v6006, 7
        %v6519 = vrot.slane %v6009, 7
        %v6520 = vsel %vm1468, %v6518, %v6519
        %v6521 = vrot.slane %v6007, 7
        %v6522 = vrot.slane %v6011, 7
        %v6523 = vsel %vm1468, %v6521, %v6522
        %v6524 = vrot.slane %v6013, 7
        %v6525 = vsel %vm1468, %v6519, %v6524
        %v6526 = vrot.slane %v6015, 7
        %v6527 = vsel %vm1468, %v6522, %v6526
        %v6528 = vrot.slane %v6016, 7
        %v6529 = vrot.slane %v6019, 7
        %v6530 = vsel %vm1468, %v6528, %v6529
        %v6531 = vrot.slane %v6017, 7
        %v6532 = vrot.slane %v6021, 7
        %v6533 = vsel %vm1468, %v6531, %v6532
        %v6534 = vrot.slane %v6023, 7
        %v6535 = vsel %vm1468, %v6529, %v6534
        %v6536 = vrot.slane %v6025, 7
        %v6537 = vsel %vm1468, %v6532, %v6536
        %v6538 = vrot.slane %v6026, 7
        %v6539 = vrot.slane %v6029, 7
        %v6540 = vsel %vm1468, %v6538, %v6539
        %v6541 = vrot.slane %v6027, 7
        %v6542 = vrot.slane %v6031, 7
        %v6543 = vsel %vm1468, %v6541, %v6542
        %v6544 = vrot.slane %v6033, 7
        %v6545 = vsel %vm1468, %v6539, %v6544
        %v6546 = vrot.slane %v6035, 7
        %v6547 = vsel %vm1468, %v6542, %v6546
        %v6548 = vrot.slane %v6036, 7
        %v6549 = vrot.slane %v6039, 7
        %v6550 = vsel %vm1468, %v6548, %v6549
        %v6551 = vrot.slane %v6037, 7
        %v6552 = vrot.slane %v6041, 7
        %v6553 = vsel %vm1468, %v6551, %v6552
        %v6554 = vrot.slane %v6043, 7
        %v6555 = vsel %vm1468, %v6549, %v6554
        %v6556 = vrot.slane %v6045, 7
        %v6557 = vsel %vm1468, %v6552, %v6556
        %v6558 = vrot.slane %v6047, 7
        %v6559 = vrot.slane %v6049, 7
        %v6560 = vsel %vm1468, %v6558, %v6559
        %v6561 = vrot.slane %v6051, 7
        %v6562 = vsel %vm1468, %v6559, %v6561
        %v6563 = vrot.slane %v6053, 7
        %v6564 = vrot.slane %v6055, 7
        %v6565 = vsel %vm1468, %v6563, %v6564
        %v6566 = vrot.slane %v6057, 7
        %v6567 = vsel %vm1468, %v6564, %v6566
        %v6568 = vrot.slane %v6059, 7
        %v6569 = vrot.slane %v6061, 7
        %v6570 = vsel %vm1468, %v6568, %v6569
        %v6571 = vrot.slane %v6063, 7
        %v6572 = vsel %vm1468, %v6569, %v6571
        %v6573 = vrot.slane %v6065, 7
        %v6574 = vrot.slane %v6067, 7
        %v6575 = vsel %vm1468, %v6573, %v6574
        %v6576 = vrot.slane %v6069, 7
        %v6577 = vsel %vm1468, %v6574, %v6576
        %v6578 = vrot.slane %v6071, 7
        %v6579 = vrot.slane %v6073, 7
        %v6580 = vsel %vm1468, %v6578, %v6579
        %v6581 = vrot.slane %v6075, 7
        %v6582 = vsel %vm1468, %v6579, %v6581
        %v6583 = vrot.slane %v6077, 7
        %v6584 = vrot.slane %v6079, 7
        %v6585 = vsel %vm1468, %v6583, %v6584
        %v6586 = vrot.slane %v6081, 7
        %v6587 = vsel %vm1468, %v6584, %v6586
        %v6588 = vrot.slane %v6083, 7
        %v6589 = vrot.slane %v6085, 7
        %v6590 = vsel %vm1468, %v6588, %v6589
        %v6591 = vrot.slane %v6087, 7
        %v6592 = vsel %vm1468, %v6589, %v6591
        %v6593 = vrot.slane %v6089, 7
        %v6594 = vrot.slane %v6091, 7
        %v6595 = vsel %vm1468, %v6593, %v6594
        %v6596 = vrot.slane %v6093, 7
        %v6597 = vsel %vm1468, %v6594, %v6596
        %v6598 = vrot.slane %v6095, 7
        %v6599 = vrot.slane %v6097, 7
        %v6600 = vsel %vm1468, %v6598, %v6599
        %v6601 = vrot.slane %v6099, 7
        %v6602 = vsel %vm1468, %v6599, %v6601
        %v6603 = vrot.slane %v6101, 7
        %v6604 = vrot.slane %v6103, 7
        %v6605 = vsel %vm1468, %v6603, %v6604
        %v6606 = vrot.slane %v6105, 7
        %v6607 = vsel %vm1468, %v6604, %v6606
        %v6608 = vrot.slane %v6107, 7
        %v6609 = vrot.slane %v6109, 7
        %v6610 = vsel %vm1468, %v6608, %v6609
        %v6611 = vrot.slane %v6111, 7
        %v6612 = vsel %vm1468, %v6609, %v6611
        %v6613 = vrot.slane %v6113, 7
        %v6614 = vrot.slane %v6115, 7
        %v6615 = vsel %vm1468, %v6613, %v6614
        %v6616 = vrot.slane %v6117, 7
        %v6617 = vsel %vm1468, %v6614, %v6616
        %v6618 = vrot.slane %v6119, 7
        %v6619 = vrot.slane %v6121, 7
        %v6620 = vsel %vm1468, %v6618, %v6619
        %v6621 = vrot.slane %v6123, 7
        %v6622 = vsel %vm1468, %v6619, %v6621
        %v6623 = vrot.slane %v6125, 7
        %v6624 = vrot.slane %v6127, 7
        %v6625 = vsel %vm1468, %v6623, %v6624
        %v6626 = vrot.slane %v6129, 7
        %v6627 = vsel %vm1468, %v6624, %v6626
        %v6628 = vrot.slane %v6131, 7
        %v6629 = vrot.slane %v6133, 7
        %v6630 = vsel %vm1468, %v6628, %v6629
        %v6631 = vrot.slane %v6135, 7
        %v6632 = vsel %vm1468, %v6629, %v6631
        %v6633 = vrot.slane %v6137, 7
        %v6634 = vrot.slane %v6139, 7
        %v6635 = vsel %vm1468, %v6633, %v6634
        %v6636 = vrot.slane %v6141, 7
        %v6637 = vsel %vm1468, %v6634, %v6636
        %6638 = vrot.lane.b32.xlu0 %v6160, 1
        %v6639 = vpop.permute.xlu0 %6638
        %6640 = vrot.lane.b32.xlu0 %v6163, 1
        %v6641 = vpop.permute.xlu0 %6640
        %6642 = vrot.lane.b32.xlu0 %v6165, 1
        %v6643 = vpop.permute.xlu0 %6642
        %6644 = vrot.lane.b32.xlu0 %v6167, 1
        %v6645 = vpop.permute.xlu0 %6644
        %6646 = vrot.lane.b32.xlu0 %v6170, 1
        %v6647 = vpop.permute.xlu0 %6646
        %6648 = vrot.lane.b32.xlu0 %v6173, 1
        %v6649 = vpop.permute.xlu0 %6648
        %6650 = vrot.lane.b32.xlu0 %v6175, 1
        %v6651 = vpop.permute.xlu0 %6650
        %6652 = vrot.lane.b32.xlu0 %v6177, 1
        %v6653 = vpop.permute.xlu0 %6652
        %6654 = vrot.lane.b32.xlu0 %v6180, 1
        %v6655 = vpop.permute.xlu0 %6654
        %6656 = vrot.lane.b32.xlu0 %v6183, 1
        %v6657 = vpop.permute.xlu0 %6656
        %6658 = vrot.lane.b32.xlu0 %v6185, 1
        %v6659 = vpop.permute.xlu0 %6658
        %6660 = vrot.lane.b32.xlu0 %v6187, 1
        %v6661 = vpop.permute.xlu0 %6660
        %6662 = vrot.lane.b32.xlu0 %v6190, 1
        %v6663 = vpop.permute.xlu0 %6662
        %6664 = vrot.lane.b32.xlu0 %v6193, 1
        %v6665 = vpop.permute.xlu0 %6664
        %6666 = vrot.lane.b32.xlu0 %v6195, 1
        %v6667 = vpop.permute.xlu0 %6666
        %6668 = vrot.lane.b32.xlu0 %v6197, 1
        %v6669 = vpop.permute.xlu0 %6668
        %6670 = vrot.lane.b32.xlu0 %v6200, 1
        %v6671 = vpop.permute.xlu0 %6670
        %6672 = vrot.lane.b32.xlu0 %v6203, 1
        %v6673 = vpop.permute.xlu0 %6672
        %6674 = vrot.lane.b32.xlu0 %v6205, 1
        %v6675 = vpop.permute.xlu0 %6674
        %6676 = vrot.lane.b32.xlu0 %v6207, 1
        %v6677 = vpop.permute.xlu0 %6676
        %6678 = vrot.lane.b32.xlu0 %v6210, 1
        %v6679 = vpop.permute.xlu0 %6678
        %6680 = vrot.lane.b32.xlu0 %v6213, 1
        %v6681 = vpop.permute.xlu0 %6680
        %6682 = vrot.lane.b32.xlu0 %v6215, 1
        %v6683 = vpop.permute.xlu0 %6682
        %6684 = vrot.lane.b32.xlu0 %v6217, 1
        %v6685 = vpop.permute.xlu0 %6684
        %6686 = vrot.lane.b32.xlu0 %v6220, 1
        %v6687 = vpop.permute.xlu0 %6686
        %6688 = vrot.lane.b32.xlu0 %v6223, 1
        %v6689 = vpop.permute.xlu0 %6688
        %6690 = vrot.lane.b32.xlu0 %v6225, 1
        %v6691 = vpop.permute.xlu0 %6690
        %6692 = vrot.lane.b32.xlu0 %v6227, 1
        %v6693 = vpop.permute.xlu0 %6692
        %6694 = vrot.lane.b32.xlu0 %v6230, 1
        %v6695 = vpop.permute.xlu0 %6694
        %6696 = vrot.lane.b32.xlu0 %v6233, 1
        %v6697 = vpop.permute.xlu0 %6696
        %6698 = vrot.lane.b32.xlu0 %v6235, 1
        %v6699 = vpop.permute.xlu0 %6698
        %6700 = vrot.lane.b32.xlu0 %v6237, 1
        %v6701 = vpop.permute.xlu0 %6700
        %6702 = vrot.lane.b32.xlu0 %v6240, 1
        %v6703 = vpop.permute.xlu0 %6702
        %6704 = vrot.lane.b32.xlu0 %v6242, 1
        %v6705 = vpop.permute.xlu0 %6704
        %6706 = vrot.lane.b32.xlu0 %v6245, 1
        %v6707 = vpop.permute.xlu0 %6706
        %6708 = vrot.lane.b32.xlu0 %v6247, 1
        %v6709 = vpop.permute.xlu0 %6708
        %6710 = vrot.lane.b32.xlu0 %v6250, 1
        %v6711 = vpop.permute.xlu0 %6710
        %6712 = vrot.lane.b32.xlu0 %v6252, 1
        %v6713 = vpop.permute.xlu0 %6712
        %6714 = vrot.lane.b32.xlu0 %v6255, 1
        %v6715 = vpop.permute.xlu0 %6714
        %6716 = vrot.lane.b32.xlu0 %v6257, 1
        %v6717 = vpop.permute.xlu0 %6716
        %6718 = vrot.lane.b32.xlu0 %v6260, 1
        %v6719 = vpop.permute.xlu0 %6718
        %6720 = vrot.lane.b32.xlu0 %v6262, 1
        %v6721 = vpop.permute.xlu0 %6720
        %6722 = vrot.lane.b32.xlu0 %v6265, 1
        %v6723 = vpop.permute.xlu0 %6722
        %6724 = vrot.lane.b32.xlu0 %v6267, 1
        %v6725 = vpop.permute.xlu0 %6724
        %6726 = vrot.lane.b32.xlu0 %v6270, 1
        %v6727 = vpop.permute.xlu0 %6726
        %6728 = vrot.lane.b32.xlu0 %v6272, 1
        %v6729 = vpop.permute.xlu0 %6728
        %6730 = vrot.lane.b32.xlu0 %v6275, 1
        %v6731 = vpop.permute.xlu0 %6730
        %6732 = vrot.lane.b32.xlu0 %v6277, 1
        %v6733 = vpop.permute.xlu0 %6732
        %6734 = vrot.lane.b32.xlu0 %v6280, 1
        %v6735 = vpop.permute.xlu0 %6734
        %6736 = vrot.lane.b32.xlu0 %v6282, 1
        %v6737 = vpop.permute.xlu0 %6736
        %6738 = vrot.lane.b32.xlu0 %v6285, 1
        %v6739 = vpop.permute.xlu0 %6738
        %6740 = vrot.lane.b32.xlu0 %v6287, 1
        %v6741 = vpop.permute.xlu0 %6740
        %6742 = vrot.lane.b32.xlu0 %v6290, 1
        %v6743 = vpop.permute.xlu0 %6742
        %6744 = vrot.lane.b32.xlu0 %v6292, 1
        %v6745 = vpop.permute.xlu0 %6744
        %6746 = vrot.lane.b32.xlu0 %v6295, 1
        %v6747 = vpop.permute.xlu0 %6746
        %6748 = vrot.lane.b32.xlu0 %v6297, 1
        %v6749 = vpop.permute.xlu0 %6748
        %6750 = vrot.lane.b32.xlu0 %v6300, 1
        %v6751 = vpop.permute.xlu0 %6750
        %6752 = vrot.lane.b32.xlu0 %v6302, 1
        %v6753 = vpop.permute.xlu0 %6752
        %6754 = vrot.lane.b32.xlu0 %v6305, 1
        %v6755 = vpop.permute.xlu0 %6754
        %6756 = vrot.lane.b32.xlu0 %v6307, 1
        %v6757 = vpop.permute.xlu0 %6756
        %6758 = vrot.lane.b32.xlu0 %v6310, 1
        %v6759 = vpop.permute.xlu0 %6758
        %6760 = vrot.lane.b32.xlu0 %v6312, 1
        %v6761 = vpop.permute.xlu0 %6760
        %6762 = vrot.lane.b32.xlu0 %v6315, 1
        %v6763 = vpop.permute.xlu0 %6762
        %6764 = vrot.lane.b32.xlu0 %v6317, 1
        %v6765 = vpop.permute.xlu0 %6764
        %6766 = vrot.lane.b32.xlu0 %v6320, 1
        %v6767 = vpop.permute.xlu0 %6766
        %6768 = vrot.lane.b32.xlu0 %v6323, 1
        %v6769 = vpop.permute.xlu0 %6768
        %6770 = vrot.lane.b32.xlu0 %v6325, 1
        %v6771 = vpop.permute.xlu0 %6770
        %6772 = vrot.lane.b32.xlu0 %v6327, 1
        %v6773 = vpop.permute.xlu0 %6772
        %6774 = vrot.lane.b32.xlu0 %v6330, 1
        %v6775 = vpop.permute.xlu0 %6774
        %6776 = vrot.lane.b32.xlu0 %v6333, 1
        %v6777 = vpop.permute.xlu0 %6776
        %6778 = vrot.lane.b32.xlu0 %v6335, 1
        %v6779 = vpop.permute.xlu0 %6778
        %6780 = vrot.lane.b32.xlu0 %v6337, 1
        %v6781 = vpop.permute.xlu0 %6780
        %6782 = vrot.lane.b32.xlu0 %v6340, 1
        %v6783 = vpop.permute.xlu0 %6782
        %6784 = vrot.lane.b32.xlu0 %v6343, 1
        %v6785 = vpop.permute.xlu0 %6784
        %6786 = vrot.lane.b32.xlu0 %v6345, 1
        %v6787 = vpop.permute.xlu0 %6786
        %6788 = vrot.lane.b32.xlu0 %v6347, 1
        %v6789 = vpop.permute.xlu0 %6788
        %6790 = vrot.lane.b32.xlu0 %v6350, 1
        %v6791 = vpop.permute.xlu0 %6790
        %6792 = vrot.lane.b32.xlu0 %v6353, 1
        %v6793 = vpop.permute.xlu0 %6792
        %6794 = vrot.lane.b32.xlu0 %v6355, 1
        %v6795 = vpop.permute.xlu0 %6794
        %6796 = vrot.lane.b32.xlu0 %v6357, 1
        %v6797 = vpop.permute.xlu0 %6796
        %6798 = vrot.lane.b32.xlu0 %v6360, 1
        %v6799 = vpop.permute.xlu0 %6798
        %6800 = vrot.lane.b32.xlu0 %v6363, 1
        %v6801 = vpop.permute.xlu0 %6800
        %6802 = vrot.lane.b32.xlu0 %v6365, 1
        %v6803 = vpop.permute.xlu0 %6802
        %6804 = vrot.lane.b32.xlu0 %v6367, 1
        %v6805 = vpop.permute.xlu0 %6804
        %6806 = vrot.lane.b32.xlu0 %v6370, 1
        %v6807 = vpop.permute.xlu0 %6806
        %6808 = vrot.lane.b32.xlu0 %v6373, 1
        %v6809 = vpop.permute.xlu0 %6808
        %6810 = vrot.lane.b32.xlu0 %v6375, 1
        %v6811 = vpop.permute.xlu0 %6810
        %6812 = vrot.lane.b32.xlu0 %v6377, 1
        %v6813 = vpop.permute.xlu0 %6812
        %6814 = vrot.lane.b32.xlu0 %v6380, 1
        %v6815 = vpop.permute.xlu0 %6814
        %6816 = vrot.lane.b32.xlu0 %v6383, 1
        %v6817 = vpop.permute.xlu0 %6816
        %6818 = vrot.lane.b32.xlu0 %v6385, 1
        %v6819 = vpop.permute.xlu0 %6818
        %6820 = vrot.lane.b32.xlu0 %v6387, 1
        %v6821 = vpop.permute.xlu0 %6820
        %6822 = vrot.lane.b32.xlu0 %v6390, 1
        %v6823 = vpop.permute.xlu0 %6822
        %6824 = vrot.lane.b32.xlu0 %v6393, 1
        %v6825 = vpop.permute.xlu0 %6824
        %6826 = vrot.lane.b32.xlu0 %v6395, 1
        %v6827 = vpop.permute.xlu0 %6826
        %6828 = vrot.lane.b32.xlu0 %v6397, 1
        %v6829 = vpop.permute.xlu0 %6828
        %6830 = vrot.lane.b32.xlu0 %v6400, 1
        %v6831 = vpop.permute.xlu0 %6830
        %6832 = vrot.lane.b32.xlu0 %v6402, 1
        %v6833 = vpop.permute.xlu0 %6832
        %6834 = vrot.lane.b32.xlu0 %v6405, 1
        %v6835 = vpop.permute.xlu0 %6834
        %6836 = vrot.lane.b32.xlu0 %v6407, 1
        %v6837 = vpop.permute.xlu0 %6836
        %6838 = vrot.lane.b32.xlu0 %v6410, 1
        %v6839 = vpop.permute.xlu0 %6838
        %6840 = vrot.lane.b32.xlu0 %v6412, 1
        %v6841 = vpop.permute.xlu0 %6840
        %6842 = vrot.lane.b32.xlu0 %v6415, 1
        %v6843 = vpop.permute.xlu0 %6842
        %6844 = vrot.lane.b32.xlu0 %v6417, 1
        %v6845 = vpop.permute.xlu0 %6844
        %6846 = vrot.lane.b32.xlu0 %v6420, 1
        %v6847 = vpop.permute.xlu0 %6846
        %6848 = vrot.lane.b32.xlu0 %v6422, 1
        %v6849 = vpop.permute.xlu0 %6848
        %6850 = vrot.lane.b32.xlu0 %v6425, 1
        %v6851 = vpop.permute.xlu0 %6850
        %6852 = vrot.lane.b32.xlu0 %v6427, 1
        %v6853 = vpop.permute.xlu0 %6852
        %6854 = vrot.lane.b32.xlu0 %v6430, 1
        %v6855 = vpop.permute.xlu0 %6854
        %6856 = vrot.lane.b32.xlu0 %v6432, 1
        %v6857 = vpop.permute.xlu0 %6856
        %6858 = vrot.lane.b32.xlu0 %v6435, 1
        %v6859 = vpop.permute.xlu0 %6858
        %6860 = vrot.lane.b32.xlu0 %v6437, 1
        %v6861 = vpop.permute.xlu0 %6860
        %6862 = vrot.lane.b32.xlu0 %v6440, 1
        %v6863 = vpop.permute.xlu0 %6862
        %6864 = vrot.lane.b32.xlu0 %v6442, 1
        %v6865 = vpop.permute.xlu0 %6864
        %6866 = vrot.lane.b32.xlu0 %v6445, 1
        %v6867 = vpop.permute.xlu0 %6866
        %6868 = vrot.lane.b32.xlu0 %v6447, 1
        %v6869 = vpop.permute.xlu0 %6868
        %6870 = vrot.lane.b32.xlu0 %v6450, 1
        %v6871 = vpop.permute.xlu0 %6870
        %6872 = vrot.lane.b32.xlu0 %v6452, 1
        %v6873 = vpop.permute.xlu0 %6872
        %6874 = vrot.lane.b32.xlu0 %v6455, 1
        %v6875 = vpop.permute.xlu0 %6874
        %6876 = vrot.lane.b32.xlu0 %v6457, 1
        %v6877 = vpop.permute.xlu0 %6876
        %6878 = vrot.lane.b32.xlu0 %v6460, 1
        %v6879 = vpop.permute.xlu0 %6878
        %6880 = vrot.lane.b32.xlu0 %v6462, 1
        %v6881 = vpop.permute.xlu0 %6880
        %6882 = vrot.lane.b32.xlu0 %v6465, 1
        %v6883 = vpop.permute.xlu0 %6882
        %6884 = vrot.lane.b32.xlu0 %v6467, 1
        %v6885 = vpop.permute.xlu0 %6884
        %6886 = vrot.lane.b32.xlu0 %v6470, 1
        %v6887 = vpop.permute.xlu0 %6886
        %6888 = vrot.lane.b32.xlu0 %v6472, 1
        %v6889 = vpop.permute.xlu0 %6888
        %6890 = vrot.lane.b32.xlu0 %v6475, 1
        %v6891 = vpop.permute.xlu0 %6890
        %6892 = vrot.lane.b32.xlu0 %v6477, 1
        %v6893 = vpop.permute.xlu0 %6892
        %6894 = vrot.lane.b32.xlu0 %v6480, 1
        %v6895 = vpop.permute.xlu0 %6894
        %6896 = vrot.lane.b32.xlu0 %v6483, 1
        %v6897 = vpop.permute.xlu0 %6896
        %6898 = vrot.lane.b32.xlu0 %v6485, 1
        %v6899 = vpop.permute.xlu0 %6898
        %6900 = vrot.lane.b32.xlu0 %v6487, 1
        %v6901 = vpop.permute.xlu0 %6900
        %6902 = vrot.lane.b32.xlu0 %v6490, 1
        %v6903 = vpop.permute.xlu0 %6902
        %6904 = vrot.lane.b32.xlu0 %v6493, 1
        %v6905 = vpop.permute.xlu0 %6904
        %6906 = vrot.lane.b32.xlu0 %v6495, 1
        %v6907 = vpop.permute.xlu0 %6906
        %6908 = vrot.lane.b32.xlu0 %v6497, 1
        %v6909 = vpop.permute.xlu0 %6908
        %6910 = vrot.lane.b32.xlu0 %v6500, 1
        %v6911 = vpop.permute.xlu0 %6910
        %6912 = vrot.lane.b32.xlu0 %v6503, 1
        %v6913 = vpop.permute.xlu0 %6912
        %6914 = vrot.lane.b32.xlu0 %v6505, 1
        %v6915 = vpop.permute.xlu0 %6914
        %6916 = vrot.lane.b32.xlu0 %v6507, 1
        %v6917 = vpop.permute.xlu0 %6916
        %6918 = vrot.lane.b32.xlu0 %v6510, 1
        %v6919 = vpop.permute.xlu0 %6918
        %6920 = vrot.lane.b32.xlu0 %v6513, 1
        %v6921 = vpop.permute.xlu0 %6920
        %6922 = vrot.lane.b32.xlu0 %v6515, 1
        %v6923 = vpop.permute.xlu0 %6922
        %6924 = vrot.lane.b32.xlu0 %v6517, 1
        %v6925 = vpop.permute.xlu0 %6924
        %6926 = vrot.lane.b32.xlu0 %v6520, 1
        %v6927 = vpop.permute.xlu0 %6926
        %6928 = vrot.lane.b32.xlu0 %v6523, 1
        %v6929 = vpop.permute.xlu0 %6928
        %6930 = vrot.lane.b32.xlu0 %v6525, 1
        %v6931 = vpop.permute.xlu0 %6930
        %6932 = vrot.lane.b32.xlu0 %v6527, 1
        %v6933 = vpop.permute.xlu0 %6932
        %6934 = vrot.lane.b32.xlu0 %v6530, 1
        %v6935 = vpop.permute.xlu0 %6934
        %6936 = vrot.lane.b32.xlu0 %v6533, 1
        %v6937 = vpop.permute.xlu0 %6936
        %6938 = vrot.lane.b32.xlu0 %v6535, 1
        %v6939 = vpop.permute.xlu0 %6938
        %6940 = vrot.lane.b32.xlu0 %v6537, 1
        %v6941 = vpop.permute.xlu0 %6940
        %6942 = vrot.lane.b32.xlu0 %v6540, 1
        %v6943 = vpop.permute.xlu0 %6942
        %6944 = vrot.lane.b32.xlu0 %v6543, 1
        %v6945 = vpop.permute.xlu0 %6944
        %6946 = vrot.lane.b32.xlu0 %v6545, 1
        %v6947 = vpop.permute.xlu0 %6946
        %6948 = vrot.lane.b32.xlu0 %v6547, 1
        %v6949 = vpop.permute.xlu0 %6948
        %6950 = vrot.lane.b32.xlu0 %v6550, 1
        %v6951 = vpop.permute.xlu0 %6950
        %6952 = vrot.lane.b32.xlu0 %v6553, 1
        %v6953 = vpop.permute.xlu0 %6952
        %6954 = vrot.lane.b32.xlu0 %v6555, 1
        %v6955 = vpop.permute.xlu0 %6954
        %6956 = vrot.lane.b32.xlu0 %v6557, 1
        %v6957 = vpop.permute.xlu0 %6956
        %6958 = vrot.lane.b32.xlu0 %v6560, 1
        %v6959 = vpop.permute.xlu0 %6958
        %6960 = vrot.lane.b32.xlu0 %v6562, 1
        %v6961 = vpop.permute.xlu0 %6960
        %6962 = vrot.lane.b32.xlu0 %v6565, 1
        %v6963 = vpop.permute.xlu0 %6962
        %6964 = vrot.lane.b32.xlu0 %v6567, 1
        %v6965 = vpop.permute.xlu0 %6964
        %6966 = vrot.lane.b32.xlu0 %v6570, 1
        %v6967 = vpop.permute.xlu0 %6966
        %6968 = vrot.lane.b32.xlu0 %v6572, 1
        %v6969 = vpop.permute.xlu0 %6968
        %6970 = vrot.lane.b32.xlu0 %v6575, 1
        %v6971 = vpop.permute.xlu0 %6970
        %6972 = vrot.lane.b32.xlu0 %v6577, 1
        %v6973 = vpop.permute.xlu0 %6972
        %6974 = vrot.lane.b32.xlu0 %v6580, 1
        %v6975 = vpop.permute.xlu0 %6974
        %6976 = vrot.lane.b32.xlu0 %v6582, 1
        %v6977 = vpop.permute.xlu0 %6976
        %6978 = vrot.lane.b32.xlu0 %v6585, 1
        %v6979 = vpop.permute.xlu0 %6978
        %6980 = vrot.lane.b32.xlu0 %v6587, 1
        %v6981 = vpop.permute.xlu0 %6980
        %6982 = vrot.lane.b32.xlu0 %v6590, 1
        %v6983 = vpop.permute.xlu0 %6982
        %6984 = vrot.lane.b32.xlu0 %v6592, 1
        %v6985 = vpop.permute.xlu0 %6984
        %6986 = vrot.lane.b32.xlu0 %v6595, 1
        %v6987 = vpop.permute.xlu0 %6986
        %6988 = vrot.lane.b32.xlu0 %v6597, 1
        %v6989 = vpop.permute.xlu0 %6988
        %6990 = vrot.lane.b32.xlu0 %v6600, 1
        %v6991 = vpop.permute.xlu0 %6990
        %6992 = vrot.lane.b32.xlu0 %v6602, 1
        %v6993 = vpop.permute.xlu0 %6992
        %6994 = vrot.lane.b32.xlu0 %v6605, 1
        %v6995 = vpop.permute.xlu0 %6994
        %6996 = vrot.lane.b32.xlu0 %v6607, 1
        %v6997 = vpop.permute.xlu0 %6996
        %6998 = vrot.lane.b32.xlu0 %v6610, 1
        %v6999 = vpop.permute.xlu0 %6998
        %7000 = vrot.lane.b32.xlu0 %v6612, 1
        %v7001 = vpop.permute.xlu0 %7000
        %7002 = vrot.lane.b32.xlu0 %v6615, 1
        %v7003 = vpop.permute.xlu0 %7002
        %7004 = vrot.lane.b32.xlu0 %v6617, 1
        %v7005 = vpop.permute.xlu0 %7004
        %7006 = vrot.lane.b32.xlu0 %v6620, 1
        %v7007 = vpop.permute.xlu0 %7006
        %7008 = vrot.lane.b32.xlu0 %v6622, 1
        %v7009 = vpop.permute.xlu0 %7008
        %7010 = vrot.lane.b32.xlu0 %v6625, 1
        %v7011 = vpop.permute.xlu0 %7010
        %7012 = vrot.lane.b32.xlu0 %v6627, 1
        %v7013 = vpop.permute.xlu0 %7012
        %7014 = vrot.lane.b32.xlu0 %v6630, 1
        %v7015 = vpop.permute.xlu0 %7014
        %7016 = vrot.lane.b32.xlu0 %v6632, 1
        %v7017 = vpop.permute.xlu0 %7016
        %7018 = vrot.lane.b32.xlu0 %v6635, 1
        %v7019 = vpop.permute.xlu0 %7018
        %7020 = vrot.lane.b32.xlu0 %v6637, 1
        %v7021 = vpop.permute.xlu0 %7020
        %v7022 = vsel %vm2333, %v6639, %v6641
        %v7023 = vsel %vm2333, %v6643, %v6645
        %v7024 = vsel %vm2333, %v6647, %v6649
        %v7025 = vsel %vm2333, %v6651, %v6653
        %v7026 = vsel %vm2333, %v6655, %v6657
        %v7027 = vsel %vm2333, %v6659, %v6661
        %v7028 = vsel %vm2333, %v6663, %v6665
        %v7029 = vsel %vm2333, %v6667, %v6669
        %v7030 = vsel %vm2333, %v6671, %v6673
        %v7031 = vsel %vm2333, %v6675, %v6677
        %v7032 = vsel %vm2333, %v6679, %v6681
        %v7033 = vsel %vm2333, %v6683, %v6685
        %v7034 = vsel %vm2333, %v6687, %v6689
        %v7035 = vsel %vm2333, %v6691, %v6693
        %v7036 = vsel %vm2333, %v6695, %v6697
        %v7037 = vsel %vm2333, %v6699, %v6701
        %v7038 = vsel %vm2333, %v6767, %v6769
        %v7039 = vsel %vm2333, %v6771, %v6773
        %v7040 = vsel %vm2333, %v6775, %v6777
        %v7041 = vsel %vm2333, %v6779, %v6781
        %v7042 = vsel %vm2333, %v6783, %v6785
        %v7043 = vsel %vm2333, %v6787, %v6789
        %v7044 = vsel %vm2333, %v6791, %v6793
        %v7045 = vsel %vm2333, %v6795, %v6797
        %v7046 = vsel %vm2333, %v6799, %v6801
        %v7047 = vsel %vm2333, %v6803, %v6805
        %v7048 = vsel %vm2333, %v6807, %v6809
        %v7049 = vsel %vm2333, %v6811, %v6813
        %v7050 = vsel %vm2333, %v6815, %v6817
        %v7051 = vsel %vm2333, %v6819, %v6821
        %v7052 = vsel %vm2333, %v6823, %v6825
        %v7053 = vsel %vm2333, %v6827, %v6829
        %v7054 = vsel %vm2333, %v6895, %v6897
        %v7055 = vsel %vm2333, %v6899, %v6901
        %v7056 = vsel %vm2333, %v6903, %v6905
        %v7057 = vsel %vm2333, %v6907, %v6909
        %v7058 = vsel %vm2333, %v6911, %v6913
        %v7059 = vsel %vm2333, %v6915, %v6917
        %v7060 = vsel %vm2333, %v6919, %v6921
        %v7061 = vsel %vm2333, %v6923, %v6925
        %v7062 = vsel %vm2333, %v6927, %v6929
        %v7063 = vsel %vm2333, %v6931, %v6933
        %v7064 = vsel %vm2333, %v6935, %v6937
        %v7065 = vsel %vm2333, %v6939, %v6941
        %v7066 = vsel %vm2333, %v6943, %v6945
        %v7067 = vsel %vm2333, %v6947, %v6949
        %v7068 = vsel %vm2333, %v6951, %v6953
        %v7069 = vsel %vm2333, %v6955, %v6957
        %v7214 = vrot.slane %v7026, 4
        %v7215 = vsel %vm617, %v7214, %v7022
        %v7216 = vrot.slane %v7022, 4
        %v7217 = vsel %vm617, %v7026, %v7216
        %v7219 = vunpack.c.l.s4 1983009808
        %v7220 = vunpack.c.0.s8 %v7219
        %v7221 = vperm.slane %v7215, %v7220
        %v7223 = vunpack.c.l.s4 1983009808
        %v7224 = vunpack.c.0.s8 %v7223
        %v7225 = vperm.slane %v7217, %v7224
        %v7226 = vrot.slane %v7028, 4
        %v7227 = vsel %vm617, %v7226, %v7024
        %v7228 = vrot.slane %v7024, 4
        %v7229 = vsel %vm617, %v7028, %v7228
        %v7231 = vunpack.c.l.s4 1983009808
        %v7232 = vunpack.c.0.s8 %v7231
        %v7233 = vperm.slane %v7227, %v7232
        %v7235 = vunpack.c.l.s4 1983009808
        %v7236 = vunpack.c.0.s8 %v7235
        %v7237 = vperm.slane %v7229, %v7236
        %v7238 = vrot.slane %v7034, 4
        %v7239 = vsel %vm617, %v7238, %v7030
        %v7240 = vrot.slane %v7030, 4
        %v7241 = vsel %vm617, %v7034, %v7240
        %v7243 = vunpack.c.l.s4 1983009808
        %v7244 = vunpack.c.0.s8 %v7243
        %v7245 = vperm.slane %v7239, %v7244
        %v7247 = vunpack.c.l.s4 1983009808
        %v7248 = vunpack.c.0.s8 %v7247
        %v7249 = vperm.slane %v7241, %v7248
        %v7250 = vrot.slane %v7036, 4
        %v7251 = vsel %vm617, %v7250, %v7032
        %v7252 = vrot.slane %v7032, 4
        %v7253 = vsel %vm617, %v7036, %v7252
        %v7255 = vunpack.c.l.s4 1983009808
        %v7256 = vunpack.c.0.s8 %v7255
        %v7257 = vperm.slane %v7251, %v7256
        %v7259 = vunpack.c.l.s4 1983009808
        %v7260 = vunpack.c.0.s8 %v7259
        %v7261 = vperm.slane %v7253, %v7260
        %v7262 = vrot.slane %v7233, 4
        %v7263 = vsel %vm617, %v7262, %v7221
        %v7264 = vrot.slane %v7221, 4
        %v7265 = vsel %vm617, %v7233, %v7264
        %v7267 = vunpack.c.l.s4 1934713408
        %v7268 = vunpack.c.0.s8 %v7267
        %v7269 = vperm.slane %v7263, %v7268
        %v7271 = vunpack.c.l.s4 1934713408
        %v7272 = vunpack.c.0.s8 %v7271
        %v7273 = vperm.slane %v7265, %v7272
        %v7274 = vrot.slane %v7237, 4
        %v7275 = vsel %vm617, %v7274, %v7225
        %v7276 = vrot.slane %v7225, 4
        %v7277 = vsel %vm617, %v7237, %v7276
        %v7279 = vunpack.c.l.s4 1934713408
        %v7280 = vunpack.c.0.s8 %v7279
        %v7281 = vperm.slane %v7275, %v7280
        %v7283 = vunpack.c.l.s4 1934713408
        %v7284 = vunpack.c.0.s8 %v7283
        %v7285 = vperm.slane %v7277, %v7284
        %v7286 = vrot.slane %v7257, 4
        %v7287 = vsel %vm617, %v7286, %v7245
        %v7288 = vrot.slane %v7245, 4
        %v7289 = vsel %vm617, %v7257, %v7288
        %v7291 = vunpack.c.l.s4 1934713408
        %v7292 = vunpack.c.0.s8 %v7291
        %v7293 = vperm.slane %v7287, %v7292
        %v7295 = vunpack.c.l.s4 1934713408
        %v7296 = vunpack.c.0.s8 %v7295
        %v7297 = vperm.slane %v7289, %v7296
        %v7298 = vrot.slane %v7261, 4
        %v7299 = vsel %vm617, %v7298, %v7249
        %v7300 = vrot.slane %v7249, 4
        %v7301 = vsel %vm617, %v7261, %v7300
        %v7303 = vunpack.c.l.s4 1934713408
        %v7304 = vunpack.c.0.s8 %v7303
        %v7305 = vperm.slane %v7299, %v7304
        %v7307 = vunpack.c.l.s4 1934713408
        %v7308 = vunpack.c.0.s8 %v7307
        %v7309 = vperm.slane %v7301, %v7308
        %v7310 = vrot.slane %v7293, 4
        %v7311 = vsel %vm617, %v7310, %v7269
        %v7312 = vrot.slane %v7269, 4
        %v7313 = vsel %vm617, %v7293, %v7312
        %v7314 = vrot.slane %v7297, 4
        %v7315 = vsel %vm617, %v7314, %v7273
        %v7316 = vrot.slane %v7273, 4
        %v7317 = vsel %vm617, %v7297, %v7316
        %v7318 = vrot.slane %v7305, 4
        %v7319 = vsel %vm617, %v7318, %v7281
        %v7320 = vrot.slane %v7281, 4
        %v7321 = vsel %vm617, %v7305, %v7320
        %v7322 = vrot.slane %v7309, 4
        %v7323 = vsel %vm617, %v7322, %v7285
        %v7324 = vrot.slane %v7285, 4
        %v7325 = vsel %vm617, %v7309, %v7324
        %v7326 = vrot.slane %v6711, 4
        %v7327 = vsel %vm617, %v7326, %v6703
        %v7328 = vrot.slane %v6703, 4
        %v7329 = vsel %vm617, %v6711, %v7328
        %v7331 = vunpack.c.l.s4 1983009808
        %v7332 = vunpack.c.0.s8 %v7331
        %v7333 = vperm.slane %v7327, %v7332
        %v7335 = vunpack.c.l.s4 1983009808
        %v7336 = vunpack.c.0.s8 %v7335
        %v7337 = vperm.slane %v7329, %v7336
        %v7338 = vrot.slane %v6715, 4
        %v7339 = vsel %vm617, %v7338, %v6707
        %v7340 = vrot.slane %v6707, 4
        %v7341 = vsel %vm617, %v6715, %v7340
        %v7343 = vunpack.c.l.s4 1983009808
        %v7344 = vunpack.c.0.s8 %v7343
        %v7345 = vperm.slane %v7339, %v7344
        %v7347 = vunpack.c.l.s4 1983009808
        %v7348 = vunpack.c.0.s8 %v7347
        %v7349 = vperm.slane %v7341, %v7348
        %v7350 = vrot.slane %v6727, 4
        %v7351 = vsel %vm617, %v7350, %v6719
        %v7352 = vrot.slane %v6719, 4
        %v7353 = vsel %vm617, %v6727, %v7352
        %v7355 = vunpack.c.l.s4 1983009808
        %v7356 = vunpack.c.0.s8 %v7355
        %v7357 = vperm.slane %v7351, %v7356
        %v7359 = vunpack.c.l.s4 1983009808
        %v7360 = vunpack.c.0.s8 %v7359
        %v7361 = vperm.slane %v7353, %v7360
        %v7362 = vrot.slane %v6731, 4
        %v7363 = vsel %vm617, %v7362, %v6723
        %v7364 = vrot.slane %v6723, 4
        %v7365 = vsel %vm617, %v6731, %v7364
        %v7367 = vunpack.c.l.s4 1983009808
        %v7368 = vunpack.c.0.s8 %v7367
        %v7369 = vperm.slane %v7363, %v7368
        %v7371 = vunpack.c.l.s4 1983009808
        %v7372 = vunpack.c.0.s8 %v7371
        %v7373 = vperm.slane %v7365, %v7372
        %v7374 = vrot.slane %v7345, 4
        %v7375 = vsel %vm617, %v7374, %v7333
        %v7376 = vrot.slane %v7333, 4
        %v7377 = vsel %vm617, %v7345, %v7376
        %v7379 = vunpack.c.l.s4 1934713408
        %v7380 = vunpack.c.0.s8 %v7379
        %v7381 = vperm.slane %v7375, %v7380
        %v7383 = vunpack.c.l.s4 1934713408
        %v7384 = vunpack.c.0.s8 %v7383
        %v7385 = vperm.slane %v7377, %v7384
        %v7386 = vrot.slane %v7349, 4
        %v7387 = vsel %vm617, %v7386, %v7337
        %v7388 = vrot.slane %v7337, 4
        %v7389 = vsel %vm617, %v7349, %v7388
        %v7391 = vunpack.c.l.s4 1934713408
        %v7392 = vunpack.c.0.s8 %v7391
        %v7393 = vperm.slane %v7387, %v7392
        %v7395 = vunpack.c.l.s4 1934713408
        %v7396 = vunpack.c.0.s8 %v7395
        %v7397 = vperm.slane %v7389, %v7396
        %v7398 = vrot.slane %v7369, 4
        %v7399 = vsel %vm617, %v7398, %v7357
        %v7400 = vrot.slane %v7357, 4
        %v7401 = vsel %vm617, %v7369, %v7400
        %v7403 = vunpack.c.l.s4 1934713408
        %v7404 = vunpack.c.0.s8 %v7403
        %v7405 = vperm.slane %v7399, %v7404
        %v7407 = vunpack.c.l.s4 1934713408
        %v7408 = vunpack.c.0.s8 %v7407
        %v7409 = vperm.slane %v7401, %v7408
        %v7410 = vrot.slane %v7373, 4
        %v7411 = vsel %vm617, %v7410, %v7361
        %v7412 = vrot.slane %v7361, 4
        %v7413 = vsel %vm617, %v7373, %v7412
        %v7415 = vunpack.c.l.s4 1934713408
        %v7416 = vunpack.c.0.s8 %v7415
        %v7417 = vperm.slane %v7411, %v7416
        %v7419 = vunpack.c.l.s4 1934713408
        %v7420 = vunpack.c.0.s8 %v7419
        %v7421 = vperm.slane %v7413, %v7420
        %v7422 = vrot.slane %v7405, 4
        %v7423 = vsel %vm617, %v7422, %v7381
        %v7424 = vrot.slane %v7381, 4
        %v7425 = vsel %vm617, %v7405, %v7424
        %v7426 = vrot.slane %v7409, 4
        %v7427 = vsel %vm617, %v7426, %v7385
        %v7428 = vrot.slane %v7385, 4
        %v7429 = vsel %vm617, %v7409, %v7428
        %v7430 = vrot.slane %v7417, 4
        %v7431 = vsel %vm617, %v7430, %v7393
        %v7432 = vrot.slane %v7393, 4
        %v7433 = vsel %vm617, %v7417, %v7432
        %v7434 = vrot.slane %v7421, 4
        %v7435 = vsel %vm617, %v7434, %v7397
        %v7436 = vrot.slane %v7397, 4
        %v7437 = vsel %vm617, %v7421, %v7436
        %v7438 = vrot.slane %v6743, 4
        %v7439 = vsel %vm617, %v7438, %v6735
        %v7440 = vrot.slane %v6735, 4
        %v7441 = vsel %vm617, %v6743, %v7440
        %v7443 = vunpack.c.l.s4 1983009808
        %v7444 = vunpack.c.0.s8 %v7443
        %v7445 = vperm.slane %v7439, %v7444
        %v7447 = vunpack.c.l.s4 1983009808
        %v7448 = vunpack.c.0.s8 %v7447
        %v7449 = vperm.slane %v7441, %v7448
        %v7450 = vrot.slane %v6747, 4
        %v7451 = vsel %vm617, %v7450, %v6739
        %v7452 = vrot.slane %v6739, 4
        %v7453 = vsel %vm617, %v6747, %v7452
        %v7455 = vunpack.c.l.s4 1983009808
        %v7456 = vunpack.c.0.s8 %v7455
        %v7457 = vperm.slane %v7451, %v7456
        %v7459 = vunpack.c.l.s4 1983009808
        %v7460 = vunpack.c.0.s8 %v7459
        %v7461 = vperm.slane %v7453, %v7460
        %v7462 = vrot.slane %v6759, 4
        %v7463 = vsel %vm617, %v7462, %v6751
        %v7464 = vrot.slane %v6751, 4
        %v7465 = vsel %vm617, %v6759, %v7464
        %v7467 = vunpack.c.l.s4 1983009808
        %v7468 = vunpack.c.0.s8 %v7467
        %v7469 = vperm.slane %v7463, %v7468
        %v7471 = vunpack.c.l.s4 1983009808
        %v7472 = vunpack.c.0.s8 %v7471
        %v7473 = vperm.slane %v7465, %v7472
        %v7474 = vrot.slane %v6763, 4
        %v7475 = vsel %vm617, %v7474, %v6755
        %v7476 = vrot.slane %v6755, 4
        %v7477 = vsel %vm617, %v6763, %v7476
        %v7479 = vunpack.c.l.s4 1983009808
        %v7480 = vunpack.c.0.s8 %v7479
        %v7481 = vperm.slane %v7475, %v7480
        %v7483 = vunpack.c.l.s4 1983009808
        %v7484 = vunpack.c.0.s8 %v7483
        %v7485 = vperm.slane %v7477, %v7484
        %v7486 = vrot.slane %v7457, 4
        %v7487 = vsel %vm617, %v7486, %v7445
        %v7488 = vrot.slane %v7445, 4
        %v7489 = vsel %vm617, %v7457, %v7488
        %v7491 = vunpack.c.l.s4 1934713408
        %v7492 = vunpack.c.0.s8 %v7491
        %v7493 = vperm.slane %v7487, %v7492
        %v7495 = vunpack.c.l.s4 1934713408
        %v7496 = vunpack.c.0.s8 %v7495
        %v7497 = vperm.slane %v7489, %v7496
        %v7498 = vrot.slane %v7461, 4
        %v7499 = vsel %vm617, %v7498, %v7449
        %v7500 = vrot.slane %v7449, 4
        %v7501 = vsel %vm617, %v7461, %v7500
        %v7503 = vunpack.c.l.s4 1934713408
        %v7504 = vunpack.c.0.s8 %v7503
        %v7505 = vperm.slane %v7499, %v7504
        %v7507 = vunpack.c.l.s4 1934713408
        %v7508 = vunpack.c.0.s8 %v7507
        %v7509 = vperm.slane %v7501, %v7508
        %v7510 = vrot.slane %v7481, 4
        %v7511 = vsel %vm617, %v7510, %v7469
        %v7512 = vrot.slane %v7469, 4
        %v7513 = vsel %vm617, %v7481, %v7512
        %v7515 = vunpack.c.l.s4 1934713408
        %v7516 = vunpack.c.0.s8 %v7515
        %v7517 = vperm.slane %v7511, %v7516
        %v7519 = vunpack.c.l.s4 1934713408
        %v7520 = vunpack.c.0.s8 %v7519
        %v7521 = vperm.slane %v7513, %v7520
        %v7522 = vrot.slane %v7485, 4
        %v7523 = vsel %vm617, %v7522, %v7473
        %v7524 = vrot.slane %v7473, 4
        %v7525 = vsel %vm617, %v7485, %v7524
        %v7527 = vunpack.c.l.s4 1934713408
        %v7528 = vunpack.c.0.s8 %v7527
        %v7529 = vperm.slane %v7523, %v7528
        %v7531 = vunpack.c.l.s4 1934713408
        %v7532 = vunpack.c.0.s8 %v7531
        %v7533 = vperm.slane %v7525, %v7532
        %v7534 = vrot.slane %v7517, 4
        %v7535 = vsel %vm617, %v7534, %v7493
        %v7536 = vrot.slane %v7493, 4
        %v7537 = vsel %vm617, %v7517, %v7536
        %v7538 = vrot.slane %v7521, 4
        %v7539 = vsel %vm617, %v7538, %v7497
        %v7540 = vrot.slane %v7497, 4
        %v7541 = vsel %vm617, %v7521, %v7540
        %v7542 = vrot.slane %v7529, 4
        %v7543 = vsel %vm617, %v7542, %v7505
        %v7544 = vrot.slane %v7505, 4
        %v7545 = vsel %vm617, %v7529, %v7544
        %v7546 = vrot.slane %v7533, 4
        %v7547 = vsel %vm617, %v7546, %v7509
        %v7548 = vrot.slane %v7509, 4
        %v7549 = vsel %vm617, %v7533, %v7548
        %v7550 = vrot.slane %v7042, 4
        %v7551 = vsel %vm617, %v7550, %v7038
        %v7552 = vrot.slane %v7038, 4
        %v7553 = vsel %vm617, %v7042, %v7552
        %v7555 = vunpack.c.l.s4 1983009808
        %v7556 = vunpack.c.0.s8 %v7555
        %v7557 = vperm.slane %v7551, %v7556
        %v7559 = vunpack.c.l.s4 1983009808
        %v7560 = vunpack.c.0.s8 %v7559
        %v7561 = vperm.slane %v7553, %v7560
        %v7562 = vrot.slane %v7044, 4
        %v7563 = vsel %vm617, %v7562, %v7040
        %v7564 = vrot.slane %v7040, 4
        %v7565 = vsel %vm617, %v7044, %v7564
        %v7567 = vunpack.c.l.s4 1983009808
        %v7568 = vunpack.c.0.s8 %v7567
        %v7569 = vperm.slane %v7563, %v7568
        %v7571 = vunpack.c.l.s4 1983009808
        %v7572 = vunpack.c.0.s8 %v7571
        %v7573 = vperm.slane %v7565, %v7572
        %v7574 = vrot.slane %v7050, 4
        %v7575 = vsel %vm617, %v7574, %v7046
        %v7576 = vrot.slane %v7046, 4
        %v7577 = vsel %vm617, %v7050, %v7576
        %v7579 = vunpack.c.l.s4 1983009808
        %v7580 = vunpack.c.0.s8 %v7579
        %v7581 = vperm.slane %v7575, %v7580
        %v7583 = vunpack.c.l.s4 1983009808
        %v7584 = vunpack.c.0.s8 %v7583
        %v7585 = vperm.slane %v7577, %v7584
        %v7586 = vrot.slane %v7052, 4
        %v7587 = vsel %vm617, %v7586, %v7048
        %v7588 = vrot.slane %v7048, 4
        %v7589 = vsel %vm617, %v7052, %v7588
        %v7591 = vunpack.c.l.s4 1983009808
        %v7592 = vunpack.c.0.s8 %v7591
        %v7593 = vperm.slane %v7587, %v7592
        %v7595 = vunpack.c.l.s4 1983009808
        %v7596 = vunpack.c.0.s8 %v7595
        %v7597 = vperm.slane %v7589, %v7596
        %v7598 = vrot.slane %v7569, 4
        %v7599 = vsel %vm617, %v7598, %v7557
        %v7600 = vrot.slane %v7557, 4
        %v7601 = vsel %vm617, %v7569, %v7600
        %v7603 = vunpack.c.l.s4 1934713408
        %v7604 = vunpack.c.0.s8 %v7603
        %v7605 = vperm.slane %v7599, %v7604
        %v7607 = vunpack.c.l.s4 1934713408
        %v7608 = vunpack.c.0.s8 %v7607
        %v7609 = vperm.slane %v7601, %v7608
        %v7610 = vrot.slane %v7573, 4
        %v7611 = vsel %vm617, %v7610, %v7561
        %v7612 = vrot.slane %v7561, 4
        %v7613 = vsel %vm617, %v7573, %v7612
        %v7615 = vunpack.c.l.s4 1934713408
        %v7616 = vunpack.c.0.s8 %v7615
        %v7617 = vperm.slane %v7611, %v7616
        %v7619 = vunpack.c.l.s4 1934713408
        %v7620 = vunpack.c.0.s8 %v7619
        %v7621 = vperm.slane %v7613, %v7620
        %v7622 = vrot.slane %v7593, 4
        %v7623 = vsel %vm617, %v7622, %v7581
        %v7624 = vrot.slane %v7581, 4
        %v7625 = vsel %vm617, %v7593, %v7624
        %v7627 = vunpack.c.l.s4 1934713408
        %v7628 = vunpack.c.0.s8 %v7627
        %v7629 = vperm.slane %v7623, %v7628
        %v7631 = vunpack.c.l.s4 1934713408
        %v7632 = vunpack.c.0.s8 %v7631
        %v7633 = vperm.slane %v7625, %v7632
        %v7634 = vrot.slane %v7597, 4
        %v7635 = vsel %vm617, %v7634, %v7585
        %v7636 = vrot.slane %v7585, 4
        %v7637 = vsel %vm617, %v7597, %v7636
        %v7639 = vunpack.c.l.s4 1934713408
        %v7640 = vunpack.c.0.s8 %v7639
        %v7641 = vperm.slane %v7635, %v7640
        %v7643 = vunpack.c.l.s4 1934713408
        %v7644 = vunpack.c.0.s8 %v7643
        %v7645 = vperm.slane %v7637, %v7644
        %v7646 = vrot.slane %v7629, 4
        %v7647 = vsel %vm617, %v7646, %v7605
        %v7648 = vrot.slane %v7605, 4
        %v7649 = vsel %vm617, %v7629, %v7648
        %v7650 = vrot.slane %v7633, 4
        %v7651 = vsel %vm617, %v7650, %v7609
        %v7652 = vrot.slane %v7609, 4
        %v7653 = vsel %vm617, %v7633, %v7652
        %v7654 = vrot.slane %v7641, 4
        %v7655 = vsel %vm617, %v7654, %v7617
        %v7656 = vrot.slane %v7617, 4
        %v7657 = vsel %vm617, %v7641, %v7656
        %v7658 = vrot.slane %v7645, 4
        %v7659 = vsel %vm617, %v7658, %v7621
        %v7660 = vrot.slane %v7621, 4
        %v7661 = vsel %vm617, %v7645, %v7660
        %v7662 = vrot.slane %v6839, 4
        %v7663 = vsel %vm617, %v7662, %v6831
        %v7664 = vrot.slane %v6831, 4
        %v7665 = vsel %vm617, %v6839, %v7664
        %v7667 = vunpack.c.l.s4 1983009808
        %v7668 = vunpack.c.0.s8 %v7667
        %v7669 = vperm.slane %v7663, %v7668
        %v7671 = vunpack.c.l.s4 1983009808
        %v7672 = vunpack.c.0.s8 %v7671
        %v7673 = vperm.slane %v7665, %v7672
        %v7674 = vrot.slane %v6843, 4
        %v7675 = vsel %vm617, %v7674, %v6835
        %v7676 = vrot.slane %v6835, 4
        %v7677 = vsel %vm617, %v6843, %v7676
        %v7679 = vunpack.c.l.s4 1983009808
        %v7680 = vunpack.c.0.s8 %v7679
        %v7681 = vperm.slane %v7675, %v7680
        %v7683 = vunpack.c.l.s4 1983009808
        %v7684 = vunpack.c.0.s8 %v7683
        %v7685 = vperm.slane %v7677, %v7684
        %v7686 = vrot.slane %v6855, 4
        %v7687 = vsel %vm617, %v7686, %v6847
        %v7688 = vrot.slane %v6847, 4
        %v7689 = vsel %vm617, %v6855, %v7688
        %v7691 = vunpack.c.l.s4 1983009808
        %v7692 = vunpack.c.0.s8 %v7691
        %v7693 = vperm.slane %v7687, %v7692
        %v7695 = vunpack.c.l.s4 1983009808
        %v7696 = vunpack.c.0.s8 %v7695
        %v7697 = vperm.slane %v7689, %v7696
        %v7698 = vrot.slane %v6859, 4
        %v7699 = vsel %vm617, %v7698, %v6851
        %v7700 = vrot.slane %v6851, 4
        %v7701 = vsel %vm617, %v6859, %v7700
        %v7703 = vunpack.c.l.s4 1983009808
        %v7704 = vunpack.c.0.s8 %v7703
        %v7705 = vperm.slane %v7699, %v7704
        %v7707 = vunpack.c.l.s4 1983009808
        %v7708 = vunpack.c.0.s8 %v7707
        %v7709 = vperm.slane %v7701, %v7708
        %v7710 = vrot.slane %v7681, 4
        %v7711 = vsel %vm617, %v7710, %v7669
        %v7712 = vrot.slane %v7669, 4
        %v7713 = vsel %vm617, %v7681, %v7712
        %v7715 = vunpack.c.l.s4 1934713408
        %v7716 = vunpack.c.0.s8 %v7715
        %v7717 = vperm.slane %v7711, %v7716
        %v7719 = vunpack.c.l.s4 1934713408
        %v7720 = vunpack.c.0.s8 %v7719
        %v7721 = vperm.slane %v7713, %v7720
        %v7722 = vrot.slane %v7685, 4
        %v7723 = vsel %vm617, %v7722, %v7673
        %v7724 = vrot.slane %v7673, 4
        %v7725 = vsel %vm617, %v7685, %v7724
        %v7727 = vunpack.c.l.s4 1934713408
        %v7728 = vunpack.c.0.s8 %v7727
        %v7729 = vperm.slane %v7723, %v7728
        %v7731 = vunpack.c.l.s4 1934713408
        %v7732 = vunpack.c.0.s8 %v7731
        %v7733 = vperm.slane %v7725, %v7732
        %v7734 = vrot.slane %v7705, 4
        %v7735 = vsel %vm617, %v7734, %v7693
        %v7736 = vrot.slane %v7693, 4
        %v7737 = vsel %vm617, %v7705, %v7736
        %v7739 = vunpack.c.l.s4 1934713408
        %v7740 = vunpack.c.0.s8 %v7739
        %v7741 = vperm.slane %v7735, %v7740
        %v7743 = vunpack.c.l.s4 1934713408
        %v7744 = vunpack.c.0.s8 %v7743
        %v7745 = vperm.slane %v7737, %v7744
        %v7746 = vrot.slane %v7709, 4
        %v7747 = vsel %vm617, %v7746, %v7697
        %v7748 = vrot.slane %v7697, 4
        %v7749 = vsel %vm617, %v7709, %v7748
        %v7751 = vunpack.c.l.s4 1934713408
        %v7752 = vunpack.c.0.s8 %v7751
        %v7753 = vperm.slane %v7747, %v7752
        %v7755 = vunpack.c.l.s4 1934713408
        %v7756 = vunpack.c.0.s8 %v7755
        %v7757 = vperm.slane %v7749, %v7756
        %v7758 = vrot.slane %v7741, 4
        %v7759 = vsel %vm617, %v7758, %v7717
        %v7760 = vrot.slane %v7717, 4
        %v7761 = vsel %vm617, %v7741, %v7760
        %v7762 = vrot.slane %v7745, 4
        %v7763 = vsel %vm617, %v7762, %v7721
        %v7764 = vrot.slane %v7721, 4
        %v7765 = vsel %vm617, %v7745, %v7764
        %v7766 = vrot.slane %v7753, 4
        %v7767 = vsel %vm617, %v7766, %v7729
        %v7768 = vrot.slane %v7729, 4
        %v7769 = vsel %vm617, %v7753, %v7768
        %v7770 = vrot.slane %v7757, 4
        %v7771 = vsel %vm617, %v7770, %v7733
        %v7772 = vrot.slane %v7733, 4
        %v7773 = vsel %vm617, %v7757, %v7772
        %v7774 = vrot.slane %v6871, 4
        %v7775 = vsel %vm617, %v7774, %v6863
        %v7776 = vrot.slane %v6863, 4
        %v7777 = vsel %vm617, %v6871, %v7776
        %v7779 = vunpack.c.l.s4 1983009808
        %v7780 = vunpack.c.0.s8 %v7779
        %v7781 = vperm.slane %v7775, %v7780
        %v7783 = vunpack.c.l.s4 1983009808
        %v7784 = vunpack.c.0.s8 %v7783
        %v7785 = vperm.slane %v7777, %v7784
        %v7786 = vrot.slane %v6875, 4
        %v7787 = vsel %vm617, %v7786, %v6867
        %v7788 = vrot.slane %v6867, 4
        %v7789 = vsel %vm617, %v6875, %v7788
        %v7791 = vunpack.c.l.s4 1983009808
        %v7792 = vunpack.c.0.s8 %v7791
        %v7793 = vperm.slane %v7787, %v7792
        %v7795 = vunpack.c.l.s4 1983009808
        %v7796 = vunpack.c.0.s8 %v7795
        %v7797 = vperm.slane %v7789, %v7796
        %v7798 = vrot.slane %v6887, 4
        %v7799 = vsel %vm617, %v7798, %v6879
        %v7800 = vrot.slane %v6879, 4
        %v7801 = vsel %vm617, %v6887, %v7800
        %v7803 = vunpack.c.l.s4 1983009808
        %v7804 = vunpack.c.0.s8 %v7803
        %v7805 = vperm.slane %v7799, %v7804
        %v7807 = vunpack.c.l.s4 1983009808
        %v7808 = vunpack.c.0.s8 %v7807
        %v7809 = vperm.slane %v7801, %v7808
        %v7810 = vrot.slane %v6891, 4
        %v7811 = vsel %vm617, %v7810, %v6883
        %v7812 = vrot.slane %v6883, 4
        %v7813 = vsel %vm617, %v6891, %v7812
        %v7815 = vunpack.c.l.s4 1983009808
        %v7816 = vunpack.c.0.s8 %v7815
        %v7817 = vperm.slane %v7811, %v7816
        %v7819 = vunpack.c.l.s4 1983009808
        %v7820 = vunpack.c.0.s8 %v7819
        %v7821 = vperm.slane %v7813, %v7820
        %v7822 = vrot.slane %v7793, 4
        %v7823 = vsel %vm617, %v7822, %v7781
        %v7824 = vrot.slane %v7781, 4
        %v7825 = vsel %vm617, %v7793, %v7824
        %v7827 = vunpack.c.l.s4 1934713408
        %v7828 = vunpack.c.0.s8 %v7827
        %v7829 = vperm.slane %v7823, %v7828
        %v7831 = vunpack.c.l.s4 1934713408
        %v7832 = vunpack.c.0.s8 %v7831
        %v7833 = vperm.slane %v7825, %v7832
        %v7834 = vrot.slane %v7797, 4
        %v7835 = vsel %vm617, %v7834, %v7785
        %v7836 = vrot.slane %v7785, 4
        %v7837 = vsel %vm617, %v7797, %v7836
        %v7839 = vunpack.c.l.s4 1934713408
        %v7840 = vunpack.c.0.s8 %v7839
        %v7841 = vperm.slane %v7835, %v7840
        %v7843 = vunpack.c.l.s4 1934713408
        %v7844 = vunpack.c.0.s8 %v7843
        %v7845 = vperm.slane %v7837, %v7844
        %v7846 = vrot.slane %v7817, 4
        %v7847 = vsel %vm617, %v7846, %v7805
        %v7848 = vrot.slane %v7805, 4
        %v7849 = vsel %vm617, %v7817, %v7848
        %v7851 = vunpack.c.l.s4 1934713408
        %v7852 = vunpack.c.0.s8 %v7851
        %v7853 = vperm.slane %v7847, %v7852
        %v7855 = vunpack.c.l.s4 1934713408
        %v7856 = vunpack.c.0.s8 %v7855
        %v7857 = vperm.slane %v7849, %v7856
        %v7858 = vrot.slane %v7821, 4
        %v7859 = vsel %vm617, %v7858, %v7809
        %v7860 = vrot.slane %v7809, 4
        %v7861 = vsel %vm617, %v7821, %v7860
        %v7863 = vunpack.c.l.s4 1934713408
        %v7864 = vunpack.c.0.s8 %v7863
        %v7865 = vperm.slane %v7859, %v7864
        %v7867 = vunpack.c.l.s4 1934713408
        %v7868 = vunpack.c.0.s8 %v7867
        %v7869 = vperm.slane %v7861, %v7868
        %v7870 = vrot.slane %v7853, 4
        %v7871 = vsel %vm617, %v7870, %v7829
        %v7872 = vrot.slane %v7829, 4
        %v7873 = vsel %vm617, %v7853, %v7872
        %v7874 = vrot.slane %v7857, 4
        %v7875 = vsel %vm617, %v7874, %v7833
        %v7876 = vrot.slane %v7833, 4
        %v7877 = vsel %vm617, %v7857, %v7876
        %v7878 = vrot.slane %v7865, 4
        %v7879 = vsel %vm617, %v7878, %v7841
        %v7880 = vrot.slane %v7841, 4
        %v7881 = vsel %vm617, %v7865, %v7880
        %v7882 = vrot.slane %v7869, 4
        %v7883 = vsel %vm617, %v7882, %v7845
        %v7884 = vrot.slane %v7845, 4
        %v7885 = vsel %vm617, %v7869, %v7884
        %v7886 = vrot.slane %v7058, 4
        %v7887 = vsel %vm617, %v7886, %v7054
        %v7888 = vrot.slane %v7054, 4
        %v7889 = vsel %vm617, %v7058, %v7888
        %v7891 = vunpack.c.l.s4 1983009808
        %v7892 = vunpack.c.0.s8 %v7891
        %v7893 = vperm.slane %v7887, %v7892
        %v7895 = vunpack.c.l.s4 1983009808
        %v7896 = vunpack.c.0.s8 %v7895
        %v7897 = vperm.slane %v7889, %v7896
        %v7898 = vrot.slane %v7060, 4
        %v7899 = vsel %vm617, %v7898, %v7056
        %v7900 = vrot.slane %v7056, 4
        %v7901 = vsel %vm617, %v7060, %v7900
        %v7903 = vunpack.c.l.s4 1983009808
        %v7904 = vunpack.c.0.s8 %v7903
        %v7905 = vperm.slane %v7899, %v7904
        %v7907 = vunpack.c.l.s4 1983009808
        %v7908 = vunpack.c.0.s8 %v7907
        %v7909 = vperm.slane %v7901, %v7908
        %v7910 = vrot.slane %v7066, 4
        %v7911 = vsel %vm617, %v7910, %v7062
        %v7912 = vrot.slane %v7062, 4
        %v7913 = vsel %vm617, %v7066, %v7912
        %v7915 = vunpack.c.l.s4 1983009808
        %v7916 = vunpack.c.0.s8 %v7915
        %v7917 = vperm.slane %v7911, %v7916
        %v7919 = vunpack.c.l.s4 1983009808
        %v7920 = vunpack.c.0.s8 %v7919
        %v7921 = vperm.slane %v7913, %v7920
        %v7922 = vrot.slane %v7068, 4
        %v7923 = vsel %vm617, %v7922, %v7064
        %v7924 = vrot.slane %v7064, 4
        %v7925 = vsel %vm617, %v7068, %v7924
        %v7927 = vunpack.c.l.s4 1983009808
        %v7928 = vunpack.c.0.s8 %v7927
        %v7929 = vperm.slane %v7923, %v7928
        %v7931 = vunpack.c.l.s4 1983009808
        %v7932 = vunpack.c.0.s8 %v7931
        %v7933 = vperm.slane %v7925, %v7932
        %v7934 = vrot.slane %v7905, 4
        %v7935 = vsel %vm617, %v7934, %v7893
        %v7936 = vrot.slane %v7893, 4
        %v7937 = vsel %vm617, %v7905, %v7936
        %v7939 = vunpack.c.l.s4 1934713408
        %v7940 = vunpack.c.0.s8 %v7939
        %v7941 = vperm.slane %v7935, %v7940
        %v7943 = vunpack.c.l.s4 1934713408
        %v7944 = vunpack.c.0.s8 %v7943
        %v7945 = vperm.slane %v7937, %v7944
        %v7946 = vrot.slane %v7909, 4
        %v7947 = vsel %vm617, %v7946, %v7897
        %v7948 = vrot.slane %v7897, 4
        %v7949 = vsel %vm617, %v7909, %v7948
        %v7951 = vunpack.c.l.s4 1934713408
        %v7952 = vunpack.c.0.s8 %v7951
        %v7953 = vperm.slane %v7947, %v7952
        %v7955 = vunpack.c.l.s4 1934713408
        %v7956 = vunpack.c.0.s8 %v7955
        %v7957 = vperm.slane %v7949, %v7956
        %v7958 = vrot.slane %v7929, 4
        %v7959 = vsel %vm617, %v7958, %v7917
        %v7960 = vrot.slane %v7917, 4
        %v7961 = vsel %vm617, %v7929, %v7960
        %v7963 = vunpack.c.l.s4 1934713408
        %v7964 = vunpack.c.0.s8 %v7963
        %v7965 = vperm.slane %v7959, %v7964
        %v7967 = vunpack.c.l.s4 1934713408
        %v7968 = vunpack.c.0.s8 %v7967
        %v7969 = vperm.slane %v7961, %v7968
        %v7970 = vrot.slane %v7933, 4
        %v7971 = vsel %vm617, %v7970, %v7921
        %v7972 = vrot.slane %v7921, 4
        %v7973 = vsel %vm617, %v7933, %v7972
        %v7975 = vunpack.c.l.s4 1934713408
        %v7976 = vunpack.c.0.s8 %v7975
        %v7977 = vperm.slane %v7971, %v7976
        %v7979 = vunpack.c.l.s4 1934713408
        %v7980 = vunpack.c.0.s8 %v7979
        %v7981 = vperm.slane %v7973, %v7980
        %v7982 = vrot.slane %v7965, 4
        %v7983 = vsel %vm617, %v7982, %v7941
        %v7984 = vrot.slane %v7941, 4
        %v7985 = vsel %vm617, %v7965, %v7984
        %v7986 = vrot.slane %v7969, 4
        %v7987 = vsel %vm617, %v7986, %v7945
        %v7988 = vrot.slane %v7945, 4
        %v7989 = vsel %vm617, %v7969, %v7988
        %v7990 = vrot.slane %v7977, 4
        %v7991 = vsel %vm617, %v7990, %v7953
        %v7992 = vrot.slane %v7953, 4
        %v7993 = vsel %vm617, %v7977, %v7992
        %v7994 = vrot.slane %v7981, 4
        %v7995 = vsel %vm617, %v7994, %v7957
        %v7996 = vrot.slane %v7957, 4
        %v7997 = vsel %vm617, %v7981, %v7996
        %v7998 = vrot.slane %v6967, 4
        %v7999 = vsel %vm617, %v7998, %v6959
        %v8000 = vrot.slane %v6959, 4
        %v8001 = vsel %vm617, %v6967, %v8000
        %v8003 = vunpack.c.l.s4 1983009808
        %v8004 = vunpack.c.0.s8 %v8003
        %v8005 = vperm.slane %v7999, %v8004
        %v8007 = vunpack.c.l.s4 1983009808
        %v8008 = vunpack.c.0.s8 %v8007
        %v8009 = vperm.slane %v8001, %v8008
        %v8010 = vrot.slane %v6971, 4
        %v8011 = vsel %vm617, %v8010, %v6963
        %v8012 = vrot.slane %v6963, 4
        %v8013 = vsel %vm617, %v6971, %v8012
        %v8015 = vunpack.c.l.s4 1983009808
        %v8016 = vunpack.c.0.s8 %v8015
        %v8017 = vperm.slane %v8011, %v8016
        %v8019 = vunpack.c.l.s4 1983009808
        %v8020 = vunpack.c.0.s8 %v8019
        %v8021 = vperm.slane %v8013, %v8020
        %v8022 = vrot.slane %v6983, 4
        %v8023 = vsel %vm617, %v8022, %v6975
        %v8024 = vrot.slane %v6975, 4
        %v8025 = vsel %vm617, %v6983, %v8024
        %v8027 = vunpack.c.l.s4 1983009808
        %v8028 = vunpack.c.0.s8 %v8027
        %v8029 = vperm.slane %v8023, %v8028
        %v8031 = vunpack.c.l.s4 1983009808
        %v8032 = vunpack.c.0.s8 %v8031
        %v8033 = vperm.slane %v8025, %v8032
        %v8034 = vrot.slane %v6987, 4
        %v8035 = vsel %vm617, %v8034, %v6979
        %v8036 = vrot.slane %v6979, 4
        %v8037 = vsel %vm617, %v6987, %v8036
        %v8039 = vunpack.c.l.s4 1983009808
        %v8040 = vunpack.c.0.s8 %v8039
        %v8041 = vperm.slane %v8035, %v8040
        %v8043 = vunpack.c.l.s4 1983009808
        %v8044 = vunpack.c.0.s8 %v8043
        %v8045 = vperm.slane %v8037, %v8044
        %v8046 = vrot.slane %v8017, 4
        %v8047 = vsel %vm617, %v8046, %v8005
        %v8048 = vrot.slane %v8005, 4
        %v8049 = vsel %vm617, %v8017, %v8048
        %v8051 = vunpack.c.l.s4 1934713408
        %v8052 = vunpack.c.0.s8 %v8051
        %v8053 = vperm.slane %v8047, %v8052
        %v8055 = vunpack.c.l.s4 1934713408
        %v8056 = vunpack.c.0.s8 %v8055
        %v8057 = vperm.slane %v8049, %v8056
        %v8058 = vrot.slane %v8021, 4
        %v8059 = vsel %vm617, %v8058, %v8009
        %v8060 = vrot.slane %v8009, 4
        %v8061 = vsel %vm617, %v8021, %v8060
        %v8063 = vunpack.c.l.s4 1934713408
        %v8064 = vunpack.c.0.s8 %v8063
        %v8065 = vperm.slane %v8059, %v8064
        %v8067 = vunpack.c.l.s4 1934713408
        %v8068 = vunpack.c.0.s8 %v8067
        %v8069 = vperm.slane %v8061, %v8068
        %v8070 = vrot.slane %v8041, 4
        %v8071 = vsel %vm617, %v8070, %v8029
        %v8072 = vrot.slane %v8029, 4
        %v8073 = vsel %vm617, %v8041, %v8072
        %v8075 = vunpack.c.l.s4 1934713408
        %v8076 = vunpack.c.0.s8 %v8075
        %v8077 = vperm.slane %v8071, %v8076
        %v8079 = vunpack.c.l.s4 1934713408
        %v8080 = vunpack.c.0.s8 %v8079
        %v8081 = vperm.slane %v8073, %v8080
        %v8082 = vrot.slane %v8045, 4
        %v8083 = vsel %vm617, %v8082, %v8033
        %v8084 = vrot.slane %v8033, 4
        %v8085 = vsel %vm617, %v8045, %v8084
        %v8087 = vunpack.c.l.s4 1934713408
        %v8088 = vunpack.c.0.s8 %v8087
        %v8089 = vperm.slane %v8083, %v8088
        %v8091 = vunpack.c.l.s4 1934713408
        %v8092 = vunpack.c.0.s8 %v8091
        %v8093 = vperm.slane %v8085, %v8092
        %v8094 = vrot.slane %v8077, 4
        %v8095 = vsel %vm617, %v8094, %v8053
        %v8096 = vrot.slane %v8053, 4
        %v8097 = vsel %vm617, %v8077, %v8096
        %v8098 = vrot.slane %v8081, 4
        %v8099 = vsel %vm617, %v8098, %v8057
        %v8100 = vrot.slane %v8057, 4
        %v8101 = vsel %vm617, %v8081, %v8100
        %v8102 = vrot.slane %v8089, 4
        %v8103 = vsel %vm617, %v8102, %v8065
        %v8104 = vrot.slane %v8065, 4
        %v8105 = vsel %vm617, %v8089, %v8104
        %v8106 = vrot.slane %v8093, 4
        %v8107 = vsel %vm617, %v8106, %v8069
        %v8108 = vrot.slane %v8069, 4
        %v8109 = vsel %vm617, %v8093, %v8108
        %v8110 = vrot.slane %v6999, 4
        %v8111 = vsel %vm617, %v8110, %v6991
        %v8112 = vrot.slane %v6991, 4
        %v8113 = vsel %vm617, %v6999, %v8112
        %v8115 = vunpack.c.l.s4 1983009808
        %v8116 = vunpack.c.0.s8 %v8115
        %v8117 = vperm.slane %v8111, %v8116
        %v8119 = vunpack.c.l.s4 1983009808
        %v8120 = vunpack.c.0.s8 %v8119
        %v8121 = vperm.slane %v8113, %v8120
        %v8122 = vrot.slane %v7003, 4
        %v8123 = vsel %vm617, %v8122, %v6995
        %v8124 = vrot.slane %v6995, 4
        %v8125 = vsel %vm617, %v7003, %v8124
        %v8127 = vunpack.c.l.s4 1983009808
        %v8128 = vunpack.c.0.s8 %v8127
        %v8129 = vperm.slane %v8123, %v8128
        %v8131 = vunpack.c.l.s4 1983009808
        %v8132 = vunpack.c.0.s8 %v8131
        %v8133 = vperm.slane %v8125, %v8132
        %v8134 = vrot.slane %v7015, 4
        %v8135 = vsel %vm617, %v8134, %v7007
        %v8136 = vrot.slane %v7007, 4
        %v8137 = vsel %vm617, %v7015, %v8136
        %v8139 = vunpack.c.l.s4 1983009808
        %v8140 = vunpack.c.0.s8 %v8139
        %v8141 = vperm.slane %v8135, %v8140
        %v8143 = vunpack.c.l.s4 1983009808
        %v8144 = vunpack.c.0.s8 %v8143
        %v8145 = vperm.slane %v8137, %v8144
        %v8146 = vrot.slane %v7019, 4
        %v8147 = vsel %vm617, %v8146, %v7011
        %v8148 = vrot.slane %v7011, 4
        %v8149 = vsel %vm617, %v7019, %v8148
        %v8151 = vunpack.c.l.s4 1983009808
        %v8152 = vunpack.c.0.s8 %v8151
        %v8153 = vperm.slane %v8147, %v8152
        %v8155 = vunpack.c.l.s4 1983009808
        %v8156 = vunpack.c.0.s8 %v8155
        %v8157 = vperm.slane %v8149, %v8156
        %v8158 = vrot.slane %v8129, 4
        %v8159 = vsel %vm617, %v8158, %v8117
        %v8160 = vrot.slane %v8117, 4
        %v8161 = vsel %vm617, %v8129, %v8160
        %v8163 = vunpack.c.l.s4 1934713408
        %v8164 = vunpack.c.0.s8 %v8163
        %v8165 = vperm.slane %v8159, %v8164
        %v8167 = vunpack.c.l.s4 1934713408
        %v8168 = vunpack.c.0.s8 %v8167
        %v8169 = vperm.slane %v8161, %v8168
        %v8170 = vrot.slane %v8133, 4
        %v8171 = vsel %vm617, %v8170, %v8121
        %v8172 = vrot.slane %v8121, 4
        %v8173 = vsel %vm617, %v8133, %v8172
        %v8175 = vunpack.c.l.s4 1934713408
        %v8176 = vunpack.c.0.s8 %v8175
        %v8177 = vperm.slane %v8171, %v8176
        %v8179 = vunpack.c.l.s4 1934713408
        %v8180 = vunpack.c.0.s8 %v8179
        %v8181 = vperm.slane %v8173, %v8180
        %v8182 = vrot.slane %v8153, 4
        %v8183 = vsel %vm617, %v8182, %v8141
        %v8184 = vrot.slane %v8141, 4
        %v8185 = vsel %vm617, %v8153, %v8184
        %v8187 = vunpack.c.l.s4 1934713408
        %v8188 = vunpack.c.0.s8 %v8187
        %v8189 = vperm.slane %v8183, %v8188
        %v8191 = vunpack.c.l.s4 1934713408
        %v8192 = vunpack.c.0.s8 %v8191
        %v8193 = vperm.slane %v8185, %v8192
        %v8194 = vrot.slane %v8157, 4
        %v8195 = vsel %vm617, %v8194, %v8145
        %v8196 = vrot.slane %v8145, 4
        %v8197 = vsel %vm617, %v8157, %v8196
        %v8199 = vunpack.c.l.s4 1934713408
        %v8200 = vunpack.c.0.s8 %v8199
        %v8201 = vperm.slane %v8195, %v8200
        %v8203 = vunpack.c.l.s4 1934713408
        %v8204 = vunpack.c.0.s8 %v8203
        %v8205 = vperm.slane %v8197, %v8204
        %v8206 = vrot.slane %v8189, 4
        %v8207 = vsel %vm617, %v8206, %v8165
        %v8208 = vrot.slane %v8165, 4
        %v8209 = vsel %vm617, %v8189, %v8208
        %v8210 = vrot.slane %v8193, 4
        %v8211 = vsel %vm617, %v8210, %v8169
        %v8212 = vrot.slane %v8169, 4
        %v8213 = vsel %vm617, %v8193, %v8212
        %v8214 = vrot.slane %v8201, 4
        %v8215 = vsel %vm617, %v8214, %v8177
        %v8216 = vrot.slane %v8177, 4
        %v8217 = vsel %vm617, %v8201, %v8216
        %v8218 = vrot.slane %v8205, 4
        %v8219 = vsel %vm617, %v8218, %v8181
        %v8220 = vrot.slane %v8181, 4
        %v8221 = vsel %vm617, %v8205, %v8220
        %v8222 = vrot.slane %v7027, 4
        %v8223 = vsel %vm617, %v8222, %v7023
        %v8224 = vrot.slane %v7023, 4
        %v8225 = vsel %vm617, %v7027, %v8224
        %v8227 = vunpack.c.l.s4 1983009808
        %v8228 = vunpack.c.0.s8 %v8227
        %v8229 = vperm.slane %v8223, %v8228
        %v8231 = vunpack.c.l.s4 1983009808
        %v8232 = vunpack.c.0.s8 %v8231
        %v8233 = vperm.slane %v8225, %v8232
        %v8234 = vrot.slane %v7029, 4
        %v8235 = vsel %vm617, %v8234, %v7025
        %v8236 = vrot.slane %v7025, 4
        %v8237 = vsel %vm617, %v7029, %v8236
        %v8239 = vunpack.c.l.s4 1983009808
        %v8240 = vunpack.c.0.s8 %v8239
        %v8241 = vperm.slane %v8235, %v8240
        %v8243 = vunpack.c.l.s4 1983009808
        %v8244 = vunpack.c.0.s8 %v8243
        %v8245 = vperm.slane %v8237, %v8244
        %v8246 = vrot.slane %v7035, 4
        %v8247 = vsel %vm617, %v8246, %v7031
        %v8248 = vrot.slane %v7031, 4
        %v8249 = vsel %vm617, %v7035, %v8248
        %v8251 = vunpack.c.l.s4 1983009808
        %v8252 = vunpack.c.0.s8 %v8251
        %v8253 = vperm.slane %v8247, %v8252
        %v8255 = vunpack.c.l.s4 1983009808
        %v8256 = vunpack.c.0.s8 %v8255
        %v8257 = vperm.slane %v8249, %v8256
        %v8258 = vrot.slane %v7037, 4
        %v8259 = vsel %vm617, %v8258, %v7033
        %v8260 = vrot.slane %v7033, 4
        %v8261 = vsel %vm617, %v7037, %v8260
        %v8263 = vunpack.c.l.s4 1983009808
        %v8264 = vunpack.c.0.s8 %v8263
        %v8265 = vperm.slane %v8259, %v8264
        %v8267 = vunpack.c.l.s4 1983009808
        %v8268 = vunpack.c.0.s8 %v8267
        %v8269 = vperm.slane %v8261, %v8268
        %v8270 = vrot.slane %v8241, 4
        %v8271 = vsel %vm617, %v8270, %v8229
        %v8272 = vrot.slane %v8229, 4
        %v8273 = vsel %vm617, %v8241, %v8272
        %v8275 = vunpack.c.l.s4 1934713408
        %v8276 = vunpack.c.0.s8 %v8275
        %v8277 = vperm.slane %v8271, %v8276
        %v8279 = vunpack.c.l.s4 1934713408
        %v8280 = vunpack.c.0.s8 %v8279
        %v8281 = vperm.slane %v8273, %v8280
        %v8282 = vrot.slane %v8245, 4
        %v8283 = vsel %vm617, %v8282, %v8233
        %v8284 = vrot.slane %v8233, 4
        %v8285 = vsel %vm617, %v8245, %v8284
        %v8287 = vunpack.c.l.s4 1934713408
        %v8288 = vunpack.c.0.s8 %v8287
        %v8289 = vperm.slane %v8283, %v8288
        %v8291 = vunpack.c.l.s4 1934713408
        %v8292 = vunpack.c.0.s8 %v8291
        %v8293 = vperm.slane %v8285, %v8292
        %v8294 = vrot.slane %v8265, 4
        %v8295 = vsel %vm617, %v8294, %v8253
        %v8296 = vrot.slane %v8253, 4
        %v8297 = vsel %vm617, %v8265, %v8296
        %v8299 = vunpack.c.l.s4 1934713408
        %v8300 = vunpack.c.0.s8 %v8299
        %v8301 = vperm.slane %v8295, %v8300
        %v8303 = vunpack.c.l.s4 1934713408
        %v8304 = vunpack.c.0.s8 %v8303
        %v8305 = vperm.slane %v8297, %v8304
        %v8306 = vrot.slane %v8269, 4
        %v8307 = vsel %vm617, %v8306, %v8257
        %v8308 = vrot.slane %v8257, 4
        %v8309 = vsel %vm617, %v8269, %v8308
        %v8311 = vunpack.c.l.s4 1934713408
        %v8312 = vunpack.c.0.s8 %v8311
        %v8313 = vperm.slane %v8307, %v8312
        %v8315 = vunpack.c.l.s4 1934713408
        %v8316 = vunpack.c.0.s8 %v8315
        %v8317 = vperm.slane %v8309, %v8316
        %v8318 = vrot.slane %v8301, 4
        %v8319 = vsel %vm617, %v8318, %v8277
        %v8320 = vrot.slane %v8277, 4
        %v8321 = vsel %vm617, %v8301, %v8320
        %v8322 = vrot.slane %v8305, 4
        %v8323 = vsel %vm617, %v8322, %v8281
        %v8324 = vrot.slane %v8281, 4
        %v8325 = vsel %vm617, %v8305, %v8324
        %v8326 = vrot.slane %v8313, 4
        %v8327 = vsel %vm617, %v8326, %v8289
        %v8328 = vrot.slane %v8289, 4
        %v8329 = vsel %vm617, %v8313, %v8328
        %v8330 = vrot.slane %v8317, 4
        %v8331 = vsel %vm617, %v8330, %v8293
        %v8332 = vrot.slane %v8293, 4
        %v8333 = vsel %vm617, %v8317, %v8332
        %v8334 = vrot.slane %v6713, 4
        %v8335 = vsel %vm617, %v8334, %v6705
        %v8336 = vrot.slane %v6705, 4
        %v8337 = vsel %vm617, %v6713, %v8336
        %v8339 = vunpack.c.l.s4 1983009808
        %v8340 = vunpack.c.0.s8 %v8339
        %v8341 = vperm.slane %v8335, %v8340
        %v8343 = vunpack.c.l.s4 1983009808
        %v8344 = vunpack.c.0.s8 %v8343
        %v8345 = vperm.slane %v8337, %v8344
        %v8346 = vrot.slane %v6717, 4
        %v8347 = vsel %vm617, %v8346, %v6709
        %v8348 = vrot.slane %v6709, 4
        %v8349 = vsel %vm617, %v6717, %v8348
        %v8351 = vunpack.c.l.s4 1983009808
        %v8352 = vunpack.c.0.s8 %v8351
        %v8353 = vperm.slane %v8347, %v8352
        %v8355 = vunpack.c.l.s4 1983009808
        %v8356 = vunpack.c.0.s8 %v8355
        %v8357 = vperm.slane %v8349, %v8356
        %v8358 = vrot.slane %v6729, 4
        %v8359 = vsel %vm617, %v8358, %v6721
        %v8360 = vrot.slane %v6721, 4
        %v8361 = vsel %vm617, %v6729, %v8360
        %v8363 = vunpack.c.l.s4 1983009808
        %v8364 = vunpack.c.0.s8 %v8363
        %v8365 = vperm.slane %v8359, %v8364
        %v8367 = vunpack.c.l.s4 1983009808
        %v8368 = vunpack.c.0.s8 %v8367
        %v8369 = vperm.slane %v8361, %v8368
        %v8370 = vrot.slane %v6733, 4
        %v8371 = vsel %vm617, %v8370, %v6725
        %v8372 = vrot.slane %v6725, 4
        %v8373 = vsel %vm617, %v6733, %v8372
        %v8375 = vunpack.c.l.s4 1983009808
        %v8376 = vunpack.c.0.s8 %v8375
        %v8377 = vperm.slane %v8371, %v8376
        %v8379 = vunpack.c.l.s4 1983009808
        %v8380 = vunpack.c.0.s8 %v8379
        %v8381 = vperm.slane %v8373, %v8380
        %v8382 = vrot.slane %v8353, 4
        %v8383 = vsel %vm617, %v8382, %v8341
        %v8384 = vrot.slane %v8341, 4
        %v8385 = vsel %vm617, %v8353, %v8384
        %v8387 = vunpack.c.l.s4 1934713408
        %v8388 = vunpack.c.0.s8 %v8387
        %v8389 = vperm.slane %v8383, %v8388
        %v8391 = vunpack.c.l.s4 1934713408
        %v8392 = vunpack.c.0.s8 %v8391
        %v8393 = vperm.slane %v8385, %v8392
        %v8394 = vrot.slane %v8357, 4
        %v8395 = vsel %vm617, %v8394, %v8345
        %v8396 = vrot.slane %v8345, 4
        %v8397 = vsel %vm617, %v8357, %v8396
        %v8399 = vunpack.c.l.s4 1934713408
        %v8400 = vunpack.c.0.s8 %v8399
        %v8401 = vperm.slane %v8395, %v8400
        %v8403 = vunpack.c.l.s4 1934713408
        %v8404 = vunpack.c.0.s8 %v8403
        %v8405 = vperm.slane %v8397, %v8404
        %v8406 = vrot.slane %v8377, 4
        %v8407 = vsel %vm617, %v8406, %v8365
        %v8408 = vrot.slane %v8365, 4
        %v8409 = vsel %vm617, %v8377, %v8408
        %v8411 = vunpack.c.l.s4 1934713408
        %v8412 = vunpack.c.0.s8 %v8411
        %v8413 = vperm.slane %v8407, %v8412
        %v8415 = vunpack.c.l.s4 1934713408
        %v8416 = vunpack.c.0.s8 %v8415
        %v8417 = vperm.slane %v8409, %v8416
        %v8418 = vrot.slane %v8381, 4
        %v8419 = vsel %vm617, %v8418, %v8369
        %v8420 = vrot.slane %v8369, 4
        %v8421 = vsel %vm617, %v8381, %v8420
        %v8423 = vunpack.c.l.s4 1934713408
        %v8424 = vunpack.c.0.s8 %v8423
        %v8425 = vperm.slane %v8419, %v8424
        %v8427 = vunpack.c.l.s4 1934713408
        %v8428 = vunpack.c.0.s8 %v8427
        %v8429 = vperm.slane %v8421, %v8428
        %v8430 = vrot.slane %v8413, 4
        %v8431 = vsel %vm617, %v8430, %v8389
        %v8432 = vrot.slane %v8389, 4
        %v8433 = vsel %vm617, %v8413, %v8432
        %v8434 = vrot.slane %v8417, 4
        %v8435 = vsel %vm617, %v8434, %v8393
        %v8436 = vrot.slane %v8393, 4
        %v8437 = vsel %vm617, %v8417, %v8436
        %v8438 = vrot.slane %v8425, 4
        %v8439 = vsel %vm617, %v8438, %v8401
        %v8440 = vrot.slane %v8401, 4
        %v8441 = vsel %vm617, %v8425, %v8440
        %v8442 = vrot.slane %v8429, 4
        %v8443 = vsel %vm617, %v8442, %v8405
        %v8444 = vrot.slane %v8405, 4
        %v8445 = vsel %vm617, %v8429, %v8444
        %v8446 = vrot.slane %v6745, 4
        %v8447 = vsel %vm617, %v8446, %v6737
        %v8448 = vrot.slane %v6737, 4
        %v8449 = vsel %vm617, %v6745, %v8448
        %v8451 = vunpack.c.l.s4 1983009808
        %v8452 = vunpack.c.0.s8 %v8451
        %v8453 = vperm.slane %v8447, %v8452
        %v8455 = vunpack.c.l.s4 1983009808
        %v8456 = vunpack.c.0.s8 %v8455
        %v8457 = vperm.slane %v8449, %v8456
        %v8458 = vrot.slane %v6749, 4
        %v8459 = vsel %vm617, %v8458, %v6741
        %v8460 = vrot.slane %v6741, 4
        %v8461 = vsel %vm617, %v6749, %v8460
        %v8463 = vunpack.c.l.s4 1983009808
        %v8464 = vunpack.c.0.s8 %v8463
        %v8465 = vperm.slane %v8459, %v8464
        %v8467 = vunpack.c.l.s4 1983009808
        %v8468 = vunpack.c.0.s8 %v8467
        %v8469 = vperm.slane %v8461, %v8468
        %v8470 = vrot.slane %v6761, 4
        %v8471 = vsel %vm617, %v8470, %v6753
        %v8472 = vrot.slane %v6753, 4
        %v8473 = vsel %vm617, %v6761, %v8472
        %v8475 = vunpack.c.l.s4 1983009808
        %v8476 = vunpack.c.0.s8 %v8475
        %v8477 = vperm.slane %v8471, %v8476
        %v8479 = vunpack.c.l.s4 1983009808
        %v8480 = vunpack.c.0.s8 %v8479
        %v8481 = vperm.slane %v8473, %v8480
        %v8482 = vrot.slane %v6765, 4
        %v8483 = vsel %vm617, %v8482, %v6757
        %v8484 = vrot.slane %v6757, 4
        %v8485 = vsel %vm617, %v6765, %v8484
        %v8487 = vunpack.c.l.s4 1983009808
        %v8488 = vunpack.c.0.s8 %v8487
        %v8489 = vperm.slane %v8483, %v8488
        %v8491 = vunpack.c.l.s4 1983009808
        %v8492 = vunpack.c.0.s8 %v8491
        %v8493 = vperm.slane %v8485, %v8492
        %v8494 = vrot.slane %v8465, 4
        %v8495 = vsel %vm617, %v8494, %v8453
        %v8496 = vrot.slane %v8453, 4
        %v8497 = vsel %vm617, %v8465, %v8496
        %v8499 = vunpack.c.l.s4 1934713408
        %v8500 = vunpack.c.0.s8 %v8499
        %v8501 = vperm.slane %v8495, %v8500
        %v8503 = vunpack.c.l.s4 1934713408
        %v8504 = vunpack.c.0.s8 %v8503
        %v8505 = vperm.slane %v8497, %v8504
        %v8506 = vrot.slane %v8469, 4
        %v8507 = vsel %vm617, %v8506, %v8457
        %v8508 = vrot.slane %v8457, 4
        %v8509 = vsel %vm617, %v8469, %v8508
        %v8511 = vunpack.c.l.s4 1934713408
        %v8512 = vunpack.c.0.s8 %v8511
        %v8513 = vperm.slane %v8507, %v8512
        %v8515 = vunpack.c.l.s4 1934713408
        %v8516 = vunpack.c.0.s8 %v8515
        %v8517 = vperm.slane %v8509, %v8516
        %v8518 = vrot.slane %v8489, 4
        %v8519 = vsel %vm617, %v8518, %v8477
        %v8520 = vrot.slane %v8477, 4
        %v8521 = vsel %vm617, %v8489, %v8520
        %v8523 = vunpack.c.l.s4 1934713408
        %v8524 = vunpack.c.0.s8 %v8523
        %v8525 = vperm.slane %v8519, %v8524
        %v8527 = vunpack.c.l.s4 1934713408
        %v8528 = vunpack.c.0.s8 %v8527
        %v8529 = vperm.slane %v8521, %v8528
        %v8530 = vrot.slane %v8493, 4
        %v8531 = vsel %vm617, %v8530, %v8481
        %v8532 = vrot.slane %v8481, 4
        %v8533 = vsel %vm617, %v8493, %v8532
        %v8535 = vunpack.c.l.s4 1934713408
        %v8536 = vunpack.c.0.s8 %v8535
        %v8537 = vperm.slane %v8531, %v8536
        %v8539 = vunpack.c.l.s4 1934713408
        %v8540 = vunpack.c.0.s8 %v8539
        %v8541 = vperm.slane %v8533, %v8540
        %v8542 = vrot.slane %v8525, 4
        %v8543 = vsel %vm617, %v8542, %v8501
        %v8544 = vrot.slane %v8501, 4
        %v8545 = vsel %vm617, %v8525, %v8544
        %v8546 = vrot.slane %v8529, 4
        %v8547 = vsel %vm617, %v8546, %v8505
        %v8548 = vrot.slane %v8505, 4
        %v8549 = vsel %vm617, %v8529, %v8548
        %v8550 = vrot.slane %v8537, 4
        %v8551 = vsel %vm617, %v8550, %v8513
        %v8552 = vrot.slane %v8513, 4
        %v8553 = vsel %vm617, %v8537, %v8552
        %v8554 = vrot.slane %v8541, 4
        %v8555 = vsel %vm617, %v8554, %v8517
        %v8556 = vrot.slane %v8517, 4
        %v8557 = vsel %vm617, %v8541, %v8556
        %v8558 = vrot.slane %v7043, 4
        %v8559 = vsel %vm617, %v8558, %v7039
        %v8560 = vrot.slane %v7039, 4
        %v8561 = vsel %vm617, %v7043, %v8560
        %v8563 = vunpack.c.l.s4 1983009808
        %v8564 = vunpack.c.0.s8 %v8563
        %v8565 = vperm.slane %v8559, %v8564
        %v8567 = vunpack.c.l.s4 1983009808
        %v8568 = vunpack.c.0.s8 %v8567
        %v8569 = vperm.slane %v8561, %v8568
        %v8570 = vrot.slane %v7045, 4
        %v8571 = vsel %vm617, %v8570, %v7041
        %v8572 = vrot.slane %v7041, 4
        %v8573 = vsel %vm617, %v7045, %v8572
        %v8575 = vunpack.c.l.s4 1983009808
        %v8576 = vunpack.c.0.s8 %v8575
        %v8577 = vperm.slane %v8571, %v8576
        %v8579 = vunpack.c.l.s4 1983009808
        %v8580 = vunpack.c.0.s8 %v8579
        %v8581 = vperm.slane %v8573, %v8580
        %v8582 = vrot.slane %v7051, 4
        %v8583 = vsel %vm617, %v8582, %v7047
        %v8584 = vrot.slane %v7047, 4
        %v8585 = vsel %vm617, %v7051, %v8584
        %v8587 = vunpack.c.l.s4 1983009808
        %v8588 = vunpack.c.0.s8 %v8587
        %v8589 = vperm.slane %v8583, %v8588
        %v8591 = vunpack.c.l.s4 1983009808
        %v8592 = vunpack.c.0.s8 %v8591
        %v8593 = vperm.slane %v8585, %v8592
        %v8594 = vrot.slane %v7053, 4
        %v8595 = vsel %vm617, %v8594, %v7049
        %v8596 = vrot.slane %v7049, 4
        %v8597 = vsel %vm617, %v7053, %v8596
        %v8599 = vunpack.c.l.s4 1983009808
        %v8600 = vunpack.c.0.s8 %v8599
        %v8601 = vperm.slane %v8595, %v8600
        %v8603 = vunpack.c.l.s4 1983009808
        %v8604 = vunpack.c.0.s8 %v8603
        %v8605 = vperm.slane %v8597, %v8604
        %v8606 = vrot.slane %v8577, 4
        %v8607 = vsel %vm617, %v8606, %v8565
        %v8608 = vrot.slane %v8565, 4
        %v8609 = vsel %vm617, %v8577, %v8608
        %v8611 = vunpack.c.l.s4 1934713408
        %v8612 = vunpack.c.0.s8 %v8611
        %v8613 = vperm.slane %v8607, %v8612
        %v8615 = vunpack.c.l.s4 1934713408
        %v8616 = vunpack.c.0.s8 %v8615
        %v8617 = vperm.slane %v8609, %v8616
        %v8618 = vrot.slane %v8581, 4
        %v8619 = vsel %vm617, %v8618, %v8569
        %v8620 = vrot.slane %v8569, 4
        %v8621 = vsel %vm617, %v8581, %v8620
        %v8623 = vunpack.c.l.s4 1934713408
        %v8624 = vunpack.c.0.s8 %v8623
        %v8625 = vperm.slane %v8619, %v8624
        %v8627 = vunpack.c.l.s4 1934713408
        %v8628 = vunpack.c.0.s8 %v8627
        %v8629 = vperm.slane %v8621, %v8628
        %v8630 = vrot.slane %v8601, 4
        %v8631 = vsel %vm617, %v8630, %v8589
        %v8632 = vrot.slane %v8589, 4
        %v8633 = vsel %vm617, %v8601, %v8632
        %v8635 = vunpack.c.l.s4 1934713408
        %v8636 = vunpack.c.0.s8 %v8635
        %v8637 = vperm.slane %v8631, %v8636
        %v8639 = vunpack.c.l.s4 1934713408
        %v8640 = vunpack.c.0.s8 %v8639
        %v8641 = vperm.slane %v8633, %v8640
        %v8642 = vrot.slane %v8605, 4
        %v8643 = vsel %vm617, %v8642, %v8593
        %v8644 = vrot.slane %v8593, 4
        %v8645 = vsel %vm617, %v8605, %v8644
        %v8647 = vunpack.c.l.s4 1934713408
        %v8648 = vunpack.c.0.s8 %v8647
        %v8649 = vperm.slane %v8643, %v8648
        %v8651 = vunpack.c.l.s4 1934713408
        %v8652 = vunpack.c.0.s8 %v8651
        %v8653 = vperm.slane %v8645, %v8652
        %v8654 = vrot.slane %v8637, 4
        %v8655 = vsel %vm617, %v8654, %v8613
        %v8656 = vrot.slane %v8613, 4
        %v8657 = vsel %vm617, %v8637, %v8656
        %v8658 = vrot.slane %v8641, 4
        %v8659 = vsel %vm617, %v8658, %v8617
        %v8660 = vrot.slane %v8617, 4
        %v8661 = vsel %vm617, %v8641, %v8660
        %v8662 = vrot.slane %v8649, 4
        %v8663 = vsel %vm617, %v8662, %v8625
        %v8664 = vrot.slane %v8625, 4
        %v8665 = vsel %vm617, %v8649, %v8664
        %v8666 = vrot.slane %v8653, 4
        %v8667 = vsel %vm617, %v8666, %v8629
        %v8668 = vrot.slane %v8629, 4
        %v8669 = vsel %vm617, %v8653, %v8668
        %v8670 = vrot.slane %v6841, 4
        %v8671 = vsel %vm617, %v8670, %v6833
        %v8672 = vrot.slane %v6833, 4
        %v8673 = vsel %vm617, %v6841, %v8672
        %v8675 = vunpack.c.l.s4 1983009808
        %v8676 = vunpack.c.0.s8 %v8675
        %v8677 = vperm.slane %v8671, %v8676
        %v8679 = vunpack.c.l.s4 1983009808
        %v8680 = vunpack.c.0.s8 %v8679
        %v8681 = vperm.slane %v8673, %v8680
        %v8682 = vrot.slane %v6845, 4
        %v8683 = vsel %vm617, %v8682, %v6837
        %v8684 = vrot.slane %v6837, 4
        %v8685 = vsel %vm617, %v6845, %v8684
        %v8687 = vunpack.c.l.s4 1983009808
        %v8688 = vunpack.c.0.s8 %v8687
        %v8689 = vperm.slane %v8683, %v8688
        %v8691 = vunpack.c.l.s4 1983009808
        %v8692 = vunpack.c.0.s8 %v8691
        %v8693 = vperm.slane %v8685, %v8692
        %v8694 = vrot.slane %v6857, 4
        %v8695 = vsel %vm617, %v8694, %v6849
        %v8696 = vrot.slane %v6849, 4
        %v8697 = vsel %vm617, %v6857, %v8696
        %v8699 = vunpack.c.l.s4 1983009808
        %v8700 = vunpack.c.0.s8 %v8699
        %v8701 = vperm.slane %v8695, %v8700
        %v8703 = vunpack.c.l.s4 1983009808
        %v8704 = vunpack.c.0.s8 %v8703
        %v8705 = vperm.slane %v8697, %v8704
        %v8706 = vrot.slane %v6861, 4
        %v8707 = vsel %vm617, %v8706, %v6853
        %v8708 = vrot.slane %v6853, 4
        %v8709 = vsel %vm617, %v6861, %v8708
        %v8711 = vunpack.c.l.s4 1983009808
        %v8712 = vunpack.c.0.s8 %v8711
        %v8713 = vperm.slane %v8707, %v8712
        %v8715 = vunpack.c.l.s4 1983009808
        %v8716 = vunpack.c.0.s8 %v8715
        %v8717 = vperm.slane %v8709, %v8716
        %v8718 = vrot.slane %v8689, 4
        %v8719 = vsel %vm617, %v8718, %v8677
        %v8720 = vrot.slane %v8677, 4
        %v8721 = vsel %vm617, %v8689, %v8720
        %v8723 = vunpack.c.l.s4 1934713408
        %v8724 = vunpack.c.0.s8 %v8723
        %v8725 = vperm.slane %v8719, %v8724
        %v8727 = vunpack.c.l.s4 1934713408
        %v8728 = vunpack.c.0.s8 %v8727
        %v8729 = vperm.slane %v8721, %v8728
        %v8730 = vrot.slane %v8693, 4
        %v8731 = vsel %vm617, %v8730, %v8681
        %v8732 = vrot.slane %v8681, 4
        %v8733 = vsel %vm617, %v8693, %v8732
        %v8735 = vunpack.c.l.s4 1934713408
        %v8736 = vunpack.c.0.s8 %v8735
        %v8737 = vperm.slane %v8731, %v8736
        %v8739 = vunpack.c.l.s4 1934713408
        %v8740 = vunpack.c.0.s8 %v8739
        %v8741 = vperm.slane %v8733, %v8740
        %v8742 = vrot.slane %v8713, 4
        %v8743 = vsel %vm617, %v8742, %v8701
        %v8744 = vrot.slane %v8701, 4
        %v8745 = vsel %vm617, %v8713, %v8744
        %v8747 = vunpack.c.l.s4 1934713408
        %v8748 = vunpack.c.0.s8 %v8747
        %v8749 = vperm.slane %v8743, %v8748
        %v8751 = vunpack.c.l.s4 1934713408
        %v8752 = vunpack.c.0.s8 %v8751
        %v8753 = vperm.slane %v8745, %v8752
        %v8754 = vrot.slane %v8717, 4
        %v8755 = vsel %vm617, %v8754, %v8705
        %v8756 = vrot.slane %v8705, 4
        %v8757 = vsel %vm617, %v8717, %v8756
        %v8759 = vunpack.c.l.s4 1934713408
        %v8760 = vunpack.c.0.s8 %v8759
        %v8761 = vperm.slane %v8755, %v8760
        %v8763 = vunpack.c.l.s4 1934713408
        %v8764 = vunpack.c.0.s8 %v8763
        %v8765 = vperm.slane %v8757, %v8764
        %v8766 = vrot.slane %v8749, 4
        %v8767 = vsel %vm617, %v8766, %v8725
        %v8768 = vrot.slane %v8725, 4
        %v8769 = vsel %vm617, %v8749, %v8768
        %v8770 = vrot.slane %v8753, 4
        %v8771 = vsel %vm617, %v8770, %v8729
        %v8772 = vrot.slane %v8729, 4
        %v8773 = vsel %vm617, %v8753, %v8772
        %v8774 = vrot.slane %v8761, 4
        %v8775 = vsel %vm617, %v8774, %v8737
        %v8776 = vrot.slane %v8737, 4
        %v8777 = vsel %vm617, %v8761, %v8776
        %v8778 = vrot.slane %v8765, 4
        %v8779 = vsel %vm617, %v8778, %v8741
        %v8780 = vrot.slane %v8741, 4
        %v8781 = vsel %vm617, %v8765, %v8780
        %v8782 = vrot.slane %v6873, 4
        %v8783 = vsel %vm617, %v8782, %v6865
        %v8784 = vrot.slane %v6865, 4
        %v8785 = vsel %vm617, %v6873, %v8784
        %v8787 = vunpack.c.l.s4 1983009808
        %v8788 = vunpack.c.0.s8 %v8787
        %v8789 = vperm.slane %v8783, %v8788
        %v8791 = vunpack.c.l.s4 1983009808
        %v8792 = vunpack.c.0.s8 %v8791
        %v8793 = vperm.slane %v8785, %v8792
        %v8794 = vrot.slane %v6877, 4
        %v8795 = vsel %vm617, %v8794, %v6869
        %v8796 = vrot.slane %v6869, 4
        %v8797 = vsel %vm617, %v6877, %v8796
        %v8799 = vunpack.c.l.s4 1983009808
        %v8800 = vunpack.c.0.s8 %v8799
        %v8801 = vperm.slane %v8795, %v8800
        %v8803 = vunpack.c.l.s4 1983009808
        %v8804 = vunpack.c.0.s8 %v8803
        %v8805 = vperm.slane %v8797, %v8804
        %v8806 = vrot.slane %v6889, 4
        %v8807 = vsel %vm617, %v8806, %v6881
        %v8808 = vrot.slane %v6881, 4
        %v8809 = vsel %vm617, %v6889, %v8808
        %v8811 = vunpack.c.l.s4 1983009808
        %v8812 = vunpack.c.0.s8 %v8811
        %v8813 = vperm.slane %v8807, %v8812
        %v8815 = vunpack.c.l.s4 1983009808
        %v8816 = vunpack.c.0.s8 %v8815
        %v8817 = vperm.slane %v8809, %v8816
        %v8818 = vrot.slane %v6893, 4
        %v8819 = vsel %vm617, %v8818, %v6885
        %v8820 = vrot.slane %v6885, 4
        %v8821 = vsel %vm617, %v6893, %v8820
        %v8823 = vunpack.c.l.s4 1983009808
        %v8824 = vunpack.c.0.s8 %v8823
        %v8825 = vperm.slane %v8819, %v8824
        %v8827 = vunpack.c.l.s4 1983009808
        %v8828 = vunpack.c.0.s8 %v8827
        %v8829 = vperm.slane %v8821, %v8828
        %v8830 = vrot.slane %v8801, 4
        %v8831 = vsel %vm617, %v8830, %v8789
        %v8832 = vrot.slane %v8789, 4
        %v8833 = vsel %vm617, %v8801, %v8832
        %v8835 = vunpack.c.l.s4 1934713408
        %v8836 = vunpack.c.0.s8 %v8835
        %v8837 = vperm.slane %v8831, %v8836
        %v8839 = vunpack.c.l.s4 1934713408
        %v8840 = vunpack.c.0.s8 %v8839
        %v8841 = vperm.slane %v8833, %v8840
        %v8842 = vrot.slane %v8805, 4
        %v8843 = vsel %vm617, %v8842, %v8793
        %v8844 = vrot.slane %v8793, 4
        %v8845 = vsel %vm617, %v8805, %v8844
        %v8847 = vunpack.c.l.s4 1934713408
        %v8848 = vunpack.c.0.s8 %v8847
        %v8849 = vperm.slane %v8843, %v8848
        %v8851 = vunpack.c.l.s4 1934713408
        %v8852 = vunpack.c.0.s8 %v8851
        %v8853 = vperm.slane %v8845, %v8852
        %v8854 = vrot.slane %v8825, 4
        %v8855 = vsel %vm617, %v8854, %v8813
        %v8856 = vrot.slane %v8813, 4
        %v8857 = vsel %vm617, %v8825, %v8856
        %v8859 = vunpack.c.l.s4 1934713408
        %v8860 = vunpack.c.0.s8 %v8859
        %v8861 = vperm.slane %v8855, %v8860
        %v8863 = vunpack.c.l.s4 1934713408
        %v8864 = vunpack.c.0.s8 %v8863
        %v8865 = vperm.slane %v8857, %v8864
        %v8866 = vrot.slane %v8829, 4
        %v8867 = vsel %vm617, %v8866, %v8817
        %v8868 = vrot.slane %v8817, 4
        %v8869 = vsel %vm617, %v8829, %v8868
        %v8871 = vunpack.c.l.s4 1934713408
        %v8872 = vunpack.c.0.s8 %v8871
        %v8873 = vperm.slane %v8867, %v8872
        %v8875 = vunpack.c.l.s4 1934713408
        %v8876 = vunpack.c.0.s8 %v8875
        %v8877 = vperm.slane %v8869, %v8876
        %v8878 = vrot.slane %v8861, 4
        %v8879 = vsel %vm617, %v8878, %v8837
        %v8880 = vrot.slane %v8837, 4
        %v8881 = vsel %vm617, %v8861, %v8880
        %v8882 = vrot.slane %v8865, 4
        %v8883 = vsel %vm617, %v8882, %v8841
        %v8884 = vrot.slane %v8841, 4
        %v8885 = vsel %vm617, %v8865, %v8884
        %v8886 = vrot.slane %v8873, 4
        %v8887 = vsel %vm617, %v8886, %v8849
        %v8888 = vrot.slane %v8849, 4
        %v8889 = vsel %vm617, %v8873, %v8888
        %v8890 = vrot.slane %v8877, 4
        %v8891 = vsel %vm617, %v8890, %v8853
        %v8892 = vrot.slane %v8853, 4
        %v8893 = vsel %vm617, %v8877, %v8892
        %v8894 = vrot.slane %v7059, 4
        %v8895 = vsel %vm617, %v8894, %v7055
        %v8896 = vrot.slane %v7055, 4
        %v8897 = vsel %vm617, %v7059, %v8896
        %v8899 = vunpack.c.l.s4 1983009808
        %v8900 = vunpack.c.0.s8 %v8899
        %v8901 = vperm.slane %v8895, %v8900
        %v8903 = vunpack.c.l.s4 1983009808
        %v8904 = vunpack.c.0.s8 %v8903
        %v8905 = vperm.slane %v8897, %v8904
        %v8906 = vrot.slane %v7061, 4
        %v8907 = vsel %vm617, %v8906, %v7057
        %v8908 = vrot.slane %v7057, 4
        %v8909 = vsel %vm617, %v7061, %v8908
        %v8911 = vunpack.c.l.s4 1983009808
        %v8912 = vunpack.c.0.s8 %v8911
        %v8913 = vperm.slane %v8907, %v8912
        %v8915 = vunpack.c.l.s4 1983009808
        %v8916 = vunpack.c.0.s8 %v8915
        %v8917 = vperm.slane %v8909, %v8916
        %v8918 = vrot.slane %v7067, 4
        %v8919 = vsel %vm617, %v8918, %v7063
        %v8920 = vrot.slane %v7063, 4
        %v8921 = vsel %vm617, %v7067, %v8920
        %v8923 = vunpack.c.l.s4 1983009808
        %v8924 = vunpack.c.0.s8 %v8923
        %v8925 = vperm.slane %v8919, %v8924
        %v8927 = vunpack.c.l.s4 1983009808
        %v8928 = vunpack.c.0.s8 %v8927
        %v8929 = vperm.slane %v8921, %v8928
        %v8930 = vrot.slane %v7069, 4
        %v8931 = vsel %vm617, %v8930, %v7065
        %v8932 = vrot.slane %v7065, 4
        %v8933 = vsel %vm617, %v7069, %v8932
        %v8935 = vunpack.c.l.s4 1983009808
        %v8936 = vunpack.c.0.s8 %v8935
        %v8937 = vperm.slane %v8931, %v8936
        %v8939 = vunpack.c.l.s4 1983009808
        %v8940 = vunpack.c.0.s8 %v8939
        %v8941 = vperm.slane %v8933, %v8940
        %v8942 = vrot.slane %v8913, 4
        %v8943 = vsel %vm617, %v8942, %v8901
        %v8944 = vrot.slane %v8901, 4
        %v8945 = vsel %vm617, %v8913, %v8944
        %v8947 = vunpack.c.l.s4 1934713408
        %v8948 = vunpack.c.0.s8 %v8947
        %v8949 = vperm.slane %v8943, %v8948
        %v8951 = vunpack.c.l.s4 1934713408
        %v8952 = vunpack.c.0.s8 %v8951
        %v8953 = vperm.slane %v8945, %v8952
        %v8954 = vrot.slane %v8917, 4
        %v8955 = vsel %vm617, %v8954, %v8905
        %v8956 = vrot.slane %v8905, 4
        %v8957 = vsel %vm617, %v8917, %v8956
        %v8959 = vunpack.c.l.s4 1934713408
        %v8960 = vunpack.c.0.s8 %v8959
        %v8961 = vperm.slane %v8955, %v8960
        %v8963 = vunpack.c.l.s4 1934713408
        %v8964 = vunpack.c.0.s8 %v8963
        %v8965 = vperm.slane %v8957, %v8964
        %v8966 = vrot.slane %v8937, 4
        %v8967 = vsel %vm617, %v8966, %v8925
        %v8968 = vrot.slane %v8925, 4
        %v8969 = vsel %vm617, %v8937, %v8968
        %v8971 = vunpack.c.l.s4 1934713408
        %v8972 = vunpack.c.0.s8 %v8971
        %v8973 = vperm.slane %v8967, %v8972
        %v8975 = vunpack.c.l.s4 1934713408
        %v8976 = vunpack.c.0.s8 %v8975
        %v8977 = vperm.slane %v8969, %v8976
        %v8978 = vrot.slane %v8941, 4
        %v8979 = vsel %vm617, %v8978, %v8929
        %v8980 = vrot.slane %v8929, 4
        %v8981 = vsel %vm617, %v8941, %v8980
        %v8983 = vunpack.c.l.s4 1934713408
        %v8984 = vunpack.c.0.s8 %v8983
        %v8985 = vperm.slane %v8979, %v8984
        %v8987 = vunpack.c.l.s4 1934713408
        %v8988 = vunpack.c.0.s8 %v8987
        %v8989 = vperm.slane %v8981, %v8988
        %v8990 = vrot.slane %v8973, 4
        %v8991 = vsel %vm617, %v8990, %v8949
        %v8992 = vrot.slane %v8949, 4
        %v8993 = vsel %vm617, %v8973, %v8992
        %v8994 = vrot.slane %v8977, 4
        %v8995 = vsel %vm617, %v8994, %v8953
        %v8996 = vrot.slane %v8953, 4
        %v8997 = vsel %vm617, %v8977, %v8996
        %v8998 = vrot.slane %v8985, 4
        %v8999 = vsel %vm617, %v8998, %v8961
        %v9000 = vrot.slane %v8961, 4
        %v9001 = vsel %vm617, %v8985, %v9000
        %v9002 = vrot.slane %v8989, 4
        %v9003 = vsel %vm617, %v9002, %v8965
        %v9004 = vrot.slane %v8965, 4
        %v9005 = vsel %vm617, %v8989, %v9004
        %v9006 = vrot.slane %v6969, 4
        %v9007 = vsel %vm617, %v9006, %v6961
        %v9008 = vrot.slane %v6961, 4
        %v9009 = vsel %vm617, %v6969, %v9008
        %v9011 = vunpack.c.l.s4 1983009808
        %v9012 = vunpack.c.0.s8 %v9011
        %v9013 = vperm.slane %v9007, %v9012
        %v9015 = vunpack.c.l.s4 1983009808
        %v9016 = vunpack.c.0.s8 %v9015
        %v9017 = vperm.slane %v9009, %v9016
        %v9018 = vrot.slane %v6973, 4
        %v9019 = vsel %vm617, %v9018, %v6965
        %v9020 = vrot.slane %v6965, 4
        %v9021 = vsel %vm617, %v6973, %v9020
        %v9023 = vunpack.c.l.s4 1983009808
        %v9024 = vunpack.c.0.s8 %v9023
        %v9025 = vperm.slane %v9019, %v9024
        %v9027 = vunpack.c.l.s4 1983009808
        %v9028 = vunpack.c.0.s8 %v9027
        %v9029 = vperm.slane %v9021, %v9028
        %v9030 = vrot.slane %v6985, 4
        %v9031 = vsel %vm617, %v9030, %v6977
        %v9032 = vrot.slane %v6977, 4
        %v9033 = vsel %vm617, %v6985, %v9032
        %v9035 = vunpack.c.l.s4 1983009808
        %v9036 = vunpack.c.0.s8 %v9035
        %v9037 = vperm.slane %v9031, %v9036
        %v9039 = vunpack.c.l.s4 1983009808
        %v9040 = vunpack.c.0.s8 %v9039
        %v9041 = vperm.slane %v9033, %v9040
        %v9042 = vrot.slane %v6989, 4
        %v9043 = vsel %vm617, %v9042, %v6981
        %v9044 = vrot.slane %v6981, 4
        %v9045 = vsel %vm617, %v6989, %v9044
        %v9047 = vunpack.c.l.s4 1983009808
        %v9048 = vunpack.c.0.s8 %v9047
        %v9049 = vperm.slane %v9043, %v9048
        %v9051 = vunpack.c.l.s4 1983009808
        %v9052 = vunpack.c.0.s8 %v9051
        %v9053 = vperm.slane %v9045, %v9052
        %v9054 = vrot.slane %v9025, 4
        %v9055 = vsel %vm617, %v9054, %v9013
        %v9056 = vrot.slane %v9013, 4
        %v9057 = vsel %vm617, %v9025, %v9056
        %v9059 = vunpack.c.l.s4 1934713408
        %v9060 = vunpack.c.0.s8 %v9059
        %v9061 = vperm.slane %v9055, %v9060
        %v9063 = vunpack.c.l.s4 1934713408
        %v9064 = vunpack.c.0.s8 %v9063
        %v9065 = vperm.slane %v9057, %v9064
        %v9066 = vrot.slane %v9029, 4
        %v9067 = vsel %vm617, %v9066, %v9017
        %v9068 = vrot.slane %v9017, 4
        %v9069 = vsel %vm617, %v9029, %v9068
        %v9071 = vunpack.c.l.s4 1934713408
        %v9072 = vunpack.c.0.s8 %v9071
        %v9073 = vperm.slane %v9067, %v9072
        %v9075 = vunpack.c.l.s4 1934713408
        %v9076 = vunpack.c.0.s8 %v9075
        %v9077 = vperm.slane %v9069, %v9076
        %v9078 = vrot.slane %v9049, 4
        %v9079 = vsel %vm617, %v9078, %v9037
        %v9080 = vrot.slane %v9037, 4
        %v9081 = vsel %vm617, %v9049, %v9080
        %v9083 = vunpack.c.l.s4 1934713408
        %v9084 = vunpack.c.0.s8 %v9083
        %v9085 = vperm.slane %v9079, %v9084
        %v9087 = vunpack.c.l.s4 1934713408
        %v9088 = vunpack.c.0.s8 %v9087
        %v9089 = vperm.slane %v9081, %v9088
        %v9090 = vrot.slane %v9053, 4
        %v9091 = vsel %vm617, %v9090, %v9041
        %v9092 = vrot.slane %v9041, 4
        %v9093 = vsel %vm617, %v9053, %v9092
        %v9095 = vunpack.c.l.s4 1934713408
        %v9096 = vunpack.c.0.s8 %v9095
        %v9097 = vperm.slane %v9091, %v9096
        %v9099 = vunpack.c.l.s4 1934713408
        %v9100 = vunpack.c.0.s8 %v9099
        %v9101 = vperm.slane %v9093, %v9100
        %v9102 = vrot.slane %v9085, 4
        %v9103 = vsel %vm617, %v9102, %v9061
        %v9104 = vrot.slane %v9061, 4
        %v9105 = vsel %vm617, %v9085, %v9104
        %v9106 = vrot.slane %v9089, 4
        %v9107 = vsel %vm617, %v9106, %v9065
        %v9108 = vrot.slane %v9065, 4
        %v9109 = vsel %vm617, %v9089, %v9108
        %v9110 = vrot.slane %v9097, 4
        %v9111 = vsel %vm617, %v9110, %v9073
        %v9112 = vrot.slane %v9073, 4
        %v9113 = vsel %vm617, %v9097, %v9112
        %v9114 = vrot.slane %v9101, 4
        %v9115 = vsel %vm617, %v9114, %v9077
        %v9116 = vrot.slane %v9077, 4
        %v9117 = vsel %vm617, %v9101, %v9116
        %v9118 = vrot.slane %v7001, 4
        %v9119 = vsel %vm617, %v9118, %v6993
        %v9120 = vrot.slane %v6993, 4
        %v9121 = vsel %vm617, %v7001, %v9120
        %v9123 = vunpack.c.l.s4 1983009808
        %v9124 = vunpack.c.0.s8 %v9123
        %v9125 = vperm.slane %v9119, %v9124
        %v9127 = vunpack.c.l.s4 1983009808
        %v9128 = vunpack.c.0.s8 %v9127
        %v9129 = vperm.slane %v9121, %v9128
        %v9130 = vrot.slane %v7005, 4
        %v9131 = vsel %vm617, %v9130, %v6997
        %v9132 = vrot.slane %v6997, 4
        %v9133 = vsel %vm617, %v7005, %v9132
        %v9135 = vunpack.c.l.s4 1983009808
        %v9136 = vunpack.c.0.s8 %v9135
        %v9137 = vperm.slane %v9131, %v9136
        %v9139 = vunpack.c.l.s4 1983009808
        %v9140 = vunpack.c.0.s8 %v9139
        %v9141 = vperm.slane %v9133, %v9140
        %v9142 = vrot.slane %v7017, 4
        %v9143 = vsel %vm617, %v9142, %v7009
        %v9144 = vrot.slane %v7009, 4
        %v9145 = vsel %vm617, %v7017, %v9144
        %v9147 = vunpack.c.l.s4 1983009808
        %v9148 = vunpack.c.0.s8 %v9147
        %v9149 = vperm.slane %v9143, %v9148
        %v9151 = vunpack.c.l.s4 1983009808
        %v9152 = vunpack.c.0.s8 %v9151
        %v9153 = vperm.slane %v9145, %v9152
        %v9154 = vrot.slane %v7021, 4
        %v9155 = vsel %vm617, %v9154, %v7013
        %v9156 = vrot.slane %v7013, 4
        %v9157 = vsel %vm617, %v7021, %v9156
        %v9159 = vunpack.c.l.s4 1983009808
        %v9160 = vunpack.c.0.s8 %v9159
        %v9161 = vperm.slane %v9155, %v9160
        %v9163 = vunpack.c.l.s4 1983009808
        %v9164 = vunpack.c.0.s8 %v9163
        %v9165 = vperm.slane %v9157, %v9164
        %v9166 = vrot.slane %v9137, 4
        %v9167 = vsel %vm617, %v9166, %v9125
        %v9168 = vrot.slane %v9125, 4
        %v9169 = vsel %vm617, %v9137, %v9168
        %v9171 = vunpack.c.l.s4 1934713408
        %v9172 = vunpack.c.0.s8 %v9171
        %v9173 = vperm.slane %v9167, %v9172
        %v9175 = vunpack.c.l.s4 1934713408
        %v9176 = vunpack.c.0.s8 %v9175
        %v9177 = vperm.slane %v9169, %v9176
        %v9178 = vrot.slane %v9141, 4
        %v9179 = vsel %vm617, %v9178, %v9129
        %v9180 = vrot.slane %v9129, 4
        %v9181 = vsel %vm617, %v9141, %v9180
        %v9183 = vunpack.c.l.s4 1934713408
        %v9184 = vunpack.c.0.s8 %v9183
        %v9185 = vperm.slane %v9179, %v9184
        %v9187 = vunpack.c.l.s4 1934713408
        %v9188 = vunpack.c.0.s8 %v9187
        %v9189 = vperm.slane %v9181, %v9188
        %v9190 = vrot.slane %v9161, 4
        %v9191 = vsel %vm617, %v9190, %v9149
        %v9192 = vrot.slane %v9149, 4
        %v9193 = vsel %vm617, %v9161, %v9192
        %v9195 = vunpack.c.l.s4 1934713408
        %v9196 = vunpack.c.0.s8 %v9195
        %v9197 = vperm.slane %v9191, %v9196
        %v9199 = vunpack.c.l.s4 1934713408
        %v9200 = vunpack.c.0.s8 %v9199
        %v9201 = vperm.slane %v9193, %v9200
        %v9202 = vrot.slane %v9165, 4
        %v9203 = vsel %vm617, %v9202, %v9153
        %v9204 = vrot.slane %v9153, 4
        %v9205 = vsel %vm617, %v9165, %v9204
        %v9207 = vunpack.c.l.s4 1934713408
        %v9208 = vunpack.c.0.s8 %v9207
        %v9209 = vperm.slane %v9203, %v9208
        %v9211 = vunpack.c.l.s4 1934713408
        %v9212 = vunpack.c.0.s8 %v9211
        %v9213 = vperm.slane %v9205, %v9212
        %v9214 = vrot.slane %v9197, 4
        %v9215 = vsel %vm617, %v9214, %v9173
        %v9216 = vrot.slane %v9173, 4
        %v9217 = vsel %vm617, %v9197, %v9216
        %v9218 = vrot.slane %v9201, 4
        %v9219 = vsel %vm617, %v9218, %v9177
        %v9220 = vrot.slane %v9177, 4
        %v9221 = vsel %vm617, %v9201, %v9220
        %v9222 = vrot.slane %v9209, 4
        %v9223 = vsel %vm617, %v9222, %v9185
        %v9224 = vrot.slane %v9185, 4
        %v9225 = vsel %vm617, %v9209, %v9224
        %v9226 = vrot.slane %v9213, 4
        %v9227 = vsel %vm617, %v9226, %v9189
        %v9228 = vrot.slane %v9189, 4
        %v9229 = vsel %vm617, %v9213, %v9228
        %9239 = vrot.lane.b32.xlu0 %v7313, 16
        %v9240 = vpop.permute.xlu0 %9239
        %9241 = vrot.lane.b32.xlu0 %v7425, 16
        %v9242 = vpop.permute.xlu0 %9241
        %9243 = vrot.lane.b32.xlu0 %v7537, 16
        %v9244 = vpop.permute.xlu0 %9243
        %9245 = vrot.lane.b32.xlu0 %v7649, 16
        %v9246 = vpop.permute.xlu0 %9245
        %9247 = vrot.lane.b32.xlu0 %v7761, 16
        %v9248 = vpop.permute.xlu0 %9247
        %9249 = vrot.lane.b32.xlu0 %v7873, 16
        %v9250 = vpop.permute.xlu0 %9249
        %9251 = vrot.lane.b32.xlu0 %v7985, 16
        %v9252 = vpop.permute.xlu0 %9251
        %9253 = vrot.lane.b32.xlu0 %v8097, 16
        %v9254 = vpop.permute.xlu0 %9253
        %9255 = vrot.lane.b32.xlu0 %v8209, 16
        %v9256 = vpop.permute.xlu0 %9255
        %9275 = vrot.lane.b32.xlu0 %v7315, 32
        %v9276 = vpop.permute.xlu0 %9275
        %9277 = vrot.lane.b32.xlu0 %v7427, 32
        %v9278 = vpop.permute.xlu0 %9277
        %9279 = vrot.lane.b32.xlu0 %v7539, 32
        %v9280 = vpop.permute.xlu0 %9279
        %9281 = vrot.lane.b32.xlu0 %v7651, 32
        %v9282 = vpop.permute.xlu0 %9281
        %9283 = vrot.lane.b32.xlu0 %v7763, 32
        %v9284 = vpop.permute.xlu0 %9283
        %9285 = vrot.lane.b32.xlu0 %v7875, 32
        %v9286 = vpop.permute.xlu0 %9285
        %9287 = vrot.lane.b32.xlu0 %v7987, 32
        %v9288 = vpop.permute.xlu0 %9287
        %9289 = vrot.lane.b32.xlu0 %v8099, 32
        %v9290 = vpop.permute.xlu0 %9289
        %9291 = vrot.lane.b32.xlu0 %v8211, 32
        %v9292 = vpop.permute.xlu0 %9291
        %9311 = vrot.lane.b32.xlu0 %v7317, 48
        %v9312 = vpop.permute.xlu0 %9311
        %9313 = vrot.lane.b32.xlu0 %v7429, 48
        %v9314 = vpop.permute.xlu0 %9313
        %9315 = vrot.lane.b32.xlu0 %v7541, 48
        %v9316 = vpop.permute.xlu0 %9315
        %9317 = vrot.lane.b32.xlu0 %v7653, 48
        %v9318 = vpop.permute.xlu0 %9317
        %9319 = vrot.lane.b32.xlu0 %v7765, 48
        %v9320 = vpop.permute.xlu0 %9319
        %9321 = vrot.lane.b32.xlu0 %v7877, 48
        %v9322 = vpop.permute.xlu0 %9321
        %9323 = vrot.lane.b32.xlu0 %v7989, 48
        %v9324 = vpop.permute.xlu0 %9323
        %9325 = vrot.lane.b32.xlu0 %v8101, 48
        %v9326 = vpop.permute.xlu0 %9325
        %9327 = vrot.lane.b32.xlu0 %v8213, 48
        %v9328 = vpop.permute.xlu0 %9327
        %9347 = vrot.lane.b32.xlu0 %v7319, 64
        %v9348 = vpop.permute.xlu0 %9347
        %9349 = vrot.lane.b32.xlu0 %v7431, 64
        %v9350 = vpop.permute.xlu0 %9349
        %9351 = vrot.lane.b32.xlu0 %v7543, 64
        %v9352 = vpop.permute.xlu0 %9351
        %9353 = vrot.lane.b32.xlu0 %v7655, 64
        %v9354 = vpop.permute.xlu0 %9353
        %9355 = vrot.lane.b32.xlu0 %v7767, 64
        %v9356 = vpop.permute.xlu0 %9355
        %9357 = vrot.lane.b32.xlu0 %v7879, 64
        %v9358 = vpop.permute.xlu0 %9357
        %9359 = vrot.lane.b32.xlu0 %v7991, 64
        %v9360 = vpop.permute.xlu0 %9359
        %9361 = vrot.lane.b32.xlu0 %v8103, 64
        %v9362 = vpop.permute.xlu0 %9361
        %9363 = vrot.lane.b32.xlu0 %v8215, 64
        %v9364 = vpop.permute.xlu0 %9363
        %9383 = vrot.lane.b32.xlu0 %v7321, 80
        %v9384 = vpop.permute.xlu0 %9383
        %9385 = vrot.lane.b32.xlu0 %v7433, 80
        %v9386 = vpop.permute.xlu0 %9385
        %9387 = vrot.lane.b32.xlu0 %v7545, 80
        %v9388 = vpop.permute.xlu0 %9387
        %9389 = vrot.lane.b32.xlu0 %v7657, 80
        %v9390 = vpop.permute.xlu0 %9389
        %9391 = vrot.lane.b32.xlu0 %v7769, 80
        %v9392 = vpop.permute.xlu0 %9391
        %9393 = vrot.lane.b32.xlu0 %v7881, 80
        %v9394 = vpop.permute.xlu0 %9393
        %9395 = vrot.lane.b32.xlu0 %v7993, 80
        %v9396 = vpop.permute.xlu0 %9395
        %9397 = vrot.lane.b32.xlu0 %v8105, 80
        %v9398 = vpop.permute.xlu0 %9397
        %9399 = vrot.lane.b32.xlu0 %v8217, 80
        %v9400 = vpop.permute.xlu0 %9399
        %9419 = vrot.lane.b32.xlu0 %v7323, 96
        %v9420 = vpop.permute.xlu0 %9419
        %9421 = vrot.lane.b32.xlu0 %v7435, 96
        %v9422 = vpop.permute.xlu0 %9421
        %9423 = vrot.lane.b32.xlu0 %v7547, 96
        %v9424 = vpop.permute.xlu0 %9423
        %9425 = vrot.lane.b32.xlu0 %v7659, 96
        %v9426 = vpop.permute.xlu0 %9425
        %9427 = vrot.lane.b32.xlu0 %v7771, 96
        %v9428 = vpop.permute.xlu0 %9427
        %9429 = vrot.lane.b32.xlu0 %v7883, 96
        %v9430 = vpop.permute.xlu0 %9429
        %9431 = vrot.lane.b32.xlu0 %v7995, 96
        %v9432 = vpop.permute.xlu0 %9431
        %9433 = vrot.lane.b32.xlu0 %v8107, 96
        %v9434 = vpop.permute.xlu0 %9433
        %9435 = vrot.lane.b32.xlu0 %v8219, 96
        %v9436 = vpop.permute.xlu0 %9435
        %9455 = vrot.lane.b32.xlu0 %v7325, 112
        %v9456 = vpop.permute.xlu0 %9455
        %9457 = vrot.lane.b32.xlu0 %v7437, 112
        %v9458 = vpop.permute.xlu0 %9457
        %9459 = vrot.lane.b32.xlu0 %v7549, 112
        %v9460 = vpop.permute.xlu0 %9459
        %9461 = vrot.lane.b32.xlu0 %v7661, 112
        %v9462 = vpop.permute.xlu0 %9461
        %9463 = vrot.lane.b32.xlu0 %v7773, 112
        %v9464 = vpop.permute.xlu0 %9463
        %9465 = vrot.lane.b32.xlu0 %v7885, 112
        %v9466 = vpop.permute.xlu0 %9465
        %9467 = vrot.lane.b32.xlu0 %v7997, 112
        %v9468 = vpop.permute.xlu0 %9467
        %9469 = vrot.lane.b32.xlu0 %v8109, 112
        %v9470 = vpop.permute.xlu0 %9469
        %9471 = vrot.lane.b32.xlu0 %v8221, 112
        %v9472 = vpop.permute.xlu0 %9471
        %9491 = vrot.lane.b32.xlu0 %v8321, 16
        %v9492 = vpop.permute.xlu0 %9491
        %9493 = vrot.lane.b32.xlu0 %v8433, 16
        %v9494 = vpop.permute.xlu0 %9493
        %9495 = vrot.lane.b32.xlu0 %v8545, 16
        %v9496 = vpop.permute.xlu0 %9495
        %9497 = vrot.lane.b32.xlu0 %v8657, 16
        %v9498 = vpop.permute.xlu0 %9497
        %9499 = vrot.lane.b32.xlu0 %v8769, 16
        %v9500 = vpop.permute.xlu0 %9499
        %9501 = vrot.lane.b32.xlu0 %v8881, 16
        %v9502 = vpop.permute.xlu0 %9501
        %9503 = vrot.lane.b32.xlu0 %v8993, 16
        %v9504 = vpop.permute.xlu0 %9503
        %9505 = vrot.lane.b32.xlu0 %v9105, 16
        %v9506 = vpop.permute.xlu0 %9505
        %9507 = vrot.lane.b32.xlu0 %v9217, 16
        %v9508 = vpop.permute.xlu0 %9507
        %9527 = vrot.lane.b32.xlu0 %v8323, 32
        %v9528 = vpop.permute.xlu0 %9527
        %9529 = vrot.lane.b32.xlu0 %v8435, 32
        %v9530 = vpop.permute.xlu0 %9529
        %9531 = vrot.lane.b32.xlu0 %v8547, 32
        %v9532 = vpop.permute.xlu0 %9531
        %9533 = vrot.lane.b32.xlu0 %v8659, 32
        %v9534 = vpop.permute.xlu0 %9533
        %9535 = vrot.lane.b32.xlu0 %v8771, 32
        %v9536 = vpop.permute.xlu0 %9535
        %9537 = vrot.lane.b32.xlu0 %v8883, 32
        %v9538 = vpop.permute.xlu0 %9537
        %9539 = vrot.lane.b32.xlu0 %v8995, 32
        %v9540 = vpop.permute.xlu0 %9539
        %9541 = vrot.lane.b32.xlu0 %v9107, 32
        %v9542 = vpop.permute.xlu0 %9541
        %9543 = vrot.lane.b32.xlu0 %v9219, 32
        %v9544 = vpop.permute.xlu0 %9543
        %9563 = vrot.lane.b32.xlu0 %v8325, 48
        %v9564 = vpop.permute.xlu0 %9563
        %9565 = vrot.lane.b32.xlu0 %v8437, 48
        %v9566 = vpop.permute.xlu0 %9565
        %9567 = vrot.lane.b32.xlu0 %v8549, 48
        %v9568 = vpop.permute.xlu0 %9567
        %9569 = vrot.lane.b32.xlu0 %v8661, 48
        %v9570 = vpop.permute.xlu0 %9569
        %9571 = vrot.lane.b32.xlu0 %v8773, 48
        %v9572 = vpop.permute.xlu0 %9571
        %9573 = vrot.lane.b32.xlu0 %v8885, 48
        %v9574 = vpop.permute.xlu0 %9573
        %9575 = vrot.lane.b32.xlu0 %v8997, 48
        %v9576 = vpop.permute.xlu0 %9575
        %9577 = vrot.lane.b32.xlu0 %v9109, 48
        %v9578 = vpop.permute.xlu0 %9577
        %9579 = vrot.lane.b32.xlu0 %v9221, 48
        %v9580 = vpop.permute.xlu0 %9579
        %9599 = vrot.lane.b32.xlu0 %v8327, 64
        %v9600 = vpop.permute.xlu0 %9599
        %9601 = vrot.lane.b32.xlu0 %v8439, 64
        %v9602 = vpop.permute.xlu0 %9601
        %9603 = vrot.lane.b32.xlu0 %v8551, 64
        %v9604 = vpop.permute.xlu0 %9603
        %9605 = vrot.lane.b32.xlu0 %v8663, 64
        %v9606 = vpop.permute.xlu0 %9605
        %9607 = vrot.lane.b32.xlu0 %v8775, 64
        %v9608 = vpop.permute.xlu0 %9607
        %9609 = vrot.lane.b32.xlu0 %v8887, 64
        %v9610 = vpop.permute.xlu0 %9609
        %9611 = vrot.lane.b32.xlu0 %v8999, 64
        %v9612 = vpop.permute.xlu0 %9611
        %9613 = vrot.lane.b32.xlu0 %v9111, 64
        %v9614 = vpop.permute.xlu0 %9613
        %9615 = vrot.lane.b32.xlu0 %v9223, 64
        %v9616 = vpop.permute.xlu0 %9615
        %9635 = vrot.lane.b32.xlu0 %v8329, 80
        %v9636 = vpop.permute.xlu0 %9635
        %9637 = vrot.lane.b32.xlu0 %v8441, 80
        %v9638 = vpop.permute.xlu0 %9637
        %9639 = vrot.lane.b32.xlu0 %v8553, 80
        %v9640 = vpop.permute.xlu0 %9639
        %9641 = vrot.lane.b32.xlu0 %v8665, 80
        %v9642 = vpop.permute.xlu0 %9641
        %9643 = vrot.lane.b32.xlu0 %v8777, 80
        %v9644 = vpop.permute.xlu0 %9643
        %9645 = vrot.lane.b32.xlu0 %v8889, 80
        %v9646 = vpop.permute.xlu0 %9645
        %9647 = vrot.lane.b32.xlu0 %v9001, 80
        %v9648 = vpop.permute.xlu0 %9647
        %9649 = vrot.lane.b32.xlu0 %v9113, 80
        %v9650 = vpop.permute.xlu0 %9649
        %9651 = vrot.lane.b32.xlu0 %v9225, 80
        %v9652 = vpop.permute.xlu0 %9651
        %9671 = vrot.lane.b32.xlu0 %v8331, 96
        %v9672 = vpop.permute.xlu0 %9671
        %9673 = vrot.lane.b32.xlu0 %v8443, 96
        %v9674 = vpop.permute.xlu0 %9673
        %9675 = vrot.lane.b32.xlu0 %v8555, 96
        %v9676 = vpop.permute.xlu0 %9675
        %9677 = vrot.lane.b32.xlu0 %v8667, 96
        %v9678 = vpop.permute.xlu0 %9677
        %9679 = vrot.lane.b32.xlu0 %v8779, 96
        %v9680 = vpop.permute.xlu0 %9679
        %9681 = vrot.lane.b32.xlu0 %v8891, 96
        %v9682 = vpop.permute.xlu0 %9681
        %9683 = vrot.lane.b32.xlu0 %v9003, 96
        %v9684 = vpop.permute.xlu0 %9683
        %9685 = vrot.lane.b32.xlu0 %v9115, 96
        %v9686 = vpop.permute.xlu0 %9685
        %9687 = vrot.lane.b32.xlu0 %v9227, 96
        %v9688 = vpop.permute.xlu0 %9687
        %9707 = vrot.lane.b32.xlu0 %v8333, 112
        %v9708 = vpop.permute.xlu0 %9707
        %9709 = vrot.lane.b32.xlu0 %v8445, 112
        %v9710 = vpop.permute.xlu0 %9709
        %9711 = vrot.lane.b32.xlu0 %v8557, 112
        %v9712 = vpop.permute.xlu0 %9711
        %9713 = vrot.lane.b32.xlu0 %v8669, 112
        %v9714 = vpop.permute.xlu0 %9713
        %9715 = vrot.lane.b32.xlu0 %v8781, 112
        %v9716 = vpop.permute.xlu0 %9715
        %9717 = vrot.lane.b32.xlu0 %v8893, 112
        %v9718 = vpop.permute.xlu0 %9717
        %9719 = vrot.lane.b32.xlu0 %v9005, 112
        %v9720 = vpop.permute.xlu0 %9719
        %9721 = vrot.lane.b32.xlu0 %v9117, 112
        %v9722 = vpop.permute.xlu0 %9721
        %9723 = vrot.lane.b32.xlu0 %v9229, 112
        %v9724 = vpop.permute.xlu0 %9723
        %v9734 = vsel %vm841, %v7311, %v9240
        %v9735 = vsel %vm841, %v7423, %v9242
        %v9736 = vsel %vm841, %v7535, %v9244
        %v9737 = vsel %vm841, %v7647, %v9246
        %v9738 = vsel %vm841, %v7759, %v9248
        %v9739 = vsel %vm841, %v7871, %v9250
        %v9740 = vsel %vm841, %v7983, %v9252
        %v9741 = vsel %vm841, %v8095, %v9254
        %v9742 = vsel %vm841, %v8207, %v9256
        %v9743 = vsel %vm441, %v9734, %v9276
        %v9744 = vsel %vm441, %v9735, %v9278
        %v9745 = vsel %vm441, %v9736, %v9280
        %v9746 = vsel %vm441, %v9737, %v9282
        %v9747 = vsel %vm441, %v9738, %v9284
        %v9748 = vsel %vm441, %v9739, %v9286
        %v9749 = vsel %vm441, %v9740, %v9288
        %v9750 = vsel %vm441, %v9741, %v9290
        %v9751 = vsel %vm441, %v9742, %v9292
        %v9752 = vsel %vm5064, %v9743, %v9312
        %v9753 = vsel %vm5064, %v9744, %v9314
        %v9754 = vsel %vm5064, %v9745, %v9316
        %v9755 = vsel %vm5064, %v9746, %v9318
        %v9756 = vsel %vm5064, %v9747, %v9320
        %v9757 = vsel %vm5064, %v9748, %v9322
        %v9758 = vsel %vm5064, %v9749, %v9324
        %v9759 = vsel %vm5064, %v9750, %v9326
        %v9760 = vsel %vm5064, %v9751, %v9328
        %v9761 = vsel %vm5074, %v9752, %v9348
        %v9762 = vsel %vm5074, %v9753, %v9350
        %v9763 = vsel %vm5074, %v9754, %v9352
        %v9764 = vsel %vm5074, %v9755, %v9354
        %v9765 = vsel %vm5074, %v9756, %v9356
        %v9766 = vsel %vm5074, %v9757, %v9358
        %v9767 = vsel %vm5074, %v9758, %v9360
        %v9768 = vsel %vm5074, %v9759, %v9362
        %v9769 = vsel %vm5074, %v9760, %v9364
        %v9770 = vsel %vm5084, %v9761, %v9384
        %v9771 = vsel %vm5084, %v9762, %v9386
        %v9772 = vsel %vm5084, %v9763, %v9388
        %v9773 = vsel %vm5084, %v9764, %v9390
        %v9774 = vsel %vm5084, %v9765, %v9392
        %v9775 = vsel %vm5084, %v9766, %v9394
        %v9776 = vsel %vm5084, %v9767, %v9396
        %v9777 = vsel %vm5084, %v9768, %v9398
        %v9778 = vsel %vm5084, %v9769, %v9400
        %v9779 = vsel %vm5094, %v9770, %v9420
        %v9780 = vsel %vm5094, %v9771, %v9422
        %v9781 = vsel %vm5094, %v9772, %v9424
        %v9782 = vsel %vm5094, %v9773, %v9426
        %v9783 = vsel %vm5094, %v9774, %v9428
        %v9784 = vsel %vm5094, %v9775, %v9430
        %v9785 = vsel %vm5094, %v9776, %v9432
        %v9786 = vsel %vm5094, %v9777, %v9434
        %v9787 = vsel %vm5094, %v9778, %v9436
        %v9788 = vsel %vm5104, %v9779, %v9456
        %v9789 = vsel %vm5104, %v9780, %v9458
        %v9790 = vsel %vm5104, %v9781, %v9460
        %v9791 = vsel %vm5104, %v9782, %v9462
        %v9792 = vsel %vm5104, %v9783, %v9464
        %v9793 = vsel %vm5104, %v9784, %v9466
        %v9794 = vsel %vm5104, %v9785, %v9468
        %v9795 = vsel %vm5104, %v9786, %v9470
        %v9796 = vsel %vm5104, %v9787, %v9472
        %v9797 = vsel %vm841, %v8319, %v9492
        %v9798 = vsel %vm841, %v8431, %v9494
        %v9799 = vsel %vm841, %v8543, %v9496
        %v9800 = vsel %vm841, %v8655, %v9498
        %v9801 = vsel %vm841, %v8767, %v9500
        %v9802 = vsel %vm841, %v8879, %v9502
        %v9803 = vsel %vm841, %v8991, %v9504
        %v9804 = vsel %vm841, %v9103, %v9506
        %v9805 = vsel %vm841, %v9215, %v9508
        %v9806 = vsel %vm441, %v9797, %v9528
        %v9807 = vsel %vm441, %v9798, %v9530
        %v9808 = vsel %vm441, %v9799, %v9532
        %v9809 = vsel %vm441, %v9800, %v9534
        %v9810 = vsel %vm441, %v9801, %v9536
        %v9811 = vsel %vm441, %v9802, %v9538
        %v9812 = vsel %vm441, %v9803, %v9540
        %v9813 = vsel %vm441, %v9804, %v9542
        %v9814 = vsel %vm441, %v9805, %v9544
        %v9815 = vsel %vm5064, %v9806, %v9564
        %v9816 = vsel %vm5064, %v9807, %v9566
        %v9817 = vsel %vm5064, %v9808, %v9568
        %v9818 = vsel %vm5064, %v9809, %v9570
        %v9819 = vsel %vm5064, %v9810, %v9572
        %v9820 = vsel %vm5064, %v9811, %v9574
        %v9821 = vsel %vm5064, %v9812, %v9576
        %v9822 = vsel %vm5064, %v9813, %v9578
        %v9823 = vsel %vm5064, %v9814, %v9580
        %v9824 = vsel %vm5074, %v9815, %v9600
        %v9825 = vsel %vm5074, %v9816, %v9602
        %v9826 = vsel %vm5074, %v9817, %v9604
        %v9827 = vsel %vm5074, %v9818, %v9606
        %v9828 = vsel %vm5074, %v9819, %v9608
        %v9829 = vsel %vm5074, %v9820, %v9610
        %v9830 = vsel %vm5074, %v9821, %v9612
        %v9831 = vsel %vm5074, %v9822, %v9614
        %v9832 = vsel %vm5074, %v9823, %v9616
        %v9833 = vsel %vm5084, %v9824, %v9636
        %v9834 = vsel %vm5084, %v9825, %v9638
        %v9835 = vsel %vm5084, %v9826, %v9640
        %v9836 = vsel %vm5084, %v9827, %v9642
        %v9837 = vsel %vm5084, %v9828, %v9644
        %v9838 = vsel %vm5084, %v9829, %v9646
        %v9839 = vsel %vm5084, %v9830, %v9648
        %v9840 = vsel %vm5084, %v9831, %v9650
        %v9841 = vsel %vm5084, %v9832, %v9652
        %v9842 = vsel %vm5094, %v9833, %v9672
        %v9843 = vsel %vm5094, %v9834, %v9674
        %v9844 = vsel %vm5094, %v9835, %v9676
        %v9845 = vsel %vm5094, %v9836, %v9678
        %v9846 = vsel %vm5094, %v9837, %v9680
        %v9847 = vsel %vm5094, %v9838, %v9682
        %v9848 = vsel %vm5094, %v9839, %v9684
        %v9849 = vsel %vm5094, %v9840, %v9686
        %v9850 = vsel %vm5094, %v9841, %v9688
        %v9851 = vsel %vm5104, %v9842, %v9708
        %v9852 = vsel %vm5104, %v9843, %v9710
        %v9853 = vsel %vm5104, %v9844, %v9712
        %v9854 = vsel %vm5104, %v9845, %v9714
        %v9855 = vsel %vm5104, %v9846, %v9716
        %v9856 = vsel %vm5104, %v9847, %v9718
        %v9857 = vsel %vm5104, %v9848, %v9720
        %v9858 = vsel %vm5104, %v9849, %v9722
        %v9859 = vsel %vm5104, %v9850, %v9724
        %9861 = vset.pattern.permute.xlu0 0
        %9862 = vperm.xlu0 %9861, %v5265
        %v9863 = vpop.permute.xlu0 %9862
        %v9866 = vsel %vm5182, %v5264, 0
        %9868 = vmatpush.msra.mxu0 0.0
        %9869 = vmatpush.msra.mxu0 0.0
        %9870 = vmatpush.msra.mxu0 0.0
        %9871 = vmatpush.msra.mxu0 0.0
        %9872 = vmatpush.msra.mxu0 0.0
        %9873 = vmatpush.msra.mxu0 0.0
        %9874 = vmatpush.msra.mxu0 0.0
        %9875 = vmatpush.msra.mxu0 %v9796
        %9876 = vmatpush.msra.mxu0 %v9795
        %9877 = vmatpush.msra.mxu0 %v9794
        %9878 = vmatpush.msra.mxu0 %v9793
        %9879 = vmatpush.msra.mxu0 %v9792
        %9880 = vmatpush.msra.mxu0 %v9791
        %9881 = vmatpush.msra.mxu0 %v9790
        %9882 = vmatpush.msra.mxu0 %v9789
        %9883 = vmatpush.msra.mxu0 %v9788
        %9884 = vmatmul.f32.gmra.mxu0 %v9866
        %v9885 = vpop.f32.mrf.mxu0
        %v9886 = vadd.f32 %v9863, %v9885
        %9887 = vdwg.mxu0
        %9888 = vmatpush.msra.mxu0 0.0
        %9889 = vmatpush.msra.mxu0 0.0
        %9890 = vmatpush.msra.mxu0 0.0
        %9891 = vmatpush.msra.mxu0 0.0
        %9892 = vmatpush.msra.mxu0 0.0
        %9893 = vmatpush.msra.mxu0 0.0
        %9894 = vmatpush.msra.mxu0 0.0
        %9895 = vmatpush.msra.mxu0 %v9859
        %9896 = vmatpush.msra.mxu0 %v9858
        %9897 = vmatpush.msra.mxu0 %v9857
        %9898 = vmatpush.msra.mxu0 %v9856
        %9899 = vmatpush.msra.mxu0 %v9855
        %9900 = vmatpush.msra.mxu0 %v9854
        %9901 = vmatpush.msra.mxu0 %v9853
        %9902 = vmatpush.msra.mxu0 %v9852
        %9903 = vmatpush.msra.mxu0 %v9851
        %9904 = vmatmul.f32.gmra.mxu0 %v9866
        %v9905 = vpop.f32.mrf.mxu0
        %v9906 = vadd.f32 %v9863, %v9905
        %9907 = vdwg.mxu0
        %v9908 = vsub.f32 0.0, %v9886
        %v9909 = vsub.f32 0.0, %v9906
        %v9910 = vmul.f32 %v9908, 1.442695
        %v9911 = vpow.pop %v9910
        %v9912 = vmul.f32 %v9909, 1.442695
        %v9913 = vpow.pop %v9912
        %v9914 = vadd.f32 %v9911, 1.0
        %v9915 = vadd.f32 %v9913, 1.0
        %v9916 = vrcp.pop %v9914
        %v9917 = vmul.f32 %v9914, %v9916
        %v9918 = vsub.f32 1.0, %v9917
        %v9919 = vmul.f32 %v9916, %v9918
        %v9920 = vadd.f32 %v9916, %v9919
        %vm9921 = vweird.f32 %v9914
        %vm9922 = vweird.f32 %v9916
        %vm9923 = vmor %vm9921, %vm9922
        %v9924 = vsel %vm9923, %v9916, %v9920
        %v9925 = vand.u32 2147483647, %v9914
        %vm9926 = vcmp.eq.f32.partialorder %v9925, 8.507059e+37
        %v9927 = vand.u32 %v9914, 2147483648
        %v9928 = vor.u32 1.1754944e-38, %v9927
        %v9929 = vsel %vm9926, %v9928, %v9924
        %v9930 = vrcp.pop %v9915
        %v9931 = vmul.f32 %v9915, %v9930
        %v9932 = vsub.f32 1.0, %v9931
        %v9933 = vmul.f32 %v9930, %v9932
        %v9934 = vadd.f32 %v9930, %v9933
        %vm9935 = vweird.f32 %v9915
        %vm9936 = vweird.f32 %v9930
        %vm9937 = vmor %vm9935, %vm9936
        %v9938 = vsel %vm9937, %v9930, %v9934
        %v9939 = vand.u32 2147483647, %v9915
        %vm9940 = vcmp.eq.f32.partialorder %v9939, 8.507059e+37
        %v9941 = vand.u32 %v9915, 2147483648
        %v9942 = vor.u32 1.1754944e-38, %v9941
        %v9943 = vsel %vm9940, %v9942, %v9938
        %v9944 = vmul.f32 %v9886, %v9929
        %v9945 = vmul.f32 %v9906, %v9943
        %v9946 = vld [vmem:[%s7] sm:$0xff]
        %v9947 = vld [vmem:[%s7 + $0x8] sm:$0xff]
        %v9948 = vld [vmem:[%s8] sm:$0xff]
        %v9949 = vld [vmem:[%s8 + $0x8] sm:$0xff]
        %9951 = vset.pattern.permute.xlu0 0
        %9952 = vperm.xlu0 %9951, %v9948
        %v9953 = vpop.permute.xlu0 %9952
        %9956 = vset.pattern.permute.xlu0 0
        %9957 = vperm.xlu0 %9956, %v9949
        %v9958 = vpop.permute.xlu0 %9957
        %v9961 = vsel %vm441, %v9946, 0
        %v9964 = vsel %vm441, %v9947, 0
        %9966 = vmatpush.msra.mxu0 0.0
        %9967 = vmatpush.msra.mxu0 0.0
        %9968 = vmatpush.msra.mxu0 0.0
        %9969 = vmatpush.msra.mxu0 0.0
        %9970 = vmatpush.msra.mxu0 0.0
        %9971 = vmatpush.msra.mxu0 0.0
        %9972 = vmatpush.msra.mxu0 0.0
        %9973 = vmatpush.msra.mxu0 0.0
        %9974 = vmatpush.msra.mxu0 0.0
        %9975 = vmatpush.msra.mxu0 0.0
        %9976 = vmatpush.msra.mxu0 0.0
        %9977 = vmatpush.msra.mxu0 0.0
        %9978 = vmatpush.msra.mxu0 %v566
        %9979 = vmatpush.msra.mxu0 %v568
        %9980 = vmatpush.msra.mxu0 %v5262
        %9981 = vmatpush.msra.mxu0 %v9944
        %9982 = vmatmul.f32.gmra.mxu0 %v9961
        %v9983 = vpop.f32.mrf.mxu0
        %v9984 = vadd.f32 %v9953, %v9983
        %9985 = vmatmul.f32.gmra.mxu0 %v9964
        %v9986 = vpop.f32.mrf.mxu0
        %v9987 = vadd.f32 %v9958, %v9986
        %9988 = vdwg.mxu0
        %9989 = vmatpush.msra.mxu0 0.0
        %9990 = vmatpush.msra.mxu0 0.0
        %9991 = vmatpush.msra.mxu0 0.0
        %9992 = vmatpush.msra.mxu0 0.0
        %9993 = vmatpush.msra.mxu0 0.0
        %9994 = vmatpush.msra.mxu0 0.0
        %9995 = vmatpush.msra.mxu0 0.0
        %9996 = vmatpush.msra.mxu0 0.0
        %9997 = vmatpush.msra.mxu0 0.0
        %9998 = vmatpush.msra.mxu0 0.0
        %9999 = vmatpush.msra.mxu0 0.0
        %10000 = vmatpush.msra.mxu0 0.0
        %10001 = vmatpush.msra.mxu0 %v567
        %10002 = vmatpush.msra.mxu0 %v569
        %10003 = vmatpush.msra.mxu0 %v5263
        %10004 = vmatpush.msra.mxu0 %v9945
        %10005 = vmatmul.f32.gmra.mxu0 %v9961
        %v10006 = vpop.f32.mrf.mxu0
        %v10007 = vadd.f32 %v9953, %v10006
        %10008 = vmatmul.f32.gmra.mxu0 %v9964
        %v10009 = vpop.f32.mrf.mxu0
        %v10010 = vadd.f32 %v9958, %v10009
        %10011 = vdwg.mxu0
        %v10012 = vsub.f32 0.0, %v9984
        %v10013 = vsub.f32 0.0, %v10007
        %v10014 = vsub.f32 0.0, %v9987
        %v10015 = vsub.f32 0.0, %v10010
        %v10016 = vmul.f32 %v10012, 1.442695
        %v10017 = vpow.pop %v10016
        %v10018 = vmul.f32 %v10013, 1.442695
        %v10019 = vpow.pop %v10018
        %v10020 = vmul.f32 %v10014, 1.442695
        %v10021 = vpow.pop %v10020
        %v10022 = vmul.f32 %v10015, 1.442695
        %v10023 = vpow.pop %v10022
        %v10024 = vadd.f32 %v10017, 1.0
        %v10025 = vadd.f32 %v10019, 1.0
        %v10026 = vadd.f32 %v10021, 1.0
        %v10027 = vadd.f32 %v10023, 1.0
        %v10028 = vrcp.pop %v10024
        %v10029 = vmul.f32 %v10024, %v10028
        %v10030 = vsub.f32 1.0, %v10029
        %v10031 = vmul.f32 %v10028, %v10030
        %v10032 = vadd.f32 %v10028, %v10031
        %vm10033 = vweird.f32 %v10024
        %vm10034 = vweird.f32 %v10028
        %vm10035 = vmor %vm10033, %vm10034
        %v10036 = vsel %vm10035, %v10028, %v10032
        %v10037 = vand.u32 2147483647, %v10024
        %vm10038 = vcmp.eq.f32.partialorder %v10037, 8.507059e+37
        %v10039 = vand.u32 %v10024, 2147483648
        %v10040 = vor.u32 1.1754944e-38, %v10039
        %v10041 = vsel %vm10038, %v10040, %v10036
        %v10042 = vrcp.pop %v10025
        %v10043 = vmul.f32 %v10025, %v10042
        %v10044 = vsub.f32 1.0, %v10043
        %v10045 = vmul.f32 %v10042, %v10044
        %v10046 = vadd.f32 %v10042, %v10045
        %vm10047 = vweird.f32 %v10025
        %vm10048 = vweird.f32 %v10042
        %vm10049 = vmor %vm10047, %vm10048
        %v10050 = vsel %vm10049, %v10042, %v10046
        %v10051 = vand.u32 2147483647, %v10025
        %vm10052 = vcmp.eq.f32.partialorder %v10051, 8.507059e+37
        %v10053 = vand.u32 %v10025, 2147483648
        %v10054 = vor.u32 1.1754944e-38, %v10053
        %v10055 = vsel %vm10052, %v10054, %v10050
        %v10056 = vrcp.pop %v10026
        %v10057 = vmul.f32 %v10026, %v10056
        %v10058 = vsub.f32 1.0, %v10057
        %v10059 = vmul.f32 %v10056, %v10058
        %v10060 = vadd.f32 %v10056, %v10059
        %vm10061 = vweird.f32 %v10026
        %vm10062 = vweird.f32 %v10056
        %vm10063 = vmor %vm10061, %vm10062
        %v10064 = vsel %vm10063, %v10056, %v10060
        %v10065 = vand.u32 2147483647, %v10026
        %vm10066 = vcmp.eq.f32.partialorder %v10065, 8.507059e+37
        %v10067 = vand.u32 %v10026, 2147483648
        %v10068 = vor.u32 1.1754944e-38, %v10067
        %v10069 = vsel %vm10066, %v10068, %v10064
        %v10070 = vrcp.pop %v10027
        %v10071 = vmul.f32 %v10027, %v10070
        %v10072 = vsub.f32 1.0, %v10071
        %v10073 = vmul.f32 %v10070, %v10072
        %v10074 = vadd.f32 %v10070, %v10073
        %vm10075 = vweird.f32 %v10027
        %vm10076 = vweird.f32 %v10070
        %vm10077 = vmor %vm10075, %vm10076
        %v10078 = vsel %vm10077, %v10070, %v10074
        %v10079 = vand.u32 2147483647, %v10027
        %vm10080 = vcmp.eq.f32.partialorder %v10079, 8.507059e+37
        %v10081 = vand.u32 %v10027, 2147483648
        %v10082 = vor.u32 1.1754944e-38, %v10081
        %v10083 = vsel %vm10080, %v10082, %v10078
        %v10084 = vmul.f32 %v9984, %v10041
        %v10085 = vmul.f32 %v10007, %v10055
        %v10086 = vmul.f32 %v9987, %v10069
        %v10087 = vmul.f32 %v10010, %v10083
        %10088 = vst [vmem:[%s352] sm:$0xff] %v10084
        %10089 = vst [vmem:[%s352 + $0x8] sm:$0xff] %v10085
        %10090 = vst [vmem:[%s352 + $0x10] sm:$0xff] %v10086
        %10091 = vst [vmem:[%s352 + $0x18] sm:$0xff] %v10087
        %s10092 = sand.u32 %s228, 1
        %s10093 = scalar_lea.sflag [#allocation5], %s10092
        %s10094 = sand.u32 %s228, 1
        %s10095 = smul.addr %s10094, 32
        %s10096 = scalar_lea.vmem [#allocation6], %s10095
        // Predicated region
        $region61: #{tpu_custom_call.1} parent=55 // pred_check
          %p10097 = pneg %p238
        $region62: #{tpu_custom_call.1} parent=55 // pred_check_branch
          %10099 = sbr.rel (%p10097) target = $region64
        $region63: #{tpu_custom_call.1} parent=55 // pred_region
          %10101 = vsyncadd %s10093, 0
          %s10102 = smul.addr %s26, 4
          %s10103 = smul.addr %s10102, 8
          %s10104 = scalar_lea.hbm %s9, %s10103
          %s10105 = sshll.u32 %s10096, 4
          %s10106 = int_to_ptr.vmem [resolvable:$true] %s10105
          %s10107 = sshll.u32 %s10104, 4
          %s10108 = int_to_ptr.hbm [resolvable:$true] %s10107
          %10113 = dma.vmem_to_hbm [thread:$0]  %s10106, 512, %s10108, %s10093, 256, 256, 16
        $region64: #{tpu_custom_call.1} parent=55 // pred_fallthru
          _
      $region56: #{tpu_custom_call.1} parent=5 // pred_fallthru
        _
      %p10114 = scmp.le.s32.totalorder 2, %s21
      // Predicated region
      $region65: #{tpu_custom_call.1} parent=5 // pred_check
        %p10115 = pneg %p10114
      $region66: #{tpu_custom_call.1} parent=5 // pred_check_branch
        %10117 = sbr.rel (%p10115) target = $region68
      $region67: #{tpu_custom_call.1} parent=5 // pred_region
        %s10118 = ssub.s32 %s21, 2
        // Predicated region
        $region69: #{tpu_custom_call.1} parent=67 // pred_check
          %p10119 = pneg %p244
        $region70: #{tpu_custom_call.1} parent=67 // pred_check_branch
          %10121 = sbr.rel (%p10119) target = $region72
        $region71: #{tpu_custom_call.1} parent=67 // pred_region
          %s10122 = sand.u32 %s229, 1
          %s10123 = scalar_lea.sflag [#allocation5], %s10122
          %s10124 = sand.u32 %s229, 1
          %s10125 = smul.addr %s10124, 32
          %s10126 = scalar_lea.vmem [#allocation6], %s10125
          %10128 = dma.done %s10123, 512
        $region72: #{tpu_custom_call.1} parent=67 // pred_fallthru
          _
      $region68: #{tpu_custom_call.1} parent=5 // pred_fallthru
        _
    $region6: #{tpu_custom_call.1} parent=1 // loop_footer
      %s25 = sadd.s32 1, %s21
    $region7: #{tpu_custom_call.1} parent=1 // loop_footer_branch
      %20 = sbr.rel target = $region3
    $region8: #{tpu_custom_call.1} parent=1 // loop_exit
      _
    %10129 = vsyncpa [#allocation4], 1
    %s10130 = scalar_lea.sflag [#allocation4], 1
    %10131 = vsyncpa %s10130, 1
    %10132 = vsyncpa [#allocation5], 1
    %s10133 = scalar_lea.sflag [#allocation5], 1
    %10134 = vsyncpa %s10133, 1

</llo_original>
